<compile_context>
chip_gen: v5e
topology: v5e:2x2
jax: 0.10.0
libtpu: 0.0.40
codegen_flags: <defaults>
</compile_context>

<pallas_src>
import functools
import math

import jax
import jax.numpy as jnp
from jax import lax
from jax.experimental import pallas as pl
from jax.experimental.pallas import tpu as pltpu

C = 1366       # channels produced by prevModel (fixed by nn.Linear(1366 * 2, 256))
T = 12         # taps consumed by fc_time / fc_freq (fixed by nn.Linear(12, 1))
H = 256        # fc hidden width
O = 9          # number of classes
OP = 128       # fc2 output padded to a full lane group (sliced back to O outside)
CCHUNK = 512   # lane chunk width for the register-blocked tap reduction


def _make_kernel(tb):
    """Build the kernel body for a (static) batch-tile size `tb`."""
    if tb % 16 == 0:
        sb = 16
    elif tb % 8 == 0:
        sb = 8
    else:
        sb = tb                       # tiny-batch path (tb == B < 8)
    n_sub = tb // sb
    c_chunks = [(c0, min(c0 + CCHUNK, C)) for c0 in range(0, C, CCHUNK)]

    def kernel(w_ref, x_ref, wfc_t_ref, wfc_f_ref, bfc_ref,
               wfc2_ref, bfc2_ref, out_ref, time_ref, freq_ref):
        # ---- fc_time / fc_freq: Linear(12 -> 1), register-blocked -----------
        # x_ref block is (2T, tb, C) bf16: rows [0, T) = time taps, rows
        # [T, 2T) = freq taps.  Loop over (sb x <=512) chunks with the taps
        # innermost: accumulators stay in vregs, each chunk of time/freq is
        # stored to the bf16 scratch exactly once.
        w = [w_ref[t] for t in range(2 * T)]          # 24 SMEM scalars, hoisted

        def sub_block(i, carry):
            b0 = i * sb
            if not isinstance(b0, int):
                b0 = pl.multiple_of(b0, sb)
            for c0, c1 in c_chunks:
                tt = x_ref[0, pl.ds(b0, sb), c0:c1] * w[0]
                ff = x_ref[T, pl.ds(b0, sb), c0:c1] * w[T]
                for t in range(1, T):
                    tt = tt + x_ref[t, pl.ds(b0, sb), c0:c1] * w[t]
                    ff = ff + x_ref[T + t, pl.ds(b0, sb), c0:c1] * w[T + t]
                time_ref[pl.ds(b0, sb), c0:c1] = tt.astype(jnp.bfloat16)
                freq_ref[pl.ds(b0, sb), c0:c1] = ff.astype(jnp.bfloat16)
            return carry

        if n_sub == 1:
            sub_block(0, 0)
        else:
            lax.fori_loop(0, n_sub, sub_block, 0)

        # ---- fc: Linear(2C -> 256) without the concat ------------------------
        # time @ Wt + freq @ Wf, bf16 MXU inputs, f32 accumulation.  The scalar
        # fc_time / fc_freq biases are pre-folded into bfc (exact algebra).
        h = (jnp.dot(time_ref[...], wfc_t_ref[...],
                     preferred_element_type=jnp.float32)
             + jnp.dot(freq_ref[...], wfc_f_ref[...],
                       preferred_element_type=jnp.float32)
             + bfc_ref[...])                                        # (tb, 256) f32

        # ---- fc2: Linear(256 -> 9), padded to 128 output lanes ---------------
        out_ref[...] = (jnp.dot(h.astype(jnp.bfloat16), wfc2_ref[...],
                                preferred_element_type=jnp.float32)
                        + bfc2_ref[...]).astype(out_ref.dtype)      # (tb, 128)

    return kernel


def _default_config():
    """Per-generation batch tile / scoped-VMEM budget."""
    block_b, vmem_limit = 128, 32 * 1024 * 1024        # safe for v7x (64 MiB VMEM)
    try:
        info = pltpu.get_tpu_info()
        vmem = getattr(info, "vmem_capacity_bytes", 0) or 0
        if vmem >= 96 * 1024 * 1024:                   # v5e / v6e: 128 MiB VMEM
            block_b, vmem_limit = 256, 64 * 1024 * 1024
    except Exception:
        pass
    return block_b, vmem_limit


def _choose_tb(B, block_b):
    """Batch tile: multiple of 8, and >= 2 grid steps whenever B > 8 so the
    v7x second TensorCore gets work and DMA/compute overlap exists."""
    if B <= 8:
        return B
    n_steps = max(2, -(-B // block_b))
    tb = -(-B // n_steps)
    return ((tb + 7) // 8) * 8


@functools.partial(jax.jit,
                   static_argnames=("block_b", "vmem_limit", "use_buffered"))
def _forward_impl(x, w_tf, wfc_t, wfc_f, bfc, wfc2, bfc2,
                  *, block_b, vmem_limit, use_buffered):
    B = x.shape[0]

    # (B, C, T, 2) f32 -> (2T, B, C) bf16: channel-last, lane-dense planes.
    # The bf16 cast fuses with the transpose (single XLA copy under jit),
    # halving the transpose write and the kernel's dominant activation read.
    x_perm = jnp.transpose(x.astype(jnp.bfloat16), (3, 2, 0, 1)).reshape(2 * T, B, C)

    tb = _choose_tb(B, block_b)
    grid = (pl.cdiv(B, tb),)

    # Resident (constant index_map) operands: fetched once, single buffer.
    resident = {"pipeline_mode": pl.Buffered(1)} if use_buffered else {}

    out = pl.pallas_call(
        _make_kernel(tb),
        grid=grid,
        in_specs=[
            pl.BlockSpec(memory_space=pltpu.MemorySpace.SMEM),       # 24 tap weights
            pl.BlockSpec((2 * T, tb, C), lambda i: (0, i, 0)),       # activations (streamed)
            pl.BlockSpec((C, H), lambda i: (0, 0), **resident),      # fc Wt (resident, bf16)
            pl.BlockSpec((C, H), lambda i: (0, 0), **resident),      # fc Wf (resident, bf16)
            pl.BlockSpec((1, H), lambda i: (0, 0), **resident),      # fc bias (folded)
            pl.BlockSpec((H, OP), lambda i: (0, 0), **resident),     # fc2 weight (padded, bf16)
            pl.BlockSpec((1, OP), lambda i: (0, 0), **resident),     # fc2 bias (padded)
        ],
        out_specs=pl.BlockSpec((tb, OP), lambda i: (i, 0)),
        out_shape=jax.ShapeDtypeStruct((B, OP), jnp.float32),
        scratch_shapes=[pltpu.VMEM((tb, C), jnp.bfloat16),           # time plane
                        pltpu.VMEM((tb, C), jnp.bfloat16)],          # freq plane
        compiler_params=pltpu.CompilerParams(
            dimension_semantics=("parallel",),
            vmem_limit_bytes=vmem_limit),
    )(w_tf, x_perm, wfc_t, wfc_f, bfc, wfc2, bfc2)

    return out[:, :O]


def classifier_forward(x, prepped, *, block_b=None, vmem_limit=None):
    """x: (B, C, T, 2) float32 — output of prevModel."""
    if block_b is None or vmem_limit is None:
        d_block, d_vmem = _default_config()
        block_b = block_b or d_block
        vmem_limit = vmem_limit or d_vmem
    try:
        return _forward_impl(x, *prepped, block_b=block_b,
                             vmem_limit=vmem_limit, use_buffered=True)
    except Exception:
        # pl.Buffered(1) is only a VMEM-footprint optimization for the resident
        # weights; fall back gracefully if this Mosaic version rejects it.
        return _forward_impl(x, *prepped, block_b=block_b,
                             vmem_limit=vmem_limit, use_buffered=False)


def prepare_params(params):
    """One-time parameter prep — keep out of the per-call hot path."""
    wt, bt, wf, bf, wfc, bfc, wfc2, bfc2 = params
    # 24 tap weights for SMEM: [time taps..., freq taps...].
    w_tf = jnp.concatenate([wt.reshape(-1), wf.reshape(-1)]).astype(jnp.float32)
    wfc_t = wfc[:, :C].T                                  # (C, H) time half
    wfc_f = wfc[:, C:].T                                  # (C, H) freq half
    # Fold the scalar fc_time / fc_freq biases into the fc bias (exact algebra):
    # (time_raw + bt) @ Wt = time_raw @ Wt + bt * colsum(Wt).
    bfc_fold = (bfc + bt[0] * jnp.sum(wfc_t, axis=0)
                    + bf[0] * jnp.sum(wfc_f, axis=0)).reshape(1, H)
    # Pad fc2 to a lane-dense 128-wide output; bf16 weight, f32 bias.
    wfc2_pad = jnp.zeros((H, OP), jnp.float32).at[:, :O].set(wfc2.T)
    bfc2_pad = jnp.zeros((1, OP), jnp.float32).at[0, :O].set(bfc2)
    return (w_tf,
            wfc_t.astype(jnp.bfloat16),
            wfc_f.astype(jnp.bfloat16),
            bfc_fold.astype(jnp.float32),
            wfc2_pad.astype(jnp.bfloat16),
            bfc2_pad.astype(jnp.float32))


def classifier_ref(x, params):
    """Pure-JAX f32 reference mirroring the PyTorch forward exactly."""
    wt, bt, wf, bf, wfc, bfc, wfc2, bfc2 = params
    B = x.shape[0]
    time = (x[:, :, :, 0] @ wt.T + bt).reshape(B, -1)    # (B, C)
    freq = (x[:, :, :, 1] @ wf.T + bf).reshape(B, -1)    # (B, C)
    f = jnp.concatenate([time, freq], axis=-1)           # (B, 2C)
    return (f @ wfc.T + bfc) @ wfc2.T + bfc2              # (B, O)


def linear_init(key, out_features, in_features):
    """Deterministic nn.Linear-style init: U(-1/sqrt(fan_in), 1/sqrt(fan_in))."""
    kw, kb = jax.random.split(key)
    bound = 1.0 / math.sqrt(in_features)
    w = jax.random.uniform(kw, (out_features, in_features), jnp.float32,
                           -bound, bound)
    b = jax.random.uniform(kb, (out_features,), jnp.float32, -bound, bound)
    return w, b


if __name__ == "__main__":
    key = jax.random.PRNGKey(0)
    k_x, k1, k2, k3, k4 = jax.random.split(key, 5)

    wt, bt = linear_init(k1, 1, T)          # fc_time
    wf, bf = linear_init(k2, 1, T)          # fc_freq
    wfc, bfc = linear_init(k3, H, 2 * C)    # fc
    wfc2, bfc2 = linear_init(k4, O, H)      # fc2
    params = (wt, bt, wf, bf, wfc, bfc, wfc2, bfc2)

    prepped = jax.block_until_ready(prepare_params(params))   # one-time prep

    # B=2: required tiny example (single block).  B=67: exercises the >=2-step
    # grid, the fori_loop sub-block path, and a padded trailing batch block.
    for B in (2, 67):
        x = jax.random.normal(jax.random.fold_in(k_x, B), (B, C, T, 2), jnp.float32)
        out = jax.block_until_ready(classifier_forward(x, prepped))
        ref = classifier_ref(x, params)
        assert out.shape == (B, O), out.shape
        # Activations + weights are bf16 in the kernel (f32 accumulation), so
        # compare against the f32 reference with a tolerance covering the
        # bf16 rounding (~1e-3 typical, comfortably < 2e-2).
        err = float(jnp.max(jnp.abs(out - ref)))
        assert jnp.allclose(out, ref, atol=2e-2, rtol=2e-2), (B, err)

    print("KERNEL_OK")
</pallas_src>

<mosaic_0001>
module attributes {stable_mosaic.version = 11 : i64} {
  func.func @kernel(%arg0: i32, %arg1: memref<24xf32, #tpu.memory_space<smem>>, %arg2: memref<24x2x1366xbf16, #tpu.memory_space<vmem>>, %arg3: memref<1366x256xbf16, #tpu.memory_space<vmem>>, %arg4: memref<1366x256xbf16, #tpu.memory_space<vmem>>, %arg5: memref<1x256xf32, #tpu.memory_space<vmem>>, %arg6: memref<256x128xbf16, #tpu.memory_space<vmem>>, %arg7: memref<1x128xf32, #tpu.memory_space<vmem>>, %arg8: memref<2x128xf32, #tpu.memory_space<vmem>>, %arg9: memref<2x1366xbf16, #tpu.memory_space<vmem>>, %arg10: memref<2x1366xbf16, #tpu.memory_space<vmem>>) attributes {dimension_semantics = [#tpu.dimension_semantics<parallel>], iteration_bounds = array<i64: 1>, scalar_prefetch = 0 : i64, scratch_operands = 2 : i64, tpu.core_type = #tpu.core_type<tc>, window_params = [{transform_indices = @transform_0, window_bounds = array<i64: 24>}, {transform_indices = @transform_1, window_bounds = array<i64: 24, 2, 1366>}, {pipeline_mode = #tpu.pipeline_mode<synchronous>, transform_indices = @transform_2, window_bounds = array<i64: 1366, 256>}, {pipeline_mode = #tpu.pipeline_mode<synchronous>, transform_indices = @transform_3, window_bounds = array<i64: 1366, 256>}, {pipeline_mode = #tpu.pipeline_mode<synchronous>, transform_indices = @transform_4, window_bounds = array<i64: 1, 256>}, {pipeline_mode = #tpu.pipeline_mode<synchronous>, transform_indices = @transform_5, window_bounds = array<i64: 256, 128>}, {pipeline_mode = #tpu.pipeline_mode<synchronous>, transform_indices = @transform_6, window_bounds = array<i64: 1, 128>}, {transform_indices = @transform_7, window_bounds = array<i64: 2, 128>}]} {
    %c0 = arith.constant 0 : index
    %0 = memref.load %arg1[%c0] : memref<24xf32, #tpu.memory_space<smem>>
    %c1 = arith.constant 1 : index
    %1 = memref.load %arg1[%c1] : memref<24xf32, #tpu.memory_space<smem>>
    %c2 = arith.constant 2 : index
    %2 = memref.load %arg1[%c2] : memref<24xf32, #tpu.memory_space<smem>>
    %c3 = arith.constant 3 : index
    %3 = memref.load %arg1[%c3] : memref<24xf32, #tpu.memory_space<smem>>
    %c4 = arith.constant 4 : index
    %4 = memref.load %arg1[%c4] : memref<24xf32, #tpu.memory_space<smem>>
    %c5 = arith.constant 5 : index
    %5 = memref.load %arg1[%c5] : memref<24xf32, #tpu.memory_space<smem>>
    %c6 = arith.constant 6 : index
    %6 = memref.load %arg1[%c6] : memref<24xf32, #tpu.memory_space<smem>>
    %c7 = arith.constant 7 : index
    %7 = memref.load %arg1[%c7] : memref<24xf32, #tpu.memory_space<smem>>
    %c8 = arith.constant 8 : index
    %8 = memref.load %arg1[%c8] : memref<24xf32, #tpu.memory_space<smem>>
    %c9 = arith.constant 9 : index
    %9 = memref.load %arg1[%c9] : memref<24xf32, #tpu.memory_space<smem>>
    %c10 = arith.constant 10 : index
    %10 = memref.load %arg1[%c10] : memref<24xf32, #tpu.memory_space<smem>>
    %c11 = arith.constant 11 : index
    %11 = memref.load %arg1[%c11] : memref<24xf32, #tpu.memory_space<smem>>
    %c12 = arith.constant 12 : index
    %12 = memref.load %arg1[%c12] : memref<24xf32, #tpu.memory_space<smem>>
    %c13 = arith.constant 13 : index
    %13 = memref.load %arg1[%c13] : memref<24xf32, #tpu.memory_space<smem>>
    %c14 = arith.constant 14 : index
    %14 = memref.load %arg1[%c14] : memref<24xf32, #tpu.memory_space<smem>>
    %c15 = arith.constant 15 : index
    %15 = memref.load %arg1[%c15] : memref<24xf32, #tpu.memory_space<smem>>
    %c16 = arith.constant 16 : index
    %16 = memref.load %arg1[%c16] : memref<24xf32, #tpu.memory_space<smem>>
    %c17 = arith.constant 17 : index
    %17 = memref.load %arg1[%c17] : memref<24xf32, #tpu.memory_space<smem>>
    %c18 = arith.constant 18 : index
    %18 = memref.load %arg1[%c18] : memref<24xf32, #tpu.memory_space<smem>>
    %c19 = arith.constant 19 : index
    %19 = memref.load %arg1[%c19] : memref<24xf32, #tpu.memory_space<smem>>
    %c20 = arith.constant 20 : index
    %20 = memref.load %arg1[%c20] : memref<24xf32, #tpu.memory_space<smem>>
    %c21 = arith.constant 21 : index
    %21 = memref.load %arg1[%c21] : memref<24xf32, #tpu.memory_space<smem>>
    %c22 = arith.constant 22 : index
    %22 = memref.load %arg1[%c22] : memref<24xf32, #tpu.memory_space<smem>>
    %c23 = arith.constant 23 : index
    %23 = memref.load %arg1[%c23] : memref<24xf32, #tpu.memory_space<smem>>
    %c0_0 = arith.constant 0 : index
    %c0_1 = arith.constant 0 : index
    %c0_2 = arith.constant 0 : index
    %24 = vector.load %arg2[%c0_0, %c0_1, %c0_2] : memref<24x2x1366xbf16, #tpu.memory_space<vmem>>, vector<1x2x512xbf16>
    %25 = vector.shape_cast %24 : vector<1x2x512xbf16> to vector<2x512xbf16>
    %26 = arith.extf %25 : vector<2x512xbf16> to vector<2x512xf32>
    %27 = vector.broadcast %0 : f32 to vector<2x512xf32>
    %28 = arith.mulf %26, %27 : vector<2x512xf32>
    %c12_3 = arith.constant 12 : index
    %c0_4 = arith.constant 0 : index
    %c0_5 = arith.constant 0 : index
    %29 = vector.load %arg2[%c12_3, %c0_4, %c0_5] : memref<24x2x1366xbf16, #tpu.memory_space<vmem>>, vector<1x2x512xbf16>
    %30 = vector.shape_cast %29 : vector<1x2x512xbf16> to vector<2x512xbf16>
    %31 = arith.extf %30 : vector<2x512xbf16> to vector<2x512xf32>
    %32 = vector.broadcast %12 : f32 to vector<2x512xf32>
    %33 = arith.mulf %31, %32 : vector<2x512xf32>
    %c1_6 = arith.constant 1 : index
    %c0_7 = arith.constant 0 : index
    %c0_8 = arith.constant 0 : index
    %34 = vector.load %arg2[%c1_6, %c0_7, %c0_8] : memref<24x2x1366xbf16, #tpu.memory_space<vmem>>, vector<1x2x512xbf16>
    %35 = vector.shape_cast %34 : vector<1x2x512xbf16> to vector<2x512xbf16>
    %36 = arith.extf %35 : vector<2x512xbf16> to vector<2x512xf32>
    %37 = vector.broadcast %1 : f32 to vector<2x512xf32>
    %38 = arith.mulf %36, %37 : vector<2x512xf32>
    %39 = arith.addf %28, %38 : vector<2x512xf32>
    %c13_9 = arith.constant 13 : index
    %c0_10 = arith.constant 0 : index
    %c0_11 = arith.constant 0 : index
    %40 = vector.load %arg2[%c13_9, %c0_10, %c0_11] : memref<24x2x1366xbf16, #tpu.memory_space<vmem>>, vector<1x2x512xbf16>
    %41 = vector.shape_cast %40 : vector<1x2x512xbf16> to vector<2x512xbf16>
    %42 = arith.extf %41 : vector<2x512xbf16> to vector<2x512xf32>
    %43 = vector.broadcast %13 : f32 to vector<2x512xf32>
    %44 = arith.mulf %42, %43 : vector<2x512xf32>
    %45 = arith.addf %33, %44 : vector<2x512xf32>
    %c2_12 = arith.constant 2 : index
    %c0_13 = arith.constant 0 : index
    %c0_14 = arith.constant 0 : index
    %46 = vector.load %arg2[%c2_12, %c0_13, %c0_14] : memref<24x2x1366xbf16, #tpu.memory_space<vmem>>, vector<1x2x512xbf16>
    %47 = vector.shape_cast %46 : vector<1x2x512xbf16> to vector<2x512xbf16>
    %48 = arith.extf %47 : vector<2x512xbf16> to vector<2x512xf32>
    %49 = vector.broadcast %2 : f32 to vector<2x512xf32>
    %50 = arith.mulf %48, %49 : vector<2x512xf32>
    %51 = arith.addf %39, %50 : vector<2x512xf32>
    %c14_15 = arith.constant 14 : index
    %c0_16 = arith.constant 0 : index
    %c0_17 = arith.constant 0 : index
    %52 = vector.load %arg2[%c14_15, %c0_16, %c0_17] : memref<24x2x1366xbf16, #tpu.memory_space<vmem>>, vector<1x2x512xbf16>
    %53 = vector.shape_cast %52 : vector<1x2x512xbf16> to vector<2x512xbf16>
    %54 = arith.extf %53 : vector<2x512xbf16> to vector<2x512xf32>
    %55 = vector.broadcast %14 : f32 to vector<2x512xf32>
    %56 = arith.mulf %54, %55 : vector<2x512xf32>
    %57 = arith.addf %45, %56 : vector<2x512xf32>
    %c3_18 = arith.constant 3 : index
    %c0_19 = arith.constant 0 : index
    %c0_20 = arith.constant 0 : index
    %58 = vector.load %arg2[%c3_18, %c0_19, %c0_20] : memref<24x2x1366xbf16, #tpu.memory_space<vmem>>, vector<1x2x512xbf16>
    %59 = vector.shape_cast %58 : vector<1x2x512xbf16> to vector<2x512xbf16>
    %60 = arith.extf %59 : vector<2x512xbf16> to vector<2x512xf32>
    %61 = vector.broadcast %3 : f32 to vector<2x512xf32>
    %62 = arith.mulf %60, %61 : vector<2x512xf32>
    %63 = arith.addf %51, %62 : vector<2x512xf32>
    %c15_21 = arith.constant 15 : index
    %c0_22 = arith.constant 0 : index
    %c0_23 = arith.constant 0 : index
    %64 = vector.load %arg2[%c15_21, %c0_22, %c0_23] : memref<24x2x1366xbf16, #tpu.memory_space<vmem>>, vector<1x2x512xbf16>
    %65 = vector.shape_cast %64 : vector<1x2x512xbf16> to vector<2x512xbf16>
    %66 = arith.extf %65 : vector<2x512xbf16> to vector<2x512xf32>
    %67 = vector.broadcast %15 : f32 to vector<2x512xf32>
    %68 = arith.mulf %66, %67 : vector<2x512xf32>
    %69 = arith.addf %57, %68 : vector<2x512xf32>
    %c4_24 = arith.constant 4 : index
    %c0_25 = arith.constant 0 : index
    %c0_26 = arith.constant 0 : index
    %70 = vector.load %arg2[%c4_24, %c0_25, %c0_26] : memref<24x2x1366xbf16, #tpu.memory_space<vmem>>, vector<1x2x512xbf16>
    %71 = vector.shape_cast %70 : vector<1x2x512xbf16> to vector<2x512xbf16>
    %72 = arith.extf %71 : vector<2x512xbf16> to vector<2x512xf32>
    %73 = vector.broadcast %4 : f32 to vector<2x512xf32>
    %74 = arith.mulf %72, %73 : vector<2x512xf32>
    %75 = arith.addf %63, %74 : vector<2x512xf32>
    %c16_27 = arith.constant 16 : index
    %c0_28 = arith.constant 0 : index
    %c0_29 = arith.constant 0 : index
    %76 = vector.load %arg2[%c16_27, %c0_28, %c0_29] : memref<24x2x1366xbf16, #tpu.memory_space<vmem>>, vector<1x2x512xbf16>
    %77 = vector.shape_cast %76 : vector<1x2x512xbf16> to vector<2x512xbf16>
    %78 = arith.extf %77 : vector<2x512xbf16> to vector<2x512xf32>
    %79 = vector.broadcast %16 : f32 to vector<2x512xf32>
    %80 = arith.mulf %78, %79 : vector<2x512xf32>
    %81 = arith.addf %69, %80 : vector<2x512xf32>
    %c5_30 = arith.constant 5 : index
    %c0_31 = arith.constant 0 : index
    %c0_32 = arith.constant 0 : index
    %82 = vector.load %arg2[%c5_30, %c0_31, %c0_32] : memref<24x2x1366xbf16, #tpu.memory_space<vmem>>, vector<1x2x512xbf16>
    %83 = vector.shape_cast %82 : vector<1x2x512xbf16> to vector<2x512xbf16>
    %84 = arith.extf %83 : vector<2x512xbf16> to vector<2x512xf32>
    %85 = vector.broadcast %5 : f32 to vector<2x512xf32>
    %86 = arith.mulf %84, %85 : vector<2x512xf32>
    %87 = arith.addf %75, %86 : vector<2x512xf32>
    %c17_33 = arith.constant 17 : index
    %c0_34 = arith.constant 0 : index
    %c0_35 = arith.constant 0 : index
    %88 = vector.load %arg2[%c17_33, %c0_34, %c0_35] : memref<24x2x1366xbf16, #tpu.memory_space<vmem>>, vector<1x2x512xbf16>
    %89 = vector.shape_cast %88 : vector<1x2x512xbf16> to vector<2x512xbf16>
    %90 = arith.extf %89 : vector<2x512xbf16> to vector<2x512xf32>
    %91 = vector.broadcast %17 : f32 to vector<2x512xf32>
    %92 = arith.mulf %90, %91 : vector<2x512xf32>
    %93 = arith.addf %81, %92 : vector<2x512xf32>
    %c6_36 = arith.constant 6 : index
    %c0_37 = arith.constant 0 : index
    %c0_38 = arith.constant 0 : index
    %94 = vector.load %arg2[%c6_36, %c0_37, %c0_38] : memref<24x2x1366xbf16, #tpu.memory_space<vmem>>, vector<1x2x512xbf16>
    %95 = vector.shape_cast %94 : vector<1x2x512xbf16> to vector<2x512xbf16>
    %96 = arith.extf %95 : vector<2x512xbf16> to vector<2x512xf32>
    %97 = vector.broadcast %6 : f32 to vector<2x512xf32>
    %98 = arith.mulf %96, %97 : vector<2x512xf32>
    %99 = arith.addf %87, %98 : vector<2x512xf32>
    %c18_39 = arith.constant 18 : index
    %c0_40 = arith.constant 0 : index
    %c0_41 = arith.constant 0 : index
    %100 = vector.load %arg2[%c18_39, %c0_40, %c0_41] : memref<24x2x1366xbf16, #tpu.memory_space<vmem>>, vector<1x2x512xbf16>
    %101 = vector.shape_cast %100 : vector<1x2x512xbf16> to vector<2x512xbf16>
    %102 = arith.extf %101 : vector<2x512xbf16> to vector<2x512xf32>
    %103 = vector.broadcast %18 : f32 to vector<2x512xf32>
    %104 = arith.mulf %102, %103 : vector<2x512xf32>
    %105 = arith.addf %93, %104 : vector<2x512xf32>
    %c7_42 = arith.constant 7 : index
    %c0_43 = arith.constant 0 : index
    %c0_44 = arith.constant 0 : index
    %106 = vector.load %arg2[%c7_42, %c0_43, %c0_44] : memref<24x2x1366xbf16, #tpu.memory_space<vmem>>, vector<1x2x512xbf16>
    %107 = vector.shape_cast %106 : vector<1x2x512xbf16> to vector<2x512xbf16>
    %108 = arith.extf %107 : vector<2x512xbf16> to vector<2x512xf32>
    %109 = vector.broadcast %7 : f32 to vector<2x512xf32>
    %110 = arith.mulf %108, %109 : vector<2x512xf32>
    %111 = arith.addf %99, %110 : vector<2x512xf32>
    %c19_45 = arith.constant 19 : index
    %c0_46 = arith.constant 0 : index
    %c0_47 = arith.constant 0 : index
    %112 = vector.load %arg2[%c19_45, %c0_46, %c0_47] : memref<24x2x1366xbf16, #tpu.memory_space<vmem>>, vector<1x2x512xbf16>
    %113 = vector.shape_cast %112 : vector<1x2x512xbf16> to vector<2x512xbf16>
    %114 = arith.extf %113 : vector<2x512xbf16> to vector<2x512xf32>
    %115 = vector.broadcast %19 : f32 to vector<2x512xf32>
    %116 = arith.mulf %114, %115 : vector<2x512xf32>
    %117 = arith.addf %105, %116 : vector<2x512xf32>
    %c8_48 = arith.constant 8 : index
    %c0_49 = arith.constant 0 : index
    %c0_50 = arith.constant 0 : index
    %118 = vector.load %arg2[%c8_48, %c0_49, %c0_50] : memref<24x2x1366xbf16, #tpu.memory_space<vmem>>, vector<1x2x512xbf16>
    %119 = vector.shape_cast %118 : vector<1x2x512xbf16> to vector<2x512xbf16>
    %120 = arith.extf %119 : vector<2x512xbf16> to vector<2x512xf32>
    %121 = vector.broadcast %8 : f32 to vector<2x512xf32>
    %122 = arith.mulf %120, %121 : vector<2x512xf32>
    %123 = arith.addf %111, %122 : vector<2x512xf32>
    %c20_51 = arith.constant 20 : index
    %c0_52 = arith.constant 0 : index
    %c0_53 = arith.constant 0 : index
    %124 = vector.load %arg2[%c20_51, %c0_52, %c0_53] : memref<24x2x1366xbf16, #tpu.memory_space<vmem>>, vector<1x2x512xbf16>
    %125 = vector.shape_cast %124 : vector<1x2x512xbf16> to vector<2x512xbf16>
    %126 = arith.extf %125 : vector<2x512xbf16> to vector<2x512xf32>
    %127 = vector.broadcast %20 : f32 to vector<2x512xf32>
    %128 = arith.mulf %126, %127 : vector<2x512xf32>
    %129 = arith.addf %117, %128 : vector<2x512xf32>
    %c9_54 = arith.constant 9 : index
    %c0_55 = arith.constant 0 : index
    %c0_56 = arith.constant 0 : index
    %130 = vector.load %arg2[%c9_54, %c0_55, %c0_56] : memref<24x2x1366xbf16, #tpu.memory_space<vmem>>, vector<1x2x512xbf16>
    %131 = vector.shape_cast %130 : vector<1x2x512xbf16> to vector<2x512xbf16>
    %132 = arith.extf %131 : vector<2x512xbf16> to vector<2x512xf32>
    %133 = vector.broadcast %9 : f32 to vector<2x512xf32>
    %134 = arith.mulf %132, %133 : vector<2x512xf32>
    %135 = arith.addf %123, %134 : vector<2x512xf32>
    %c21_57 = arith.constant 21 : index
    %c0_58 = arith.constant 0 : index
    %c0_59 = arith.constant 0 : index
    %136 = vector.load %arg2[%c21_57, %c0_58, %c0_59] : memref<24x2x1366xbf16, #tpu.memory_space<vmem>>, vector<1x2x512xbf16>
    %137 = vector.shape_cast %136 : vector<1x2x512xbf16> to vector<2x512xbf16>
    %138 = arith.extf %137 : vector<2x512xbf16> to vector<2x512xf32>
    %139 = vector.broadcast %21 : f32 to vector<2x512xf32>
    %140 = arith.mulf %138, %139 : vector<2x512xf32>
    %141 = arith.addf %129, %140 : vector<2x512xf32>
    %c10_60 = arith.constant 10 : index
    %c0_61 = arith.constant 0 : index
    %c0_62 = arith.constant 0 : index
    %142 = vector.load %arg2[%c10_60, %c0_61, %c0_62] : memref<24x2x1366xbf16, #tpu.memory_space<vmem>>, vector<1x2x512xbf16>
    %143 = vector.shape_cast %142 : vector<1x2x512xbf16> to vector<2x512xbf16>
    %144 = arith.extf %143 : vector<2x512xbf16> to vector<2x512xf32>
    %145 = vector.broadcast %10 : f32 to vector<2x512xf32>
    %146 = arith.mulf %144, %145 : vector<2x512xf32>
    %147 = arith.addf %135, %146 : vector<2x512xf32>
    %c22_63 = arith.constant 22 : index
    %c0_64 = arith.constant 0 : index
    %c0_65 = arith.constant 0 : index
    %148 = vector.load %arg2[%c22_63, %c0_64, %c0_65] : memref<24x2x1366xbf16, #tpu.memory_space<vmem>>, vector<1x2x512xbf16>
    %149 = vector.shape_cast %148 : vector<1x2x512xbf16> to vector<2x512xbf16>
    %150 = arith.extf %149 : vector<2x512xbf16> to vector<2x512xf32>
    %151 = vector.broadcast %22 : f32 to vector<2x512xf32>
    %152 = arith.mulf %150, %151 : vector<2x512xf32>
    %153 = arith.addf %141, %152 : vector<2x512xf32>
    %c11_66 = arith.constant 11 : index
    %c0_67 = arith.constant 0 : index
    %c0_68 = arith.constant 0 : index
    %154 = vector.load %arg2[%c11_66, %c0_67, %c0_68] : memref<24x2x1366xbf16, #tpu.memory_space<vmem>>, vector<1x2x512xbf16>
    %155 = vector.shape_cast %154 : vector<1x2x512xbf16> to vector<2x512xbf16>
    %156 = arith.extf %155 : vector<2x512xbf16> to vector<2x512xf32>
    %157 = vector.broadcast %11 : f32 to vector<2x512xf32>
    %158 = arith.mulf %156, %157 : vector<2x512xf32>
    %159 = arith.addf %147, %158 : vector<2x512xf32>
    %c23_69 = arith.constant 23 : index
    %c0_70 = arith.constant 0 : index
    %c0_71 = arith.constant 0 : index
    %160 = vector.load %arg2[%c23_69, %c0_70, %c0_71] : memref<24x2x1366xbf16, #tpu.memory_space<vmem>>, vector<1x2x512xbf16>
    %161 = vector.shape_cast %160 : vector<1x2x512xbf16> to vector<2x512xbf16>
    %162 = arith.extf %161 : vector<2x512xbf16> to vector<2x512xf32>
    %163 = vector.broadcast %23 : f32 to vector<2x512xf32>
    %164 = arith.mulf %162, %163 : vector<2x512xf32>
    %165 = arith.addf %153, %164 : vector<2x512xf32>
    %166 = arith.truncf %159 : vector<2x512xf32> to vector<2x512xbf16>
    %c0_72 = arith.constant 0 : index
    %c0_73 = arith.constant 0 : index
    %167 = vector.load %arg9[%c0_72, %c0_73] : memref<2x1366xbf16, #tpu.memory_space<vmem>>, vector<2x512xbf16>
    tpu.vector_store %arg9[%c0_72, %c0_73], %166 {strides = array<i32>} : memref<2x1366xbf16, #tpu.memory_space<vmem>>, vector<2x512xbf16>,
    %168 = arith.truncf %165 : vector<2x512xf32> to vector<2x512xbf16>
    %c0_74 = arith.constant 0 : index
    %c0_75 = arith.constant 0 : index
    %169 = vector.load %arg10[%c0_74, %c0_75] : memref<2x1366xbf16, #tpu.memory_space<vmem>>, vector<2x512xbf16>
    tpu.vector_store %arg10[%c0_74, %c0_75], %168 {strides = array<i32>} : memref<2x1366xbf16, #tpu.memory_space<vmem>>, vector<2x512xbf16>,
    %c0_76 = arith.constant 0 : index
    %c0_77 = arith.constant 0 : index
    %c512 = arith.constant 512 : index
    %170 = vector.load %arg2[%c0_76, %c0_77, %c512] : memref<24x2x1366xbf16, #tpu.memory_space<vmem>>, vector<1x2x512xbf16>
    %171 = vector.shape_cast %170 : vector<1x2x512xbf16> to vector<2x512xbf16>
    %172 = arith.extf %171 : vector<2x512xbf16> to vector<2x512xf32>
    %173 = vector.broadcast %0 : f32 to vector<2x512xf32>
    %174 = arith.mulf %172, %173 : vector<2x512xf32>
    %c12_78 = arith.constant 12 : index
    %c0_79 = arith.constant 0 : index
    %c512_80 = arith.constant 512 : index
    %175 = vector.load %arg2[%c12_78, %c0_79, %c512_80] : memref<24x2x1366xbf16, #tpu.memory_space<vmem>>, vector<1x2x512xbf16>
    %176 = vector.shape_cast %175 : vector<1x2x512xbf16> to vector<2x512xbf16>
    %177 = arith.extf %176 : vector<2x512xbf16> to vector<2x512xf32>
    %178 = vector.broadcast %12 : f32 to vector<2x512xf32>
    %179 = arith.mulf %177, %178 : vector<2x512xf32>
    %c1_81 = arith.constant 1 : index
    %c0_82 = arith.constant 0 : index
    %c512_83 = arith.constant 512 : index
    %180 = vector.load %arg2[%c1_81, %c0_82, %c512_83] : memref<24x2x1366xbf16, #tpu.memory_space<vmem>>, vector<1x2x512xbf16>
    %181 = vector.shape_cast %180 : vector<1x2x512xbf16> to vector<2x512xbf16>
    %182 = arith.extf %181 : vector<2x512xbf16> to vector<2x512xf32>
    %183 = vector.broadcast %1 : f32 to vector<2x512xf32>
    %184 = arith.mulf %182, %183 : vector<2x512xf32>
    %185 = arith.addf %174, %184 : vector<2x512xf32>
    %c13_84 = arith.constant 13 : index
    %c0_85 = arith.constant 0 : index
    %c512_86 = arith.constant 512 : index
    %186 = vector.load %arg2[%c13_84, %c0_85, %c512_86] : memref<24x2x1366xbf16, #tpu.memory_space<vmem>>, vector<1x2x512xbf16>
    %187 = vector.shape_cast %186 : vector<1x2x512xbf16> to vector<2x512xbf16>
    %188 = arith.extf %187 : vector<2x512xbf16> to vector<2x512xf32>
    %189 = vector.broadcast %13 : f32 to vector<2x512xf32>
    %190 = arith.mulf %188, %189 : vector<2x512xf32>
    %191 = arith.addf %179, %190 : vector<2x512xf32>
    %c2_87 = arith.constant 2 : index
    %c0_88 = arith.constant 0 : index
    %c512_89 = arith.constant 512 : index
    %192 = vector.load %arg2[%c2_87, %c0_88, %c512_89] : memref<24x2x1366xbf16, #tpu.memory_space<vmem>>, vector<1x2x512xbf16>
    %193 = vector.shape_cast %192 : vector<1x2x512xbf16> to vector<2x512xbf16>
    %194 = arith.extf %193 : vector<2x512xbf16> to vector<2x512xf32>
    %195 = vector.broadcast %2 : f32 to vector<2x512xf32>
    %196 = arith.mulf %194, %195 : vector<2x512xf32>
    %197 = arith.addf %185, %196 : vector<2x512xf32>
    %c14_90 = arith.constant 14 : index
    %c0_91 = arith.constant 0 : index
    %c512_92 = arith.constant 512 : index
    %198 = vector.load %arg2[%c14_90, %c0_91, %c512_92] : memref<24x2x1366xbf16, #tpu.memory_space<vmem>>, vector<1x2x512xbf16>
    %199 = vector.shape_cast %198 : vector<1x2x512xbf16> to vector<2x512xbf16>
    %200 = arith.extf %199 : vector<2x512xbf16> to vector<2x512xf32>
    %201 = vector.broadcast %14 : f32 to vector<2x512xf32>
    %202 = arith.mulf %200, %201 : vector<2x512xf32>
    %203 = arith.addf %191, %202 : vector<2x512xf32>
    %c3_93 = arith.constant 3 : index
    %c0_94 = arith.constant 0 : index
    %c512_95 = arith.constant 512 : index
    %204 = vector.load %arg2[%c3_93, %c0_94, %c512_95] : memref<24x2x1366xbf16, #tpu.memory_space<vmem>>, vector<1x2x512xbf16>
    %205 = vector.shape_cast %204 : vector<1x2x512xbf16> to vector<2x512xbf16>
    %206 = arith.extf %205 : vector<2x512xbf16> to vector<2x512xf32>
    %207 = vector.broadcast %3 : f32 to vector<2x512xf32>
    %208 = arith.mulf %206, %207 : vector<2x512xf32>
    %209 = arith.addf %197, %208 : vector<2x512xf32>
    %c15_96 = arith.constant 15 : index
    %c0_97 = arith.constant 0 : index
    %c512_98 = arith.constant 512 : index
    %210 = vector.load %arg2[%c15_96, %c0_97, %c512_98] : memref<24x2x1366xbf16, #tpu.memory_space<vmem>>, vector<1x2x512xbf16>
    %211 = vector.shape_cast %210 : vector<1x2x512xbf16> to vector<2x512xbf16>
    %212 = arith.extf %211 : vector<2x512xbf16> to vector<2x512xf32>
    %213 = vector.broadcast %15 : f32 to vector<2x512xf32>
    %214 = arith.mulf %212, %213 : vector<2x512xf32>
    %215 = arith.addf %203, %214 : vector<2x512xf32>
    %c4_99 = arith.constant 4 : index
    %c0_100 = arith.constant 0 : index
    %c512_101 = arith.constant 512 : index
    %216 = vector.load %arg2[%c4_99, %c0_100, %c512_101] : memref<24x2x1366xbf16, #tpu.memory_space<vmem>>, vector<1x2x512xbf16>
    %217 = vector.shape_cast %216 : vector<1x2x512xbf16> to vector<2x512xbf16>
    %218 = arith.extf %217 : vector<2x512xbf16> to vector<2x512xf32>
    %219 = vector.broadcast %4 : f32 to vector<2x512xf32>
    %220 = arith.mulf %218, %219 : vector<2x512xf32>
    %221 = arith.addf %209, %220 : vector<2x512xf32>
    %c16_102 = arith.constant 16 : index
    %c0_103 = arith.constant 0 : index
    %c512_104 = arith.constant 512 : index
    %222 = vector.load %arg2[%c16_102, %c0_103, %c512_104] : memref<24x2x1366xbf16, #tpu.memory_space<vmem>>, vector<1x2x512xbf16>
    %223 = vector.shape_cast %222 : vector<1x2x512xbf16> to vector<2x512xbf16>
    %224 = arith.extf %223 : vector<2x512xbf16> to vector<2x512xf32>
    %225 = vector.broadcast %16 : f32 to vector<2x512xf32>
    %226 = arith.mulf %224, %225 : vector<2x512xf32>
    %227 = arith.addf %215, %226 : vector<2x512xf32>
    %c5_105 = arith.constant 5 : index
    %c0_106 = arith.constant 0 : index
    %c512_107 = arith.constant 512 : index
    %228 = vector.load %arg2[%c5_105, %c0_106, %c512_107] : memref<24x2x1366xbf16, #tpu.memory_space<vmem>>, vector<1x2x512xbf16>
    %229 = vector.shape_cast %228 : vector<1x2x512xbf16> to vector<2x512xbf16>
    %230 = arith.extf %229 : vector<2x512xbf16> to vector<2x512xf32>
    %231 = vector.broadcast %5 : f32 to vector<2x512xf32>
    %232 = arith.mulf %230, %231 : vector<2x512xf32>
    %233 = arith.addf %221, %232 : vector<2x512xf32>
    %c17_108 = arith.constant 17 : index
    %c0_109 = arith.constant 0 : index
    %c512_110 = arith.constant 512 : index
    %234 = vector.load %arg2[%c17_108, %c0_109, %c512_110] : memref<24x2x1366xbf16, #tpu.memory_space<vmem>>, vector<1x2x512xbf16>
    %235 = vector.shape_cast %234 : vector<1x2x512xbf16> to vector<2x512xbf16>
    %236 = arith.extf %235 : vector<2x512xbf16> to vector<2x512xf32>
    %237 = vector.broadcast %17 : f32 to vector<2x512xf32>
    %238 = arith.mulf %236, %237 : vector<2x512xf32>
    %239 = arith.addf %227, %238 : vector<2x512xf32>
    %c6_111 = arith.constant 6 : index
    %c0_112 = arith.constant 0 : index
    %c512_113 = arith.constant 512 : index
    %240 = vector.load %arg2[%c6_111, %c0_112, %c512_113] : memref<24x2x1366xbf16, #tpu.memory_space<vmem>>, vector<1x2x512xbf16>
    %241 = vector.shape_cast %240 : vector<1x2x512xbf16> to vector<2x512xbf16>
    %242 = arith.extf %241 : vector<2x512xbf16> to vector<2x512xf32>
    %243 = vector.broadcast %6 : f32 to vector<2x512xf32>
    %244 = arith.mulf %242, %243 : vector<2x512xf32>
    %245 = arith.addf %233, %244 : vector<2x512xf32>
    %c18_114 = arith.constant 18 : index
    %c0_115 = arith.constant 0 : index
    %c512_116 = arith.constant 512 : index
    %246 = vector.load %arg2[%c18_114, %c0_115, %c512_116] : memref<24x2x1366xbf16, #tpu.memory_space<vmem>>, vector<1x2x512xbf16>
    %247 = vector.shape_cast %246 : vector<1x2x512xbf16> to vector<2x512xbf16>
    %248 = arith.extf %247 : vector<2x512xbf16> to vector<2x512xf32>
    %249 = vector.broadcast %18 : f32 to vector<2x512xf32>
    %250 = arith.mulf %248, %249 : vector<2x512xf32>
    %251 = arith.addf %239, %250 : vector<2x512xf32>
    %c7_117 = arith.constant 7 : index
    %c0_118 = arith.constant 0 : index
    %c512_119 = arith.constant 512 : index
    %252 = vector.load %arg2[%c7_117, %c0_118, %c512_119] : memref<24x2x1366xbf16, #tpu.memory_space<vmem>>, vector<1x2x512xbf16>
    %253 = vector.shape_cast %252 : vector<1x2x512xbf16> to vector<2x512xbf16>
    %254 = arith.extf %253 : vector<2x512xbf16> to vector<2x512xf32>
    %255 = vector.broadcast %7 : f32 to vector<2x512xf32>
    %256 = arith.mulf %254, %255 : vector<2x512xf32>
    %257 = arith.addf %245, %256 : vector<2x512xf32>
    %c19_120 = arith.constant 19 : index
    %c0_121 = arith.constant 0 : index
    %c512_122 = arith.constant 512 : index
    %258 = vector.load %arg2[%c19_120, %c0_121, %c512_122] : memref<24x2x1366xbf16, #tpu.memory_space<vmem>>, vector<1x2x512xbf16>
    %259 = vector.shape_cast %258 : vector<1x2x512xbf16> to vector<2x512xbf16>
    %260 = arith.extf %259 : vector<2x512xbf16> to vector<2x512xf32>
    %261 = vector.broadcast %19 : f32 to vector<2x512xf32>
    %262 = arith.mulf %260, %261 : vector<2x512xf32>
    %263 = arith.addf %251, %262 : vector<2x512xf32>
    %c8_123 = arith.constant 8 : index
    %c0_124 = arith.constant 0 : index
    %c512_125 = arith.constant 512 : index
    %264 = vector.load %arg2[%c8_123, %c0_124, %c512_125] : memref<24x2x1366xbf16, #tpu.memory_space<vmem>>, vector<1x2x512xbf16>
    %265 = vector.shape_cast %264 : vector<1x2x512xbf16> to vector<2x512xbf16>
    %266 = arith.extf %265 : vector<2x512xbf16> to vector<2x512xf32>
    %267 = vector.broadcast %8 : f32 to vector<2x512xf32>
    %268 = arith.mulf %266, %267 : vector<2x512xf32>
    %269 = arith.addf %257, %268 : vector<2x512xf32>
    %c20_126 = arith.constant 20 : index
    %c0_127 = arith.constant 0 : index
    %c512_128 = arith.constant 512 : index
    %270 = vector.load %arg2[%c20_126, %c0_127, %c512_128] : memref<24x2x1366xbf16, #tpu.memory_space<vmem>>, vector<1x2x512xbf16>
    %271 = vector.shape_cast %270 : vector<1x2x512xbf16> to vector<2x512xbf16>
    %272 = arith.extf %271 : vector<2x512xbf16> to vector<2x512xf32>
    %273 = vector.broadcast %20 : f32 to vector<2x512xf32>
    %274 = arith.mulf %272, %273 : vector<2x512xf32>
    %275 = arith.addf %263, %274 : vector<2x512xf32>
    %c9_129 = arith.constant 9 : index
    %c0_130 = arith.constant 0 : index
    %c512_131 = arith.constant 512 : index
    %276 = vector.load %arg2[%c9_129, %c0_130, %c512_131] : memref<24x2x1366xbf16, #tpu.memory_space<vmem>>, vector<1x2x512xbf16>
    %277 = vector.shape_cast %276 : vector<1x2x512xbf16> to vector<2x512xbf16>
    %278 = arith.extf %277 : vector<2x512xbf16> to vector<2x512xf32>
    %279 = vector.broadcast %9 : f32 to vector<2x512xf32>
    %280 = arith.mulf %278, %279 : vector<2x512xf32>
    %281 = arith.addf %269, %280 : vector<2x512xf32>
    %c21_132 = arith.constant 21 : index
    %c0_133 = arith.constant 0 : index
    %c512_134 = arith.constant 512 : index
    %282 = vector.load %arg2[%c21_132, %c0_133, %c512_134] : memref<24x2x1366xbf16, #tpu.memory_space<vmem>>, vector<1x2x512xbf16>
    %283 = vector.shape_cast %282 : vector<1x2x512xbf16> to vector<2x512xbf16>
    %284 = arith.extf %283 : vector<2x512xbf16> to vector<2x512xf32>
    %285 = vector.broadcast %21 : f32 to vector<2x512xf32>
    %286 = arith.mulf %284, %285 : vector<2x512xf32>
    %287 = arith.addf %275, %286 : vector<2x512xf32>
    %c10_135 = arith.constant 10 : index
    %c0_136 = arith.constant 0 : index
    %c512_137 = arith.constant 512 : index
    %288 = vector.load %arg2[%c10_135, %c0_136, %c512_137] : memref<24x2x1366xbf16, #tpu.memory_space<vmem>>, vector<1x2x512xbf16>
    %289 = vector.shape_cast %288 : vector<1x2x512xbf16> to vector<2x512xbf16>
    %290 = arith.extf %289 : vector<2x512xbf16> to vector<2x512xf32>
    %291 = vector.broadcast %10 : f32 to vector<2x512xf32>
    %292 = arith.mulf %290, %291 : vector<2x512xf32>
    %293 = arith.addf %281, %292 : vector<2x512xf32>
    %c22_138 = arith.constant 22 : index
    %c0_139 = arith.constant 0 : index
    %c512_140 = arith.constant 512 : index
    %294 = vector.load %arg2[%c22_138, %c0_139, %c512_140] : memref<24x2x1366xbf16, #tpu.memory_space<vmem>>, vector<1x2x512xbf16>
    %295 = vector.shape_cast %294 : vector<1x2x512xbf16> to vector<2x512xbf16>
    %296 = arith.extf %295 : vector<2x512xbf16> to vector<2x512xf32>
    %297 = vector.broadcast %22 : f32 to vector<2x512xf32>
    %298 = arith.mulf %296, %297 : vector<2x512xf32>
    %299 = arith.addf %287, %298 : vector<2x512xf32>
    %c11_141 = arith.constant 11 : index
    %c0_142 = arith.constant 0 : index
    %c512_143 = arith.constant 512 : index
    %300 = vector.load %arg2[%c11_141, %c0_142, %c512_143] : memref<24x2x1366xbf16, #tpu.memory_space<vmem>>, vector<1x2x512xbf16>
    %301 = vector.shape_cast %300 : vector<1x2x512xbf16> to vector<2x512xbf16>
    %302 = arith.extf %301 : vector<2x512xbf16> to vector<2x512xf32>
    %303 = vector.broadcast %11 : f32 to vector<2x512xf32>
    %304 = arith.mulf %302, %303 : vector<2x512xf32>
    %305 = arith.addf %293, %304 : vector<2x512xf32>
    %c23_144 = arith.constant 23 : index
    %c0_145 = arith.constant 0 : index
    %c512_146 = arith.constant 512 : index
    %306 = vector.load %arg2[%c23_144, %c0_145, %c512_146] : memref<24x2x1366xbf16, #tpu.memory_space<vmem>>, vector<1x2x512xbf16>
    %307 = vector.shape_cast %306 : vector<1x2x512xbf16> to vector<2x512xbf16>
    %308 = arith.extf %307 : vector<2x512xbf16> to vector<2x512xf32>
    %309 = vector.broadcast %23 : f32 to vector<2x512xf32>
    %310 = arith.mulf %308, %309 : vector<2x512xf32>
    %311 = arith.addf %299, %310 : vector<2x512xf32>
    %312 = arith.truncf %305 : vector<2x512xf32> to vector<2x512xbf16>
    %c0_147 = arith.constant 0 : index
    %c512_148 = arith.constant 512 : index
    %313 = vector.load %arg9[%c0_147, %c512_148] : memref<2x1366xbf16, #tpu.memory_space<vmem>>, vector<2x512xbf16>
    tpu.vector_store %arg9[%c0_147, %c512_148], %312 {strides = array<i32>} : memref<2x1366xbf16, #tpu.memory_space<vmem>>, vector<2x512xbf16>,
    %314 = arith.truncf %311 : vector<2x512xf32> to vector<2x512xbf16>
    %c0_149 = arith.constant 0 : index
    %c512_150 = arith.constant 512 : index
    %315 = vector.load %arg10[%c0_149, %c512_150] : memref<2x1366xbf16, #tpu.memory_space<vmem>>, vector<2x512xbf16>
    tpu.vector_store %arg10[%c0_149, %c512_150], %314 {strides = array<i32>} : memref<2x1366xbf16, #tpu.memory_space<vmem>>, vector<2x512xbf16>,
    %c0_151 = arith.constant 0 : index
    %c0_152 = arith.constant 0 : index
    %c1024 = arith.constant 1024 : index
    %316 = vector.load %arg2[%c0_151, %c0_152, %c1024] : memref<24x2x1366xbf16, #tpu.memory_space<vmem>>, vector<1x2x342xbf16>
    %317 = vector.shape_cast %316 : vector<1x2x342xbf16> to vector<2x342xbf16>
    %318 = arith.extf %317 : vector<2x342xbf16> to vector<2x342xf32>
    %319 = vector.broadcast %0 : f32 to vector<2x342xf32>
    %320 = arith.mulf %318, %319 : vector<2x342xf32>
    %c12_153 = arith.constant 12 : index
    %c0_154 = arith.constant 0 : index
    %c1024_155 = arith.constant 1024 : index
    %321 = vector.load %arg2[%c12_153, %c0_154, %c1024_155] : memref<24x2x1366xbf16, #tpu.memory_space<vmem>>, vector<1x2x342xbf16>
    %322 = vector.shape_cast %321 : vector<1x2x342xbf16> to vector<2x342xbf16>
    %323 = arith.extf %322 : vector<2x342xbf16> to vector<2x342xf32>
    %324 = vector.broadcast %12 : f32 to vector<2x342xf32>
    %325 = arith.mulf %323, %324 : vector<2x342xf32>
    %c1_156 = arith.constant 1 : index
    %c0_157 = arith.constant 0 : index
    %c1024_158 = arith.constant 1024 : index
    %326 = vector.load %arg2[%c1_156, %c0_157, %c1024_158] : memref<24x2x1366xbf16, #tpu.memory_space<vmem>>, vector<1x2x342xbf16>
    %327 = vector.shape_cast %326 : vector<1x2x342xbf16> to vector<2x342xbf16>
    %328 = arith.extf %327 : vector<2x342xbf16> to vector<2x342xf32>
    %329 = vector.broadcast %1 : f32 to vector<2x342xf32>
    %330 = arith.mulf %328, %329 : vector<2x342xf32>
    %331 = arith.addf %320, %330 : vector<2x342xf32>
    %c13_159 = arith.constant 13 : index
    %c0_160 = arith.constant 0 : index
    %c1024_161 = arith.constant 1024 : index
    %332 = vector.load %arg2[%c13_159, %c0_160, %c1024_161] : memref<24x2x1366xbf16, #tpu.memory_space<vmem>>, vector<1x2x342xbf16>
    %333 = vector.shape_cast %332 : vector<1x2x342xbf16> to vector<2x342xbf16>
    %334 = arith.extf %333 : vector<2x342xbf16> to vector<2x342xf32>
    %335 = vector.broadcast %13 : f32 to vector<2x342xf32>
    %336 = arith.mulf %334, %335 : vector<2x342xf32>
    %337 = arith.addf %325, %336 : vector<2x342xf32>
    %c2_162 = arith.constant 2 : index
    %c0_163 = arith.constant 0 : index
    %c1024_164 = arith.constant 1024 : index
    %338 = vector.load %arg2[%c2_162, %c0_163, %c1024_164] : memref<24x2x1366xbf16, #tpu.memory_space<vmem>>, vector<1x2x342xbf16>
    %339 = vector.shape_cast %338 : vector<1x2x342xbf16> to vector<2x342xbf16>
    %340 = arith.extf %339 : vector<2x342xbf16> to vector<2x342xf32>
    %341 = vector.broadcast %2 : f32 to vector<2x342xf32>
    %342 = arith.mulf %340, %341 : vector<2x342xf32>
    %343 = arith.addf %331, %342 : vector<2x342xf32>
    %c14_165 = arith.constant 14 : index
    %c0_166 = arith.constant 0 : index
    %c1024_167 = arith.constant 1024 : index
    %344 = vector.load %arg2[%c14_165, %c0_166, %c1024_167] : memref<24x2x1366xbf16, #tpu.memory_space<vmem>>, vector<1x2x342xbf16>
    %345 = vector.shape_cast %344 : vector<1x2x342xbf16> to vector<2x342xbf16>
    %346 = arith.extf %345 : vector<2x342xbf16> to vector<2x342xf32>
    %347 = vector.broadcast %14 : f32 to vector<2x342xf32>
    %348 = arith.mulf %346, %347 : vector<2x342xf32>
    %349 = arith.addf %337, %348 : vector<2x342xf32>
    %c3_168 = arith.constant 3 : index
    %c0_169 = arith.constant 0 : index
    %c1024_170 = arith.constant 1024 : index
    %350 = vector.load %arg2[%c3_168, %c0_169, %c1024_170] : memref<24x2x1366xbf16, #tpu.memory_space<vmem>>, vector<1x2x342xbf16>
    %351 = vector.shape_cast %350 : vector<1x2x342xbf16> to vector<2x342xbf16>
    %352 = arith.extf %351 : vector<2x342xbf16> to vector<2x342xf32>
    %353 = vector.broadcast %3 : f32 to vector<2x342xf32>
    %354 = arith.mulf %352, %353 : vector<2x342xf32>
    %355 = arith.addf %343, %354 : vector<2x342xf32>
    %c15_171 = arith.constant 15 : index
    %c0_172 = arith.constant 0 : index
    %c1024_173 = arith.constant 1024 : index
    %356 = vector.load %arg2[%c15_171, %c0_172, %c1024_173] : memref<24x2x1366xbf16, #tpu.memory_space<vmem>>, vector<1x2x342xbf16>
    %357 = vector.shape_cast %356 : vector<1x2x342xbf16> to vector<2x342xbf16>
    %358 = arith.extf %357 : vector<2x342xbf16> to vector<2x342xf32>
    %359 = vector.broadcast %15 : f32 to vector<2x342xf32>
    %360 = arith.mulf %358, %359 : vector<2x342xf32>
    %361 = arith.addf %349, %360 : vector<2x342xf32>
    %c4_174 = arith.constant 4 : index
    %c0_175 = arith.constant 0 : index
    %c1024_176 = arith.constant 1024 : index
    %362 = vector.load %arg2[%c4_174, %c0_175, %c1024_176] : memref<24x2x1366xbf16, #tpu.memory_space<vmem>>, vector<1x2x342xbf16>
    %363 = vector.shape_cast %362 : vector<1x2x342xbf16> to vector<2x342xbf16>
    %364 = arith.extf %363 : vector<2x342xbf16> to vector<2x342xf32>
    %365 = vector.broadcast %4 : f32 to vector<2x342xf32>
    %366 = arith.mulf %364, %365 : vector<2x342xf32>
    %367 = arith.addf %355, %366 : vector<2x342xf32>
    %c16_177 = arith.constant 16 : index
    %c0_178 = arith.constant 0 : index
    %c1024_179 = arith.constant 1024 : index
    %368 = vector.load %arg2[%c16_177, %c0_178, %c1024_179] : memref<24x2x1366xbf16, #tpu.memory_space<vmem>>, vector<1x2x342xbf16>
    %369 = vector.shape_cast %368 : vector<1x2x342xbf16> to vector<2x342xbf16>
    %370 = arith.extf %369 : vector<2x342xbf16> to vector<2x342xf32>
    %371 = vector.broadcast %16 : f32 to vector<2x342xf32>
    %372 = arith.mulf %370, %371 : vector<2x342xf32>
    %373 = arith.addf %361, %372 : vector<2x342xf32>
    %c5_180 = arith.constant 5 : index
    %c0_181 = arith.constant 0 : index
    %c1024_182 = arith.constant 1024 : index
    %374 = vector.load %arg2[%c5_180, %c0_181, %c1024_182] : memref<24x2x1366xbf16, #tpu.memory_space<vmem>>, vector<1x2x342xbf16>
    %375 = vector.shape_cast %374 : vector<1x2x342xbf16> to vector<2x342xbf16>
    %376 = arith.extf %375 : vector<2x342xbf16> to vector<2x342xf32>
    %377 = vector.broadcast %5 : f32 to vector<2x342xf32>
    %378 = arith.mulf %376, %377 : vector<2x342xf32>
    %379 = arith.addf %367, %378 : vector<2x342xf32>
    %c17_183 = arith.constant 17 : index
    %c0_184 = arith.constant 0 : index
    %c1024_185 = arith.constant 1024 : index
    %380 = vector.load %arg2[%c17_183, %c0_184, %c1024_185] : memref<24x2x1366xbf16, #tpu.memory_space<vmem>>, vector<1x2x342xbf16>
    %381 = vector.shape_cast %380 : vector<1x2x342xbf16> to vector<2x342xbf16>
    %382 = arith.extf %381 : vector<2x342xbf16> to vector<2x342xf32>
    %383 = vector.broadcast %17 : f32 to vector<2x342xf32>
    %384 = arith.mulf %382, %383 : vector<2x342xf32>
    %385 = arith.addf %373, %384 : vector<2x342xf32>
    %c6_186 = arith.constant 6 : index
    %c0_187 = arith.constant 0 : index
    %c1024_188 = arith.constant 1024 : index
    %386 = vector.load %arg2[%c6_186, %c0_187, %c1024_188] : memref<24x2x1366xbf16, #tpu.memory_space<vmem>>, vector<1x2x342xbf16>
    %387 = vector.shape_cast %386 : vector<1x2x342xbf16> to vector<2x342xbf16>
    %388 = arith.extf %387 : vector<2x342xbf16> to vector<2x342xf32>
    %389 = vector.broadcast %6 : f32 to vector<2x342xf32>
    %390 = arith.mulf %388, %389 : vector<2x342xf32>
    %391 = arith.addf %379, %390 : vector<2x342xf32>
    %c18_189 = arith.constant 18 : index
    %c0_190 = arith.constant 0 : index
    %c1024_191 = arith.constant 1024 : index
    %392 = vector.load %arg2[%c18_189, %c0_190, %c1024_191] : memref<24x2x1366xbf16, #tpu.memory_space<vmem>>, vector<1x2x342xbf16>
    %393 = vector.shape_cast %392 : vector<1x2x342xbf16> to vector<2x342xbf16>
    %394 = arith.extf %393 : vector<2x342xbf16> to vector<2x342xf32>
    %395 = vector.broadcast %18 : f32 to vector<2x342xf32>
    %396 = arith.mulf %394, %395 : vector<2x342xf32>
    %397 = arith.addf %385, %396 : vector<2x342xf32>
    %c7_192 = arith.constant 7 : index
    %c0_193 = arith.constant 0 : index
    %c1024_194 = arith.constant 1024 : index
    %398 = vector.load %arg2[%c7_192, %c0_193, %c1024_194] : memref<24x2x1366xbf16, #tpu.memory_space<vmem>>, vector<1x2x342xbf16>
    %399 = vector.shape_cast %398 : vector<1x2x342xbf16> to vector<2x342xbf16>
    %400 = arith.extf %399 : vector<2x342xbf16> to vector<2x342xf32>
    %401 = vector.broadcast %7 : f32 to vector<2x342xf32>
    %402 = arith.mulf %400, %401 : vector<2x342xf32>
    %403 = arith.addf %391, %402 : vector<2x342xf32>
    %c19_195 = arith.constant 19 : index
    %c0_196 = arith.constant 0 : index
    %c1024_197 = arith.constant 1024 : index
    %404 = vector.load %arg2[%c19_195, %c0_196, %c1024_197] : memref<24x2x1366xbf16, #tpu.memory_space<vmem>>, vector<1x2x342xbf16>
    %405 = vector.shape_cast %404 : vector<1x2x342xbf16> to vector<2x342xbf16>
    %406 = arith.extf %405 : vector<2x342xbf16> to vector<2x342xf32>
    %407 = vector.broadcast %19 : f32 to vector<2x342xf32>
    %408 = arith.mulf %406, %407 : vector<2x342xf32>
    %409 = arith.addf %397, %408 : vector<2x342xf32>
    %c8_198 = arith.constant 8 : index
    %c0_199 = arith.constant 0 : index
    %c1024_200 = arith.constant 1024 : index
    %410 = vector.load %arg2[%c8_198, %c0_199, %c1024_200] : memref<24x2x1366xbf16, #tpu.memory_space<vmem>>, vector<1x2x342xbf16>
    %411 = vector.shape_cast %410 : vector<1x2x342xbf16> to vector<2x342xbf16>
    %412 = arith.extf %411 : vector<2x342xbf16> to vector<2x342xf32>
    %413 = vector.broadcast %8 : f32 to vector<2x342xf32>
    %414 = arith.mulf %412, %413 : vector<2x342xf32>
    %415 = arith.addf %403, %414 : vector<2x342xf32>
    %c20_201 = arith.constant 20 : index
    %c0_202 = arith.constant 0 : index
    %c1024_203 = arith.constant 1024 : index
    %416 = vector.load %arg2[%c20_201, %c0_202, %c1024_203] : memref<24x2x1366xbf16, #tpu.memory_space<vmem>>, vector<1x2x342xbf16>
    %417 = vector.shape_cast %416 : vector<1x2x342xbf16> to vector<2x342xbf16>
    %418 = arith.extf %417 : vector<2x342xbf16> to vector<2x342xf32>
    %419 = vector.broadcast %20 : f32 to vector<2x342xf32>
    %420 = arith.mulf %418, %419 : vector<2x342xf32>
    %421 = arith.addf %409, %420 : vector<2x342xf32>
    %c9_204 = arith.constant 9 : index
    %c0_205 = arith.constant 0 : index
    %c1024_206 = arith.constant 1024 : index
    %422 = vector.load %arg2[%c9_204, %c0_205, %c1024_206] : memref<24x2x1366xbf16, #tpu.memory_space<vmem>>, vector<1x2x342xbf16>
    %423 = vector.shape_cast %422 : vector<1x2x342xbf16> to vector<2x342xbf16>
    %424 = arith.extf %423 : vector<2x342xbf16> to vector<2x342xf32>
    %425 = vector.broadcast %9 : f32 to vector<2x342xf32>
    %426 = arith.mulf %424, %425 : vector<2x342xf32>
    %427 = arith.addf %415, %426 : vector<2x342xf32>
    %c21_207 = arith.constant 21 : index
    %c0_208 = arith.constant 0 : index
    %c1024_209 = arith.constant 1024 : index
    %428 = vector.load %arg2[%c21_207, %c0_208, %c1024_209] : memref<24x2x1366xbf16, #tpu.memory_space<vmem>>, vector<1x2x342xbf16>
    %429 = vector.shape_cast %428 : vector<1x2x342xbf16> to vector<2x342xbf16>
    %430 = arith.extf %429 : vector<2x342xbf16> to vector<2x342xf32>
    %431 = vector.broadcast %21 : f32 to vector<2x342xf32>
    %432 = arith.mulf %430, %431 : vector<2x342xf32>
    %433 = arith.addf %421, %432 : vector<2x342xf32>
    %c10_210 = arith.constant 10 : index
    %c0_211 = arith.constant 0 : index
    %c1024_212 = arith.constant 1024 : index
    %434 = vector.load %arg2[%c10_210, %c0_211, %c1024_212] : memref<24x2x1366xbf16, #tpu.memory_space<vmem>>, vector<1x2x342xbf16>
    %435 = vector.shape_cast %434 : vector<1x2x342xbf16> to vector<2x342xbf16>
    %436 = arith.extf %435 : vector<2x342xbf16> to vector<2x342xf32>
    %437 = vector.broadcast %10 : f32 to vector<2x342xf32>
    %438 = arith.mulf %436, %437 : vector<2x342xf32>
    %439 = arith.addf %427, %438 : vector<2x342xf32>
    %c22_213 = arith.constant 22 : index
    %c0_214 = arith.constant 0 : index
    %c1024_215 = arith.constant 1024 : index
    %440 = vector.load %arg2[%c22_213, %c0_214, %c1024_215] : memref<24x2x1366xbf16, #tpu.memory_space<vmem>>, vector<1x2x342xbf16>
    %441 = vector.shape_cast %440 : vector<1x2x342xbf16> to vector<2x342xbf16>
    %442 = arith.extf %441 : vector<2x342xbf16> to vector<2x342xf32>
    %443 = vector.broadcast %22 : f32 to vector<2x342xf32>
    %444 = arith.mulf %442, %443 : vector<2x342xf32>
    %445 = arith.addf %433, %444 : vector<2x342xf32>
    %c11_216 = arith.constant 11 : index
    %c0_217 = arith.constant 0 : index
    %c1024_218 = arith.constant 1024 : index
    %446 = vector.load %arg2[%c11_216, %c0_217, %c1024_218] : memref<24x2x1366xbf16, #tpu.memory_space<vmem>>, vector<1x2x342xbf16>
    %447 = vector.shape_cast %446 : vector<1x2x342xbf16> to vector<2x342xbf16>
    %448 = arith.extf %447 : vector<2x342xbf16> to vector<2x342xf32>
    %449 = vector.broadcast %11 : f32 to vector<2x342xf32>
    %450 = arith.mulf %448, %449 : vector<2x342xf32>
    %451 = arith.addf %439, %450 : vector<2x342xf32>
    %c23_219 = arith.constant 23 : index
    %c0_220 = arith.constant 0 : index
    %c1024_221 = arith.constant 1024 : index
    %452 = vector.load %arg2[%c23_219, %c0_220, %c1024_221] : memref<24x2x1366xbf16, #tpu.memory_space<vmem>>, vector<1x2x342xbf16>
    %453 = vector.shape_cast %452 : vector<1x2x342xbf16> to vector<2x342xbf16>
    %454 = arith.extf %453 : vector<2x342xbf16> to vector<2x342xf32>
    %455 = vector.broadcast %23 : f32 to vector<2x342xf32>
    %456 = arith.mulf %454, %455 : vector<2x342xf32>
    %457 = arith.addf %445, %456 : vector<2x342xf32>
    %458 = arith.truncf %451 : vector<2x342xf32> to vector<2x342xbf16>
    %c0_222 = arith.constant 0 : index
    %c1024_223 = arith.constant 1024 : index
    %459 = vector.load %arg9[%c0_222, %c1024_223] : memref<2x1366xbf16, #tpu.memory_space<vmem>>, vector<2x342xbf16>
    tpu.vector_store %arg9[%c0_222, %c1024_223], %458 {strides = array<i32>} : memref<2x1366xbf16, #tpu.memory_space<vmem>>, vector<2x342xbf16>,
    %460 = arith.truncf %457 : vector<2x342xf32> to vector<2x342xbf16>
    %c0_224 = arith.constant 0 : index
    %c1024_225 = arith.constant 1024 : index
    %461 = vector.load %arg10[%c0_224, %c1024_225] : memref<2x1366xbf16, #tpu.memory_space<vmem>>, vector<2x342xbf16>
    tpu.vector_store %arg10[%c0_224, %c1024_225], %460 {strides = array<i32>} : memref<2x1366xbf16, #tpu.memory_space<vmem>>, vector<2x342xbf16>,
    %c0_226 = arith.constant 0 : index
    %c0_227 = arith.constant 0 : index
    %462 = vector.load %arg9[%c0_226, %c0_227] : memref<2x1366xbf16, #tpu.memory_space<vmem>>, vector<2x1366xbf16>
    %c0_228 = arith.constant 0 : index
    %c0_229 = arith.constant 0 : index
    %463 = vector.load %arg3[%c0_228, %c0_229] : memref<1366x256xbf16, #tpu.memory_space<vmem>>, vector<1366x256xbf16>
    %cst = arith.constant dense<0.000000e+00> : vector<2x256xf32>
    %464 = tpu.matmul %462, %463, %cst {dimension_numbers = #tpu.dot_dimension_numbers<[1], [0], [0], [1], [0, 0, 1, 1], [], []>} : vector<2x1366xbf16>, vector<1366x256xbf16>, vector<2x256xf32> -> vector<2x256xf32>
    %c0_230 = arith.constant 0 : index
    %c0_231 = arith.constant 0 : index
    %465 = vector.load %arg10[%c0_230, %c0_231] : memref<2x1366xbf16, #tpu.memory_space<vmem>>, vector<2x1366xbf16>
    %c0_232 = arith.constant 0 : index
    %c0_233 = arith.constant 0 : index
    %466 = vector.load %arg4[%c0_232, %c0_233] : memref<1366x256xbf16, #tpu.memory_space<vmem>>, vector<1366x256xbf16>
    %cst_234 = arith.constant dense<0.000000e+00> : vector<2x256xf32>
    %467 = tpu.matmul %465, %466, %cst_234 {dimension_numbers = #tpu.dot_dimension_numbers<[1], [0], [0], [1], [0, 0, 1, 1], [], []>} : vector<2x1366xbf16>, vector<1366x256xbf16>, vector<2x256xf32> -> vector<2x256xf32>
    %468 = arith.addf %464, %467 : vector<2x256xf32>
    %c0_235 = arith.constant 0 : index
    %c0_236 = arith.constant 0 : index
    %469 = vector.load %arg5[%c0_235, %c0_236] : memref<1x256xf32, #tpu.memory_space<vmem>>, vector<1x256xf32>
    %470 = vector.broadcast %469 : vector<1x256xf32> to vector<2x256xf32>
    %471 = arith.addf %468, %470 : vector<2x256xf32>
    %472 = arith.truncf %471 : vector<2x256xf32> to vector<2x256xbf16>
    %c0_237 = arith.constant 0 : index
    %c0_238 = arith.constant 0 : index
    %473 = vector.load %arg6[%c0_237, %c0_238] : memref<256x128xbf16, #tpu.memory_space<vmem>>, vector<256x128xbf16>
    %cst_239 = arith.constant dense<0.000000e+00> : vector<2x128xf32>
    %474 = tpu.matmul %472, %473, %cst_239 {dimension_numbers = #tpu.dot_dimension_numbers<[1], [0], [0], [1], [0, 0, 1, 1], [], []>} : vector<2x256xbf16>, vector<256x128xbf16>, vector<2x128xf32> -> vector<2x128xf32>
    %c0_240 = arith.constant 0 : index
    %c0_241 = arith.constant 0 : index
    %475 = vector.load %arg7[%c0_240, %c0_241] : memref<1x128xf32, #tpu.memory_space<vmem>>, vector<1x128xf32>
    %476 = vector.broadcast %475 : vector<1x128xf32> to vector<2x128xf32>
    %477 = arith.addf %474, %476 : vector<2x128xf32>
    %c0_242 = arith.constant 0 : index
    %c0_243 = arith.constant 0 : index
    %478 = vector.load %arg8[%c0_242, %c0_243] : memref<2x128xf32, #tpu.memory_space<vmem>>, vector<2x128xf32>
    tpu.vector_store %arg8[%c0_242, %c0_243], %477 {strides = array<i32>} : memref<2x128xf32, #tpu.memory_space<vmem>>, vector<2x128xf32>,
    return
  }
  func.func @transform_0(%arg0: i32) -> i32 {
    %c0_i32 = arith.constant 0 : i32
    %c0_i32_0 = arith.constant 0 : i32
    return %c0_i32 : i32
  }
  func.func @transform_1(%arg0: i32) -> (i32, i32, i32) {
    %c0_i32 = arith.constant 0 : i32
    %c0_i32_0 = arith.constant 0 : i32
    %c0_i32_1 = arith.constant 0 : i32
    return %c0_i32, %arg0, %c0_i32_0 : i32, i32, i32
  }
  func.func @transform_2(%arg0: i32) -> (i32, i32) {
    %c0_i32 = arith.constant 0 : i32
    %c0_i32_0 = arith.constant 0 : i32
    %c0_i32_1 = arith.constant 0 : i32
    return %c0_i32, %c0_i32_0 : i32, i32
  }
  func.func @transform_3(%arg0: i32) -> (i32, i32) {
    %c0_i32 = arith.constant 0 : i32
    %c0_i32_0 = arith.constant 0 : i32
    %c0_i32_1 = arith.constant 0 : i32
    return %c0_i32, %c0_i32_0 : i32, i32
  }
  func.func @transform_4(%arg0: i32) -> (i32, i32) {
    %c0_i32 = arith.constant 0 : i32
    %c0_i32_0 = arith.constant 0 : i32
    %c0_i32_1 = arith.constant 0 : i32
    return %c0_i32, %c0_i32_0 : i32, i32
  }
  func.func @transform_5(%arg0: i32) -> (i32, i32) {
    %c0_i32 = arith.constant 0 : i32
    %c0_i32_0 = arith.constant 0 : i32
    %c0_i32_1 = arith.constant 0 : i32
    return %c0_i32, %c0_i32_0 : i32, i32
  }
  func.func @transform_6(%arg0: i32) -> (i32, i32) {
    %c0_i32 = arith.constant 0 : i32
    %c0_i32_0 = arith.constant 0 : i32
    %c0_i32_1 = arith.constant 0 : i32
    return %c0_i32, %c0_i32_0 : i32, i32
  }
  func.func @transform_7(%arg0: i32) -> (i32, i32) {
    %c0_i32 = arith.constant 0 : i32
    %c0_i32_0 = arith.constant 0 : i32
    return %arg0, %c0_i32 : i32, i32
  }
}

module attributes {stable_mosaic.version = 11 : i64} {
  func.func @kernel(%arg0: i32, %arg1: memref<24xf32, #tpu.memory_space<smem>>, %arg2: memref<24x2x1366xbf16, #tpu.memory_space<vmem>>, %arg3: memref<1366x256xbf16, #tpu.memory_space<vmem>>, %arg4: memref<1366x256xbf16, #tpu.memory_space<vmem>>, %arg5: memref<1x256xf32, #tpu.memory_space<vmem>>, %arg6: memref<256x128xbf16, #tpu.memory_space<vmem>>, %arg7: memref<1x128xf32, #tpu.memory_space<vmem>>, %arg8: memref<2x128xf32, #tpu.memory_space<vmem>>, %arg9: memref<2x1366xbf16, #tpu.memory_space<vmem>>, %arg10: memref<2x1366xbf16, #tpu.memory_space<vmem>>) attributes {dimension_semantics = [#tpu.dimension_semantics<parallel>], iteration_bounds = array<i64: 1>, scalar_prefetch = 0 : i64, scratch_operands = 2 : i64, tpu.core_type = #tpu.core_type<tc>, window_params = [{transform_indices = @transform_0, window_bounds = array<i64: 24>}, {transform_indices = @transform_1, window_bounds = array<i64: 24, 2, 1366>}, {pipeline_mode = #tpu.pipeline_mode<synchronous>, transform_indices = @transform_2, window_bounds = array<i64: 1366, 256>}, {pipeline_mode = #tpu.pipeline_mode<synchronous>, transform_indices = @transform_3, window_bounds = array<i64: 1366, 256>}, {pipeline_mode = #tpu.pipeline_mode<synchronous>, transform_indices = @transform_4, window_bounds = array<i64: 1, 256>}, {pipeline_mode = #tpu.pipeline_mode<synchronous>, transform_indices = @transform_5, window_bounds = array<i64: 256, 128>}, {pipeline_mode = #tpu.pipeline_mode<synchronous>, transform_indices = @transform_6, window_bounds = array<i64: 1, 128>}, {transform_indices = @transform_7, window_bounds = array<i64: 2, 128>}]} {
    %c0 = arith.constant 0 : index
    %0 = memref.load %arg1[%c0] : memref<24xf32, #tpu.memory_space<smem>>
    %c1 = arith.constant 1 : index
    %1 = memref.load %arg1[%c1] : memref<24xf32, #tpu.memory_space<smem>>
    %c2 = arith.constant 2 : index
    %2 = memref.load %arg1[%c2] : memref<24xf32, #tpu.memory_space<smem>>
    %c3 = arith.constant 3 : index
    %3 = memref.load %arg1[%c3] : memref<24xf32, #tpu.memory_space<smem>>
    %c4 = arith.constant 4 : index
    %4 = memref.load %arg1[%c4] : memref<24xf32, #tpu.memory_space<smem>>
    %c5 = arith.constant 5 : index
    %5 = memref.load %arg1[%c5] : memref<24xf32, #tpu.memory_space<smem>>
    %c6 = arith.constant 6 : index
    %6 = memref.load %arg1[%c6] : memref<24xf32, #tpu.memory_space<smem>>
    %c7 = arith.constant 7 : index
    %7 = memref.load %arg1[%c7] : memref<24xf32, #tpu.memory_space<smem>>
    %c8 = arith.constant 8 : index
    %8 = memref.load %arg1[%c8] : memref<24xf32, #tpu.memory_space<smem>>
    %c9 = arith.constant 9 : index
    %9 = memref.load %arg1[%c9] : memref<24xf32, #tpu.memory_space<smem>>
    %c10 = arith.constant 10 : index
    %10 = memref.load %arg1[%c10] : memref<24xf32, #tpu.memory_space<smem>>
    %c11 = arith.constant 11 : index
    %11 = memref.load %arg1[%c11] : memref<24xf32, #tpu.memory_space<smem>>
    %c12 = arith.constant 12 : index
    %12 = memref.load %arg1[%c12] : memref<24xf32, #tpu.memory_space<smem>>
    %c13 = arith.constant 13 : index
    %13 = memref.load %arg1[%c13] : memref<24xf32, #tpu.memory_space<smem>>
    %c14 = arith.constant 14 : index
    %14 = memref.load %arg1[%c14] : memref<24xf32, #tpu.memory_space<smem>>
    %c15 = arith.constant 15 : index
    %15 = memref.load %arg1[%c15] : memref<24xf32, #tpu.memory_space<smem>>
    %c16 = arith.constant 16 : index
    %16 = memref.load %arg1[%c16] : memref<24xf32, #tpu.memory_space<smem>>
    %c17 = arith.constant 17 : index
    %17 = memref.load %arg1[%c17] : memref<24xf32, #tpu.memory_space<smem>>
    %c18 = arith.constant 18 : index
    %18 = memref.load %arg1[%c18] : memref<24xf32, #tpu.memory_space<smem>>
    %c19 = arith.constant 19 : index
    %19 = memref.load %arg1[%c19] : memref<24xf32, #tpu.memory_space<smem>>
    %c20 = arith.constant 20 : index
    %20 = memref.load %arg1[%c20] : memref<24xf32, #tpu.memory_space<smem>>
    %c21 = arith.constant 21 : index
    %21 = memref.load %arg1[%c21] : memref<24xf32, #tpu.memory_space<smem>>
    %c22 = arith.constant 22 : index
    %22 = memref.load %arg1[%c22] : memref<24xf32, #tpu.memory_space<smem>>
    %c23 = arith.constant 23 : index
    %23 = memref.load %arg1[%c23] : memref<24xf32, #tpu.memory_space<smem>>
    %c0_0 = arith.constant 0 : index
    %c0_1 = arith.constant 0 : index
    %c0_2 = arith.constant 0 : index
    %24 = vector.load %arg2[%c0_0, %c0_1, %c0_2] : memref<24x2x1366xbf16, #tpu.memory_space<vmem>>, vector<1x2x512xbf16>
    %25 = vector.shape_cast %24 : vector<1x2x512xbf16> to vector<2x512xbf16>
    %26 = arith.extf %25 : vector<2x512xbf16> to vector<2x512xf32>
    %27 = vector.broadcast %0 : f32 to vector<2x512xf32>
    %28 = arith.mulf %26, %27 : vector<2x512xf32>
    %c12_3 = arith.constant 12 : index
    %c0_4 = arith.constant 0 : index
    %c0_5 = arith.constant 0 : index
    %29 = vector.load %arg2[%c12_3, %c0_4, %c0_5] : memref<24x2x1366xbf16, #tpu.memory_space<vmem>>, vector<1x2x512xbf16>
    %30 = vector.shape_cast %29 : vector<1x2x512xbf16> to vector<2x512xbf16>
    %31 = arith.extf %30 : vector<2x512xbf16> to vector<2x512xf32>
    %32 = vector.broadcast %12 : f32 to vector<2x512xf32>
    %33 = arith.mulf %31, %32 : vector<2x512xf32>
    %c1_6 = arith.constant 1 : index
    %c0_7 = arith.constant 0 : index
    %c0_8 = arith.constant 0 : index
    %34 = vector.load %arg2[%c1_6, %c0_7, %c0_8] : memref<24x2x1366xbf16, #tpu.memory_space<vmem>>, vector<1x2x512xbf16>
    %35 = vector.shape_cast %34 : vector<1x2x512xbf16> to vector<2x512xbf16>
    %36 = arith.extf %35 : vector<2x512xbf16> to vector<2x512xf32>
    %37 = vector.broadcast %1 : f32 to vector<2x512xf32>
    %38 = arith.mulf %36, %37 : vector<2x512xf32>
    %39 = arith.addf %28, %38 : vector<2x512xf32>
    %c13_9 = arith.constant 13 : index
    %c0_10 = arith.constant 0 : index
    %c0_11 = arith.constant 0 : index
    %40 = vector.load %arg2[%c13_9, %c0_10, %c0_11] : memref<24x2x1366xbf16, #tpu.memory_space<vmem>>, vector<1x2x512xbf16>
    %41 = vector.shape_cast %40 : vector<1x2x512xbf16> to vector<2x512xbf16>
    %42 = arith.extf %41 : vector<2x512xbf16> to vector<2x512xf32>
    %43 = vector.broadcast %13 : f32 to vector<2x512xf32>
    %44 = arith.mulf %42, %43 : vector<2x512xf32>
    %45 = arith.addf %33, %44 : vector<2x512xf32>
    %c2_12 = arith.constant 2 : index
    %c0_13 = arith.constant 0 : index
    %c0_14 = arith.constant 0 : index
    %46 = vector.load %arg2[%c2_12, %c0_13, %c0_14] : memref<24x2x1366xbf16, #tpu.memory_space<vmem>>, vector<1x2x512xbf16>
    %47 = vector.shape_cast %46 : vector<1x2x512xbf16> to vector<2x512xbf16>
    %48 = arith.extf %47 : vector<2x512xbf16> to vector<2x512xf32>
    %49 = vector.broadcast %2 : f32 to vector<2x512xf32>
    %50 = arith.mulf %48, %49 : vector<2x512xf32>
    %51 = arith.addf %39, %50 : vector<2x512xf32>
    %c14_15 = arith.constant 14 : index
    %c0_16 = arith.constant 0 : index
    %c0_17 = arith.constant 0 : index
    %52 = vector.load %arg2[%c14_15, %c0_16, %c0_17] : memref<24x2x1366xbf16, #tpu.memory_space<vmem>>, vector<1x2x512xbf16>
    %53 = vector.shape_cast %52 : vector<1x2x512xbf16> to vector<2x512xbf16>
    %54 = arith.extf %53 : vector<2x512xbf16> to vector<2x512xf32>
    %55 = vector.broadcast %14 : f32 to vector<2x512xf32>
    %56 = arith.mulf %54, %55 : vector<2x512xf32>
    %57 = arith.addf %45, %56 : vector<2x512xf32>
    %c3_18 = arith.constant 3 : index
    %c0_19 = arith.constant 0 : index
    %c0_20 = arith.constant 0 : index
    %58 = vector.load %arg2[%c3_18, %c0_19, %c0_20] : memref<24x2x1366xbf16, #tpu.memory_space<vmem>>, vector<1x2x512xbf16>
    %59 = vector.shape_cast %58 : vector<1x2x512xbf16> to vector<2x512xbf16>
    %60 = arith.extf %59 : vector<2x512xbf16> to vector<2x512xf32>
    %61 = vector.broadcast %3 : f32 to vector<2x512xf32>
    %62 = arith.mulf %60, %61 : vector<2x512xf32>
    %63 = arith.addf %51, %62 : vector<2x512xf32>
    %c15_21 = arith.constant 15 : index
    %c0_22 = arith.constant 0 : index
    %c0_23 = arith.constant 0 : index
    %64 = vector.load %arg2[%c15_21, %c0_22, %c0_23] : memref<24x2x1366xbf16, #tpu.memory_space<vmem>>, vector<1x2x512xbf16>
    %65 = vector.shape_cast %64 : vector<1x2x512xbf16> to vector<2x512xbf16>
    %66 = arith.extf %65 : vector<2x512xbf16> to vector<2x512xf32>
    %67 = vector.broadcast %15 : f32 to vector<2x512xf32>
    %68 = arith.mulf %66, %67 : vector<2x512xf32>
    %69 = arith.addf %57, %68 : vector<2x512xf32>
    %c4_24 = arith.constant 4 : index
    %c0_25 = arith.constant 0 : index
    %c0_26 = arith.constant 0 : index
    %70 = vector.load %arg2[%c4_24, %c0_25, %c0_26] : memref<24x2x1366xbf16, #tpu.memory_space<vmem>>, vector<1x2x512xbf16>
    %71 = vector.shape_cast %70 : vector<1x2x512xbf16> to vector<2x512xbf16>
    %72 = arith.extf %71 : vector<2x512xbf16> to vector<2x512xf32>
    %73 = vector.broadcast %4 : f32 to vector<2x512xf32>
    %74 = arith.mulf %72, %73 : vector<2x512xf32>
    %75 = arith.addf %63, %74 : vector<2x512xf32>
    %c16_27 = arith.constant 16 : index
    %c0_28 = arith.constant 0 : index
    %c0_29 = arith.constant 0 : index
    %76 = vector.load %arg2[%c16_27, %c0_28, %c0_29] : memref<24x2x1366xbf16, #tpu.memory_space<vmem>>, vector<1x2x512xbf16>
    %77 = vector.shape_cast %76 : vector<1x2x512xbf16> to vector<2x512xbf16>
    %78 = arith.extf %77 : vector<2x512xbf16> to vector<2x512xf32>
    %79 = vector.broadcast %16 : f32 to vector<2x512xf32>
    %80 = arith.mulf %78, %79 : vector<2x512xf32>
    %81 = arith.addf %69, %80 : vector<2x512xf32>
    %c5_30 = arith.constant 5 : index
    %c0_31 = arith.constant 0 : index
    %c0_32 = arith.constant 0 : index
    %82 = vector.load %arg2[%c5_30, %c0_31, %c0_32] : memref<24x2x1366xbf16, #tpu.memory_space<vmem>>, vector<1x2x512xbf16>
    %83 = vector.shape_cast %82 : vector<1x2x512xbf16> to vector<2x512xbf16>
    %84 = arith.extf %83 : vector<2x512xbf16> to vector<2x512xf32>
    %85 = vector.broadcast %5 : f32 to vector<2x512xf32>
    %86 = arith.mulf %84, %85 : vector<2x512xf32>
    %87 = arith.addf %75, %86 : vector<2x512xf32>
    %c17_33 = arith.constant 17 : index
    %c0_34 = arith.constant 0 : index
    %c0_35 = arith.constant 0 : index
    %88 = vector.load %arg2[%c17_33, %c0_34, %c0_35] : memref<24x2x1366xbf16, #tpu.memory_space<vmem>>, vector<1x2x512xbf16>
    %89 = vector.shape_cast %88 : vector<1x2x512xbf16> to vector<2x512xbf16>
    %90 = arith.extf %89 : vector<2x512xbf16> to vector<2x512xf32>
    %91 = vector.broadcast %17 : f32 to vector<2x512xf32>
    %92 = arith.mulf %90, %91 : vector<2x512xf32>
    %93 = arith.addf %81, %92 : vector<2x512xf32>
    %c6_36 = arith.constant 6 : index
    %c0_37 = arith.constant 0 : index
    %c0_38 = arith.constant 0 : index
    %94 = vector.load %arg2[%c6_36, %c0_37, %c0_38] : memref<24x2x1366xbf16, #tpu.memory_space<vmem>>, vector<1x2x512xbf16>
    %95 = vector.shape_cast %94 : vector<1x2x512xbf16> to vector<2x512xbf16>
    %96 = arith.extf %95 : vector<2x512xbf16> to vector<2x512xf32>
    %97 = vector.broadcast %6 : f32 to vector<2x512xf32>
    %98 = arith.mulf %96, %97 : vector<2x512xf32>
    %99 = arith.addf %87, %98 : vector<2x512xf32>
    %c18_39 = arith.constant 18 : index
    %c0_40 = arith.constant 0 : index
    %c0_41 = arith.constant 0 : index
    %100 = vector.load %arg2[%c18_39, %c0_40, %c0_41] : memref<24x2x1366xbf16, #tpu.memory_space<vmem>>, vector<1x2x512xbf16>
    %101 = vector.shape_cast %100 : vector<1x2x512xbf16> to vector<2x512xbf16>
    %102 = arith.extf %101 : vector<2x512xbf16> to vector<2x512xf32>
    %103 = vector.broadcast %18 : f32 to vector<2x512xf32>
    %104 = arith.mulf %102, %103 : vector<2x512xf32>
    %105 = arith.addf %93, %104 : vector<2x512xf32>
    %c7_42 = arith.constant 7 : index
    %c0_43 = arith.constant 0 : index
    %c0_44 = arith.constant 0 : index
    %106 = vector.load %arg2[%c7_42, %c0_43, %c0_44] : memref<24x2x1366xbf16, #tpu.memory_space<vmem>>, vector<1x2x512xbf16>
    %107 = vector.shape_cast %106 : vector<1x2x512xbf16> to vector<2x512xbf16>
    %108 = arith.extf %107 : vector<2x512xbf16> to vector<2x512xf32>
    %109 = vector.broadcast %7 : f32 to vector<2x512xf32>
    %110 = arith.mulf %108, %109 : vector<2x512xf32>
    %111 = arith.addf %99, %110 : vector<2x512xf32>
    %c19_45 = arith.constant 19 : index
    %c0_46 = arith.constant 0 : index
    %c0_47 = arith.constant 0 : index
    %112 = vector.load %arg2[%c19_45, %c0_46, %c0_47] : memref<24x2x1366xbf16, #tpu.memory_space<vmem>>, vector<1x2x512xbf16>
    %113 = vector.shape_cast %112 : vector<1x2x512xbf16> to vector<2x512xbf16>
    %114 = arith.extf %113 : vector<2x512xbf16> to vector<2x512xf32>
    %115 = vector.broadcast %19 : f32 to vector<2x512xf32>
    %116 = arith.mulf %114, %115 : vector<2x512xf32>
    %117 = arith.addf %105, %116 : vector<2x512xf32>
    %c8_48 = arith.constant 8 : index
    %c0_49 = arith.constant 0 : index
    %c0_50 = arith.constant 0 : index
    %118 = vector.load %arg2[%c8_48, %c0_49, %c0_50] : memref<24x2x1366xbf16, #tpu.memory_space<vmem>>, vector<1x2x512xbf16>
    %119 = vector.shape_cast %118 : vector<1x2x512xbf16> to vector<2x512xbf16>
    %120 = arith.extf %119 : vector<2x512xbf16> to vector<2x512xf32>
    %121 = vector.broadcast %8 : f32 to vector<2x512xf32>
    %122 = arith.mulf %120, %121 : vector<2x512xf32>
    %123 = arith.addf %111, %122 : vector<2x512xf32>
    %c20_51 = arith.constant 20 : index
    %c0_52 = arith.constant 0 : index
    %c0_53 = arith.constant 0 : index
    %124 = vector.load %arg2[%c20_51, %c0_52, %c0_53] : memref<24x2x1366xbf16, #tpu.memory_space<vmem>>, vector<1x2x512xbf16>
    %125 = vector.shape_cast %124 : vector<1x2x512xbf16> to vector<2x512xbf16>
    %126 = arith.extf %125 : vector<2x512xbf16> to vector<2x512xf32>
    %127 = vector.broadcast %20 : f32 to vector<2x512xf32>
    %128 = arith.mulf %126, %127 : vector<2x512xf32>
    %129 = arith.addf %117, %128 : vector<2x512xf32>
    %c9_54 = arith.constant 9 : index
    %c0_55 = arith.constant 0 : index
    %c0_56 = arith.constant 0 : index
    %130 = vector.load %arg2[%c9_54, %c0_55, %c0_56] : memref<24x2x1366xbf16, #tpu.memory_space<vmem>>, vector<1x2x512xbf16>
    %131 = vector.shape_cast %130 : vector<1x2x512xbf16> to vector<2x512xbf16>
    %132 = arith.extf %131 : vector<2x512xbf16> to vector<2x512xf32>
    %133 = vector.broadcast %9 : f32 to vector<2x512xf32>
    %134 = arith.mulf %132, %133 : vector<2x512xf32>
    %135 = arith.addf %123, %134 : vector<2x512xf32>
    %c21_57 = arith.constant 21 : index
    %c0_58 = arith.constant 0 : index
    %c0_59 = arith.constant 0 : index
    %136 = vector.load %arg2[%c21_57, %c0_58, %c0_59] : memref<24x2x1366xbf16, #tpu.memory_space<vmem>>, vector<1x2x512xbf16>
    %137 = vector.shape_cast %136 : vector<1x2x512xbf16> to vector<2x512xbf16>
    %138 = arith.extf %137 : vector<2x512xbf16> to vector<2x512xf32>
    %139 = vector.broadcast %21 : f32 to vector<2x512xf32>
    %140 = arith.mulf %138, %139 : vector<2x512xf32>
    %141 = arith.addf %129, %140 : vector<2x512xf32>
    %c10_60 = arith.constant 10 : index
    %c0_61 = arith.constant 0 : index
    %c0_62 = arith.constant 0 : index
    %142 = vector.load %arg2[%c10_60, %c0_61, %c0_62] : memref<24x2x1366xbf16, #tpu.memory_space<vmem>>, vector<1x2x512xbf16>
    %143 = vector.shape_cast %142 : vector<1x2x512xbf16> to vector<2x512xbf16>
    %144 = arith.extf %143 : vector<2x512xbf16> to vector<2x512xf32>
    %145 = vector.broadcast %10 : f32 to vector<2x512xf32>
    %146 = arith.mulf %144, %145 : vector<2x512xf32>
    %147 = arith.addf %135, %146 : vector<2x512xf32>
    %c22_63 = arith.constant 22 : index
    %c0_64 = arith.constant 0 : index
    %c0_65 = arith.constant 0 : index
    %148 = vector.load %arg2[%c22_63, %c0_64, %c0_65] : memref<24x2x1366xbf16, #tpu.memory_space<vmem>>, vector<1x2x512xbf16>
    %149 = vector.shape_cast %148 : vector<1x2x512xbf16> to vector<2x512xbf16>
    %150 = arith.extf %149 : vector<2x512xbf16> to vector<2x512xf32>
    %151 = vector.broadcast %22 : f32 to vector<2x512xf32>
    %152 = arith.mulf %150, %151 : vector<2x512xf32>
    %153 = arith.addf %141, %152 : vector<2x512xf32>
    %c11_66 = arith.constant 11 : index
    %c0_67 = arith.constant 0 : index
    %c0_68 = arith.constant 0 : index
    %154 = vector.load %arg2[%c11_66, %c0_67, %c0_68] : memref<24x2x1366xbf16, #tpu.memory_space<vmem>>, vector<1x2x512xbf16>
    %155 = vector.shape_cast %154 : vector<1x2x512xbf16> to vector<2x512xbf16>
    %156 = arith.extf %155 : vector<2x512xbf16> to vector<2x512xf32>
    %157 = vector.broadcast %11 : f32 to vector<2x512xf32>
    %158 = arith.mulf %156, %157 : vector<2x512xf32>
    %159 = arith.addf %147, %158 : vector<2x512xf32>
    %c23_69 = arith.constant 23 : index
    %c0_70 = arith.constant 0 : index
    %c0_71 = arith.constant 0 : index
    %160 = vector.load %arg2[%c23_69, %c0_70, %c0_71] : memref<24x2x1366xbf16, #tpu.memory_space<vmem>>, vector<1x2x512xbf16>
    %161 = vector.shape_cast %160 : vector<1x2x512xbf16> to vector<2x512xbf16>
    %162 = arith.extf %161 : vector<2x512xbf16> to vector<2x512xf32>
    %163 = vector.broadcast %23 : f32 to vector<2x512xf32>
    %164 = arith.mulf %162, %163 : vector<2x512xf32>
    %165 = arith.addf %153, %164 : vector<2x512xf32>
    %166 = arith.truncf %159 : vector<2x512xf32> to vector<2x512xbf16>
    %c0_72 = arith.constant 0 : index
    %c0_73 = arith.constant 0 : index
    %167 = vector.load %arg9[%c0_72, %c0_73] : memref<2x1366xbf16, #tpu.memory_space<vmem>>, vector<2x512xbf16>
    tpu.vector_store %arg9[%c0_72, %c0_73], %166 {strides = array<i32>} : memref<2x1366xbf16, #tpu.memory_space<vmem>>, vector<2x512xbf16>,
    %168 = arith.truncf %165 : vector<2x512xf32> to vector<2x512xbf16>
    %c0_74 = arith.constant 0 : index
    %c0_75 = arith.constant 0 : index
    %169 = vector.load %arg10[%c0_74, %c0_75] : memref<2x1366xbf16, #tpu.memory_space<vmem>>, vector<2x512xbf16>
    tpu.vector_store %arg10[%c0_74, %c0_75], %168 {strides = array<i32>} : memref<2x1366xbf16, #tpu.memory_space<vmem>>, vector<2x512xbf16>,
    %c0_76 = arith.constant 0 : index
    %c0_77 = arith.constant 0 : index
    %c512 = arith.constant 512 : index
    %170 = vector.load %arg2[%c0_76, %c0_77, %c512] : memref<24x2x1366xbf16, #tpu.memory_space<vmem>>, vector<1x2x512xbf16>
    %171 = vector.shape_cast %170 : vector<1x2x512xbf16> to vector<2x512xbf16>
    %172 = arith.extf %171 : vector<2x512xbf16> to vector<2x512xf32>
    %173 = vector.broadcast %0 : f32 to vector<2x512xf32>
    %174 = arith.mulf %172, %173 : vector<2x512xf32>
    %c12_78 = arith.constant 12 : index
    %c0_79 = arith.constant 0 : index
    %c512_80 = arith.constant 512 : index
    %175 = vector.load %arg2[%c12_78, %c0_79, %c512_80] : memref<24x2x1366xbf16, #tpu.memory_space<vmem>>, vector<1x2x512xbf16>
    %176 = vector.shape_cast %175 : vector<1x2x512xbf16> to vector<2x512xbf16>
    %177 = arith.extf %176 : vector<2x512xbf16> to vector<2x512xf32>
    %178 = vector.broadcast %12 : f32 to vector<2x512xf32>
    %179 = arith.mulf %177, %178 : vector<2x512xf32>
    %c1_81 = arith.constant 1 : index
    %c0_82 = arith.constant 0 : index
    %c512_83 = arith.constant 512 : index
    %180 = vector.load %arg2[%c1_81, %c0_82, %c512_83] : memref<24x2x1366xbf16, #tpu.memory_space<vmem>>, vector<1x2x512xbf16>
    %181 = vector.shape_cast %180 : vector<1x2x512xbf16> to vector<2x512xbf16>
    %182 = arith.extf %181 : vector<2x512xbf16> to vector<2x512xf32>
    %183 = vector.broadcast %1 : f32 to vector<2x512xf32>
    %184 = arith.mulf %182, %183 : vector<2x512xf32>
    %185 = arith.addf %174, %184 : vector<2x512xf32>
    %c13_84 = arith.constant 13 : index
    %c0_85 = arith.constant 0 : index
    %c512_86 = arith.constant 512 : index
    %186 = vector.load %arg2[%c13_84, %c0_85, %c512_86] : memref<24x2x1366xbf16, #tpu.memory_space<vmem>>, vector<1x2x512xbf16>
    %187 = vector.shape_cast %186 : vector<1x2x512xbf16> to vector<2x512xbf16>
    %188 = arith.extf %187 : vector<2x512xbf16> to vector<2x512xf32>
    %189 = vector.broadcast %13 : f32 to vector<2x512xf32>
    %190 = arith.mulf %188, %189 : vector<2x512xf32>
    %191 = arith.addf %179, %190 : vector<2x512xf32>
    %c2_87 = arith.constant 2 : index
    %c0_88 = arith.constant 0 : index
    %c512_89 = arith.constant 512 : index
    %192 = vector.load %arg2[%c2_87, %c0_88, %c512_89] : memref<24x2x1366xbf16, #tpu.memory_space<vmem>>, vector<1x2x512xbf16>
    %193 = vector.shape_cast %192 : vector<1x2x512xbf16> to vector<2x512xbf16>
    %194 = arith.extf %193 : vector<2x512xbf16> to vector<2x512xf32>
    %195 = vector.broadcast %2 : f32 to vector<2x512xf32>
    %196 = arith.mulf %194, %195 : vector<2x512xf32>
    %197 = arith.addf %185, %196 : vector<2x512xf32>
    %c14_90 = arith.constant 14 : index
    %c0_91 = arith.constant 0 : index
    %c512_92 = arith.constant 512 : index
    %198 = vector.load %arg2[%c14_90, %c0_91, %c512_92] : memref<24x2x1366xbf16, #tpu.memory_space<vmem>>, vector<1x2x512xbf16>
    %199 = vector.shape_cast %198 : vector<1x2x512xbf16> to vector<2x512xbf16>
    %200 = arith.extf %199 : vector<2x512xbf16> to vector<2x512xf32>
    %201 = vector.broadcast %14 : f32 to vector<2x512xf32>
    %202 = arith.mulf %200, %201 : vector<2x512xf32>
    %203 = arith.addf %191, %202 : vector<2x512xf32>
    %c3_93 = arith.constant 3 : index
    %c0_94 = arith.constant 0 : index
    %c512_95 = arith.constant 512 : index
    %204 = vector.load %arg2[%c3_93, %c0_94, %c512_95] : memref<24x2x1366xbf16, #tpu.memory_space<vmem>>, vector<1x2x512xbf16>
    %205 = vector.shape_cast %204 : vector<1x2x512xbf16> to vector<2x512xbf16>
    %206 = arith.extf %205 : vector<2x512xbf16> to vector<2x512xf32>
    %207 = vector.broadcast %3 : f32 to vector<2x512xf32>
    %208 = arith.mulf %206, %207 : vector<2x512xf32>
    %209 = arith.addf %197, %208 : vector<2x512xf32>
    %c15_96 = arith.constant 15 : index
    %c0_97 = arith.constant 0 : index
    %c512_98 = arith.constant 512 : index
    %210 = vector.load %arg2[%c15_96, %c0_97, %c512_98] : memref<24x2x1366xbf16, #tpu.memory_space<vmem>>, vector<1x2x512xbf16>
    %211 = vector.shape_cast %210 : vector<1x2x512xbf16> to vector<2x512xbf16>
    %212 = arith.extf %211 : vector<2x512xbf16> to vector<2x512xf32>
    %213 = vector.broadcast %15 : f32 to vector<2x512xf32>
    %214 = arith.mulf %212, %213 : vector<2x512xf32>
    %215 = arith.addf %203, %214 : vector<2x512xf32>
    %c4_99 = arith.constant 4 : index
    %c0_100 = arith.constant 0 : index
    %c512_101 = arith.constant 512 : index
    %216 = vector.load %arg2[%c4_99, %c0_100, %c512_101] : memref<24x2x1366xbf16, #tpu.memory_space<vmem>>, vector<1x2x512xbf16>
    %217 = vector.shape_cast %216 : vector<1x2x512xbf16> to vector<2x512xbf16>
    %218 = arith.extf %217 : vector<2x512xbf16> to vector<2x512xf32>
    %219 = vector.broadcast %4 : f32 to vector<2x512xf32>
    %220 = arith.mulf %218, %219 : vector<2x512xf32>
    %221 = arith.addf %209, %220 : vector<2x512xf32>
    %c16_102 = arith.constant 16 : index
    %c0_103 = arith.constant 0 : index
    %c512_104 = arith.constant 512 : index
    %222 = vector.load %arg2[%c16_102, %c0_103, %c512_104] : memref<24x2x1366xbf16, #tpu.memory_space<vmem>>, vector<1x2x512xbf16>
    %223 = vector.shape_cast %222 : vector<1x2x512xbf16> to vector<2x512xbf16>
    %224 = arith.extf %223 : vector<2x512xbf16> to vector<2x512xf32>
    %225 = vector.broadcast %16 : f32 to vector<2x512xf32>
    %226 = arith.mulf %224, %225 : vector<2x512xf32>
    %227 = arith.addf %215, %226 : vector<2x512xf32>
    %c5_105 = arith.constant 5 : index
    %c0_106 = arith.constant 0 : index
    %c512_107 = arith.constant 512 : index
    %228 = vector.load %arg2[%c5_105, %c0_106, %c512_107] : memref<24x2x1366xbf16, #tpu.memory_space<vmem>>, vector<1x2x512xbf16>
    %229 = vector.shape_cast %228 : vector<1x2x512xbf16> to vector<2x512xbf16>
    %230 = arith.extf %229 : vector<2x512xbf16> to vector<2x512xf32>
    %231 = vector.broadcast %5 : f32 to vector<2x512xf32>
    %232 = arith.mulf %230, %231 : vector<2x512xf32>
    %233 = arith.addf %221, %232 : vector<2x512xf32>
    %c17_108 = arith.constant 17 : index
    %c0_109 = arith.constant 0 : index
    %c512_110 = arith.constant 512 : index
    %234 = vector.load %arg2[%c17_108, %c0_109, %c512_110] : memref<24x2x1366xbf16, #tpu.memory_space<vmem>>, vector<1x2x512xbf16>
    %235 = vector.shape_cast %234 : vector<1x2x512xbf16> to vector<2x512xbf16>
    %236 = arith.extf %235 : vector<2x512xbf16> to vector<2x512xf32>
    %237 = vector.broadcast %17 : f32 to vector<2x512xf32>
    %238 = arith.mulf %236, %237 : vector<2x512xf32>
    %239 = arith.addf %227, %238 : vector<2x512xf32>
    %c6_111 = arith.constant 6 : index
    %c0_112 = arith.constant 0 : index
    %c512_113 = arith.constant 512 : index
    %240 = vector.load %arg2[%c6_111, %c0_112, %c512_113] : memref<24x2x1366xbf16, #tpu.memory_space<vmem>>, vector<1x2x512xbf16>
    %241 = vector.shape_cast %240 : vector<1x2x512xbf16> to vector<2x512xbf16>
    %242 = arith.extf %241 : vector<2x512xbf16> to vector<2x512xf32>
    %243 = vector.broadcast %6 : f32 to vector<2x512xf32>
    %244 = arith.mulf %242, %243 : vector<2x512xf32>
    %245 = arith.addf %233, %244 : vector<2x512xf32>
    %c18_114 = arith.constant 18 : index
    %c0_115 = arith.constant 0 : index
    %c512_116 = arith.constant 512 : index
    %246 = vector.load %arg2[%c18_114, %c0_115, %c512_116] : memref<24x2x1366xbf16, #tpu.memory_space<vmem>>, vector<1x2x512xbf16>
    %247 = vector.shape_cast %246 : vector<1x2x512xbf16> to vector<2x512xbf16>
    %248 = arith.extf %247 : vector<2x512xbf16> to vector<2x512xf32>
    %249 = vector.broadcast %18 : f32 to vector<2x512xf32>
    %250 = arith.mulf %248, %249 : vector<2x512xf32>
    %251 = arith.addf %239, %250 : vector<2x512xf32>
    %c7_117 = arith.constant 7 : index
    %c0_118 = arith.constant 0 : index
    %c512_119 = arith.constant 512 : index
    %252 = vector.load %arg2[%c7_117, %c0_118, %c512_119] : memref<24x2x1366xbf16, #tpu.memory_space<vmem>>, vector<1x2x512xbf16>
    %253 = vector.shape_cast %252 : vector<1x2x512xbf16> to vector<2x512xbf16>
    %254 = arith.extf %253 : vector<2x512xbf16> to vector<2x512xf32>
    %255 = vector.broadcast %7 : f32 to vector<2x512xf32>
    %256 = arith.mulf %254, %255 : vector<2x512xf32>
    %257 = arith.addf %245, %256 : vector<2x512xf32>
    %c19_120 = arith.constant 19 : index
    %c0_121 = arith.constant 0 : index
    %c512_122 = arith.constant 512 : index
    %258 = vector.load %arg2[%c19_120, %c0_121, %c512_122] : memref<24x2x1366xbf16, #tpu.memory_space<vmem>>, vector<1x2x512xbf16>
    %259 = vector.shape_cast %258 : vector<1x2x512xbf16> to vector<2x512xbf16>
    %260 = arith.extf %259 : vector<2x512xbf16> to vector<2x512xf32>
    %261 = vector.broadcast %19 : f32 to vector<2x512xf32>
    %262 = arith.mulf %260, %261 : vector<2x512xf32>
    %263 = arith.addf %251, %262 : vector<2x512xf32>
    %c8_123 = arith.constant 8 : index
    %c0_124 = arith.constant 0 : index
    %c512_125 = arith.constant 512 : index
    %264 = vector.load %arg2[%c8_123, %c0_124, %c512_125] : memref<24x2x1366xbf16, #tpu.memory_space<vmem>>, vector<1x2x512xbf16>
    %265 = vector.shape_cast %264 : vector<1x2x512xbf16> to vector<2x512xbf16>
    %266 = arith.extf %265 : vector<2x512xbf16> to vector<2x512xf32>
    %267 = vector.broadcast %8 : f32 to vector<2x512xf32>
    %268 = arith.mulf %266, %267 : vector<2x512xf32>
    %269 = arith.addf %257, %268 : vector<2x512xf32>
    %c20_126 = arith.constant 20 : index
    %c0_127 = arith.constant 0 : index
    %c512_128 = arith.constant 512 : index
    %270 = vector.load %arg2[%c20_126, %c0_127, %c512_128] : memref<24x2x1366xbf16, #tpu.memory_space<vmem>>, vector<1x2x512xbf16>
    %271 = vector.shape_cast %270 : vector<1x2x512xbf16> to vector<2x512xbf16>
    %272 = arith.extf %271 : vector<2x512xbf16> to vector<2x512xf32>
    %273 = vector.broadcast %20 : f32 to vector<2x512xf32>
    %274 = arith.mulf %272, %273 : vector<2x512xf32>
    %275 = arith.addf %263, %274 : vector<2x512xf32>
    %c9_129 = arith.constant 9 : index
    %c0_130 = arith.constant 0 : index
    %c512_131 = arith.constant 512 : index
    %276 = vector.load %arg2[%c9_129, %c0_130, %c512_131] : memref<24x2x1366xbf16, #tpu.memory_space<vmem>>, vector<1x2x512xbf16>
    %277 = vector.shape_cast %276 : vector<1x2x512xbf16> to vector<2x512xbf16>
    %278 = arith.extf %277 : vector<2x512xbf16> to vector<2x512xf32>
    %279 = vector.broadcast %9 : f32 to vector<2x512xf32>
    %280 = arith.mulf %278, %279 : vector<2x512xf32>
    %281 = arith.addf %269, %280 : vector<2x512xf32>
    %c21_132 = arith.constant 21 : index
    %c0_133 = arith.constant 0 : index
    %c512_134 = arith.constant 512 : index
    %282 = vector.load %arg2[%c21_132, %c0_133, %c512_134] : memref<24x2x1366xbf16, #tpu.memory_space<vmem>>, vector<1x2x512xbf16>
    %283 = vector.shape_cast %282 : vector<1x2x512xbf16> to vector<2x512xbf16>
    %284 = arith.extf %283 : vector<2x512xbf16> to vector<2x512xf32>
    %285 = vector.broadcast %21 : f32 to vector<2x512xf32>
    %286 = arith.mulf %284, %285 : vector<2x512xf32>
    %287 = arith.addf %275, %286 : vector<2x512xf32>
    %c10_135 = arith.constant 10 : index
    %c0_136 = arith.constant 0 : index
    %c512_137 = arith.constant 512 : index
    %288 = vector.load %arg2[%c10_135, %c0_136, %c512_137] : memref<24x2x1366xbf16, #tpu.memory_space<vmem>>, vector<1x2x512xbf16>
    %289 = vector.shape_cast %288 : vector<1x2x512xbf16> to vector<2x512xbf16>
    %290 = arith.extf %289 : vector<2x512xbf16> to vector<2x512xf32>
    %291 = vector.broadcast %10 : f32 to vector<2x512xf32>
    %292 = arith.mulf %290, %291 : vector<2x512xf32>
    %293 = arith.addf %281, %292 : vector<2x512xf32>
    %c22_138 = arith.constant 22 : index
    %c0_139 = arith.constant 0 : index
    %c512_140 = arith.constant 512 : index
    %294 = vector.load %arg2[%c22_138, %c0_139, %c512_140] : memref<24x2x1366xbf16, #tpu.memory_space<vmem>>, vector<1x2x512xbf16>
    %295 = vector.shape_cast %294 : vector<1x2x512xbf16> to vector<2x512xbf16>
    %296 = arith.extf %295 : vector<2x512xbf16> to vector<2x512xf32>
    %297 = vector.broadcast %22 : f32 to vector<2x512xf32>
    %298 = arith.mulf %296, %297 : vector<2x512xf32>
    %299 = arith.addf %287, %298 : vector<2x512xf32>
    %c11_141 = arith.constant 11 : index
    %c0_142 = arith.constant 0 : index
    %c512_143 = arith.constant 512 : index
    %300 = vector.load %arg2[%c11_141, %c0_142, %c512_143] : memref<24x2x1366xbf16, #tpu.memory_space<vmem>>, vector<1x2x512xbf16>
    %301 = vector.shape_cast %300 : vector<1x2x512xbf16> to vector<2x512xbf16>
    %302 = arith.extf %301 : vector<2x512xbf16> to vector<2x512xf32>
    %303 = vector.broadcast %11 : f32 to vector<2x512xf32>
    %304 = arith.mulf %302, %303 : vector<2x512xf32>
    %305 = arith.addf %293, %304 : vector<2x512xf32>
    %c23_144 = arith.constant 23 : index
    %c0_145 = arith.constant 0 : index
    %c512_146 = arith.constant 512 : index
    %306 = vector.load %arg2[%c23_144, %c0_145, %c512_146] : memref<24x2x1366xbf16, #tpu.memory_space<vmem>>, vector<1x2x512xbf16>
    %307 = vector.shape_cast %306 : vector<1x2x512xbf16> to vector<2x512xbf16>
    %308 = arith.extf %307 : vector<2x512xbf16> to vector<2x512xf32>
    %309 = vector.broadcast %23 : f32 to vector<2x512xf32>
    %310 = arith.mulf %308, %309 : vector<2x512xf32>
    %311 = arith.addf %299, %310 : vector<2x512xf32>
    %312 = arith.truncf %305 : vector<2x512xf32> to vector<2x512xbf16>
    %c0_147 = arith.constant 0 : index
    %c512_148 = arith.constant 512 : index
    %313 = vector.load %arg9[%c0_147, %c512_148] : memref<2x1366xbf16, #tpu.memory_space<vmem>>, vector<2x512xbf16>
    tpu.vector_store %arg9[%c0_147, %c512_148], %312 {strides = array<i32>} : memref<2x1366xbf16, #tpu.memory_space<vmem>>, vector<2x512xbf16>,
    %314 = arith.truncf %311 : vector<2x512xf32> to vector<2x512xbf16>
    %c0_149 = arith.constant 0 : index
    %c512_150 = arith.constant 512 : index
    %315 = vector.load %arg10[%c0_149, %c512_150] : memref<2x1366xbf16, #tpu.memory_space<vmem>>, vector<2x512xbf16>
    tpu.vector_store %arg10[%c0_149, %c512_150], %314 {strides = array<i32>} : memref<2x1366xbf16, #tpu.memory_space<vmem>>, vector<2x512xbf16>,
    %c0_151 = arith.constant 0 : index
    %c0_152 = arith.constant 0 : index
    %c1024 = arith.constant 1024 : index
    %316 = vector.load %arg2[%c0_151, %c0_152, %c1024] : memref<24x2x1366xbf16, #tpu.memory_space<vmem>>, vector<1x2x342xbf16>
    %317 = vector.shape_cast %316 : vector<1x2x342xbf16> to vector<2x342xbf16>
    %318 = arith.extf %317 : vector<2x342xbf16> to vector<2x342xf32>
    %319 = vector.broadcast %0 : f32 to vector<2x342xf32>
    %320 = arith.mulf %318, %319 : vector<2x342xf32>
    %c12_153 = arith.constant 12 : index
    %c0_154 = arith.constant 0 : index
    %c1024_155 = arith.constant 1024 : index
    %321 = vector.load %arg2[%c12_153, %c0_154, %c1024_155] : memref<24x2x1366xbf16, #tpu.memory_space<vmem>>, vector<1x2x342xbf16>
    %322 = vector.shape_cast %321 : vector<1x2x342xbf16> to vector<2x342xbf16>
    %323 = arith.extf %322 : vector<2x342xbf16> to vector<2x342xf32>
    %324 = vector.broadcast %12 : f32 to vector<2x342xf32>
    %325 = arith.mulf %323, %324 : vector<2x342xf32>
    %c1_156 = arith.constant 1 : index
    %c0_157 = arith.constant 0 : index
    %c1024_158 = arith.constant 1024 : index
    %326 = vector.load %arg2[%c1_156, %c0_157, %c1024_158] : memref<24x2x1366xbf16, #tpu.memory_space<vmem>>, vector<1x2x342xbf16>
    %327 = vector.shape_cast %326 : vector<1x2x342xbf16> to vector<2x342xbf16>
    %328 = arith.extf %327 : vector<2x342xbf16> to vector<2x342xf32>
    %329 = vector.broadcast %1 : f32 to vector<2x342xf32>
    %330 = arith.mulf %328, %329 : vector<2x342xf32>
    %331 = arith.addf %320, %330 : vector<2x342xf32>
    %c13_159 = arith.constant 13 : index
    %c0_160 = arith.constant 0 : index
    %c1024_161 = arith.constant 1024 : index
    %332 = vector.load %arg2[%c13_159, %c0_160, %c1024_161] : memref<24x2x1366xbf16, #tpu.memory_space<vmem>>, vector<1x2x342xbf16>
    %333 = vector.shape_cast %332 : vector<1x2x342xbf16> to vector<2x342xbf16>
    %334 = arith.extf %333 : vector<2x342xbf16> to vector<2x342xf32>
    %335 = vector.broadcast %13 : f32 to vector<2x342xf32>
    %336 = arith.mulf %334, %335 : vector<2x342xf32>
    %337 = arith.addf %325, %336 : vector<2x342xf32>
    %c2_162 = arith.constant 2 : index
    %c0_163 = arith.constant 0 : index
    %c1024_164 = arith.constant 1024 : index
    %338 = vector.load %arg2[%c2_162, %c0_163, %c1024_164] : memref<24x2x1366xbf16, #tpu.memory_space<vmem>>, vector<1x2x342xbf16>
    %339 = vector.shape_cast %338 : vector<1x2x342xbf16> to vector<2x342xbf16>
    %340 = arith.extf %339 : vector<2x342xbf16> to vector<2x342xf32>
    %341 = vector.broadcast %2 : f32 to vector<2x342xf32>
    %342 = arith.mulf %340, %341 : vector<2x342xf32>
    %343 = arith.addf %331, %342 : vector<2x342xf32>
    %c14_165 = arith.constant 14 : index
    %c0_166 = arith.constant 0 : index
    %c1024_167 = arith.constant 1024 : index
    %344 = vector.load %arg2[%c14_165, %c0_166, %c1024_167] : memref<24x2x1366xbf16, #tpu.memory_space<vmem>>, vector<1x2x342xbf16>
    %345 = vector.shape_cast %344 : vector<1x2x342xbf16> to vector<2x342xbf16>
    %346 = arith.extf %345 : vector<2x342xbf16> to vector<2x342xf32>
    %347 = vector.broadcast %14 : f32 to vector<2x342xf32>
    %348 = arith.mulf %346, %347 : vector<2x342xf32>
    %349 = arith.addf %337, %348 : vector<2x342xf32>
    %c3_168 = arith.constant 3 : index
    %c0_169 = arith.constant 0 : index
    %c1024_170 = arith.constant 1024 : index
    %350 = vector.load %arg2[%c3_168, %c0_169, %c1024_170] : memref<24x2x1366xbf16, #tpu.memory_space<vmem>>, vector<1x2x342xbf16>
    %351 = vector.shape_cast %350 : vector<1x2x342xbf16> to vector<2x342xbf16>
    %352 = arith.extf %351 : vector<2x342xbf16> to vector<2x342xf32>
    %353 = vector.broadcast %3 : f32 to vector<2x342xf32>
    %354 = arith.mulf %352, %353 : vector<2x342xf32>
    %355 = arith.addf %343, %354 : vector<2x342xf32>
    %c15_171 = arith.constant 15 : index
    %c0_172 = arith.constant 0 : index
    %c1024_173 = arith.constant 1024 : index
    %356 = vector.load %arg2[%c15_171, %c0_172, %c1024_173] : memref<24x2x1366xbf16, #tpu.memory_space<vmem>>, vector<1x2x342xbf16>
    %357 = vector.shape_cast %356 : vector<1x2x342xbf16> to vector<2x342xbf16>
    %358 = arith.extf %357 : vector<2x342xbf16> to vector<2x342xf32>
    %359 = vector.broadcast %15 : f32 to vector<2x342xf32>
    %360 = arith.mulf %358, %359 : vector<2x342xf32>
    %361 = arith.addf %349, %360 : vector<2x342xf32>
    %c4_174 = arith.constant 4 : index
    %c0_175 = arith.constant 0 : index
    %c1024_176 = arith.constant 1024 : index
    %362 = vector.load %arg2[%c4_174, %c0_175, %c1024_176] : memref<24x2x1366xbf16, #tpu.memory_space<vmem>>, vector<1x2x342xbf16>
    %363 = vector.shape_cast %362 : vector<1x2x342xbf16> to vector<2x342xbf16>
    %364 = arith.extf %363 : vector<2x342xbf16> to vector<2x342xf32>
    %365 = vector.broadcast %4 : f32 to vector<2x342xf32>
    %366 = arith.mulf %364, %365 : vector<2x342xf32>
    %367 = arith.addf %355, %366 : vector<2x342xf32>
    %c16_177 = arith.constant 16 : index
    %c0_178 = arith.constant 0 : index
    %c1024_179 = arith.constant 1024 : index
    %368 = vector.load %arg2[%c16_177, %c0_178, %c1024_179] : memref<24x2x1366xbf16, #tpu.memory_space<vmem>>, vector<1x2x342xbf16>
    %369 = vector.shape_cast %368 : vector<1x2x342xbf16> to vector<2x342xbf16>
    %370 = arith.extf %369 : vector<2x342xbf16> to vector<2x342xf32>
    %371 = vector.broadcast %16 : f32 to vector<2x342xf32>
    %372 = arith.mulf %370, %371 : vector<2x342xf32>
    %373 = arith.addf %361, %372 : vector<2x342xf32>
    %c5_180 = arith.constant 5 : index
    %c0_181 = arith.constant 0 : index
    %c1024_182 = arith.constant 1024 : index
    %374 = vector.load %arg2[%c5_180, %c0_181, %c1024_182] : memref<24x2x1366xbf16, #tpu.memory_space<vmem>>, vector<1x2x342xbf16>
    %375 = vector.shape_cast %374 : vector<1x2x342xbf16> to vector<2x342xbf16>
    %376 = arith.extf %375 : vector<2x342xbf16> to vector<2x342xf32>
    %377 = vector.broadcast %5 : f32 to vector<2x342xf32>
    %378 = arith.mulf %376, %377 : vector<2x342xf32>
    %379 = arith.addf %367, %378 : vector<2x342xf32>
    %c17_183 = arith.constant 17 : index
    %c0_184 = arith.constant 0 : index
    %c1024_185 = arith.constant 1024 : index
    %380 = vector.load %arg2[%c17_183, %c0_184, %c1024_185] : memref<24x2x1366xbf16, #tpu.memory_space<vmem>>, vector<1x2x342xbf16>
    %381 = vector.shape_cast %380 : vector<1x2x342xbf16> to vector<2x342xbf16>
    %382 = arith.extf %381 : vector<2x342xbf16> to vector<2x342xf32>
    %383 = vector.broadcast %17 : f32 to vector<2x342xf32>
    %384 = arith.mulf %382, %383 : vector<2x342xf32>
    %385 = arith.addf %373, %384 : vector<2x342xf32>
    %c6_186 = arith.constant 6 : index
    %c0_187 = arith.constant 0 : index
    %c1024_188 = arith.constant 1024 : index
    %386 = vector.load %arg2[%c6_186, %c0_187, %c1024_188] : memref<24x2x1366xbf16, #tpu.memory_space<vmem>>, vector<1x2x342xbf16>
    %387 = vector.shape_cast %386 : vector<1x2x342xbf16> to vector<2x342xbf16>
    %388 = arith.extf %387 : vector<2x342xbf16> to vector<2x342xf32>
    %389 = vector.broadcast %6 : f32 to vector<2x342xf32>
    %390 = arith.mulf %388, %389 : vector<2x342xf32>
    %391 = arith.addf %379, %390 : vector<2x342xf32>
    %c18_189 = arith.constant 18 : index
    %c0_190 = arith.constant 0 : index
    %c1024_191 = arith.constant 1024 : index
    %392 = vector.load %arg2[%c18_189, %c0_190, %c1024_191] : memref<24x2x1366xbf16, #tpu.memory_space<vmem>>, vector<1x2x342xbf16>
    %393 = vector.shape_cast %392 : vector<1x2x342xbf16> to vector<2x342xbf16>
    %394 = arith.extf %393 : vector<2x342xbf16> to vector<2x342xf32>
    %395 = vector.broadcast %18 : f32 to vector<2x342xf32>
    %396 = arith.mulf %394, %395 : vector<2x342xf32>
    %397 = arith.addf %385, %396 : vector<2x342xf32>
    %c7_192 = arith.constant 7 : index
    %c0_193 = arith.constant 0 : index
    %c1024_194 = arith.constant 1024 : index
    %398 = vector.load %arg2[%c7_192, %c0_193, %c1024_194] : memref<24x2x1366xbf16, #tpu.memory_space<vmem>>, vector<1x2x342xbf16>
    %399 = vector.shape_cast %398 : vector<1x2x342xbf16> to vector<2x342xbf16>
    %400 = arith.extf %399 : vector<2x342xbf16> to vector<2x342xf32>
    %401 = vector.broadcast %7 : f32 to vector<2x342xf32>
    %402 = arith.mulf %400, %401 : vector<2x342xf32>
    %403 = arith.addf %391, %402 : vector<2x342xf32>
    %c19_195 = arith.constant 19 : index
    %c0_196 = arith.constant 0 : index
    %c1024_197 = arith.constant 1024 : index
    %404 = vector.load %arg2[%c19_195, %c0_196, %c1024_197] : memref<24x2x1366xbf16, #tpu.memory_space<vmem>>, vector<1x2x342xbf16>
    %405 = vector.shape_cast %404 : vector<1x2x342xbf16> to vector<2x342xbf16>
    %406 = arith.extf %405 : vector<2x342xbf16> to vector<2x342xf32>
    %407 = vector.broadcast %19 : f32 to vector<2x342xf32>
    %408 = arith.mulf %406, %407 : vector<2x342xf32>
    %409 = arith.addf %397, %408 : vector<2x342xf32>
    %c8_198 = arith.constant 8 : index
    %c0_199 = arith.constant 0 : index
    %c1024_200 = arith.constant 1024 : index
    %410 = vector.load %arg2[%c8_198, %c0_199, %c1024_200] : memref<24x2x1366xbf16, #tpu.memory_space<vmem>>, vector<1x2x342xbf16>
    %411 = vector.shape_cast %410 : vector<1x2x342xbf16> to vector<2x342xbf16>
    %412 = arith.extf %411 : vector<2x342xbf16> to vector<2x342xf32>
    %413 = vector.broadcast %8 : f32 to vector<2x342xf32>
    %414 = arith.mulf %412, %413 : vector<2x342xf32>
    %415 = arith.addf %403, %414 : vector<2x342xf32>
    %c20_201 = arith.constant 20 : index
    %c0_202 = arith.constant 0 : index
    %c1024_203 = arith.constant 1024 : index
    %416 = vector.load %arg2[%c20_201, %c0_202, %c1024_203] : memref<24x2x1366xbf16, #tpu.memory_space<vmem>>, vector<1x2x342xbf16>
    %417 = vector.shape_cast %416 : vector<1x2x342xbf16> to vector<2x342xbf16>
    %418 = arith.extf %417 : vector<2x342xbf16> to vector<2x342xf32>
    %419 = vector.broadcast %20 : f32 to vector<2x342xf32>
    %420 = arith.mulf %418, %419 : vector<2x342xf32>
    %421 = arith.addf %409, %420 : vector<2x342xf32>
    %c9_204 = arith.constant 9 : index
    %c0_205 = arith.constant 0 : index
    %c1024_206 = arith.constant 1024 : index
    %422 = vector.load %arg2[%c9_204, %c0_205, %c1024_206] : memref<24x2x1366xbf16, #tpu.memory_space<vmem>>, vector<1x2x342xbf16>
    %423 = vector.shape_cast %422 : vector<1x2x342xbf16> to vector<2x342xbf16>
    %424 = arith.extf %423 : vector<2x342xbf16> to vector<2x342xf32>
    %425 = vector.broadcast %9 : f32 to vector<2x342xf32>
    %426 = arith.mulf %424, %425 : vector<2x342xf32>
    %427 = arith.addf %415, %426 : vector<2x342xf32>
    %c21_207 = arith.constant 21 : index
    %c0_208 = arith.constant 0 : index
    %c1024_209 = arith.constant 1024 : index
    %428 = vector.load %arg2[%c21_207, %c0_208, %c1024_209] : memref<24x2x1366xbf16, #tpu.memory_space<vmem>>, vector<1x2x342xbf16>
    %429 = vector.shape_cast %428 : vector<1x2x342xbf16> to vector<2x342xbf16>
    %430 = arith.extf %429 : vector<2x342xbf16> to vector<2x342xf32>
    %431 = vector.broadcast %21 : f32 to vector<2x342xf32>
    %432 = arith.mulf %430, %431 : vector<2x342xf32>
    %433 = arith.addf %421, %432 : vector<2x342xf32>
    %c10_210 = arith.constant 10 : index
    %c0_211 = arith.constant 0 : index
    %c1024_212 = arith.constant 1024 : index
    %434 = vector.load %arg2[%c10_210, %c0_211, %c1024_212] : memref<24x2x1366xbf16, #tpu.memory_space<vmem>>, vector<1x2x342xbf16>
    %435 = vector.shape_cast %434 : vector<1x2x342xbf16> to vector<2x342xbf16>
    %436 = arith.extf %435 : vector<2x342xbf16> to vector<2x342xf32>
    %437 = vector.broadcast %10 : f32 to vector<2x342xf32>
    %438 = arith.mulf %436, %437 : vector<2x342xf32>
    %439 = arith.addf %427, %438 : vector<2x342xf32>
    %c22_213 = arith.constant 22 : index
    %c0_214 = arith.constant 0 : index
    %c1024_215 = arith.constant 1024 : index
    %440 = vector.load %arg2[%c22_213, %c0_214, %c1024_215] : memref<24x2x1366xbf16, #tpu.memory_space<vmem>>, vector<1x2x342xbf16>
    %441 = vector.shape_cast %440 : vector<1x2x342xbf16> to vector<2x342xbf16>
    %442 = arith.extf %441 : vector<2x342xbf16> to vector<2x342xf32>
    %443 = vector.broadcast %22 : f32 to vector<2x342xf32>
    %444 = arith.mulf %442, %443 : vector<2x342xf32>
    %445 = arith.addf %433, %444 : vector<2x342xf32>
    %c11_216 = arith.constant 11 : index
    %c0_217 = arith.constant 0 : index
    %c1024_218 = arith.constant 1024 : index
    %446 = vector.load %arg2[%c11_216, %c0_217, %c1024_218] : memref<24x2x1366xbf16, #tpu.memory_space<vmem>>, vector<1x2x342xbf16>
    %447 = vector.shape_cast %446 : vector<1x2x342xbf16> to vector<2x342xbf16>
    %448 = arith.extf %447 : vector<2x342xbf16> to vector<2x342xf32>
    %449 = vector.broadcast %11 : f32 to vector<2x342xf32>
    %450 = arith.mulf %448, %449 : vector<2x342xf32>
    %451 = arith.addf %439, %450 : vector<2x342xf32>
    %c23_219 = arith.constant 23 : index
    %c0_220 = arith.constant 0 : index
    %c1024_221 = arith.constant 1024 : index
    %452 = vector.load %arg2[%c23_219, %c0_220, %c1024_221] : memref<24x2x1366xbf16, #tpu.memory_space<vmem>>, vector<1x2x342xbf16>
    %453 = vector.shape_cast %452 : vector<1x2x342xbf16> to vector<2x342xbf16>
    %454 = arith.extf %453 : vector<2x342xbf16> to vector<2x342xf32>
    %455 = vector.broadcast %23 : f32 to vector<2x342xf32>
    %456 = arith.mulf %454, %455 : vector<2x342xf32>
    %457 = arith.addf %445, %456 : vector<2x342xf32>
    %458 = arith.truncf %451 : vector<2x342xf32> to vector<2x342xbf16>
    %c0_222 = arith.constant 0 : index
    %c1024_223 = arith.constant 1024 : index
    %459 = vector.load %arg9[%c0_222, %c1024_223] : memref<2x1366xbf16, #tpu.memory_space<vmem>>, vector<2x342xbf16>
    tpu.vector_store %arg9[%c0_222, %c1024_223], %458 {strides = array<i32>} : memref<2x1366xbf16, #tpu.memory_space<vmem>>, vector<2x342xbf16>,
    %460 = arith.truncf %457 : vector<2x342xf32> to vector<2x342xbf16>
    %c0_224 = arith.constant 0 : index
    %c1024_225 = arith.constant 1024 : index
    %461 = vector.load %arg10[%c0_224, %c1024_225] : memref<2x1366xbf16, #tpu.memory_space<vmem>>, vector<2x342xbf16>
    tpu.vector_store %arg10[%c0_224, %c1024_225], %460 {strides = array<i32>} : memref<2x1366xbf16, #tpu.memory_space<vmem>>, vector<2x342xbf16>,
    %c0_226 = arith.constant 0 : index
    %c0_227 = arith.constant 0 : index
    %462 = vector.load %arg9[%c0_226, %c0_227] : memref<2x1366xbf16, #tpu.memory_space<vmem>>, vector<2x1366xbf16>
    %c0_228 = arith.constant 0 : index
    %c0_229 = arith.constant 0 : index
    %463 = vector.load %arg3[%c0_228, %c0_229] : memref<1366x256xbf16, #tpu.memory_space<vmem>>, vector<1366x256xbf16>
    %cst = arith.constant dense<0.000000e+00> : vector<2x256xf32>
    %464 = tpu.matmul %462, %463, %cst {dimension_numbers = #tpu.dot_dimension_numbers<[1], [0], [0], [1], [0, 0, 1, 1], [], []>} : vector<2x1366xbf16>, vector<1366x256xbf16>, vector<2x256xf32> -> vector<2x256xf32>
    %c0_230 = arith.constant 0 : index
    %c0_231 = arith.constant 0 : index
    %465 = vector.load %arg10[%c0_230, %c0_231] : memref<2x1366xbf16, #tpu.memory_space<vmem>>, vector<2x1366xbf16>
    %c0_232 = arith.constant 0 : index
    %c0_233 = arith.constant 0 : index
    %466 = vector.load %arg4[%c0_232, %c0_233] : memref<1366x256xbf16, #tpu.memory_space<vmem>>, vector<1366x256xbf16>
    %cst_234 = arith.constant dense<0.000000e+00> : vector<2x256xf32>
    %467 = tpu.matmul %465, %466, %cst_234 {dimension_numbers = #tpu.dot_dimension_numbers<[1], [0], [0], [1], [0, 0, 1, 1], [], []>} : vector<2x1366xbf16>, vector<1366x256xbf16>, vector<2x256xf32> -> vector<2x256xf32>
    %468 = arith.addf %464, %467 : vector<2x256xf32>
    %c0_235 = arith.constant 0 : index
    %c0_236 = arith.constant 0 : index
    %469 = vector.load %arg5[%c0_235, %c0_236] : memref<1x256xf32, #tpu.memory_space<vmem>>, vector<1x256xf32>
    %470 = vector.broadcast %469 : vector<1x256xf32> to vector<2x256xf32>
    %471 = arith.addf %468, %470 : vector<2x256xf32>
    %472 = arith.truncf %471 : vector<2x256xf32> to vector<2x256xbf16>
    %c0_237 = arith.constant 0 : index
    %c0_238 = arith.constant 0 : index
    %473 = vector.load %arg6[%c0_237, %c0_238] : memref<256x128xbf16, #tpu.memory_space<vmem>>, vector<256x128xbf16>
    %cst_239 = arith.constant dense<0.000000e+00> : vector<2x128xf32>
    %474 = tpu.matmul %472, %473, %cst_239 {dimension_numbers = #tpu.dot_dimension_numbers<[1], [0], [0], [1], [0, 0, 1, 1], [], []>} : vector<2x256xbf16>, vector<256x128xbf16>, vector<2x128xf32> -> vector<2x128xf32>
    %c0_240 = arith.constant 0 : index
    %c0_241 = arith.constant 0 : index
    %475 = vector.load %arg7[%c0_240, %c0_241] : memref<1x128xf32, #tpu.memory_space<vmem>>, vector<1x128xf32>
    %476 = vector.broadcast %475 : vector<1x128xf32> to vector<2x128xf32>
    %477 = arith.addf %474, %476 : vector<2x128xf32>
    %c0_242 = arith.constant 0 : index
    %c0_243 = arith.constant 0 : index
    %478 = vector.load %arg8[%c0_242, %c0_243] : memref<2x128xf32, #tpu.memory_space<vmem>>, vector<2x128xf32>
    tpu.vector_store %arg8[%c0_242, %c0_243], %477 {strides = array<i32>} : memref<2x128xf32, #tpu.memory_space<vmem>>, vector<2x128xf32>,
    return
  }
  func.func @transform_0(%arg0: i32) -> i32 {
    %c0_i32 = arith.constant 0 : i32
    %c0_i32_0 = arith.constant 0 : i32
    return %c0_i32 : i32
  }
  func.func @transform_1(%arg0: i32) -> (i32, i32, i32) {
    %c0_i32 = arith.constant 0 : i32
    %c0_i32_0 = arith.constant 0 : i32
    %c0_i32_1 = arith.constant 0 : i32
    return %c0_i32, %arg0, %c0_i32_0 : i32, i32, i32
  }
  func.func @transform_2(%arg0: i32) -> (i32, i32) {
    %c0_i32 = arith.constant 0 : i32
    %c0_i32_0 = arith.constant 0 : i32
    %c0_i32_1 = arith.constant 0 : i32
    return %c0_i32, %c0_i32_0 : i32, i32
  }
  func.func @transform_3(%arg0: i32) -> (i32, i32) {
    %c0_i32 = arith.constant 0 : i32
    %c0_i32_0 = arith.constant 0 : i32
    %c0_i32_1 = arith.constant 0 : i32
    return %c0_i32, %c0_i32_0 : i32, i32
  }
  func.func @transform_4(%arg0: i32) -> (i32, i32) {
    %c0_i32 = arith.constant 0 : i32
    %c0_i32_0 = arith.constant 0 : i32
    %c0_i32_1 = arith.constant 0 : i32
    return %c0_i32, %c0_i32_0 : i32, i32
  }
  func.func @transform_5(%arg0: i32) -> (i32, i32) {
    %c0_i32 = arith.constant 0 : i32
    %c0_i32_0 = arith.constant 0 : i32
    %c0_i32_1 = arith.constant 0 : i32
    return %c0_i32, %c0_i32_0 : i32, i32
  }
  func.func @transform_6(%arg0: i32) -> (i32, i32) {
    %c0_i32 = arith.constant 0 : i32
    %c0_i32_0 = arith.constant 0 : i32
    %c0_i32_1 = arith.constant 0 : i32
    return %c0_i32, %c0_i32_0 : i32, i32
  }
  func.func @transform_7(%arg0: i32) -> (i32, i32) {
    %c0_i32 = arith.constant 0 : i32
    %c0_i32_0 = arith.constant 0 : i32
    return %arg0, %c0_i32 : i32, i32
  }
}

</mosaic_0001>

<llo_original>
// kernel: _forward_impl.1
$region0: #{_forward_impl.1}
  #allocation0 [shape = 'u32[]', space=smem, size = 0x4, offset = 0x4, fixed_abs, tag = 'smem constant byte address 0x4 - core index']
  #allocation1 [shape = 'u32[72,128]{1,0:T(1,128)}', space=vmem, size = 0x9000, scoped, tag = 'internal scratch']
  #allocation2 [shape = 'bf16[2,1366]{1,0:T(2,128)(2,1)}', space=vmem, size = 0x1600, scoped, tag = 'scratch operand']
  #allocation3 [shape = 'bf16[2,1366]{1,0:T(2,128)(2,1)}', space=vmem, size = 0x1600, scoped, tag = 'scratch operand']
  %s0 = inlined_call_operand.vmem [shape: f32[24], index: 0, kind: input, shape index: {}]
  %s1 = inlined_call_operand.vmem [shape: bf16[24,2,1366], index: 1, kind: input, shape index: {}]
  %s2 = inlined_call_operand.hbm [shape: bf16[1366,256], index: 2, kind: input, shape index: {}]
  %s3 = inlined_call_operand.hbm [shape: bf16[1366,256], index: 3, kind: input, shape index: {}]
  %s4 = inlined_call_operand.vmem [shape: f32[1,256], index: 4, kind: input, shape index: {}]
  %s5 = inlined_call_operand.vmem [shape: bf16[256,128], index: 5, kind: input, shape index: {}]
  %s6 = inlined_call_operand.vmem [shape: f32[1,128], index: 6, kind: input, shape index: {}]
  %s7 = inlined_call_operand.hbm [shape: f32[2,128], index: 7, kind: output, shape index: {}]
  %s8 = sld [smem:[#allocation0]]
  $region50: #{_forward_impl.1} parent=0
    _
  %s10 = ssub.s32 1, %s8
  %s11 = scalar_select 0, %s10, %s8
  $region1: #{_forward_impl.1} parent=0
    #allocation4 [shape = 'u8[512]{0}', space=smem, size = 0x200, scoped, tag = 'input window, operand 0, single buffered']
    #allocation5 [shape = 's32[1]{0}', space=sflag, size = 0x4, scoped, tag = 'scoped memory for _forward_impl.1']
    #allocation6 [shape = 's32[1]{0}', space=sflag, size = 0x4, scoped, tag = 'scoped memory for _forward_impl.1']
    #allocation7 [shape = 's32[1]{0}', space=sflag, size = 0x4, scoped, tag = 'scoped memory for _forward_impl.1']
    #allocation8 [shape = 'u8[700416]{0}', space=vmem, size = 0xab000, scoped, tag = 'input window, operand 2, single buffered']
    #allocation9 [shape = 'u8[700416]{0}', space=vmem, size = 0xab000, scoped, tag = 'input window, operand 3, single buffered']
    #allocation10 [shape = 's32[1]{0}', space=sflag, size = 0x4, scoped, tag = 'scoped memory for _forward_impl.1']
    #allocation11 [shape = 'u8[1024]{0}', space=vmem, size = 0x400, scoped, tag = 'output window, operand 0, single buffered']
    %12 = vsyncpa [#allocation7], 0
    %13 = vsyncpa [#allocation5], 0
    %14 = vsyncpa [#allocation10], 0
    %15 = vsyncpa [#allocation6], 0
    // Predicated region
    $region2: #{_forward_impl.1} parent=1 // pred_check
      _
    $region3: #{_forward_impl.1} parent=1 // pred_check_branch
      %17 = sbr.rel (0) target = $region5
    $region4: #{_forward_impl.1} parent=1 // pred_region
      %19 = vsyncadd [#allocation7], 0
      %s21 = sshll.u32 %s0, 4
      %s22 = int_to_ptr.vmem [resolvable:$true] %s21
      %24 = dma.vmem_to_smem %s22, 16, [#allocation4], [#allocation7]
    $region5: #{_forward_impl.1} parent=1 // pred_fallthru
      _
    // Predicated region
    $region6: #{_forward_impl.1} parent=1 // pred_check
      _
    $region7: #{_forward_impl.1} parent=1 // pred_check_branch
      %26 = sbr.rel (0) target = $region9
    $region8: #{_forward_impl.1} parent=1 // pred_region
      _
    $region9: #{_forward_impl.1} parent=1 // pred_fallthru
      _
    // Predicated region
    $region10: #{_forward_impl.1} parent=1 // pred_check
      _
    $region11: #{_forward_impl.1} parent=1 // pred_check_branch
      %28 = sbr.rel (0) target = $region13
    $region12: #{_forward_impl.1} parent=1 // pred_region
      %30 = vsyncadd [#allocation5], 0
      %s31 = sshll.u32 %s2, 4
      %s32 = int_to_ptr.hbm [resolvable:$true] %s31
      %s33 = sshll.u32 [#allocation8], 4
      %s34 = int_to_ptr.vmem [resolvable:$true] %s33
      %39 = dma.hbm_to_vmem [thread:$0]  %s32, 21888, %s34, [#allocation5], 128, 128, 8
    $region13: #{_forward_impl.1} parent=1 // pred_fallthru
      _
    // Predicated region
    $region14: #{_forward_impl.1} parent=1 // pred_check
      _
    $region15: #{_forward_impl.1} parent=1 // pred_check_branch
      %41 = sbr.rel (0) target = $region17
    $region16: #{_forward_impl.1} parent=1 // pred_region
      %43 = vsyncadd [#allocation10], 0
      %s44 = sshll.u32 %s3, 4
      %s45 = int_to_ptr.hbm [resolvable:$true] %s44
      %s46 = sshll.u32 [#allocation9], 4
      %s47 = int_to_ptr.vmem [resolvable:$true] %s46
      %52 = dma.hbm_to_vmem [thread:$0]  %s45, 21888, %s47, [#allocation10], 128, 128, 8
    $region17: #{_forward_impl.1} parent=1 // pred_fallthru
      _
    // Predicated region
    $region18: #{_forward_impl.1} parent=1 // pred_check
      _
    $region19: #{_forward_impl.1} parent=1 // pred_check_branch
      %54 = sbr.rel (0) target = $region21
    $region20: #{_forward_impl.1} parent=1 // pred_region
      _
    $region21: #{_forward_impl.1} parent=1 // pred_fallthru
      _
    // Predicated region
    $region22: #{_forward_impl.1} parent=1 // pred_check
      _
    $region23: #{_forward_impl.1} parent=1 // pred_check_branch
      %56 = sbr.rel (0) target = $region25
    $region24: #{_forward_impl.1} parent=1 // pred_region
      _
    $region25: #{_forward_impl.1} parent=1 // pred_fallthru
      _
    // Predicated region
    $region26: #{_forward_impl.1} parent=1 // pred_check
      _
    $region27: #{_forward_impl.1} parent=1 // pred_check_branch
      %58 = sbr.rel (0) target = $region29
    $region28: #{_forward_impl.1} parent=1 // pred_region
      _
    $region29: #{_forward_impl.1} parent=1 // pred_fallthru
      _
    // Predicated region
    $region30: #{_forward_impl.1} parent=1 // pred_check
      _
    $region31: #{_forward_impl.1} parent=1 // pred_check_branch
      %60 = sbr.rel (0) target = $region33
    $region32: #{_forward_impl.1} parent=1 // pred_region
      %62 = dma.done [#allocation7], 16
    $region33: #{_forward_impl.1} parent=1 // pred_fallthru
      _
    // Predicated region
    $region34: #{_forward_impl.1} parent=1 // pred_check
      _
    $region35: #{_forward_impl.1} parent=1 // pred_check_branch
      %64 = sbr.rel (0) target = $region37
    $region36: #{_forward_impl.1} parent=1 // pred_region
      %66 = dma.done [#allocation5], 21888
    $region37: #{_forward_impl.1} parent=1 // pred_fallthru
      _
    // Predicated region
    $region38: #{_forward_impl.1} parent=1 // pred_check
      _
    $region39: #{_forward_impl.1} parent=1 // pred_check_branch
      %68 = sbr.rel (0) target = $region41
    $region40: #{_forward_impl.1} parent=1 // pred_region
      %70 = dma.done [#allocation10], 21888
    $region41: #{_forward_impl.1} parent=1 // pred_fallthru
      _
    %71 = sfence
    %s73 = sld [smem:[#allocation4]]
    %s74 = sld [smem:[#allocation4 + $0x1]]
    %s75 = sld [smem:[#allocation4 + $0x2]]
    %s76 = sld [smem:[#allocation4 + $0x3]]
    %s77 = sld [smem:[#allocation4 + $0x4]]
    %s78 = sld [smem:[#allocation4 + $0x5]]
    %s79 = sld [smem:[#allocation4 + $0x6]]
    %s80 = sld [smem:[#allocation4 + $0x7]]
    %s81 = sld [smem:[#allocation4 + $0x8]]
    %s82 = sld [smem:[#allocation4 + $0x9]]
    %s83 = sld [smem:[#allocation4 + $0xa]]
    %s84 = sld [smem:[#allocation4 + $0xb]]
    %s85 = sld [smem:[#allocation4 + $0xc]]
    %s86 = sld [smem:[#allocation4 + $0xd]]
    %s87 = sld [smem:[#allocation4 + $0xe]]
    %s88 = sld [smem:[#allocation4 + $0xf]]
    %s89 = sld [smem:[#allocation4 + $0x10]]
    %s90 = sld [smem:[#allocation4 + $0x11]]
    %s91 = sld [smem:[#allocation4 + $0x12]]
    %s92 = sld [smem:[#allocation4 + $0x13]]
    %s93 = sld [smem:[#allocation4 + $0x14]]
    %s94 = sld [smem:[#allocation4 + $0x15]]
    %s95 = sld [smem:[#allocation4 + $0x16]]
    %s96 = sld [smem:[#allocation4 + $0x17]]
    %v97 = vld [vmem:[%s1] sm:$0xf]
    %v98 = vunpack.c.l.bf16 %v97
    %v99 = vstv %s73
    %v100 = vmul.f32 %v98, %v99
    %s101 = scalar_lea.vmem %s1, 132
    %v102 = vld [vmem:[%s101] sm:$0xf]
    %v103 = vunpack.c.l.bf16 %v102
    %v104 = vstv %s85
    %v105 = vmul.f32 %v103, %v104
    %s106 = scalar_lea.vmem %s1, 11
    %v107 = vld [vmem:[%s106] sm:$0xf]
    %v108 = vunpack.c.l.bf16 %v107
    %v109 = vstv %s74
    %v110 = vmul.f32 %v108, %v109
    %v111 = vadd.f32 %v100, %v110
    %s112 = scalar_lea.vmem %s1, 143
    %v113 = vld [vmem:[%s112] sm:$0xf]
    %v114 = vunpack.c.l.bf16 %v113
    %v115 = vstv %s86
    %v116 = vmul.f32 %v114, %v115
    %v117 = vadd.f32 %v105, %v116
    %s118 = scalar_lea.vmem %s1, 22
    %v119 = vld [vmem:[%s118] sm:$0xf]
    %v120 = vunpack.c.l.bf16 %v119
    %v121 = vstv %s75
    %v122 = vmul.f32 %v120, %v121
    %v123 = vadd.f32 %v111, %v122
    %s124 = scalar_lea.vmem %s1, 154
    %v125 = vld [vmem:[%s124] sm:$0xf]
    %v126 = vunpack.c.l.bf16 %v125
    %v127 = vstv %s87
    %v128 = vmul.f32 %v126, %v127
    %v129 = vadd.f32 %v117, %v128
    %s130 = scalar_lea.vmem %s1, 33
    %v131 = vld [vmem:[%s130] sm:$0xf]
    %v132 = vunpack.c.l.bf16 %v131
    %v133 = vstv %s76
    %v134 = vmul.f32 %v132, %v133
    %v135 = vadd.f32 %v123, %v134
    %s136 = scalar_lea.vmem %s1, 165
    %v137 = vld [vmem:[%s136] sm:$0xf]
    %v138 = vunpack.c.l.bf16 %v137
    %v139 = vstv %s88
    %v140 = vmul.f32 %v138, %v139
    %v141 = vadd.f32 %v129, %v140
    %s142 = scalar_lea.vmem %s1, 44
    %v143 = vld [vmem:[%s142] sm:$0xf]
    %v144 = vunpack.c.l.bf16 %v143
    %v145 = vstv %s77
    %v146 = vmul.f32 %v144, %v145
    %v147 = vadd.f32 %v135, %v146
    %s148 = scalar_lea.vmem %s1, 176
    %v149 = vld [vmem:[%s148] sm:$0xf]
    %v150 = vunpack.c.l.bf16 %v149
    %v151 = vstv %s89
    %v152 = vmul.f32 %v150, %v151
    %v153 = vadd.f32 %v141, %v152
    %s154 = scalar_lea.vmem %s1, 55
    %v155 = vld [vmem:[%s154] sm:$0xf]
    %v156 = vunpack.c.l.bf16 %v155
    %v157 = vstv %s78
    %v158 = vmul.f32 %v156, %v157
    %v159 = vadd.f32 %v147, %v158
    %s160 = scalar_lea.vmem %s1, 187
    %v161 = vld [vmem:[%s160] sm:$0xf]
    %v162 = vunpack.c.l.bf16 %v161
    %v163 = vstv %s90
    %v164 = vmul.f32 %v162, %v163
    %v165 = vadd.f32 %v153, %v164
    %s166 = scalar_lea.vmem %s1, 66
    %v167 = vld [vmem:[%s166] sm:$0xf]
    %v168 = vunpack.c.l.bf16 %v167
    %v169 = vstv %s79
    %v170 = vmul.f32 %v168, %v169
    %v171 = vadd.f32 %v159, %v170
    %s172 = scalar_lea.vmem %s1, 198
    %v173 = vld [vmem:[%s172] sm:$0xf]
    %v174 = vunpack.c.l.bf16 %v173
    %v175 = vstv %s91
    %v176 = vmul.f32 %v174, %v175
    %v177 = vadd.f32 %v165, %v176
    %s178 = scalar_lea.vmem %s1, 77
    %v179 = vld [vmem:[%s178] sm:$0xf]
    %v180 = vunpack.c.l.bf16 %v179
    %v181 = vstv %s80
    %v182 = vmul.f32 %v180, %v181
    %v183 = vadd.f32 %v171, %v182
    %s184 = scalar_lea.vmem %s1, 209
    %v185 = vld [vmem:[%s184] sm:$0xf]
    %v186 = vunpack.c.l.bf16 %v185
    %v187 = vstv %s92
    %v188 = vmul.f32 %v186, %v187
    %v189 = vadd.f32 %v177, %v188
    %s190 = scalar_lea.vmem %s1, 88
    %v191 = vld [vmem:[%s190] sm:$0xf]
    %v192 = vunpack.c.l.bf16 %v191
    %v193 = vstv %s81
    %v194 = vmul.f32 %v192, %v193
    %v195 = vadd.f32 %v183, %v194
    %s196 = scalar_lea.vmem %s1, 220
    %v197 = vld [vmem:[%s196] sm:$0xf]
    %v198 = vunpack.c.l.bf16 %v197
    %v199 = vstv %s93
    %v200 = vmul.f32 %v198, %v199
    %v201 = vadd.f32 %v189, %v200
    %s202 = scalar_lea.vmem %s1, 99
    %v203 = vld [vmem:[%s202] sm:$0xf]
    %v204 = vunpack.c.l.bf16 %v203
    %v205 = vstv %s82
    %v206 = vmul.f32 %v204, %v205
    %v207 = vadd.f32 %v195, %v206
    %s208 = scalar_lea.vmem %s1, 231
    %v209 = vld [vmem:[%s208] sm:$0xf]
    %v210 = vunpack.c.l.bf16 %v209
    %v211 = vstv %s94
    %v212 = vmul.f32 %v210, %v211
    %v213 = vadd.f32 %v201, %v212
    %s214 = scalar_lea.vmem %s1, 110
    %v215 = vld [vmem:[%s214] sm:$0xf]
    %v216 = vunpack.c.l.bf16 %v215
    %v217 = vstv %s83
    %v218 = vmul.f32 %v216, %v217
    %v219 = vadd.f32 %v207, %v218
    %s220 = scalar_lea.vmem %s1, 242
    %v221 = vld [vmem:[%s220] sm:$0xf]
    %v222 = vunpack.c.l.bf16 %v221
    %v223 = vstv %s95
    %v224 = vmul.f32 %v222, %v223
    %v225 = vadd.f32 %v213, %v224
    %s226 = scalar_lea.vmem %s1, 121
    %v227 = vld [vmem:[%s226] sm:$0xf]
    %v228 = vunpack.c.l.bf16 %v227
    %v229 = vstv %s84
    %v230 = vmul.f32 %v228, %v229
    %v231 = vadd.f32 %v219, %v230
    %s232 = scalar_lea.vmem %s1, 253
    %v233 = vld [vmem:[%s232] sm:$0xf]
    %v234 = vunpack.c.l.bf16 %v233
    %v235 = vstv %s96
    %v236 = vmul.f32 %v234, %v235
    %v237 = vadd.f32 %v225, %v236
    %239 = vst [vmem:[#allocation1] ss:$4 sm:$0xff] %v231
    %v240 = vld.sshfl [vmem:[#allocation1] sm:$0xff pattern:$0x73625140]
    %v241 = vld.sshfl [vmem:[#allocation1 + $0x8] sm:$0xff pattern:$0x73625140]
    %v242 = vld.sshfl [vmem:[#allocation1 + $0x10] sm:$0xff pattern:$0x73625140]
    %v243 = vld.sshfl [vmem:[#allocation1 + $0x18] sm:$0xff pattern:$0x73625140]
    %v248 = vpack.c.bf16 %v241, %v240
    %v249 = vpack.c.bf16 %v243, %v242
    %v252 = vrot.slane %v248, 3
    %v253 = vrot.slane %v249, 6
    %v254 = vrot.slane %v249, 1
    %vm255 = vcmask 1040384
    %v258 = vsel %vm255, %v248, %v252
    %vm259 = vcmask 1042434
    %v262 = vsel %vm259, %v253, %v254
    %vm263 = vcmask 1041408
    %v264 = vsel %vm263, %v258, %v262
    %266 = vst [vmem:[#allocation2] sm:$0xf] %v264
    %268 = vst [vmem:[#allocation1] ss:$4 sm:$0xff] %v237
    %v269 = vld.sshfl [vmem:[#allocation1] sm:$0xff pattern:$0x73625140]
    %v270 = vld.sshfl [vmem:[#allocation1 + $0x8] sm:$0xff pattern:$0x73625140]
    %v271 = vld.sshfl [vmem:[#allocation1 + $0x10] sm:$0xff pattern:$0x73625140]
    %v272 = vld.sshfl [vmem:[#allocation1 + $0x18] sm:$0xff pattern:$0x73625140]
    %v277 = vpack.c.bf16 %v270, %v269
    %v278 = vpack.c.bf16 %v272, %v271
    %v281 = vrot.slane %v277, 3
    %v282 = vrot.slane %v278, 6
    %v283 = vrot.slane %v278, 1
    %v286 = vsel %vm255, %v277, %v281
    %v289 = vsel %vm259, %v282, %v283
    %v290 = vsel %vm263, %v286, %v289
    %292 = vst [vmem:[#allocation3] sm:$0xf] %v290
    %v293 = vld [vmem:[%s1 + $0x4] sm:$0xf]
    %v294 = vunpack.c.l.bf16 %v293
    %v295 = vmul.f32 %v294, %v99
    %v296 = vld [vmem:[%s101 + $0x4] sm:$0xf]
    %v297 = vunpack.c.l.bf16 %v296
    %v298 = vmul.f32 %v297, %v104
    %v299 = vld [vmem:[%s106 + $0x4] sm:$0xf]
    %v300 = vunpack.c.l.bf16 %v299
    %v301 = vmul.f32 %v300, %v109
    %v302 = vadd.f32 %v295, %v301
    %v303 = vld [vmem:[%s112 + $0x4] sm:$0xf]
    %v304 = vunpack.c.l.bf16 %v303
    %v305 = vmul.f32 %v304, %v115
    %v306 = vadd.f32 %v298, %v305
    %v307 = vld [vmem:[%s118 + $0x4] sm:$0xf]
    %v308 = vunpack.c.l.bf16 %v307
    %v309 = vmul.f32 %v308, %v121
    %v310 = vadd.f32 %v302, %v309
    %v311 = vld [vmem:[%s124 + $0x4] sm:$0xf]
    %v312 = vunpack.c.l.bf16 %v311
    %v313 = vmul.f32 %v312, %v127
    %v314 = vadd.f32 %v306, %v313
    %v315 = vld [vmem:[%s130 + $0x4] sm:$0xf]
    %v316 = vunpack.c.l.bf16 %v315
    %v317 = vmul.f32 %v316, %v133
    %v318 = vadd.f32 %v310, %v317
    %v319 = vld [vmem:[%s136 + $0x4] sm:$0xf]
    %v320 = vunpack.c.l.bf16 %v319
    %v321 = vmul.f32 %v320, %v139
    %v322 = vadd.f32 %v314, %v321
    %v323 = vld [vmem:[%s142 + $0x4] sm:$0xf]
    %v324 = vunpack.c.l.bf16 %v323
    %v325 = vmul.f32 %v324, %v145
    %v326 = vadd.f32 %v318, %v325
    %v327 = vld [vmem:[%s148 + $0x4] sm:$0xf]
    %v328 = vunpack.c.l.bf16 %v327
    %v329 = vmul.f32 %v328, %v151
    %v330 = vadd.f32 %v322, %v329
    %v331 = vld [vmem:[%s154 + $0x4] sm:$0xf]
    %v332 = vunpack.c.l.bf16 %v331
    %v333 = vmul.f32 %v332, %v157
    %v334 = vadd.f32 %v326, %v333
    %v335 = vld [vmem:[%s160 + $0x4] sm:$0xf]
    %v336 = vunpack.c.l.bf16 %v335
    %v337 = vmul.f32 %v336, %v163
    %v338 = vadd.f32 %v330, %v337
    %v339 = vld [vmem:[%s166 + $0x4] sm:$0xf]
    %v340 = vunpack.c.l.bf16 %v339
    %v341 = vmul.f32 %v340, %v169
    %v342 = vadd.f32 %v334, %v341
    %v343 = vld [vmem:[%s172 + $0x4] sm:$0xf]
    %v344 = vunpack.c.l.bf16 %v343
    %v345 = vmul.f32 %v344, %v175
    %v346 = vadd.f32 %v338, %v345
    %v347 = vld [vmem:[%s178 + $0x4] sm:$0xf]
    %v348 = vunpack.c.l.bf16 %v347
    %v349 = vmul.f32 %v348, %v181
    %v350 = vadd.f32 %v342, %v349
    %v351 = vld [vmem:[%s184 + $0x4] sm:$0xf]
    %v352 = vunpack.c.l.bf16 %v351
    %v353 = vmul.f32 %v352, %v187
    %v354 = vadd.f32 %v346, %v353
    %v355 = vld [vmem:[%s190 + $0x4] sm:$0xf]
    %v356 = vunpack.c.l.bf16 %v355
    %v357 = vmul.f32 %v356, %v193
    %v358 = vadd.f32 %v350, %v357
    %v359 = vld [vmem:[%s196 + $0x4] sm:$0xf]
    %v360 = vunpack.c.l.bf16 %v359
    %v361 = vmul.f32 %v360, %v199
    %v362 = vadd.f32 %v354, %v361
    %v363 = vld [vmem:[%s202 + $0x4] sm:$0xf]
    %v364 = vunpack.c.l.bf16 %v363
    %v365 = vmul.f32 %v364, %v205
    %v366 = vadd.f32 %v358, %v365
    %v367 = vld [vmem:[%s208 + $0x4] sm:$0xf]
    %v368 = vunpack.c.l.bf16 %v367
    %v369 = vmul.f32 %v368, %v211
    %v370 = vadd.f32 %v362, %v369
    %v371 = vld [vmem:[%s214 + $0x4] sm:$0xf]
    %v372 = vunpack.c.l.bf16 %v371
    %v373 = vmul.f32 %v372, %v217
    %v374 = vadd.f32 %v366, %v373
    %v375 = vld [vmem:[%s220 + $0x4] sm:$0xf]
    %v376 = vunpack.c.l.bf16 %v375
    %v377 = vmul.f32 %v376, %v223
    %v378 = vadd.f32 %v370, %v377
    %v379 = vld [vmem:[%s226 + $0x4] sm:$0xf]
    %v380 = vunpack.c.l.bf16 %v379
    %v381 = vmul.f32 %v380, %v229
    %v382 = vadd.f32 %v374, %v381
    %v383 = vld [vmem:[%s232 + $0x4] sm:$0xf]
    %v384 = vunpack.c.l.bf16 %v383
    %v385 = vmul.f32 %v384, %v235
    %v386 = vadd.f32 %v378, %v385
    %388 = vst [vmem:[#allocation1] ss:$4 sm:$0xff] %v382
    %v389 = vld.sshfl [vmem:[#allocation1] sm:$0xff pattern:$0x73625140]
    %v390 = vld.sshfl [vmem:[#allocation1 + $0x8] sm:$0xff pattern:$0x73625140]
    %v391 = vld.sshfl [vmem:[#allocation1 + $0x10] sm:$0xff pattern:$0x73625140]
    %v392 = vld.sshfl [vmem:[#allocation1 + $0x18] sm:$0xff pattern:$0x73625140]
    %v397 = vpack.c.bf16 %v390, %v389
    %v398 = vpack.c.bf16 %v392, %v391
    %v401 = vrot.slane %v397, 3
    %v402 = vrot.slane %v398, 6
    %v403 = vrot.slane %v398, 1
    %v406 = vsel %vm255, %v397, %v401
    %v409 = vsel %vm259, %v402, %v403
    %v410 = vsel %vm263, %v406, %v409
    %412 = vst [vmem:[#allocation2 + $0x4] sm:$0xf] %v410
    %414 = vst [vmem:[#allocation1] ss:$4 sm:$0xff] %v386
    %v415 = vld.sshfl [vmem:[#allocation1] sm:$0xff pattern:$0x73625140]
    %v416 = vld.sshfl [vmem:[#allocation1 + $0x8] sm:$0xff pattern:$0x73625140]
    %v417 = vld.sshfl [vmem:[#allocation1 + $0x10] sm:$0xff pattern:$0x73625140]
    %v418 = vld.sshfl [vmem:[#allocation1 + $0x18] sm:$0xff pattern:$0x73625140]
    %v423 = vpack.c.bf16 %v416, %v415
    %v424 = vpack.c.bf16 %v418, %v417
    %v427 = vrot.slane %v423, 3
    %v428 = vrot.slane %v424, 6
    %v429 = vrot.slane %v424, 1
    %v432 = vsel %vm255, %v423, %v427
    %v435 = vsel %vm259, %v428, %v429
    %v436 = vsel %vm263, %v432, %v435
    %438 = vst [vmem:[#allocation3 + $0x4] sm:$0xf] %v436
    %v439 = vld [vmem:[%s1 + $0x8] sm:$0x7]
    %v440 = vunpack.c.l.bf16 %v439
    %v441 = vmul.f32 %v440, %v99
    %v442 = vld [vmem:[%s101 + $0x8] sm:$0x7]
    %v443 = vunpack.c.l.bf16 %v442
    %v444 = vmul.f32 %v443, %v104
    %v445 = vld [vmem:[%s106 + $0x8] sm:$0x7]
    %v446 = vunpack.c.l.bf16 %v445
    %v447 = vmul.f32 %v446, %v109
    %v448 = vadd.f32 %v441, %v447
    %v449 = vld [vmem:[%s112 + $0x8] sm:$0x7]
    %v450 = vunpack.c.l.bf16 %v449
    %v451 = vmul.f32 %v450, %v115
    %v452 = vadd.f32 %v444, %v451
    %v453 = vld [vmem:[%s118 + $0x8] sm:$0x7]
    %v454 = vunpack.c.l.bf16 %v453
    %v455 = vmul.f32 %v454, %v121
    %v456 = vadd.f32 %v448, %v455
    %v457 = vld [vmem:[%s124 + $0x8] sm:$0x7]
    %v458 = vunpack.c.l.bf16 %v457
    %v459 = vmul.f32 %v458, %v127
    %v460 = vadd.f32 %v452, %v459
    %v461 = vld [vmem:[%s130 + $0x8] sm:$0x7]
    %v462 = vunpack.c.l.bf16 %v461
    %v463 = vmul.f32 %v462, %v133
    %v464 = vadd.f32 %v456, %v463
    %v465 = vld [vmem:[%s136 + $0x8] sm:$0x7]
    %v466 = vunpack.c.l.bf16 %v465
    %v467 = vmul.f32 %v466, %v139
    %v468 = vadd.f32 %v460, %v467
    %v469 = vld [vmem:[%s142 + $0x8] sm:$0x7]
    %v470 = vunpack.c.l.bf16 %v469
    %v471 = vmul.f32 %v470, %v145
    %v472 = vadd.f32 %v464, %v471
    %v473 = vld [vmem:[%s148 + $0x8] sm:$0x7]
    %v474 = vunpack.c.l.bf16 %v473
    %v475 = vmul.f32 %v474, %v151
    %v476 = vadd.f32 %v468, %v475
    %v477 = vld [vmem:[%s154 + $0x8] sm:$0x7]
    %v478 = vunpack.c.l.bf16 %v477
    %v479 = vmul.f32 %v478, %v157
    %v480 = vadd.f32 %v472, %v479
    %v481 = vld [vmem:[%s160 + $0x8] sm:$0x7]
    %v482 = vunpack.c.l.bf16 %v481
    %v483 = vmul.f32 %v482, %v163
    %v484 = vadd.f32 %v476, %v483
    %v485 = vld [vmem:[%s166 + $0x8] sm:$0x7]
    %v486 = vunpack.c.l.bf16 %v485
    %v487 = vmul.f32 %v486, %v169
    %v488 = vadd.f32 %v480, %v487
    %v489 = vld [vmem:[%s172 + $0x8] sm:$0x7]
    %v490 = vunpack.c.l.bf16 %v489
    %v491 = vmul.f32 %v490, %v175
    %v492 = vadd.f32 %v484, %v491
    %v493 = vld [vmem:[%s178 + $0x8] sm:$0x7]
    %v494 = vunpack.c.l.bf16 %v493
    %v495 = vmul.f32 %v494, %v181
    %v496 = vadd.f32 %v488, %v495
    %v497 = vld [vmem:[%s184 + $0x8] sm:$0x7]
    %v498 = vunpack.c.l.bf16 %v497
    %v499 = vmul.f32 %v498, %v187
    %v500 = vadd.f32 %v492, %v499
    %v501 = vld [vmem:[%s190 + $0x8] sm:$0x7]
    %v502 = vunpack.c.l.bf16 %v501
    %v503 = vmul.f32 %v502, %v193
    %v504 = vadd.f32 %v496, %v503
    %v505 = vld [vmem:[%s196 + $0x8] sm:$0x7]
    %v506 = vunpack.c.l.bf16 %v505
    %v507 = vmul.f32 %v506, %v199
    %v508 = vadd.f32 %v500, %v507
    %v509 = vld [vmem:[%s202 + $0x8] sm:$0x7]
    %v510 = vunpack.c.l.bf16 %v509
    %v511 = vmul.f32 %v510, %v205
    %v512 = vadd.f32 %v504, %v511
    %v513 = vld [vmem:[%s208 + $0x8] sm:$0x7]
    %v514 = vunpack.c.l.bf16 %v513
    %v515 = vmul.f32 %v514, %v211
    %v516 = vadd.f32 %v508, %v515
    %v517 = vld [vmem:[%s214 + $0x8] sm:$0x7]
    %v518 = vunpack.c.l.bf16 %v517
    %v519 = vmul.f32 %v518, %v217
    %v520 = vadd.f32 %v512, %v519
    %v521 = vld [vmem:[%s220 + $0x8] sm:$0x7]
    %v522 = vunpack.c.l.bf16 %v521
    %v523 = vmul.f32 %v522, %v223
    %v524 = vadd.f32 %v516, %v523
    %v525 = vld [vmem:[%s226 + $0x8] sm:$0x7]
    %v526 = vunpack.c.l.bf16 %v525
    %v527 = vmul.f32 %v526, %v229
    %v528 = vadd.f32 %v520, %v527
    %v529 = vld [vmem:[%s232 + $0x8] sm:$0x7]
    %v530 = vunpack.c.l.bf16 %v529
    %v531 = vmul.f32 %v530, %v235
    %v532 = vadd.f32 %v524, %v531
    %534 = vst [vmem:[#allocation1] ss:$4 sm:$0xff] %v528
    %v535 = vld.sshfl [vmem:[#allocation1] sm:$0xff pattern:$0x73625140]
    %v536 = vld.sshfl [vmem:[#allocation1 + $0x8] sm:$0xff pattern:$0x73625140]
    %v537 = vld.sshfl [vmem:[#allocation1 + $0x10] sm:$0xff pattern:$0x73625140]
    %v541 = vpack.c.bf16 %v536, %v535
    %v542 = vpack.c.bf16 %v537, %v537
    %v545 = vrot.slane %v541, 3
    %v546 = vrot.slane %v542, 6
    %v547 = vrot.slane %v542, 1
    %v550 = vsel %vm255, %v541, %v545
    %v553 = vsel %vm259, %v546, %v547
    %v554 = vsel %vm263, %v550, %v553
    %vm556 = vcmask 1041409
    %vm557 = vmor %vm556, %vm255
    %vm558 = vcmask 698370
    %vm559 = vmor %vm558, %vm557
    %560 = vst.msk [vmem:[#allocation2 + $0x8] sm:$0x7] %vm559, %v554
    %562 = vst [vmem:[#allocation1] ss:$4 sm:$0xff] %v532
    %v563 = vld.sshfl [vmem:[#allocation1] sm:$0xff pattern:$0x73625140]
    %v564 = vld.sshfl [vmem:[#allocation1 + $0x8] sm:$0xff pattern:$0x73625140]
    %v565 = vld.sshfl [vmem:[#allocation1 + $0x10] sm:$0xff pattern:$0x73625140]
    %v569 = vpack.c.bf16 %v564, %v563
    %v570 = vpack.c.bf16 %v565, %v565
    %v573 = vrot.slane %v569, 3
    %v574 = vrot.slane %v570, 6
    %v575 = vrot.slane %v570, 1
    %v578 = vsel %vm255, %v569, %v573
    %v581 = vsel %vm259, %v574, %v575
    %v582 = vsel %vm263, %v578, %v581
    %584 = vst.msk [vmem:[#allocation3 + $0x8] sm:$0x7] %vm559, %v582
    %v585 = vld [vmem:[#allocation2] sm:$0xff]
    %v586 = vld [vmem:[#allocation2 + $0x8] sm:$0x7]
    %v587 = vld [vmem:[#allocation8] sm:$0xff]
    %v588 = vld [vmem:[#allocation8 + $0x8] sm:$0xff]
    %v589 = vld [vmem:[#allocation8 + $0x10] sm:$0xff]
    %v590 = vld [vmem:[#allocation8 + $0x18] sm:$0xff]
    %v591 = vld [vmem:[#allocation8 + $0x20] sm:$0xff]
    %v592 = vld [vmem:[#allocation8 + $0x28] sm:$0xff]
    %v593 = vld [vmem:[#allocation8 + $0x30] sm:$0xff]
    %v594 = vld [vmem:[#allocation8 + $0x38] sm:$0xff]
    %v595 = vld [vmem:[#allocation8 + $0x40] sm:$0xff]
    %v596 = vld [vmem:[#allocation8 + $0x48] sm:$0xff]
    %v597 = vld [vmem:[#allocation8 + $0x50] sm:$0xff]
    %v598 = vld [vmem:[#allocation8 + $0x58] sm:$0xff]
    %v599 = vld [vmem:[#allocation8 + $0x60] sm:$0xff]
    %v600 = vld [vmem:[#allocation8 + $0x68] sm:$0xff]
    %v601 = vld [vmem:[#allocation8 + $0x70] sm:$0xff]
    %v602 = vld [vmem:[#allocation8 + $0x78] sm:$0xff]
    %v603 = vld [vmem:[#allocation8 + $0x80] sm:$0xff]
    %v604 = vld [vmem:[#allocation8 + $0x88] sm:$0xff]
    %v605 = vld [vmem:[#allocation8 + $0x90] sm:$0xff]
    %v606 = vld [vmem:[#allocation8 + $0x98] sm:$0xff]
    %v607 = vld [vmem:[#allocation8 + $0xa0] sm:$0xff]
    %v608 = vld [vmem:[#allocation8 + $0xa8] sm:$0xff]
    %v609 = vld [vmem:[#allocation8 + $0xb0] sm:$0xff]
    %v610 = vld [vmem:[#allocation8 + $0xb8] sm:$0xff]
    %v611 = vld [vmem:[#allocation8 + $0xc0] sm:$0xff]
    %v612 = vld [vmem:[#allocation8 + $0xc8] sm:$0xff]
    %v613 = vld [vmem:[#allocation8 + $0xd0] sm:$0xff]
    %v614 = vld [vmem:[#allocation8 + $0xd8] sm:$0xff]
    %v615 = vld [vmem:[#allocation8 + $0xe0] sm:$0xff]
    %v616 = vld [vmem:[#allocation8 + $0xe8] sm:$0xff]
    %v617 = vld [vmem:[#allocation8 + $0xf0] sm:$0xff]
    %v618 = vld [vmem:[#allocation8 + $0xf8] sm:$0xff]
    %v619 = vld [vmem:[#allocation8 + $0x100] sm:$0xff]
    %v620 = vld [vmem:[#allocation8 + $0x108] sm:$0xff]
    %v621 = vld [vmem:[#allocation8 + $0x110] sm:$0xff]
    %v622 = vld [vmem:[#allocation8 + $0x118] sm:$0xff]
    %v623 = vld [vmem:[#allocation8 + $0x120] sm:$0xff]
    %v624 = vld [vmem:[#allocation8 + $0x128] sm:$0xff]
    %v625 = vld [vmem:[#allocation8 + $0x130] sm:$0xff]
    %v626 = vld [vmem:[#allocation8 + $0x138] sm:$0xff]
    %v627 = vld [vmem:[#allocation8 + $0x140] sm:$0xff]
    %v628 = vld [vmem:[#allocation8 + $0x148] sm:$0xff]
    %v629 = vld [vmem:[#allocation8 + $0x150] sm:$0xff]
    %v630 = vld [vmem:[#allocation8 + $0x158] sm:$0xff]
    %v631 = vld [vmem:[#allocation8 + $0x160] sm:$0xff]
    %v632 = vld [vmem:[#allocation8 + $0x168] sm:$0xff]
    %v633 = vld [vmem:[#allocation8 + $0x170] sm:$0xff]
    %v634 = vld [vmem:[#allocation8 + $0x178] sm:$0xff]
    %v635 = vld [vmem:[#allocation8 + $0x180] sm:$0xff]
    %v636 = vld [vmem:[#allocation8 + $0x188] sm:$0xff]
    %v637 = vld [vmem:[#allocation8 + $0x190] sm:$0xff]
    %v638 = vld [vmem:[#allocation8 + $0x198] sm:$0xff]
    %v639 = vld [vmem:[#allocation8 + $0x1a0] sm:$0xff]
    %v640 = vld [vmem:[#allocation8 + $0x1a8] sm:$0xff]
    %v641 = vld [vmem:[#allocation8 + $0x1b0] sm:$0xff]
    %v642 = vld [vmem:[#allocation8 + $0x1b8] sm:$0xff]
    %v643 = vld [vmem:[#allocation8 + $0x1c0] sm:$0xff]
    %v644 = vld [vmem:[#allocation8 + $0x1c8] sm:$0xff]
    %v645 = vld [vmem:[#allocation8 + $0x1d0] sm:$0xff]
    %v646 = vld [vmem:[#allocation8 + $0x1d8] sm:$0xff]
    %v647 = vld [vmem:[#allocation8 + $0x1e0] sm:$0xff]
    %v648 = vld [vmem:[#allocation8 + $0x1e8] sm:$0xff]
    %v649 = vld [vmem:[#allocation8 + $0x1f0] sm:$0xff]
    %v650 = vld [vmem:[#allocation8 + $0x1f8] sm:$0xff]
    %v651 = vld [vmem:[#allocation8 + $0x200] sm:$0xff]
    %v652 = vld [vmem:[#allocation8 + $0x208] sm:$0xff]
    %v653 = vld [vmem:[#allocation8 + $0x210] sm:$0xff]
    %v654 = vld [vmem:[#allocation8 + $0x218] sm:$0xff]
    %v655 = vld [vmem:[#allocation8 + $0x220] sm:$0xff]
    %v656 = vld [vmem:[#allocation8 + $0x228] sm:$0xff]
    %v657 = vld [vmem:[#allocation8 + $0x230] sm:$0xff]
    %v658 = vld [vmem:[#allocation8 + $0x238] sm:$0xff]
    %v659 = vld [vmem:[#allocation8 + $0x240] sm:$0xff]
    %v660 = vld [vmem:[#allocation8 + $0x248] sm:$0xff]
    %v661 = vld [vmem:[#allocation8 + $0x250] sm:$0xff]
    %v662 = vld [vmem:[#allocation8 + $0x258] sm:$0xff]
    %v663 = vld [vmem:[#allocation8 + $0x260] sm:$0xff]
    %v664 = vld [vmem:[#allocation8 + $0x268] sm:$0xff]
    %v665 = vld [vmem:[#allocation8 + $0x270] sm:$0xff]
    %v666 = vld [vmem:[#allocation8 + $0x278] sm:$0xff]
    %v667 = vld [vmem:[#allocation8 + $0x280] sm:$0xff]
    %v668 = vld [vmem:[#allocation8 + $0x288] sm:$0xff]
    %v669 = vld [vmem:[#allocation8 + $0x290] sm:$0xff]
    %v670 = vld [vmem:[#allocation8 + $0x298] sm:$0xff]
    %v671 = vld [vmem:[#allocation8 + $0x2a0] sm:$0xff]
    %v672 = vld [vmem:[#allocation8 + $0x2a8] sm:$0xff]
    %v673 = vld [vmem:[#allocation8 + $0x2b0] sm:$0xff]
    %v674 = vld [vmem:[#allocation8 + $0x2b8] sm:$0xff]
    %v675 = vld [vmem:[#allocation8 + $0x2c0] sm:$0xff]
    %v676 = vld [vmem:[#allocation8 + $0x2c8] sm:$0xff]
    %v677 = vld [vmem:[#allocation8 + $0x2d0] sm:$0xff]
    %v678 = vld [vmem:[#allocation8 + $0x2d8] sm:$0xff]
    %v679 = vld [vmem:[#allocation8 + $0x2e0] sm:$0xff]
    %v680 = vld [vmem:[#allocation8 + $0x2e8] sm:$0xff]
    %v681 = vld [vmem:[#allocation8 + $0x2f0] sm:$0xff]
    %v682 = vld [vmem:[#allocation8 + $0x2f8] sm:$0xff]
    %v683 = vld [vmem:[#allocation8 + $0x300] sm:$0xff]
    %v684 = vld [vmem:[#allocation8 + $0x308] sm:$0xff]
    %v685 = vld [vmem:[#allocation8 + $0x310] sm:$0xff]
    %v686 = vld [vmem:[#allocation8 + $0x318] sm:$0xff]
    %v687 = vld [vmem:[#allocation8 + $0x320] sm:$0xff]
    %v688 = vld [vmem:[#allocation8 + $0x328] sm:$0xff]
    %v689 = vld [vmem:[#allocation8 + $0x330] sm:$0xff]
    %v690 = vld [vmem:[#allocation8 + $0x338] sm:$0xff]
    %v691 = vld [vmem:[#allocation8 + $0x340] sm:$0xff]
    %v692 = vld [vmem:[#allocation8 + $0x348] sm:$0xff]
    %v693 = vld [vmem:[#allocation8 + $0x350] sm:$0xff]
    %v694 = vld [vmem:[#allocation8 + $0x358] sm:$0xff]
    %v695 = vld [vmem:[#allocation8 + $0x360] sm:$0xff]
    %v696 = vld [vmem:[#allocation8 + $0x368] sm:$0xff]
    %v697 = vld [vmem:[#allocation8 + $0x370] sm:$0xff]
    %v698 = vld [vmem:[#allocation8 + $0x378] sm:$0xff]
    %v699 = vld [vmem:[#allocation8 + $0x380] sm:$0xff]
    %v700 = vld [vmem:[#allocation8 + $0x388] sm:$0xff]
    %v701 = vld [vmem:[#allocation8 + $0x390] sm:$0xff]
    %v702 = vld [vmem:[#allocation8 + $0x398] sm:$0xff]
    %v703 = vld [vmem:[#allocation8 + $0x3a0] sm:$0xff]
    %v704 = vld [vmem:[#allocation8 + $0x3a8] sm:$0xff]
    %v705 = vld [vmem:[#allocation8 + $0x3b0] sm:$0xff]
    %v706 = vld [vmem:[#allocation8 + $0x3b8] sm:$0xff]
    %v707 = vld [vmem:[#allocation8 + $0x3c0] sm:$0xff]
    %v708 = vld [vmem:[#allocation8 + $0x3c8] sm:$0xff]
    %v709 = vld [vmem:[#allocation8 + $0x3d0] sm:$0xff]
    %v710 = vld [vmem:[#allocation8 + $0x3d8] sm:$0xff]
    %v711 = vld [vmem:[#allocation8 + $0x3e0] sm:$0xff]
    %v712 = vld [vmem:[#allocation8 + $0x3e8] sm:$0xff]
    %v713 = vld [vmem:[#allocation8 + $0x3f0] sm:$0xff]
    %v714 = vld [vmem:[#allocation8 + $0x3f8] sm:$0xff]
    %v715 = vld [vmem:[#allocation8 + $0x400] sm:$0xff]
    %v716 = vld [vmem:[#allocation8 + $0x408] sm:$0xff]
    %v717 = vld [vmem:[#allocation8 + $0x410] sm:$0xff]
    %v718 = vld [vmem:[#allocation8 + $0x418] sm:$0xff]
    %v719 = vld [vmem:[#allocation8 + $0x420] sm:$0xff]
    %v720 = vld [vmem:[#allocation8 + $0x428] sm:$0xff]
    %v721 = vld [vmem:[#allocation8 + $0x430] sm:$0xff]
    %v722 = vld [vmem:[#allocation8 + $0x438] sm:$0xff]
    %v723 = vld [vmem:[#allocation8 + $0x440] sm:$0xff]
    %v724 = vld [vmem:[#allocation8 + $0x448] sm:$0xff]
    %v725 = vld [vmem:[#allocation8 + $0x450] sm:$0xff]
    %v726 = vld [vmem:[#allocation8 + $0x458] sm:$0xff]
    %v727 = vld [vmem:[#allocation8 + $0x460] sm:$0xff]
    %v728 = vld [vmem:[#allocation8 + $0x468] sm:$0xff]
    %v729 = vld [vmem:[#allocation8 + $0x470] sm:$0xff]
    %v730 = vld [vmem:[#allocation8 + $0x478] sm:$0xff]
    %v731 = vld [vmem:[#allocation8 + $0x480] sm:$0xff]
    %v732 = vld [vmem:[#allocation8 + $0x488] sm:$0xff]
    %v733 = vld [vmem:[#allocation8 + $0x490] sm:$0xff]
    %v734 = vld [vmem:[#allocation8 + $0x498] sm:$0xff]
    %v735 = vld [vmem:[#allocation8 + $0x4a0] sm:$0xff]
    %v736 = vld [vmem:[#allocation8 + $0x4a8] sm:$0xff]
    %v737 = vld [vmem:[#allocation8 + $0x4b0] sm:$0xff]
    %v738 = vld [vmem:[#allocation8 + $0x4b8] sm:$0xff]
    %v739 = vld [vmem:[#allocation8 + $0x4c0] sm:$0xff]
    %v740 = vld [vmem:[#allocation8 + $0x4c8] sm:$0xff]
    %v741 = vld [vmem:[#allocation8 + $0x4d0] sm:$0xff]
    %v742 = vld [vmem:[#allocation8 + $0x4d8] sm:$0xff]
    %v743 = vld [vmem:[#allocation8 + $0x4e0] sm:$0xff]
    %v744 = vld [vmem:[#allocation8 + $0x4e8] sm:$0xff]
    %v745 = vld [vmem:[#allocation8 + $0x4f0] sm:$0xff]
    %v746 = vld [vmem:[#allocation8 + $0x4f8] sm:$0xff]
    %v747 = vld [vmem:[#allocation8 + $0x500] sm:$0xff]
    %v748 = vld [vmem:[#allocation8 + $0x508] sm:$0xff]
    %v749 = vld [vmem:[#allocation8 + $0x510] sm:$0xff]
    %v750 = vld [vmem:[#allocation8 + $0x518] sm:$0xff]
    %v751 = vld [vmem:[#allocation8 + $0x520] sm:$0xff]
    %v752 = vld [vmem:[#allocation8 + $0x528] sm:$0xff]
    %v753 = vld [vmem:[#allocation8 + $0x530] sm:$0xff]
    %v754 = vld [vmem:[#allocation8 + $0x538] sm:$0xff]
    %v755 = vld [vmem:[#allocation8 + $0x540] sm:$0xff]
    %v756 = vld [vmem:[#allocation8 + $0x548] sm:$0xff]
    %v757 = vld [vmem:[#allocation8 + $0x550] sm:$0x77]
    %v758 = vld [vmem:[#allocation3] sm:$0xff]
    %v759 = vld [vmem:[#allocation3 + $0x8] sm:$0x7]
    %v760 = vld [vmem:[#allocation9] sm:$0xff]
    %v761 = vld [vmem:[#allocation9 + $0x8] sm:$0xff]
    %v762 = vld [vmem:[#allocation9 + $0x10] sm:$0xff]
    %v763 = vld [vmem:[#allocation9 + $0x18] sm:$0xff]
    %v764 = vld [vmem:[#allocation9 + $0x20] sm:$0xff]
    %v765 = vld [vmem:[#allocation9 + $0x28] sm:$0xff]
    %v766 = vld [vmem:[#allocation9 + $0x30] sm:$0xff]
    %v767 = vld [vmem:[#allocation9 + $0x38] sm:$0xff]
    %v768 = vld [vmem:[#allocation9 + $0x40] sm:$0xff]
    %v769 = vld [vmem:[#allocation9 + $0x48] sm:$0xff]
    %v770 = vld [vmem:[#allocation9 + $0x50] sm:$0xff]
    %v771 = vld [vmem:[#allocation9 + $0x58] sm:$0xff]
    %v772 = vld [vmem:[#allocation9 + $0x60] sm:$0xff]
    %v773 = vld [vmem:[#allocation9 + $0x68] sm:$0xff]
    %v774 = vld [vmem:[#allocation9 + $0x70] sm:$0xff]
    %v775 = vld [vmem:[#allocation9 + $0x78] sm:$0xff]
    %v776 = vld [vmem:[#allocation9 + $0x80] sm:$0xff]
    %v777 = vld [vmem:[#allocation9 + $0x88] sm:$0xff]
    %v778 = vld [vmem:[#allocation9 + $0x90] sm:$0xff]
    %v779 = vld [vmem:[#allocation9 + $0x98] sm:$0xff]
    %v780 = vld [vmem:[#allocation9 + $0xa0] sm:$0xff]
    %v781 = vld [vmem:[#allocation9 + $0xa8] sm:$0xff]
    %v782 = vld [vmem:[#allocation9 + $0xb0] sm:$0xff]
    %v783 = vld [vmem:[#allocation9 + $0xb8] sm:$0xff]
    %v784 = vld [vmem:[#allocation9 + $0xc0] sm:$0xff]
    %v785 = vld [vmem:[#allocation9 + $0xc8] sm:$0xff]
    %v786 = vld [vmem:[#allocation9 + $0xd0] sm:$0xff]
    %v787 = vld [vmem:[#allocation9 + $0xd8] sm:$0xff]
    %v788 = vld [vmem:[#allocation9 + $0xe0] sm:$0xff]
    %v789 = vld [vmem:[#allocation9 + $0xe8] sm:$0xff]
    %v790 = vld [vmem:[#allocation9 + $0xf0] sm:$0xff]
    %v791 = vld [vmem:[#allocation9 + $0xf8] sm:$0xff]
    %v792 = vld [vmem:[#allocation9 + $0x100] sm:$0xff]
    %v793 = vld [vmem:[#allocation9 + $0x108] sm:$0xff]
    %v794 = vld [vmem:[#allocation9 + $0x110] sm:$0xff]
    %v795 = vld [vmem:[#allocation9 + $0x118] sm:$0xff]
    %v796 = vld [vmem:[#allocation9 + $0x120] sm:$0xff]
    %v797 = vld [vmem:[#allocation9 + $0x128] sm:$0xff]
    %v798 = vld [vmem:[#allocation9 + $0x130] sm:$0xff]
    %v799 = vld [vmem:[#allocation9 + $0x138] sm:$0xff]
    %v800 = vld [vmem:[#allocation9 + $0x140] sm:$0xff]
    %v801 = vld [vmem:[#allocation9 + $0x148] sm:$0xff]
    %v802 = vld [vmem:[#allocation9 + $0x150] sm:$0xff]
    %v803 = vld [vmem:[#allocation9 + $0x158] sm:$0xff]
    %v804 = vld [vmem:[#allocation9 + $0x160] sm:$0xff]
    %v805 = vld [vmem:[#allocation9 + $0x168] sm:$0xff]
    %v806 = vld [vmem:[#allocation9 + $0x170] sm:$0xff]
    %v807 = vld [vmem:[#allocation9 + $0x178] sm:$0xff]
    %v808 = vld [vmem:[#allocation9 + $0x180] sm:$0xff]
    %v809 = vld [vmem:[#allocation9 + $0x188] sm:$0xff]
    %v810 = vld [vmem:[#allocation9 + $0x190] sm:$0xff]
    %v811 = vld [vmem:[#allocation9 + $0x198] sm:$0xff]
    %v812 = vld [vmem:[#allocation9 + $0x1a0] sm:$0xff]
    %v813 = vld [vmem:[#allocation9 + $0x1a8] sm:$0xff]
    %v814 = vld [vmem:[#allocation9 + $0x1b0] sm:$0xff]
    %v815 = vld [vmem:[#allocation9 + $0x1b8] sm:$0xff]
    %v816 = vld [vmem:[#allocation9 + $0x1c0] sm:$0xff]
    %v817 = vld [vmem:[#allocation9 + $0x1c8] sm:$0xff]
    %v818 = vld [vmem:[#allocation9 + $0x1d0] sm:$0xff]
    %v819 = vld [vmem:[#allocation9 + $0x1d8] sm:$0xff]
    %v820 = vld [vmem:[#allocation9 + $0x1e0] sm:$0xff]
    %v821 = vld [vmem:[#allocation9 + $0x1e8] sm:$0xff]
    %v822 = vld [vmem:[#allocation9 + $0x1f0] sm:$0xff]
    %v823 = vld [vmem:[#allocation9 + $0x1f8] sm:$0xff]
    %v824 = vld [vmem:[#allocation9 + $0x200] sm:$0xff]
    %v825 = vld [vmem:[#allocation9 + $0x208] sm:$0xff]
    %v826 = vld [vmem:[#allocation9 + $0x210] sm:$0xff]
    %v827 = vld [vmem:[#allocation9 + $0x218] sm:$0xff]
    %v828 = vld [vmem:[#allocation9 + $0x220] sm:$0xff]
    %v829 = vld [vmem:[#allocation9 + $0x228] sm:$0xff]
    %v830 = vld [vmem:[#allocation9 + $0x230] sm:$0xff]
    %v831 = vld [vmem:[#allocation9 + $0x238] sm:$0xff]
    %v832 = vld [vmem:[#allocation9 + $0x240] sm:$0xff]
    %v833 = vld [vmem:[#allocation9 + $0x248] sm:$0xff]
    %v834 = vld [vmem:[#allocation9 + $0x250] sm:$0xff]
    %v835 = vld [vmem:[#allocation9 + $0x258] sm:$0xff]
    %v836 = vld [vmem:[#allocation9 + $0x260] sm:$0xff]
    %v837 = vld [vmem:[#allocation9 + $0x268] sm:$0xff]
    %v838 = vld [vmem:[#allocation9 + $0x270] sm:$0xff]
    %v839 = vld [vmem:[#allocation9 + $0x278] sm:$0xff]
    %v840 = vld [vmem:[#allocation9 + $0x280] sm:$0xff]
    %v841 = vld [vmem:[#allocation9 + $0x288] sm:$0xff]
    %v842 = vld [vmem:[#allocation9 + $0x290] sm:$0xff]
    %v843 = vld [vmem:[#allocation9 + $0x298] sm:$0xff]
    %v844 = vld [vmem:[#allocation9 + $0x2a0] sm:$0xff]
    %v845 = vld [vmem:[#allocation9 + $0x2a8] sm:$0xff]
    %v846 = vld [vmem:[#allocation9 + $0x2b0] sm:$0xff]
    %v847 = vld [vmem:[#allocation9 + $0x2b8] sm:$0xff]
    %v848 = vld [vmem:[#allocation9 + $0x2c0] sm:$0xff]
    %v849 = vld [vmem:[#allocation9 + $0x2c8] sm:$0xff]
    %v850 = vld [vmem:[#allocation9 + $0x2d0] sm:$0xff]
    %v851 = vld [vmem:[#allocation9 + $0x2d8] sm:$0xff]
    %v852 = vld [vmem:[#allocation9 + $0x2e0] sm:$0xff]
    %v853 = vld [vmem:[#allocation9 + $0x2e8] sm:$0xff]
    %v854 = vld [vmem:[#allocation9 + $0x2f0] sm:$0xff]
    %v855 = vld [vmem:[#allocation9 + $0x2f8] sm:$0xff]
    %v856 = vld [vmem:[#allocation9 + $0x300] sm:$0xff]
    %v857 = vld [vmem:[#allocation9 + $0x308] sm:$0xff]
    %v858 = vld [vmem:[#allocation9 + $0x310] sm:$0xff]
    %v859 = vld [vmem:[#allocation9 + $0x318] sm:$0xff]
    %v860 = vld [vmem:[#allocation9 + $0x320] sm:$0xff]
    %v861 = vld [vmem:[#allocation9 + $0x328] sm:$0xff]
    %v862 = vld [vmem:[#allocation9 + $0x330] sm:$0xff]
    %v863 = vld [vmem:[#allocation9 + $0x338] sm:$0xff]
    %v864 = vld [vmem:[#allocation9 + $0x340] sm:$0xff]
    %v865 = vld [vmem:[#allocation9 + $0x348] sm:$0xff]
    %v866 = vld [vmem:[#allocation9 + $0x350] sm:$0xff]
    %v867 = vld [vmem:[#allocation9 + $0x358] sm:$0xff]
    %v868 = vld [vmem:[#allocation9 + $0x360] sm:$0xff]
    %v869 = vld [vmem:[#allocation9 + $0x368] sm:$0xff]
    %v870 = vld [vmem:[#allocation9 + $0x370] sm:$0xff]
    %v871 = vld [vmem:[#allocation9 + $0x378] sm:$0xff]
    %v872 = vld [vmem:[#allocation9 + $0x380] sm:$0xff]
    %v873 = vld [vmem:[#allocation9 + $0x388] sm:$0xff]
    %v874 = vld [vmem:[#allocation9 + $0x390] sm:$0xff]
    %v875 = vld [vmem:[#allocation9 + $0x398] sm:$0xff]
    %v876 = vld [vmem:[#allocation9 + $0x3a0] sm:$0xff]
    %v877 = vld [vmem:[#allocation9 + $0x3a8] sm:$0xff]
    %v878 = vld [vmem:[#allocation9 + $0x3b0] sm:$0xff]
    %v879 = vld [vmem:[#allocation9 + $0x3b8] sm:$0xff]
    %v880 = vld [vmem:[#allocation9 + $0x3c0] sm:$0xff]
    %v881 = vld [vmem:[#allocation9 + $0x3c8] sm:$0xff]
    %v882 = vld [vmem:[#allocation9 + $0x3d0] sm:$0xff]
    %v883 = vld [vmem:[#allocation9 + $0x3d8] sm:$0xff]
    %v884 = vld [vmem:[#allocation9 + $0x3e0] sm:$0xff]
    %v885 = vld [vmem:[#allocation9 + $0x3e8] sm:$0xff]
    %v886 = vld [vmem:[#allocation9 + $0x3f0] sm:$0xff]
    %v887 = vld [vmem:[#allocation9 + $0x3f8] sm:$0xff]
    %v888 = vld [vmem:[#allocation9 + $0x400] sm:$0xff]
    %v889 = vld [vmem:[#allocation9 + $0x408] sm:$0xff]
    %v890 = vld [vmem:[#allocation9 + $0x410] sm:$0xff]
    %v891 = vld [vmem:[#allocation9 + $0x418] sm:$0xff]
    %v892 = vld [vmem:[#allocation9 + $0x420] sm:$0xff]
    %v893 = vld [vmem:[#allocation9 + $0x428] sm:$0xff]
    %v894 = vld [vmem:[#allocation9 + $0x430] sm:$0xff]
    %v895 = vld [vmem:[#allocation9 + $0x438] sm:$0xff]
    %v896 = vld [vmem:[#allocation9 + $0x440] sm:$0xff]
    %v897 = vld [vmem:[#allocation9 + $0x448] sm:$0xff]
    %v898 = vld [vmem:[#allocation9 + $0x450] sm:$0xff]
    %v899 = vld [vmem:[#allocation9 + $0x458] sm:$0xff]
    %v900 = vld [vmem:[#allocation9 + $0x460] sm:$0xff]
    %v901 = vld [vmem:[#allocation9 + $0x468] sm:$0xff]
    %v902 = vld [vmem:[#allocation9 + $0x470] sm:$0xff]
    %v903 = vld [vmem:[#allocation9 + $0x478] sm:$0xff]
    %v904 = vld [vmem:[#allocation9 + $0x480] sm:$0xff]
    %v905 = vld [vmem:[#allocation9 + $0x488] sm:$0xff]
    %v906 = vld [vmem:[#allocation9 + $0x490] sm:$0xff]
    %v907 = vld [vmem:[#allocation9 + $0x498] sm:$0xff]
    %v908 = vld [vmem:[#allocation9 + $0x4a0] sm:$0xff]
    %v909 = vld [vmem:[#allocation9 + $0x4a8] sm:$0xff]
    %v910 = vld [vmem:[#allocation9 + $0x4b0] sm:$0xff]
    %v911 = vld [vmem:[#allocation9 + $0x4b8] sm:$0xff]
    %v912 = vld [vmem:[#allocation9 + $0x4c0] sm:$0xff]
    %v913 = vld [vmem:[#allocation9 + $0x4c8] sm:$0xff]
    %v914 = vld [vmem:[#allocation9 + $0x4d0] sm:$0xff]
    %v915 = vld [vmem:[#allocation9 + $0x4d8] sm:$0xff]
    %v916 = vld [vmem:[#allocation9 + $0x4e0] sm:$0xff]
    %v917 = vld [vmem:[#allocation9 + $0x4e8] sm:$0xff]
    %v918 = vld [vmem:[#allocation9 + $0x4f0] sm:$0xff]
    %v919 = vld [vmem:[#allocation9 + $0x4f8] sm:$0xff]
    %v920 = vld [vmem:[#allocation9 + $0x500] sm:$0xff]
    %v921 = vld [vmem:[#allocation9 + $0x508] sm:$0xff]
    %v922 = vld [vmem:[#allocation9 + $0x510] sm:$0xff]
    %v923 = vld [vmem:[#allocation9 + $0x518] sm:$0xff]
    %v924 = vld [vmem:[#allocation9 + $0x520] sm:$0xff]
    %v925 = vld [vmem:[#allocation9 + $0x528] sm:$0xff]
    %v926 = vld [vmem:[#allocation9 + $0x530] sm:$0xff]
    %v927 = vld [vmem:[#allocation9 + $0x538] sm:$0xff]
    %v928 = vld [vmem:[#allocation9 + $0x540] sm:$0xff]
    %v929 = vld [vmem:[#allocation9 + $0x548] sm:$0xff]
    %v930 = vld [vmem:[#allocation9 + $0x550] sm:$0x77]
    %932 = vst [vmem:[#allocation1] ss:$9 sm:$0xff] %v758
    %v933 = vld [vmem:[#allocation1] sm:$0xff]
    %v934 = vld [vmem:[#allocation1 + $0x9] sm:$0xff]
    %v935 = vld [vmem:[#allocation1 + $0x12] sm:$0xff]
    %v936 = vld [vmem:[#allocation1 + $0x1b] sm:$0xff]
    %v937 = vld [vmem:[#allocation1 + $0x24] sm:$0xff]
    %v938 = vld [vmem:[#allocation1 + $0x2d] sm:$0xff]
    %v939 = vld [vmem:[#allocation1 + $0x36] sm:$0xff]
    %v940 = vld [vmem:[#allocation1 + $0x3f] sm:$0xff]
    %942 = vst [vmem:[#allocation1] ss:$9 sm:$0xff] %v759
    %v943 = vld [vmem:[#allocation1] sm:$0xff]
    %v944 = vld [vmem:[#allocation1 + $0x9] sm:$0xff]
    %v945 = vld [vmem:[#allocation1 + $0x12] sm:$0xff]
    %v1127 = vunpack.c.l.b16 %v760
    %v1128 = vunpack.c.h.b16 %v760
    %v1129 = vunpack.c.l.b16 %v761
    %v1130 = vunpack.c.h.b16 %v761
    %v1131 = vunpack.c.l.b16 %v762
    %v1132 = vunpack.c.h.b16 %v762
    %v1133 = vunpack.c.l.b16 %v763
    %v1134 = vunpack.c.h.b16 %v763
    %v1135 = vunpack.c.l.b16 %v764
    %v1136 = vunpack.c.h.b16 %v764
    %v1137 = vunpack.c.l.b16 %v765
    %v1138 = vunpack.c.h.b16 %v765
    %v1139 = vunpack.c.l.b16 %v766
    %v1140 = vunpack.c.h.b16 %v766
    %v1141 = vunpack.c.l.b16 %v767
    %v1142 = vunpack.c.h.b16 %v767
    %v1143 = vunpack.c.l.b16 %v768
    %v1144 = vunpack.c.h.b16 %v768
    %v1145 = vunpack.c.l.b16 %v769
    %v1146 = vunpack.c.h.b16 %v769
    %v1147 = vunpack.c.l.b16 %v770
    %v1148 = vunpack.c.h.b16 %v770
    %v1149 = vunpack.c.l.b16 %v771
    %v1150 = vunpack.c.h.b16 %v771
    %v1151 = vunpack.c.l.b16 %v772
    %v1152 = vunpack.c.h.b16 %v772
    %v1153 = vunpack.c.l.b16 %v773
    %v1154 = vunpack.c.h.b16 %v773
    %v1155 = vunpack.c.l.b16 %v774
    %v1156 = vunpack.c.h.b16 %v774
    %v1157 = vunpack.c.l.b16 %v775
    %v1158 = vunpack.c.h.b16 %v775
    %v1159 = vunpack.c.l.b16 %v776
    %v1160 = vunpack.c.h.b16 %v776
    %v1161 = vunpack.c.l.b16 %v777
    %v1162 = vunpack.c.h.b16 %v777
    %v1163 = vunpack.c.l.b16 %v778
    %v1164 = vunpack.c.h.b16 %v778
    %v1165 = vunpack.c.l.b16 %v779
    %v1166 = vunpack.c.h.b16 %v779
    %v1167 = vunpack.c.l.b16 %v780
    %v1168 = vunpack.c.h.b16 %v780
    %v1169 = vunpack.c.l.b16 %v781
    %v1170 = vunpack.c.h.b16 %v781
    %v1171 = vunpack.c.l.b16 %v782
    %v1172 = vunpack.c.h.b16 %v782
    %v1173 = vunpack.c.l.b16 %v783
    %v1174 = vunpack.c.h.b16 %v783
    %v1175 = vunpack.c.l.b16 %v784
    %v1176 = vunpack.c.h.b16 %v784
    %v1177 = vunpack.c.l.b16 %v785
    %v1178 = vunpack.c.h.b16 %v785
    %v1179 = vunpack.c.l.b16 %v786
    %v1180 = vunpack.c.h.b16 %v786
    %v1181 = vunpack.c.l.b16 %v787
    %v1182 = vunpack.c.h.b16 %v787
    %v1183 = vunpack.c.l.b16 %v788
    %v1184 = vunpack.c.h.b16 %v788
    %v1185 = vunpack.c.l.b16 %v789
    %v1186 = vunpack.c.h.b16 %v789
    %v1187 = vunpack.c.l.b16 %v790
    %v1188 = vunpack.c.h.b16 %v790
    %v1189 = vunpack.c.l.b16 %v791
    %v1190 = vunpack.c.h.b16 %v791
    %v1191 = vunpack.c.l.b16 %v792
    %v1192 = vunpack.c.h.b16 %v792
    %v1193 = vunpack.c.l.b16 %v793
    %v1194 = vunpack.c.h.b16 %v793
    %v1195 = vunpack.c.l.b16 %v794
    %v1196 = vunpack.c.h.b16 %v794
    %v1197 = vunpack.c.l.b16 %v795
    %v1198 = vunpack.c.h.b16 %v795
    %v1199 = vunpack.c.l.b16 %v796
    %v1200 = vunpack.c.h.b16 %v796
    %v1201 = vunpack.c.l.b16 %v797
    %v1202 = vunpack.c.h.b16 %v797
    %v1203 = vunpack.c.l.b16 %v798
    %v1204 = vunpack.c.h.b16 %v798
    %v1205 = vunpack.c.l.b16 %v799
    %v1206 = vunpack.c.h.b16 %v799
    %v1207 = vunpack.c.l.b16 %v800
    %v1208 = vunpack.c.h.b16 %v800
    %v1209 = vunpack.c.l.b16 %v801
    %v1210 = vunpack.c.h.b16 %v801
    %v1211 = vunpack.c.l.b16 %v802
    %v1212 = vunpack.c.h.b16 %v802
    %v1213 = vunpack.c.l.b16 %v803
    %v1214 = vunpack.c.h.b16 %v803
    %v1215 = vunpack.c.l.b16 %v804
    %v1216 = vunpack.c.h.b16 %v804
    %v1217 = vunpack.c.l.b16 %v805
    %v1218 = vunpack.c.h.b16 %v805
    %v1219 = vunpack.c.l.b16 %v806
    %v1220 = vunpack.c.h.b16 %v806
    %v1221 = vunpack.c.l.b16 %v807
    %v1222 = vunpack.c.h.b16 %v807
    %v1223 = vunpack.c.l.b16 %v808
    %v1224 = vunpack.c.h.b16 %v808
    %v1225 = vunpack.c.l.b16 %v809
    %v1226 = vunpack.c.h.b16 %v809
    %v1227 = vunpack.c.l.b16 %v810
    %v1228 = vunpack.c.h.b16 %v810
    %v1229 = vunpack.c.l.b16 %v811
    %v1230 = vunpack.c.h.b16 %v811
    %v1231 = vunpack.c.l.b16 %v812
    %v1232 = vunpack.c.h.b16 %v812
    %v1233 = vunpack.c.l.b16 %v813
    %v1234 = vunpack.c.h.b16 %v813
    %v1235 = vunpack.c.l.b16 %v814
    %v1236 = vunpack.c.h.b16 %v814
    %v1237 = vunpack.c.l.b16 %v815
    %v1238 = vunpack.c.h.b16 %v815
    %v1239 = vunpack.c.l.b16 %v816
    %v1240 = vunpack.c.h.b16 %v816
    %v1241 = vunpack.c.l.b16 %v817
    %v1242 = vunpack.c.h.b16 %v817
    %v1243 = vunpack.c.l.b16 %v818
    %v1244 = vunpack.c.h.b16 %v818
    %v1245 = vunpack.c.l.b16 %v819
    %v1246 = vunpack.c.h.b16 %v819
    %v1247 = vunpack.c.l.b16 %v820
    %v1248 = vunpack.c.h.b16 %v820
    %v1249 = vunpack.c.l.b16 %v821
    %v1250 = vunpack.c.h.b16 %v821
    %v1251 = vunpack.c.l.b16 %v822
    %v1252 = vunpack.c.h.b16 %v822
    %v1253 = vunpack.c.l.b16 %v823
    %v1254 = vunpack.c.h.b16 %v823
    %v1255 = vunpack.c.l.b16 %v824
    %v1256 = vunpack.c.h.b16 %v824
    %v1257 = vunpack.c.l.b16 %v825
    %v1258 = vunpack.c.h.b16 %v825
    %v1259 = vunpack.c.l.b16 %v826
    %v1260 = vunpack.c.h.b16 %v826
    %v1261 = vunpack.c.l.b16 %v827
    %v1262 = vunpack.c.h.b16 %v827
    %v1263 = vunpack.c.l.b16 %v828
    %v1264 = vunpack.c.h.b16 %v828
    %v1265 = vunpack.c.l.b16 %v829
    %v1266 = vunpack.c.h.b16 %v829
    %v1267 = vunpack.c.l.b16 %v830
    %v1268 = vunpack.c.h.b16 %v830
    %v1269 = vunpack.c.l.b16 %v831
    %v1270 = vunpack.c.h.b16 %v831
    %v1271 = vunpack.c.l.b16 %v832
    %v1272 = vunpack.c.h.b16 %v832
    %v1273 = vunpack.c.l.b16 %v833
    %v1274 = vunpack.c.h.b16 %v833
    %v1275 = vunpack.c.l.b16 %v834
    %v1276 = vunpack.c.h.b16 %v834
    %v1277 = vunpack.c.l.b16 %v835
    %v1278 = vunpack.c.h.b16 %v835
    %v1279 = vunpack.c.l.b16 %v836
    %v1280 = vunpack.c.h.b16 %v836
    %v1281 = vunpack.c.l.b16 %v837
    %v1282 = vunpack.c.h.b16 %v837
    %v1283 = vunpack.c.l.b16 %v838
    %v1284 = vunpack.c.h.b16 %v838
    %v1285 = vunpack.c.l.b16 %v839
    %v1286 = vunpack.c.h.b16 %v839
    %v1287 = vunpack.c.l.b16 %v840
    %v1288 = vunpack.c.h.b16 %v840
    %v1289 = vunpack.c.l.b16 %v841
    %v1290 = vunpack.c.h.b16 %v841
    %v1291 = vunpack.c.l.b16 %v842
    %v1292 = vunpack.c.h.b16 %v842
    %v1293 = vunpack.c.l.b16 %v843
    %v1294 = vunpack.c.h.b16 %v843
    %v1295 = vunpack.c.l.b16 %v844
    %v1296 = vunpack.c.h.b16 %v844
    %v1297 = vunpack.c.l.b16 %v845
    %v1298 = vunpack.c.h.b16 %v845
    %v1299 = vunpack.c.l.b16 %v846
    %v1300 = vunpack.c.h.b16 %v846
    %v1301 = vunpack.c.l.b16 %v847
    %v1302 = vunpack.c.h.b16 %v847
    %v1303 = vunpack.c.l.b16 %v848
    %v1304 = vunpack.c.h.b16 %v848
    %v1305 = vunpack.c.l.b16 %v849
    %v1306 = vunpack.c.h.b16 %v849
    %v1307 = vunpack.c.l.b16 %v850
    %v1308 = vunpack.c.h.b16 %v850
    %v1309 = vunpack.c.l.b16 %v851
    %v1310 = vunpack.c.h.b16 %v851
    %v1311 = vunpack.c.l.b16 %v852
    %v1312 = vunpack.c.h.b16 %v852
    %v1313 = vunpack.c.l.b16 %v853
    %v1314 = vunpack.c.h.b16 %v853
    %v1315 = vunpack.c.l.b16 %v854
    %v1316 = vunpack.c.h.b16 %v854
    %v1317 = vunpack.c.l.b16 %v855
    %v1318 = vunpack.c.h.b16 %v855
    %v1319 = vunpack.c.l.b16 %v856
    %v1320 = vunpack.c.h.b16 %v856
    %v1321 = vunpack.c.l.b16 %v857
    %v1322 = vunpack.c.h.b16 %v857
    %v1323 = vunpack.c.l.b16 %v858
    %v1324 = vunpack.c.h.b16 %v858
    %v1325 = vunpack.c.l.b16 %v859
    %v1326 = vunpack.c.h.b16 %v859
    %v1327 = vunpack.c.l.b16 %v860
    %v1328 = vunpack.c.h.b16 %v860
    %v1329 = vunpack.c.l.b16 %v861
    %v1330 = vunpack.c.h.b16 %v861
    %v1331 = vunpack.c.l.b16 %v862
    %v1332 = vunpack.c.h.b16 %v862
    %v1333 = vunpack.c.l.b16 %v863
    %v1334 = vunpack.c.h.b16 %v863
    %v1335 = vunpack.c.l.b16 %v864
    %v1336 = vunpack.c.h.b16 %v864
    %v1337 = vunpack.c.l.b16 %v865
    %v1338 = vunpack.c.h.b16 %v865
    %v1339 = vunpack.c.l.b16 %v866
    %v1340 = vunpack.c.h.b16 %v866
    %v1341 = vunpack.c.l.b16 %v867
    %v1342 = vunpack.c.h.b16 %v867
    %v1343 = vunpack.c.l.b16 %v868
    %v1344 = vunpack.c.h.b16 %v868
    %v1345 = vunpack.c.l.b16 %v869
    %v1346 = vunpack.c.h.b16 %v869
    %v1347 = vunpack.c.l.b16 %v870
    %v1348 = vunpack.c.h.b16 %v870
    %v1349 = vunpack.c.l.b16 %v871
    %v1350 = vunpack.c.h.b16 %v871
    %v1351 = vunpack.c.l.b16 %v872
    %v1352 = vunpack.c.h.b16 %v872
    %v1353 = vunpack.c.l.b16 %v873
    %v1354 = vunpack.c.h.b16 %v873
    %v1355 = vunpack.c.l.b16 %v874
    %v1356 = vunpack.c.h.b16 %v874
    %v1357 = vunpack.c.l.b16 %v875
    %v1358 = vunpack.c.h.b16 %v875
    %v1359 = vunpack.c.l.b16 %v876
    %v1360 = vunpack.c.h.b16 %v876
    %v1361 = vunpack.c.l.b16 %v877
    %v1362 = vunpack.c.h.b16 %v877
    %v1363 = vunpack.c.l.b16 %v878
    %v1364 = vunpack.c.h.b16 %v878
    %v1365 = vunpack.c.l.b16 %v879
    %v1366 = vunpack.c.h.b16 %v879
    %v1367 = vunpack.c.l.b16 %v880
    %v1368 = vunpack.c.h.b16 %v880
    %v1369 = vunpack.c.l.b16 %v881
    %v1370 = vunpack.c.h.b16 %v881
    %v1371 = vunpack.c.l.b16 %v882
    %v1372 = vunpack.c.h.b16 %v882
    %v1373 = vunpack.c.l.b16 %v883
    %v1374 = vunpack.c.h.b16 %v883
    %v1375 = vunpack.c.l.b16 %v884
    %v1376 = vunpack.c.h.b16 %v884
    %v1377 = vunpack.c.l.b16 %v885
    %v1378 = vunpack.c.h.b16 %v885
    %v1379 = vunpack.c.l.b16 %v886
    %v1380 = vunpack.c.h.b16 %v886
    %v1381 = vunpack.c.l.b16 %v887
    %v1382 = vunpack.c.h.b16 %v887
    %v1383 = vunpack.c.l.b16 %v888
    %v1384 = vunpack.c.h.b16 %v888
    %v1385 = vunpack.c.l.b16 %v889
    %v1386 = vunpack.c.h.b16 %v889
    %v1387 = vunpack.c.l.b16 %v890
    %v1388 = vunpack.c.h.b16 %v890
    %v1389 = vunpack.c.l.b16 %v891
    %v1390 = vunpack.c.h.b16 %v891
    %v1391 = vunpack.c.l.b16 %v892
    %v1392 = vunpack.c.h.b16 %v892
    %v1393 = vunpack.c.l.b16 %v893
    %v1394 = vunpack.c.h.b16 %v893
    %v1395 = vunpack.c.l.b16 %v894
    %v1396 = vunpack.c.h.b16 %v894
    %v1397 = vunpack.c.l.b16 %v895
    %v1398 = vunpack.c.h.b16 %v895
    %v1399 = vunpack.c.l.b16 %v896
    %v1400 = vunpack.c.h.b16 %v896
    %v1401 = vunpack.c.l.b16 %v897
    %v1402 = vunpack.c.h.b16 %v897
    %v1403 = vunpack.c.l.b16 %v898
    %v1404 = vunpack.c.h.b16 %v898
    %v1405 = vunpack.c.l.b16 %v899
    %v1406 = vunpack.c.h.b16 %v899
    %v1407 = vunpack.c.l.b16 %v900
    %v1408 = vunpack.c.h.b16 %v900
    %v1409 = vunpack.c.l.b16 %v901
    %v1410 = vunpack.c.h.b16 %v901
    %v1411 = vunpack.c.l.b16 %v902
    %v1412 = vunpack.c.h.b16 %v902
    %v1413 = vunpack.c.l.b16 %v903
    %v1414 = vunpack.c.h.b16 %v903
    %v1415 = vunpack.c.l.b16 %v904
    %v1416 = vunpack.c.h.b16 %v904
    %v1417 = vunpack.c.l.b16 %v905
    %v1418 = vunpack.c.h.b16 %v905
    %v1419 = vunpack.c.l.b16 %v906
    %v1420 = vunpack.c.h.b16 %v906
    %v1421 = vunpack.c.l.b16 %v907
    %v1422 = vunpack.c.h.b16 %v907
    %v1423 = vunpack.c.l.b16 %v908
    %v1424 = vunpack.c.h.b16 %v908
    %v1425 = vunpack.c.l.b16 %v909
    %v1426 = vunpack.c.h.b16 %v909
    %v1427 = vunpack.c.l.b16 %v910
    %v1428 = vunpack.c.h.b16 %v910
    %v1429 = vunpack.c.l.b16 %v911
    %v1430 = vunpack.c.h.b16 %v911
    %v1431 = vunpack.c.l.b16 %v912
    %v1432 = vunpack.c.h.b16 %v912
    %v1433 = vunpack.c.l.b16 %v913
    %v1434 = vunpack.c.h.b16 %v913
    %v1435 = vunpack.c.l.b16 %v914
    %v1436 = vunpack.c.h.b16 %v914
    %v1437 = vunpack.c.l.b16 %v915
    %v1438 = vunpack.c.h.b16 %v915
    %v1439 = vunpack.c.l.b16 %v916
    %v1440 = vunpack.c.h.b16 %v916
    %v1441 = vunpack.c.l.b16 %v917
    %v1442 = vunpack.c.h.b16 %v917
    %v1443 = vunpack.c.l.b16 %v918
    %v1444 = vunpack.c.h.b16 %v918
    %v1445 = vunpack.c.l.b16 %v919
    %v1446 = vunpack.c.h.b16 %v919
    %v1447 = vunpack.c.l.b16 %v920
    %v1448 = vunpack.c.h.b16 %v920
    %v1449 = vunpack.c.l.b16 %v921
    %v1450 = vunpack.c.h.b16 %v921
    %v1451 = vunpack.c.l.b16 %v922
    %v1452 = vunpack.c.h.b16 %v922
    %v1453 = vunpack.c.l.b16 %v923
    %v1454 = vunpack.c.h.b16 %v923
    %v1455 = vunpack.c.l.b16 %v924
    %v1456 = vunpack.c.h.b16 %v924
    %v1457 = vunpack.c.l.b16 %v925
    %v1458 = vunpack.c.h.b16 %v925
    %v1459 = vunpack.c.l.b16 %v926
    %v1460 = vunpack.c.h.b16 %v926
    %v1461 = vunpack.c.l.b16 %v927
    %v1462 = vunpack.c.h.b16 %v927
    %v1463 = vunpack.c.l.b16 %v928
    %v1464 = vunpack.c.h.b16 %v928
    %v1465 = vunpack.c.l.b16 %v929
    %v1466 = vunpack.c.h.b16 %v929
    %v1467 = vunpack.c.l.b16 %v930
    %v1468 = vunpack.c.h.b16 %v930
    %v1469 = vpack.c.b16 %v1129, %v1127
    %v1470 = vpack.c.b16 %v1130, %v1128
    %v1471 = vpack.c.b16 %v1133, %v1131
    %v1472 = vpack.c.b16 %v1134, %v1132
    %v1473 = vpack.c.b16 %v1137, %v1135
    %v1474 = vpack.c.b16 %v1138, %v1136
    %v1475 = vpack.c.b16 %v1141, %v1139
    %v1476 = vpack.c.b16 %v1142, %v1140
    %v1477 = vpack.c.b16 %v1145, %v1143
    %v1478 = vpack.c.b16 %v1146, %v1144
    %v1479 = vpack.c.b16 %v1149, %v1147
    %v1480 = vpack.c.b16 %v1150, %v1148
    %v1481 = vpack.c.b16 %v1153, %v1151
    %v1482 = vpack.c.b16 %v1154, %v1152
    %v1483 = vpack.c.b16 %v1157, %v1155
    %v1484 = vpack.c.b16 %v1158, %v1156
    %v1485 = vpack.c.b16 %v1161, %v1159
    %v1486 = vpack.c.b16 %v1162, %v1160
    %v1487 = vpack.c.b16 %v1165, %v1163
    %v1488 = vpack.c.b16 %v1166, %v1164
    %v1489 = vpack.c.b16 %v1169, %v1167
    %v1490 = vpack.c.b16 %v1170, %v1168
    %v1491 = vpack.c.b16 %v1173, %v1171
    %v1492 = vpack.c.b16 %v1174, %v1172
    %v1493 = vpack.c.b16 %v1177, %v1175
    %v1494 = vpack.c.b16 %v1178, %v1176
    %v1495 = vpack.c.b16 %v1181, %v1179
    %v1496 = vpack.c.b16 %v1182, %v1180
    %v1497 = vpack.c.b16 %v1185, %v1183
    %v1498 = vpack.c.b16 %v1186, %v1184
    %v1499 = vpack.c.b16 %v1189, %v1187
    %v1500 = vpack.c.b16 %v1190, %v1188
    %v1501 = vpack.c.b16 %v1193, %v1191
    %v1502 = vpack.c.b16 %v1194, %v1192
    %v1503 = vpack.c.b16 %v1197, %v1195
    %v1504 = vpack.c.b16 %v1198, %v1196
    %v1505 = vpack.c.b16 %v1201, %v1199
    %v1506 = vpack.c.b16 %v1202, %v1200
    %v1507 = vpack.c.b16 %v1205, %v1203
    %v1508 = vpack.c.b16 %v1206, %v1204
    %v1509 = vpack.c.b16 %v1209, %v1207
    %v1510 = vpack.c.b16 %v1210, %v1208
    %v1511 = vpack.c.b16 %v1213, %v1211
    %v1512 = vpack.c.b16 %v1214, %v1212
    %v1513 = vpack.c.b16 %v1217, %v1215
    %v1514 = vpack.c.b16 %v1218, %v1216
    %v1515 = vpack.c.b16 %v1221, %v1219
    %v1516 = vpack.c.b16 %v1222, %v1220
    %v1517 = vpack.c.b16 %v1225, %v1223
    %v1518 = vpack.c.b16 %v1226, %v1224
    %v1519 = vpack.c.b16 %v1229, %v1227
    %v1520 = vpack.c.b16 %v1230, %v1228
    %v1521 = vpack.c.b16 %v1233, %v1231
    %v1522 = vpack.c.b16 %v1234, %v1232
    %v1523 = vpack.c.b16 %v1237, %v1235
    %v1524 = vpack.c.b16 %v1238, %v1236
    %v1525 = vpack.c.b16 %v1241, %v1239
    %v1526 = vpack.c.b16 %v1242, %v1240
    %v1527 = vpack.c.b16 %v1245, %v1243
    %v1528 = vpack.c.b16 %v1246, %v1244
    %v1529 = vpack.c.b16 %v1249, %v1247
    %v1530 = vpack.c.b16 %v1250, %v1248
    %v1531 = vpack.c.b16 %v1253, %v1251
    %v1532 = vpack.c.b16 %v1254, %v1252
    %v1533 = vpack.c.b16 %v1257, %v1255
    %v1534 = vpack.c.b16 %v1258, %v1256
    %v1535 = vpack.c.b16 %v1261, %v1259
    %v1536 = vpack.c.b16 %v1262, %v1260
    %v1537 = vpack.c.b16 %v1265, %v1263
    %v1538 = vpack.c.b16 %v1266, %v1264
    %v1539 = vpack.c.b16 %v1269, %v1267
    %v1540 = vpack.c.b16 %v1270, %v1268
    %v1541 = vpack.c.b16 %v1273, %v1271
    %v1542 = vpack.c.b16 %v1274, %v1272
    %v1543 = vpack.c.b16 %v1277, %v1275
    %v1544 = vpack.c.b16 %v1278, %v1276
    %v1545 = vpack.c.b16 %v1281, %v1279
    %v1546 = vpack.c.b16 %v1282, %v1280
    %v1547 = vpack.c.b16 %v1285, %v1283
    %v1548 = vpack.c.b16 %v1286, %v1284
    %v1549 = vpack.c.b16 %v1289, %v1287
    %v1550 = vpack.c.b16 %v1290, %v1288
    %v1551 = vpack.c.b16 %v1293, %v1291
    %v1552 = vpack.c.b16 %v1294, %v1292
    %v1553 = vpack.c.b16 %v1297, %v1295
    %v1554 = vpack.c.b16 %v1298, %v1296
    %v1555 = vpack.c.b16 %v1301, %v1299
    %v1556 = vpack.c.b16 %v1302, %v1300
    %v1557 = vpack.c.b16 %v1305, %v1303
    %v1558 = vpack.c.b16 %v1306, %v1304
    %v1559 = vpack.c.b16 %v1309, %v1307
    %v1560 = vpack.c.b16 %v1310, %v1308
    %v1561 = vpack.c.b16 %v1313, %v1311
    %v1562 = vpack.c.b16 %v1314, %v1312
    %v1563 = vpack.c.b16 %v1317, %v1315
    %v1564 = vpack.c.b16 %v1318, %v1316
    %v1565 = vpack.c.b16 %v1321, %v1319
    %v1566 = vpack.c.b16 %v1322, %v1320
    %v1567 = vpack.c.b16 %v1325, %v1323
    %v1568 = vpack.c.b16 %v1326, %v1324
    %v1569 = vpack.c.b16 %v1329, %v1327
    %v1570 = vpack.c.b16 %v1330, %v1328
    %v1571 = vpack.c.b16 %v1333, %v1331
    %v1572 = vpack.c.b16 %v1334, %v1332
    %v1573 = vpack.c.b16 %v1337, %v1335
    %v1574 = vpack.c.b16 %v1338, %v1336
    %v1575 = vpack.c.b16 %v1341, %v1339
    %v1576 = vpack.c.b16 %v1342, %v1340
    %v1577 = vpack.c.b16 %v1345, %v1343
    %v1578 = vpack.c.b16 %v1346, %v1344
    %v1579 = vpack.c.b16 %v1349, %v1347
    %v1580 = vpack.c.b16 %v1350, %v1348
    %v1581 = vpack.c.b16 %v1353, %v1351
    %v1582 = vpack.c.b16 %v1354, %v1352
    %v1583 = vpack.c.b16 %v1357, %v1355
    %v1584 = vpack.c.b16 %v1358, %v1356
    %v1585 = vpack.c.b16 %v1361, %v1359
    %v1586 = vpack.c.b16 %v1362, %v1360
    %v1587 = vpack.c.b16 %v1365, %v1363
    %v1588 = vpack.c.b16 %v1366, %v1364
    %v1589 = vpack.c.b16 %v1369, %v1367
    %v1590 = vpack.c.b16 %v1370, %v1368
    %v1591 = vpack.c.b16 %v1373, %v1371
    %v1592 = vpack.c.b16 %v1374, %v1372
    %v1593 = vpack.c.b16 %v1377, %v1375
    %v1594 = vpack.c.b16 %v1378, %v1376
    %v1595 = vpack.c.b16 %v1381, %v1379
    %v1596 = vpack.c.b16 %v1382, %v1380
    %v1597 = vpack.c.b16 %v1385, %v1383
    %v1598 = vpack.c.b16 %v1386, %v1384
    %v1599 = vpack.c.b16 %v1389, %v1387
    %v1600 = vpack.c.b16 %v1390, %v1388
    %v1601 = vpack.c.b16 %v1393, %v1391
    %v1602 = vpack.c.b16 %v1394, %v1392
    %v1603 = vpack.c.b16 %v1397, %v1395
    %v1604 = vpack.c.b16 %v1398, %v1396
    %v1605 = vpack.c.b16 %v1401, %v1399
    %v1606 = vpack.c.b16 %v1402, %v1400
    %v1607 = vpack.c.b16 %v1405, %v1403
    %v1608 = vpack.c.b16 %v1406, %v1404
    %v1609 = vpack.c.b16 %v1409, %v1407
    %v1610 = vpack.c.b16 %v1410, %v1408
    %v1611 = vpack.c.b16 %v1413, %v1411
    %v1612 = vpack.c.b16 %v1414, %v1412
    %v1613 = vpack.c.b16 %v1417, %v1415
    %v1614 = vpack.c.b16 %v1418, %v1416
    %v1615 = vpack.c.b16 %v1421, %v1419
    %v1616 = vpack.c.b16 %v1422, %v1420
    %v1617 = vpack.c.b16 %v1425, %v1423
    %v1618 = vpack.c.b16 %v1426, %v1424
    %v1619 = vpack.c.b16 %v1429, %v1427
    %v1620 = vpack.c.b16 %v1430, %v1428
    %v1621 = vpack.c.b16 %v1433, %v1431
    %v1622 = vpack.c.b16 %v1434, %v1432
    %v1623 = vpack.c.b16 %v1437, %v1435
    %v1624 = vpack.c.b16 %v1438, %v1436
    %v1625 = vpack.c.b16 %v1441, %v1439
    %v1626 = vpack.c.b16 %v1442, %v1440
    %v1627 = vpack.c.b16 %v1445, %v1443
    %v1628 = vpack.c.b16 %v1446, %v1444
    %v1629 = vpack.c.b16 %v1449, %v1447
    %v1630 = vpack.c.b16 %v1450, %v1448
    %v1631 = vpack.c.b16 %v1453, %v1451
    %v1632 = vpack.c.b16 %v1454, %v1452
    %v1633 = vpack.c.b16 %v1457, %v1455
    %v1634 = vpack.c.b16 %v1458, %v1456
    %v1635 = vpack.c.b16 %v1461, %v1459
    %v1636 = vpack.c.b16 %v1462, %v1460
    %v1637 = vpack.c.b16 %v1465, %v1463
    %v1638 = vpack.c.b16 %v1466, %v1464
    %v1639 = vpack.c.b16 %v1467, %v1467
    %v1640 = vpack.c.b16 %v1468, %v1468
    %vm1811 = vcmask 703488
    %v1812 = vsel %vm1811, %v945, 0
    %vm1814 = vcmask 1042432
    %v1816 = vsel %vm1814, %v1639, 0
    %v1819 = vsel %vm1814, %v1640, 0
    %1821 = vmatpush.bf16.msra.mxu0 %v1483
    %1822 = vmatpush.bf16.msra.mxu0 %v1481
    %1823 = vmatpush.bf16.msra.mxu0 %v1479
    %1824 = vmatpush.bf16.msra.mxu0 %v1477
    %1825 = vmatpush.bf16.msra.mxu0 %v1475
    %1826 = vmatpush.bf16.msra.mxu0 %v1473
    %1827 = vmatpush.bf16.msra.mxu0 %v1471
    %1828 = vmatpush.bf16.msra.mxu0 %v1469
    %1829 = vmatmul.bf16.gmra.mxu0 %v933
    %v1830 = vpop.f32.mrf.mxu0
    %v1831 = vadd.f32 0.0, %v1830
    %v1832 = vpop.f32.mrf.mxu0
    %1833 = vdwg.mxu0
    %1834 = vmatpush.bf16.msra.mxu0 %v1499
    %1835 = vmatpush.bf16.msra.mxu0 %v1497
    %1836 = vmatpush.bf16.msra.mxu0 %v1495
    %1837 = vmatpush.bf16.msra.mxu0 %v1493
    %1838 = vmatpush.bf16.msra.mxu0 %v1491
    %1839 = vmatpush.bf16.msra.mxu0 %v1489
    %1840 = vmatpush.bf16.msra.mxu0 %v1487
    %1841 = vmatpush.bf16.msra.mxu0 %v1485
    %1842 = vmatmul.bf16.gmra.mxu0 %v934
    %v1843 = vpop.f32.mrf.mxu0
    %v1844 = vadd.f32 %v1831, %v1843
    %v1845 = vpop.f32.mrf.mxu0
    %1846 = vdwg.mxu0
    %1847 = vmatpush.bf16.msra.mxu0 %v1515
    %1848 = vmatpush.bf16.msra.mxu0 %v1513
    %1849 = vmatpush.bf16.msra.mxu0 %v1511
    %1850 = vmatpush.bf16.msra.mxu0 %v1509
    %1851 = vmatpush.bf16.msra.mxu0 %v1507
    %1852 = vmatpush.bf16.msra.mxu0 %v1505
    %1853 = vmatpush.bf16.msra.mxu0 %v1503
    %1854 = vmatpush.bf16.msra.mxu0 %v1501
    %1855 = vmatmul.bf16.gmra.mxu0 %v935
    %v1856 = vpop.f32.mrf.mxu0
    %v1857 = vadd.f32 %v1844, %v1856
    %v1858 = vpop.f32.mrf.mxu0
    %1859 = vdwg.mxu0
    %1860 = vmatpush.bf16.msra.mxu0 %v1531
    %1861 = vmatpush.bf16.msra.mxu0 %v1529
    %1862 = vmatpush.bf16.msra.mxu0 %v1527
    %1863 = vmatpush.bf16.msra.mxu0 %v1525
    %1864 = vmatpush.bf16.msra.mxu0 %v1523
    %1865 = vmatpush.bf16.msra.mxu0 %v1521
    %1866 = vmatpush.bf16.msra.mxu0 %v1519
    %1867 = vmatpush.bf16.msra.mxu0 %v1517
    %1868 = vmatmul.bf16.gmra.mxu0 %v936
    %v1869 = vpop.f32.mrf.mxu0
    %v1870 = vadd.f32 %v1857, %v1869
    %v1871 = vpop.f32.mrf.mxu0
    %1872 = vdwg.mxu0
    %1873 = vmatpush.bf16.msra.mxu0 %v1547
    %1874 = vmatpush.bf16.msra.mxu0 %v1545
    %1875 = vmatpush.bf16.msra.mxu0 %v1543
    %1876 = vmatpush.bf16.msra.mxu0 %v1541
    %1877 = vmatpush.bf16.msra.mxu0 %v1539
    %1878 = vmatpush.bf16.msra.mxu0 %v1537
    %1879 = vmatpush.bf16.msra.mxu0 %v1535
    %1880 = vmatpush.bf16.msra.mxu0 %v1533
    %1881 = vmatmul.bf16.gmra.mxu0 %v937
    %v1882 = vpop.f32.mrf.mxu0
    %v1883 = vadd.f32 %v1870, %v1882
    %v1884 = vpop.f32.mrf.mxu0
    %1885 = vdwg.mxu0
    %1886 = vmatpush.bf16.msra.mxu0 %v1563
    %1887 = vmatpush.bf16.msra.mxu0 %v1561
    %1888 = vmatpush.bf16.msra.mxu0 %v1559
    %1889 = vmatpush.bf16.msra.mxu0 %v1557
    %1890 = vmatpush.bf16.msra.mxu0 %v1555
    %1891 = vmatpush.bf16.msra.mxu0 %v1553
    %1892 = vmatpush.bf16.msra.mxu0 %v1551
    %1893 = vmatpush.bf16.msra.mxu0 %v1549
    %1894 = vmatmul.bf16.gmra.mxu0 %v938
    %v1895 = vpop.f32.mrf.mxu0
    %v1896 = vadd.f32 %v1883, %v1895
    %v1897 = vpop.f32.mrf.mxu0
    %1898 = vdwg.mxu0
    %1899 = vmatpush.bf16.msra.mxu0 %v1579
    %1900 = vmatpush.bf16.msra.mxu0 %v1577
    %1901 = vmatpush.bf16.msra.mxu0 %v1575
    %1902 = vmatpush.bf16.msra.mxu0 %v1573
    %1903 = vmatpush.bf16.msra.mxu0 %v1571
    %1904 = vmatpush.bf16.msra.mxu0 %v1569
    %1905 = vmatpush.bf16.msra.mxu0 %v1567
    %1906 = vmatpush.bf16.msra.mxu0 %v1565
    %1907 = vmatmul.bf16.gmra.mxu0 %v939
    %v1908 = vpop.f32.mrf.mxu0
    %v1909 = vadd.f32 %v1896, %v1908
    %v1910 = vpop.f32.mrf.mxu0
    %1911 = vdwg.mxu0
    %1912 = vmatpush.bf16.msra.mxu0 %v1595
    %1913 = vmatpush.bf16.msra.mxu0 %v1593
    %1914 = vmatpush.bf16.msra.mxu0 %v1591
    %1915 = vmatpush.bf16.msra.mxu0 %v1589
    %1916 = vmatpush.bf16.msra.mxu0 %v1587
    %1917 = vmatpush.bf16.msra.mxu0 %v1585
    %1918 = vmatpush.bf16.msra.mxu0 %v1583
    %1919 = vmatpush.bf16.msra.mxu0 %v1581
    %1920 = vmatmul.bf16.gmra.mxu0 %v940
    %v1921 = vpop.f32.mrf.mxu0
    %v1922 = vadd.f32 %v1909, %v1921
    %v1923 = vpop.f32.mrf.mxu0
    %1924 = vdwg.mxu0
    %1925 = vmatpush.bf16.msra.mxu0 %v1611
    %1926 = vmatpush.bf16.msra.mxu0 %v1609
    %1927 = vmatpush.bf16.msra.mxu0 %v1607
    %1928 = vmatpush.bf16.msra.mxu0 %v1605
    %1929 = vmatpush.bf16.msra.mxu0 %v1603
    %1930 = vmatpush.bf16.msra.mxu0 %v1601
    %1931 = vmatpush.bf16.msra.mxu0 %v1599
    %1932 = vmatpush.bf16.msra.mxu0 %v1597
    %1933 = vmatmul.bf16.gmra.mxu0 %v943
    %v1934 = vpop.f32.mrf.mxu0
    %v1935 = vadd.f32 %v1922, %v1934
    %v1936 = vpop.f32.mrf.mxu0
    %1937 = vdwg.mxu0
    %1938 = vmatpush.bf16.msra.mxu0 %v1627
    %1939 = vmatpush.bf16.msra.mxu0 %v1625
    %1940 = vmatpush.bf16.msra.mxu0 %v1623
    %1941 = vmatpush.bf16.msra.mxu0 %v1621
    %1942 = vmatpush.bf16.msra.mxu0 %v1619
    %1943 = vmatpush.bf16.msra.mxu0 %v1617
    %1944 = vmatpush.bf16.msra.mxu0 %v1615
    %1945 = vmatpush.bf16.msra.mxu0 %v1613
    %1946 = vmatmul.bf16.gmra.mxu0 %v944
    %v1947 = vpop.f32.mrf.mxu0
    %v1948 = vadd.f32 %v1935, %v1947
    %v1949 = vpop.f32.mrf.mxu0
    %1950 = vdwg.mxu0
    %1951 = vmatpush.bf16.msra.mxu0 0
    %1952 = vmatpush.bf16.msra.mxu0 0
    %1953 = vmatpush.bf16.msra.mxu0 %v1816
    %1954 = vmatpush.bf16.msra.mxu0 %v1637
    %1955 = vmatpush.bf16.msra.mxu0 %v1635
    %1956 = vmatpush.bf16.msra.mxu0 %v1633
    %1957 = vmatpush.bf16.msra.mxu0 %v1631
    %1958 = vmatpush.bf16.msra.mxu0 %v1629
    %1959 = vmatmul.bf16.gmra.mxu0 %v1812
    %v1960 = vpop.f32.mrf.mxu0
    %v1961 = vadd.f32 %v1948, %v1960
    %v1962 = vpop.f32.mrf.mxu0
    %1963 = vdwg.mxu0
    %1964 = vmatpush.bf16.msra.mxu0 %v1484
    %1965 = vmatpush.bf16.msra.mxu0 %v1482
    %1966 = vmatpush.bf16.msra.mxu0 %v1480
    %1967 = vmatpush.bf16.msra.mxu0 %v1478
    %1968 = vmatpush.bf16.msra.mxu0 %v1476
    %1969 = vmatpush.bf16.msra.mxu0 %v1474
    %1970 = vmatpush.bf16.msra.mxu0 %v1472
    %1971 = vmatpush.bf16.msra.mxu0 %v1470
    %1972 = vmatmul.bf16.gmra.mxu0 %v933
    %v1973 = vpop.f32.mrf.mxu0
    %v1974 = vadd.f32 0.0, %v1973
    %v1975 = vpop.f32.mrf.mxu0
    %1976 = vdwg.mxu0
    %1977 = vmatpush.bf16.msra.mxu0 %v1500
    %1978 = vmatpush.bf16.msra.mxu0 %v1498
    %1979 = vmatpush.bf16.msra.mxu0 %v1496
    %1980 = vmatpush.bf16.msra.mxu0 %v1494
    %1981 = vmatpush.bf16.msra.mxu0 %v1492
    %1982 = vmatpush.bf16.msra.mxu0 %v1490
    %1983 = vmatpush.bf16.msra.mxu0 %v1488
    %1984 = vmatpush.bf16.msra.mxu0 %v1486
    %1985 = vmatmul.bf16.gmra.mxu0 %v934
    %v1986 = vpop.f32.mrf.mxu0
    %v1987 = vadd.f32 %v1974, %v1986
    %v1988 = vpop.f32.mrf.mxu0
    %1989 = vdwg.mxu0
    %1990 = vmatpush.bf16.msra.mxu0 %v1516
    %1991 = vmatpush.bf16.msra.mxu0 %v1514
    %1992 = vmatpush.bf16.msra.mxu0 %v1512
    %1993 = vmatpush.bf16.msra.mxu0 %v1510
    %1994 = vmatpush.bf16.msra.mxu0 %v1508
    %1995 = vmatpush.bf16.msra.mxu0 %v1506
    %1996 = vmatpush.bf16.msra.mxu0 %v1504
    %1997 = vmatpush.bf16.msra.mxu0 %v1502
    %1998 = vmatmul.bf16.gmra.mxu0 %v935
    %v1999 = vpop.f32.mrf.mxu0
    %v2000 = vadd.f32 %v1987, %v1999
    %v2001 = vpop.f32.mrf.mxu0
    %2002 = vdwg.mxu0
    %2003 = vmatpush.bf16.msra.mxu0 %v1532
    %2004 = vmatpush.bf16.msra.mxu0 %v1530
    %2005 = vmatpush.bf16.msra.mxu0 %v1528
    %2006 = vmatpush.bf16.msra.mxu0 %v1526
    %2007 = vmatpush.bf16.msra.mxu0 %v1524
    %2008 = vmatpush.bf16.msra.mxu0 %v1522
    %2009 = vmatpush.bf16.msra.mxu0 %v1520
    %2010 = vmatpush.bf16.msra.mxu0 %v1518
    %2011 = vmatmul.bf16.gmra.mxu0 %v936
    %v2012 = vpop.f32.mrf.mxu0
    %v2013 = vadd.f32 %v2000, %v2012
    %v2014 = vpop.f32.mrf.mxu0
    %2015 = vdwg.mxu0
    %2016 = vmatpush.bf16.msra.mxu0 %v1548
    %2017 = vmatpush.bf16.msra.mxu0 %v1546
    %2018 = vmatpush.bf16.msra.mxu0 %v1544
    %2019 = vmatpush.bf16.msra.mxu0 %v1542
    %2020 = vmatpush.bf16.msra.mxu0 %v1540
    %2021 = vmatpush.bf16.msra.mxu0 %v1538
    %2022 = vmatpush.bf16.msra.mxu0 %v1536
    %2023 = vmatpush.bf16.msra.mxu0 %v1534
    %2024 = vmatmul.bf16.gmra.mxu0 %v937
    %v2025 = vpop.f32.mrf.mxu0
    %v2026 = vadd.f32 %v2013, %v2025
    %v2027 = vpop.f32.mrf.mxu0
    %2028 = vdwg.mxu0
    %2029 = vmatpush.bf16.msra.mxu0 %v1564
    %2030 = vmatpush.bf16.msra.mxu0 %v1562
    %2031 = vmatpush.bf16.msra.mxu0 %v1560
    %2032 = vmatpush.bf16.msra.mxu0 %v1558
    %2033 = vmatpush.bf16.msra.mxu0 %v1556
    %2034 = vmatpush.bf16.msra.mxu0 %v1554
    %2035 = vmatpush.bf16.msra.mxu0 %v1552
    %2036 = vmatpush.bf16.msra.mxu0 %v1550
    %2037 = vmatmul.bf16.gmra.mxu0 %v938
    %v2038 = vpop.f32.mrf.mxu0
    %v2039 = vadd.f32 %v2026, %v2038
    %v2040 = vpop.f32.mrf.mxu0
    %2041 = vdwg.mxu0
    %2042 = vmatpush.bf16.msra.mxu0 %v1580
    %2043 = vmatpush.bf16.msra.mxu0 %v1578
    %2044 = vmatpush.bf16.msra.mxu0 %v1576
    %2045 = vmatpush.bf16.msra.mxu0 %v1574
    %2046 = vmatpush.bf16.msra.mxu0 %v1572
    %2047 = vmatpush.bf16.msra.mxu0 %v1570
    %2048 = vmatpush.bf16.msra.mxu0 %v1568
    %2049 = vmatpush.bf16.msra.mxu0 %v1566
    %2050 = vmatmul.bf16.gmra.mxu0 %v939
    %v2051 = vpop.f32.mrf.mxu0
    %v2052 = vadd.f32 %v2039, %v2051
    %v2053 = vpop.f32.mrf.mxu0
    %2054 = vdwg.mxu0
    %2055 = vmatpush.bf16.msra.mxu0 %v1596
    %2056 = vmatpush.bf16.msra.mxu0 %v1594
    %2057 = vmatpush.bf16.msra.mxu0 %v1592
    %2058 = vmatpush.bf16.msra.mxu0 %v1590
    %2059 = vmatpush.bf16.msra.mxu0 %v1588
    %2060 = vmatpush.bf16.msra.mxu0 %v1586
    %2061 = vmatpush.bf16.msra.mxu0 %v1584
    %2062 = vmatpush.bf16.msra.mxu0 %v1582
    %2063 = vmatmul.bf16.gmra.mxu0 %v940
    %v2064 = vpop.f32.mrf.mxu0
    %v2065 = vadd.f32 %v2052, %v2064
    %v2066 = vpop.f32.mrf.mxu0
    %2067 = vdwg.mxu0
    %2068 = vmatpush.bf16.msra.mxu0 %v1612
    %2069 = vmatpush.bf16.msra.mxu0 %v1610
    %2070 = vmatpush.bf16.msra.mxu0 %v1608
    %2071 = vmatpush.bf16.msra.mxu0 %v1606
    %2072 = vmatpush.bf16.msra.mxu0 %v1604
    %2073 = vmatpush.bf16.msra.mxu0 %v1602
    %2074 = vmatpush.bf16.msra.mxu0 %v1600
    %2075 = vmatpush.bf16.msra.mxu0 %v1598
    %2076 = vmatmul.bf16.gmra.mxu0 %v943
    %v2077 = vpop.f32.mrf.mxu0
    %v2078 = vadd.f32 %v2065, %v2077
    %v2079 = vpop.f32.mrf.mxu0
    %2080 = vdwg.mxu0
    %2081 = vmatpush.bf16.msra.mxu0 %v1628
    %2082 = vmatpush.bf16.msra.mxu0 %v1626
    %2083 = vmatpush.bf16.msra.mxu0 %v1624
    %2084 = vmatpush.bf16.msra.mxu0 %v1622
    %2085 = vmatpush.bf16.msra.mxu0 %v1620
    %2086 = vmatpush.bf16.msra.mxu0 %v1618
    %2087 = vmatpush.bf16.msra.mxu0 %v1616
    %2088 = vmatpush.bf16.msra.mxu0 %v1614
    %2089 = vmatmul.bf16.gmra.mxu0 %v944
    %v2090 = vpop.f32.mrf.mxu0
    %v2091 = vadd.f32 %v2078, %v2090
    %v2092 = vpop.f32.mrf.mxu0
    %2093 = vdwg.mxu0
    %2094 = vmatpush.bf16.msra.mxu0 0
    %2095 = vmatpush.bf16.msra.mxu0 0
    %2096 = vmatpush.bf16.msra.mxu0 %v1819
    %2097 = vmatpush.bf16.msra.mxu0 %v1638
    %2098 = vmatpush.bf16.msra.mxu0 %v1636
    %2099 = vmatpush.bf16.msra.mxu0 %v1634
    %2100 = vmatpush.bf16.msra.mxu0 %v1632
    %2101 = vmatpush.bf16.msra.mxu0 %v1630
    %2102 = vmatmul.bf16.gmra.mxu0 %v1812
    %v2103 = vpop.f32.mrf.mxu0
    %v2104 = vadd.f32 %v2091, %v2103
    %v2105 = vpop.f32.mrf.mxu0
    %2106 = vdwg.mxu0
    %2108 = vst [vmem:[#allocation1] ss:$9 sm:$0xff] %v585
    %v2109 = vld [vmem:[#allocation1] sm:$0xff]
    %v2110 = vld [vmem:[#allocation1 + $0x9] sm:$0xff]
    %v2111 = vld [vmem:[#allocation1 + $0x12] sm:$0xff]
    %v2112 = vld [vmem:[#allocation1 + $0x1b] sm:$0xff]
    %v2113 = vld [vmem:[#allocation1 + $0x24] sm:$0xff]
    %v2114 = vld [vmem:[#allocation1 + $0x2d] sm:$0xff]
    %v2115 = vld [vmem:[#allocation1 + $0x36] sm:$0xff]
    %v2116 = vld [vmem:[#allocation1 + $0x3f] sm:$0xff]
    %2118 = vst [vmem:[#allocation1] ss:$9 sm:$0xff] %v586
    %v2119 = vld [vmem:[#allocation1] sm:$0xff]
    %v2120 = vld [vmem:[#allocation1 + $0x9] sm:$0xff]
    %v2121 = vld [vmem:[#allocation1 + $0x12] sm:$0xff]
    %v2303 = vunpack.c.l.b16 %v587
    %v2304 = vunpack.c.h.b16 %v587
    %v2305 = vunpack.c.l.b16 %v588
    %v2306 = vunpack.c.h.b16 %v588
    %v2307 = vunpack.c.l.b16 %v589
    %v2308 = vunpack.c.h.b16 %v589
    %v2309 = vunpack.c.l.b16 %v590
    %v2310 = vunpack.c.h.b16 %v590
    %v2311 = vunpack.c.l.b16 %v591
    %v2312 = vunpack.c.h.b16 %v591
    %v2313 = vunpack.c.l.b16 %v592
    %v2314 = vunpack.c.h.b16 %v592
    %v2315 = vunpack.c.l.b16 %v593
    %v2316 = vunpack.c.h.b16 %v593
    %v2317 = vunpack.c.l.b16 %v594
    %v2318 = vunpack.c.h.b16 %v594
    %v2319 = vunpack.c.l.b16 %v595
    %v2320 = vunpack.c.h.b16 %v595
    %v2321 = vunpack.c.l.b16 %v596
    %v2322 = vunpack.c.h.b16 %v596
    %v2323 = vunpack.c.l.b16 %v597
    %v2324 = vunpack.c.h.b16 %v597
    %v2325 = vunpack.c.l.b16 %v598
    %v2326 = vunpack.c.h.b16 %v598
    %v2327 = vunpack.c.l.b16 %v599
    %v2328 = vunpack.c.h.b16 %v599
    %v2329 = vunpack.c.l.b16 %v600
    %v2330 = vunpack.c.h.b16 %v600
    %v2331 = vunpack.c.l.b16 %v601
    %v2332 = vunpack.c.h.b16 %v601
    %v2333 = vunpack.c.l.b16 %v602
    %v2334 = vunpack.c.h.b16 %v602
    %v2335 = vunpack.c.l.b16 %v603
    %v2336 = vunpack.c.h.b16 %v603
    %v2337 = vunpack.c.l.b16 %v604
    %v2338 = vunpack.c.h.b16 %v604
    %v2339 = vunpack.c.l.b16 %v605
    %v2340 = vunpack.c.h.b16 %v605
    %v2341 = vunpack.c.l.b16 %v606
    %v2342 = vunpack.c.h.b16 %v606
    %v2343 = vunpack.c.l.b16 %v607
    %v2344 = vunpack.c.h.b16 %v607
    %v2345 = vunpack.c.l.b16 %v608
    %v2346 = vunpack.c.h.b16 %v608
    %v2347 = vunpack.c.l.b16 %v609
    %v2348 = vunpack.c.h.b16 %v609
    %v2349 = vunpack.c.l.b16 %v610
    %v2350 = vunpack.c.h.b16 %v610
    %v2351 = vunpack.c.l.b16 %v611
    %v2352 = vunpack.c.h.b16 %v611
    %v2353 = vunpack.c.l.b16 %v612
    %v2354 = vunpack.c.h.b16 %v612
    %v2355 = vunpack.c.l.b16 %v613
    %v2356 = vunpack.c.h.b16 %v613
    %v2357 = vunpack.c.l.b16 %v614
    %v2358 = vunpack.c.h.b16 %v614
    %v2359 = vunpack.c.l.b16 %v615
    %v2360 = vunpack.c.h.b16 %v615
    %v2361 = vunpack.c.l.b16 %v616
    %v2362 = vunpack.c.h.b16 %v616
    %v2363 = vunpack.c.l.b16 %v617
    %v2364 = vunpack.c.h.b16 %v617
    %v2365 = vunpack.c.l.b16 %v618
    %v2366 = vunpack.c.h.b16 %v618
    %v2367 = vunpack.c.l.b16 %v619
    %v2368 = vunpack.c.h.b16 %v619
    %v2369 = vunpack.c.l.b16 %v620
    %v2370 = vunpack.c.h.b16 %v620
    %v2371 = vunpack.c.l.b16 %v621
    %v2372 = vunpack.c.h.b16 %v621
    %v2373 = vunpack.c.l.b16 %v622
    %v2374 = vunpack.c.h.b16 %v622
    %v2375 = vunpack.c.l.b16 %v623
    %v2376 = vunpack.c.h.b16 %v623
    %v2377 = vunpack.c.l.b16 %v624
    %v2378 = vunpack.c.h.b16 %v624
    %v2379 = vunpack.c.l.b16 %v625
    %v2380 = vunpack.c.h.b16 %v625
    %v2381 = vunpack.c.l.b16 %v626
    %v2382 = vunpack.c.h.b16 %v626
    %v2383 = vunpack.c.l.b16 %v627
    %v2384 = vunpack.c.h.b16 %v627
    %v2385 = vunpack.c.l.b16 %v628
    %v2386 = vunpack.c.h.b16 %v628
    %v2387 = vunpack.c.l.b16 %v629
    %v2388 = vunpack.c.h.b16 %v629
    %v2389 = vunpack.c.l.b16 %v630
    %v2390 = vunpack.c.h.b16 %v630
    %v2391 = vunpack.c.l.b16 %v631
    %v2392 = vunpack.c.h.b16 %v631
    %v2393 = vunpack.c.l.b16 %v632
    %v2394 = vunpack.c.h.b16 %v632
    %v2395 = vunpack.c.l.b16 %v633
    %v2396 = vunpack.c.h.b16 %v633
    %v2397 = vunpack.c.l.b16 %v634
    %v2398 = vunpack.c.h.b16 %v634
    %v2399 = vunpack.c.l.b16 %v635
    %v2400 = vunpack.c.h.b16 %v635
    %v2401 = vunpack.c.l.b16 %v636
    %v2402 = vunpack.c.h.b16 %v636
    %v2403 = vunpack.c.l.b16 %v637
    %v2404 = vunpack.c.h.b16 %v637
    %v2405 = vunpack.c.l.b16 %v638
    %v2406 = vunpack.c.h.b16 %v638
    %v2407 = vunpack.c.l.b16 %v639
    %v2408 = vunpack.c.h.b16 %v639
    %v2409 = vunpack.c.l.b16 %v640
    %v2410 = vunpack.c.h.b16 %v640
    %v2411 = vunpack.c.l.b16 %v641
    %v2412 = vunpack.c.h.b16 %v641
    %v2413 = vunpack.c.l.b16 %v642
    %v2414 = vunpack.c.h.b16 %v642
    %v2415 = vunpack.c.l.b16 %v643
    %v2416 = vunpack.c.h.b16 %v643
    %v2417 = vunpack.c.l.b16 %v644
    %v2418 = vunpack.c.h.b16 %v644
    %v2419 = vunpack.c.l.b16 %v645
    %v2420 = vunpack.c.h.b16 %v645
    %v2421 = vunpack.c.l.b16 %v646
    %v2422 = vunpack.c.h.b16 %v646
    %v2423 = vunpack.c.l.b16 %v647
    %v2424 = vunpack.c.h.b16 %v647
    %v2425 = vunpack.c.l.b16 %v648
    %v2426 = vunpack.c.h.b16 %v648
    %v2427 = vunpack.c.l.b16 %v649
    %v2428 = vunpack.c.h.b16 %v649
    %v2429 = vunpack.c.l.b16 %v650
    %v2430 = vunpack.c.h.b16 %v650
    %v2431 = vunpack.c.l.b16 %v651
    %v2432 = vunpack.c.h.b16 %v651
    %v2433 = vunpack.c.l.b16 %v652
    %v2434 = vunpack.c.h.b16 %v652
    %v2435 = vunpack.c.l.b16 %v653
    %v2436 = vunpack.c.h.b16 %v653
    %v2437 = vunpack.c.l.b16 %v654
    %v2438 = vunpack.c.h.b16 %v654
    %v2439 = vunpack.c.l.b16 %v655
    %v2440 = vunpack.c.h.b16 %v655
    %v2441 = vunpack.c.l.b16 %v656
    %v2442 = vunpack.c.h.b16 %v656
    %v2443 = vunpack.c.l.b16 %v657
    %v2444 = vunpack.c.h.b16 %v657
    %v2445 = vunpack.c.l.b16 %v658
    %v2446 = vunpack.c.h.b16 %v658
    %v2447 = vunpack.c.l.b16 %v659
    %v2448 = vunpack.c.h.b16 %v659
    %v2449 = vunpack.c.l.b16 %v660
    %v2450 = vunpack.c.h.b16 %v660
    %v2451 = vunpack.c.l.b16 %v661
    %v2452 = vunpack.c.h.b16 %v661
    %v2453 = vunpack.c.l.b16 %v662
    %v2454 = vunpack.c.h.b16 %v662
    %v2455 = vunpack.c.l.b16 %v663
    %v2456 = vunpack.c.h.b16 %v663
    %v2457 = vunpack.c.l.b16 %v664
    %v2458 = vunpack.c.h.b16 %v664
    %v2459 = vunpack.c.l.b16 %v665
    %v2460 = vunpack.c.h.b16 %v665
    %v2461 = vunpack.c.l.b16 %v666
    %v2462 = vunpack.c.h.b16 %v666
    %v2463 = vunpack.c.l.b16 %v667
    %v2464 = vunpack.c.h.b16 %v667
    %v2465 = vunpack.c.l.b16 %v668
    %v2466 = vunpack.c.h.b16 %v668
    %v2467 = vunpack.c.l.b16 %v669
    %v2468 = vunpack.c.h.b16 %v669
    %v2469 = vunpack.c.l.b16 %v670
    %v2470 = vunpack.c.h.b16 %v670
    %v2471 = vunpack.c.l.b16 %v671
    %v2472 = vunpack.c.h.b16 %v671
    %v2473 = vunpack.c.l.b16 %v672
    %v2474 = vunpack.c.h.b16 %v672
    %v2475 = vunpack.c.l.b16 %v673
    %v2476 = vunpack.c.h.b16 %v673
    %v2477 = vunpack.c.l.b16 %v674
    %v2478 = vunpack.c.h.b16 %v674
    %v2479 = vunpack.c.l.b16 %v675
    %v2480 = vunpack.c.h.b16 %v675
    %v2481 = vunpack.c.l.b16 %v676
    %v2482 = vunpack.c.h.b16 %v676
    %v2483 = vunpack.c.l.b16 %v677
    %v2484 = vunpack.c.h.b16 %v677
    %v2485 = vunpack.c.l.b16 %v678
    %v2486 = vunpack.c.h.b16 %v678
    %v2487 = vunpack.c.l.b16 %v679
    %v2488 = vunpack.c.h.b16 %v679
    %v2489 = vunpack.c.l.b16 %v680
    %v2490 = vunpack.c.h.b16 %v680
    %v2491 = vunpack.c.l.b16 %v681
    %v2492 = vunpack.c.h.b16 %v681
    %v2493 = vunpack.c.l.b16 %v682
    %v2494 = vunpack.c.h.b16 %v682
    %v2495 = vunpack.c.l.b16 %v683
    %v2496 = vunpack.c.h.b16 %v683
    %v2497 = vunpack.c.l.b16 %v684
    %v2498 = vunpack.c.h.b16 %v684
    %v2499 = vunpack.c.l.b16 %v685
    %v2500 = vunpack.c.h.b16 %v685
    %v2501 = vunpack.c.l.b16 %v686
    %v2502 = vunpack.c.h.b16 %v686
    %v2503 = vunpack.c.l.b16 %v687
    %v2504 = vunpack.c.h.b16 %v687
    %v2505 = vunpack.c.l.b16 %v688
    %v2506 = vunpack.c.h.b16 %v688
    %v2507 = vunpack.c.l.b16 %v689
    %v2508 = vunpack.c.h.b16 %v689
    %v2509 = vunpack.c.l.b16 %v690
    %v2510 = vunpack.c.h.b16 %v690
    %v2511 = vunpack.c.l.b16 %v691
    %v2512 = vunpack.c.h.b16 %v691
    %v2513 = vunpack.c.l.b16 %v692
    %v2514 = vunpack.c.h.b16 %v692
    %v2515 = vunpack.c.l.b16 %v693
    %v2516 = vunpack.c.h.b16 %v693
    %v2517 = vunpack.c.l.b16 %v694
    %v2518 = vunpack.c.h.b16 %v694
    %v2519 = vunpack.c.l.b16 %v695
    %v2520 = vunpack.c.h.b16 %v695
    %v2521 = vunpack.c.l.b16 %v696
    %v2522 = vunpack.c.h.b16 %v696
    %v2523 = vunpack.c.l.b16 %v697
    %v2524 = vunpack.c.h.b16 %v697
    %v2525 = vunpack.c.l.b16 %v698
    %v2526 = vunpack.c.h.b16 %v698
    %v2527 = vunpack.c.l.b16 %v699
    %v2528 = vunpack.c.h.b16 %v699
    %v2529 = vunpack.c.l.b16 %v700
    %v2530 = vunpack.c.h.b16 %v700
    %v2531 = vunpack.c.l.b16 %v701
    %v2532 = vunpack.c.h.b16 %v701
    %v2533 = vunpack.c.l.b16 %v702
    %v2534 = vunpack.c.h.b16 %v702
    %v2535 = vunpack.c.l.b16 %v703
    %v2536 = vunpack.c.h.b16 %v703
    %v2537 = vunpack.c.l.b16 %v704
    %v2538 = vunpack.c.h.b16 %v704
    %v2539 = vunpack.c.l.b16 %v705
    %v2540 = vunpack.c.h.b16 %v705
    %v2541 = vunpack.c.l.b16 %v706
    %v2542 = vunpack.c.h.b16 %v706
    %v2543 = vunpack.c.l.b16 %v707
    %v2544 = vunpack.c.h.b16 %v707
    %v2545 = vunpack.c.l.b16 %v708
    %v2546 = vunpack.c.h.b16 %v708
    %v2547 = vunpack.c.l.b16 %v709
    %v2548 = vunpack.c.h.b16 %v709
    %v2549 = vunpack.c.l.b16 %v710
    %v2550 = vunpack.c.h.b16 %v710
    %v2551 = vunpack.c.l.b16 %v711
    %v2552 = vunpack.c.h.b16 %v711
    %v2553 = vunpack.c.l.b16 %v712
    %v2554 = vunpack.c.h.b16 %v712
    %v2555 = vunpack.c.l.b16 %v713
    %v2556 = vunpack.c.h.b16 %v713
    %v2557 = vunpack.c.l.b16 %v714
    %v2558 = vunpack.c.h.b16 %v714
    %v2559 = vunpack.c.l.b16 %v715
    %v2560 = vunpack.c.h.b16 %v715
    %v2561 = vunpack.c.l.b16 %v716
    %v2562 = vunpack.c.h.b16 %v716
    %v2563 = vunpack.c.l.b16 %v717
    %v2564 = vunpack.c.h.b16 %v717
    %v2565 = vunpack.c.l.b16 %v718
    %v2566 = vunpack.c.h.b16 %v718
    %v2567 = vunpack.c.l.b16 %v719
    %v2568 = vunpack.c.h.b16 %v719
    %v2569 = vunpack.c.l.b16 %v720
    %v2570 = vunpack.c.h.b16 %v720
    %v2571 = vunpack.c.l.b16 %v721
    %v2572 = vunpack.c.h.b16 %v721
    %v2573 = vunpack.c.l.b16 %v722
    %v2574 = vunpack.c.h.b16 %v722
    %v2575 = vunpack.c.l.b16 %v723
    %v2576 = vunpack.c.h.b16 %v723
    %v2577 = vunpack.c.l.b16 %v724
    %v2578 = vunpack.c.h.b16 %v724
    %v2579 = vunpack.c.l.b16 %v725
    %v2580 = vunpack.c.h.b16 %v725
    %v2581 = vunpack.c.l.b16 %v726
    %v2582 = vunpack.c.h.b16 %v726
    %v2583 = vunpack.c.l.b16 %v727
    %v2584 = vunpack.c.h.b16 %v727
    %v2585 = vunpack.c.l.b16 %v728
    %v2586 = vunpack.c.h.b16 %v728
    %v2587 = vunpack.c.l.b16 %v729
    %v2588 = vunpack.c.h.b16 %v729
    %v2589 = vunpack.c.l.b16 %v730
    %v2590 = vunpack.c.h.b16 %v730
    %v2591 = vunpack.c.l.b16 %v731
    %v2592 = vunpack.c.h.b16 %v731
    %v2593 = vunpack.c.l.b16 %v732
    %v2594 = vunpack.c.h.b16 %v732
    %v2595 = vunpack.c.l.b16 %v733
    %v2596 = vunpack.c.h.b16 %v733
    %v2597 = vunpack.c.l.b16 %v734
    %v2598 = vunpack.c.h.b16 %v734
    %v2599 = vunpack.c.l.b16 %v735
    %v2600 = vunpack.c.h.b16 %v735
    %v2601 = vunpack.c.l.b16 %v736
    %v2602 = vunpack.c.h.b16 %v736
    %v2603 = vunpack.c.l.b16 %v737
    %v2604 = vunpack.c.h.b16 %v737
    %v2605 = vunpack.c.l.b16 %v738
    %v2606 = vunpack.c.h.b16 %v738
    %v2607 = vunpack.c.l.b16 %v739
    %v2608 = vunpack.c.h.b16 %v739
    %v2609 = vunpack.c.l.b16 %v740
    %v2610 = vunpack.c.h.b16 %v740
    %v2611 = vunpack.c.l.b16 %v741
    %v2612 = vunpack.c.h.b16 %v741
    %v2613 = vunpack.c.l.b16 %v742
    %v2614 = vunpack.c.h.b16 %v742
    %v2615 = vunpack.c.l.b16 %v743
    %v2616 = vunpack.c.h.b16 %v743
    %v2617 = vunpack.c.l.b16 %v744
    %v2618 = vunpack.c.h.b16 %v744
    %v2619 = vunpack.c.l.b16 %v745
    %v2620 = vunpack.c.h.b16 %v745
    %v2621 = vunpack.c.l.b16 %v746
    %v2622 = vunpack.c.h.b16 %v746
    %v2623 = vunpack.c.l.b16 %v747
    %v2624 = vunpack.c.h.b16 %v747
    %v2625 = vunpack.c.l.b16 %v748
    %v2626 = vunpack.c.h.b16 %v748
    %v2627 = vunpack.c.l.b16 %v749
    %v2628 = vunpack.c.h.b16 %v749
    %v2629 = vunpack.c.l.b16 %v750
    %v2630 = vunpack.c.h.b16 %v750
    %v2631 = vunpack.c.l.b16 %v751
    %v2632 = vunpack.c.h.b16 %v751
    %v2633 = vunpack.c.l.b16 %v752
    %v2634 = vunpack.c.h.b16 %v752
    %v2635 = vunpack.c.l.b16 %v753
    %v2636 = vunpack.c.h.b16 %v753
    %v2637 = vunpack.c.l.b16 %v754
    %v2638 = vunpack.c.h.b16 %v754
    %v2639 = vunpack.c.l.b16 %v755
    %v2640 = vunpack.c.h.b16 %v755
    %v2641 = vunpack.c.l.b16 %v756
    %v2642 = vunpack.c.h.b16 %v756
    %v2643 = vunpack.c.l.b16 %v757
    %v2644 = vunpack.c.h.b16 %v757
    %v2645 = vpack.c.b16 %v2305, %v2303
    %v2646 = vpack.c.b16 %v2306, %v2304
    %v2647 = vpack.c.b16 %v2309, %v2307
    %v2648 = vpack.c.b16 %v2310, %v2308
    %v2649 = vpack.c.b16 %v2313, %v2311
    %v2650 = vpack.c.b16 %v2314, %v2312
    %v2651 = vpack.c.b16 %v2317, %v2315
    %v2652 = vpack.c.b16 %v2318, %v2316
    %v2653 = vpack.c.b16 %v2321, %v2319
    %v2654 = vpack.c.b16 %v2322, %v2320
    %v2655 = vpack.c.b16 %v2325, %v2323
    %v2656 = vpack.c.b16 %v2326, %v2324
    %v2657 = vpack.c.b16 %v2329, %v2327
    %v2658 = vpack.c.b16 %v2330, %v2328
    %v2659 = vpack.c.b16 %v2333, %v2331
    %v2660 = vpack.c.b16 %v2334, %v2332
    %v2661 = vpack.c.b16 %v2337, %v2335
    %v2662 = vpack.c.b16 %v2338, %v2336
    %v2663 = vpack.c.b16 %v2341, %v2339
    %v2664 = vpack.c.b16 %v2342, %v2340
    %v2665 = vpack.c.b16 %v2345, %v2343
    %v2666 = vpack.c.b16 %v2346, %v2344
    %v2667 = vpack.c.b16 %v2349, %v2347
    %v2668 = vpack.c.b16 %v2350, %v2348
    %v2669 = vpack.c.b16 %v2353, %v2351
    %v2670 = vpack.c.b16 %v2354, %v2352
    %v2671 = vpack.c.b16 %v2357, %v2355
    %v2672 = vpack.c.b16 %v2358, %v2356
    %v2673 = vpack.c.b16 %v2361, %v2359
    %v2674 = vpack.c.b16 %v2362, %v2360
    %v2675 = vpack.c.b16 %v2365, %v2363
    %v2676 = vpack.c.b16 %v2366, %v2364
    %v2677 = vpack.c.b16 %v2369, %v2367
    %v2678 = vpack.c.b16 %v2370, %v2368
    %v2679 = vpack.c.b16 %v2373, %v2371
    %v2680 = vpack.c.b16 %v2374, %v2372
    %v2681 = vpack.c.b16 %v2377, %v2375
    %v2682 = vpack.c.b16 %v2378, %v2376
    %v2683 = vpack.c.b16 %v2381, %v2379
    %v2684 = vpack.c.b16 %v2382, %v2380
    %v2685 = vpack.c.b16 %v2385, %v2383
    %v2686 = vpack.c.b16 %v2386, %v2384
    %v2687 = vpack.c.b16 %v2389, %v2387
    %v2688 = vpack.c.b16 %v2390, %v2388
    %v2689 = vpack.c.b16 %v2393, %v2391
    %v2690 = vpack.c.b16 %v2394, %v2392
    %v2691 = vpack.c.b16 %v2397, %v2395
    %v2692 = vpack.c.b16 %v2398, %v2396
    %v2693 = vpack.c.b16 %v2401, %v2399
    %v2694 = vpack.c.b16 %v2402, %v2400
    %v2695 = vpack.c.b16 %v2405, %v2403
    %v2696 = vpack.c.b16 %v2406, %v2404
    %v2697 = vpack.c.b16 %v2409, %v2407
    %v2698 = vpack.c.b16 %v2410, %v2408
    %v2699 = vpack.c.b16 %v2413, %v2411
    %v2700 = vpack.c.b16 %v2414, %v2412
    %v2701 = vpack.c.b16 %v2417, %v2415
    %v2702 = vpack.c.b16 %v2418, %v2416
    %v2703 = vpack.c.b16 %v2421, %v2419
    %v2704 = vpack.c.b16 %v2422, %v2420
    %v2705 = vpack.c.b16 %v2425, %v2423
    %v2706 = vpack.c.b16 %v2426, %v2424
    %v2707 = vpack.c.b16 %v2429, %v2427
    %v2708 = vpack.c.b16 %v2430, %v2428
    %v2709 = vpack.c.b16 %v2433, %v2431
    %v2710 = vpack.c.b16 %v2434, %v2432
    %v2711 = vpack.c.b16 %v2437, %v2435
    %v2712 = vpack.c.b16 %v2438, %v2436
    %v2713 = vpack.c.b16 %v2441, %v2439
    %v2714 = vpack.c.b16 %v2442, %v2440
    %v2715 = vpack.c.b16 %v2445, %v2443
    %v2716 = vpack.c.b16 %v2446, %v2444
    %v2717 = vpack.c.b16 %v2449, %v2447
    %v2718 = vpack.c.b16 %v2450, %v2448
    %v2719 = vpack.c.b16 %v2453, %v2451
    %v2720 = vpack.c.b16 %v2454, %v2452
    %v2721 = vpack.c.b16 %v2457, %v2455
    %v2722 = vpack.c.b16 %v2458, %v2456
    %v2723 = vpack.c.b16 %v2461, %v2459
    %v2724 = vpack.c.b16 %v2462, %v2460
    %v2725 = vpack.c.b16 %v2465, %v2463
    %v2726 = vpack.c.b16 %v2466, %v2464
    %v2727 = vpack.c.b16 %v2469, %v2467
    %v2728 = vpack.c.b16 %v2470, %v2468
    %v2729 = vpack.c.b16 %v2473, %v2471
    %v2730 = vpack.c.b16 %v2474, %v2472
    %v2731 = vpack.c.b16 %v2477, %v2475
    %v2732 = vpack.c.b16 %v2478, %v2476
    %v2733 = vpack.c.b16 %v2481, %v2479
    %v2734 = vpack.c.b16 %v2482, %v2480
    %v2735 = vpack.c.b16 %v2485, %v2483
    %v2736 = vpack.c.b16 %v2486, %v2484
    %v2737 = vpack.c.b16 %v2489, %v2487
    %v2738 = vpack.c.b16 %v2490, %v2488
    %v2739 = vpack.c.b16 %v2493, %v2491
    %v2740 = vpack.c.b16 %v2494, %v2492
    %v2741 = vpack.c.b16 %v2497, %v2495
    %v2742 = vpack.c.b16 %v2498, %v2496
    %v2743 = vpack.c.b16 %v2501, %v2499
    %v2744 = vpack.c.b16 %v2502, %v2500
    %v2745 = vpack.c.b16 %v2505, %v2503
    %v2746 = vpack.c.b16 %v2506, %v2504
    %v2747 = vpack.c.b16 %v2509, %v2507
    %v2748 = vpack.c.b16 %v2510, %v2508
    %v2749 = vpack.c.b16 %v2513, %v2511
    %v2750 = vpack.c.b16 %v2514, %v2512
    %v2751 = vpack.c.b16 %v2517, %v2515
    %v2752 = vpack.c.b16 %v2518, %v2516
    %v2753 = vpack.c.b16 %v2521, %v2519
    %v2754 = vpack.c.b16 %v2522, %v2520
    %v2755 = vpack.c.b16 %v2525, %v2523
    %v2756 = vpack.c.b16 %v2526, %v2524
    %v2757 = vpack.c.b16 %v2529, %v2527
    %v2758 = vpack.c.b16 %v2530, %v2528
    %v2759 = vpack.c.b16 %v2533, %v2531
    %v2760 = vpack.c.b16 %v2534, %v2532
    %v2761 = vpack.c.b16 %v2537, %v2535
    %v2762 = vpack.c.b16 %v2538, %v2536
    %v2763 = vpack.c.b16 %v2541, %v2539
    %v2764 = vpack.c.b16 %v2542, %v2540
    %v2765 = vpack.c.b16 %v2545, %v2543
    %v2766 = vpack.c.b16 %v2546, %v2544
    %v2767 = vpack.c.b16 %v2549, %v2547
    %v2768 = vpack.c.b16 %v2550, %v2548
    %v2769 = vpack.c.b16 %v2553, %v2551
    %v2770 = vpack.c.b16 %v2554, %v2552
    %v2771 = vpack.c.b16 %v2557, %v2555
    %v2772 = vpack.c.b16 %v2558, %v2556
    %v2773 = vpack.c.b16 %v2561, %v2559
    %v2774 = vpack.c.b16 %v2562, %v2560
    %v2775 = vpack.c.b16 %v2565, %v2563
    %v2776 = vpack.c.b16 %v2566, %v2564
    %v2777 = vpack.c.b16 %v2569, %v2567
    %v2778 = vpack.c.b16 %v2570, %v2568
    %v2779 = vpack.c.b16 %v2573, %v2571
    %v2780 = vpack.c.b16 %v2574, %v2572
    %v2781 = vpack.c.b16 %v2577, %v2575
    %v2782 = vpack.c.b16 %v2578, %v2576
    %v2783 = vpack.c.b16 %v2581, %v2579
    %v2784 = vpack.c.b16 %v2582, %v2580
    %v2785 = vpack.c.b16 %v2585, %v2583
    %v2786 = vpack.c.b16 %v2586, %v2584
    %v2787 = vpack.c.b16 %v2589, %v2587
    %v2788 = vpack.c.b16 %v2590, %v2588
    %v2789 = vpack.c.b16 %v2593, %v2591
    %v2790 = vpack.c.b16 %v2594, %v2592
    %v2791 = vpack.c.b16 %v2597, %v2595
    %v2792 = vpack.c.b16 %v2598, %v2596
    %v2793 = vpack.c.b16 %v2601, %v2599
    %v2794 = vpack.c.b16 %v2602, %v2600
    %v2795 = vpack.c.b16 %v2605, %v2603
    %v2796 = vpack.c.b16 %v2606, %v2604
    %v2797 = vpack.c.b16 %v2609, %v2607
    %v2798 = vpack.c.b16 %v2610, %v2608
    %v2799 = vpack.c.b16 %v2613, %v2611
    %v2800 = vpack.c.b16 %v2614, %v2612
    %v2801 = vpack.c.b16 %v2617, %v2615
    %v2802 = vpack.c.b16 %v2618, %v2616
    %v2803 = vpack.c.b16 %v2621, %v2619
    %v2804 = vpack.c.b16 %v2622, %v2620
    %v2805 = vpack.c.b16 %v2625, %v2623
    %v2806 = vpack.c.b16 %v2626, %v2624
    %v2807 = vpack.c.b16 %v2629, %v2627
    %v2808 = vpack.c.b16 %v2630, %v2628
    %v2809 = vpack.c.b16 %v2633, %v2631
    %v2810 = vpack.c.b16 %v2634, %v2632
    %v2811 = vpack.c.b16 %v2637, %v2635
    %v2812 = vpack.c.b16 %v2638, %v2636
    %v2813 = vpack.c.b16 %v2641, %v2639
    %v2814 = vpack.c.b16 %v2642, %v2640
    %v2815 = vpack.c.b16 %v2643, %v2643
    %v2816 = vpack.c.b16 %v2644, %v2644
    %v2987 = vsel %vm1811, %v2121, 0
    %v2990 = vsel %vm1814, %v2815, 0
    %v2993 = vsel %vm1814, %v2816, 0
    %2995 = vmatpush.bf16.msra.mxu0 %v2659
    %2996 = vmatpush.bf16.msra.mxu0 %v2657
    %2997 = vmatpush.bf16.msra.mxu0 %v2655
    %2998 = vmatpush.bf16.msra.mxu0 %v2653
    %2999 = vmatpush.bf16.msra.mxu0 %v2651
    %3000 = vmatpush.bf16.msra.mxu0 %v2649
    %3001 = vmatpush.bf16.msra.mxu0 %v2647
    %3002 = vmatpush.bf16.msra.mxu0 %v2645
    %3003 = vmatmul.bf16.gmra.mxu0 %v2109
    %v3004 = vpop.f32.mrf.mxu0
    %v3005 = vadd.f32 %v1961, %v3004
    %v3006 = vpop.f32.mrf.mxu0
    %3007 = vdwg.mxu0
    %3008 = vmatpush.bf16.msra.mxu0 %v2675
    %3009 = vmatpush.bf16.msra.mxu0 %v2673
    %3010 = vmatpush.bf16.msra.mxu0 %v2671
    %3011 = vmatpush.bf16.msra.mxu0 %v2669
    %3012 = vmatpush.bf16.msra.mxu0 %v2667
    %3013 = vmatpush.bf16.msra.mxu0 %v2665
    %3014 = vmatpush.bf16.msra.mxu0 %v2663
    %3015 = vmatpush.bf16.msra.mxu0 %v2661
    %3016 = vmatmul.bf16.gmra.mxu0 %v2110
    %v3017 = vpop.f32.mrf.mxu0
    %v3018 = vadd.f32 %v3005, %v3017
    %v3019 = vpop.f32.mrf.mxu0
    %3020 = vdwg.mxu0
    %3021 = vmatpush.bf16.msra.mxu0 %v2691
    %3022 = vmatpush.bf16.msra.mxu0 %v2689
    %3023 = vmatpush.bf16.msra.mxu0 %v2687
    %3024 = vmatpush.bf16.msra.mxu0 %v2685
    %3025 = vmatpush.bf16.msra.mxu0 %v2683
    %3026 = vmatpush.bf16.msra.mxu0 %v2681
    %3027 = vmatpush.bf16.msra.mxu0 %v2679
    %3028 = vmatpush.bf16.msra.mxu0 %v2677
    %3029 = vmatmul.bf16.gmra.mxu0 %v2111
    %v3030 = vpop.f32.mrf.mxu0
    %v3031 = vadd.f32 %v3018, %v3030
    %v3032 = vpop.f32.mrf.mxu0
    %3033 = vdwg.mxu0
    %3034 = vmatpush.bf16.msra.mxu0 %v2707
    %3035 = vmatpush.bf16.msra.mxu0 %v2705
    %3036 = vmatpush.bf16.msra.mxu0 %v2703
    %3037 = vmatpush.bf16.msra.mxu0 %v2701
    %3038 = vmatpush.bf16.msra.mxu0 %v2699
    %3039 = vmatpush.bf16.msra.mxu0 %v2697
    %3040 = vmatpush.bf16.msra.mxu0 %v2695
    %3041 = vmatpush.bf16.msra.mxu0 %v2693
    %3042 = vmatmul.bf16.gmra.mxu0 %v2112
    %v3043 = vpop.f32.mrf.mxu0
    %v3044 = vadd.f32 %v3031, %v3043
    %v3045 = vpop.f32.mrf.mxu0
    %3046 = vdwg.mxu0
    %3047 = vmatpush.bf16.msra.mxu0 %v2723
    %3048 = vmatpush.bf16.msra.mxu0 %v2721
    %3049 = vmatpush.bf16.msra.mxu0 %v2719
    %3050 = vmatpush.bf16.msra.mxu0 %v2717
    %3051 = vmatpush.bf16.msra.mxu0 %v2715
    %3052 = vmatpush.bf16.msra.mxu0 %v2713
    %3053 = vmatpush.bf16.msra.mxu0 %v2711
    %3054 = vmatpush.bf16.msra.mxu0 %v2709
    %3055 = vmatmul.bf16.gmra.mxu0 %v2113
    %v3056 = vpop.f32.mrf.mxu0
    %v3057 = vadd.f32 %v3044, %v3056
    %v3058 = vpop.f32.mrf.mxu0
    %3059 = vdwg.mxu0
    %3060 = vmatpush.bf16.msra.mxu0 %v2739
    %3061 = vmatpush.bf16.msra.mxu0 %v2737
    %3062 = vmatpush.bf16.msra.mxu0 %v2735
    %3063 = vmatpush.bf16.msra.mxu0 %v2733
    %3064 = vmatpush.bf16.msra.mxu0 %v2731
    %3065 = vmatpush.bf16.msra.mxu0 %v2729
    %3066 = vmatpush.bf16.msra.mxu0 %v2727
    %3067 = vmatpush.bf16.msra.mxu0 %v2725
    %3068 = vmatmul.bf16.gmra.mxu0 %v2114
    %v3069 = vpop.f32.mrf.mxu0
    %v3070 = vadd.f32 %v3057, %v3069
    %v3071 = vpop.f32.mrf.mxu0
    %3072 = vdwg.mxu0
    %3073 = vmatpush.bf16.msra.mxu0 %v2755
    %3074 = vmatpush.bf16.msra.mxu0 %v2753
    %3075 = vmatpush.bf16.msra.mxu0 %v2751
    %3076 = vmatpush.bf16.msra.mxu0 %v2749
    %3077 = vmatpush.bf16.msra.mxu0 %v2747
    %3078 = vmatpush.bf16.msra.mxu0 %v2745
    %3079 = vmatpush.bf16.msra.mxu0 %v2743
    %3080 = vmatpush.bf16.msra.mxu0 %v2741
    %3081 = vmatmul.bf16.gmra.mxu0 %v2115
    %v3082 = vpop.f32.mrf.mxu0
    %v3083 = vadd.f32 %v3070, %v3082
    %v3084 = vpop.f32.mrf.mxu0
    %3085 = vdwg.mxu0
    %3086 = vmatpush.bf16.msra.mxu0 %v2771
    %3087 = vmatpush.bf16.msra.mxu0 %v2769
    %3088 = vmatpush.bf16.msra.mxu0 %v2767
    %3089 = vmatpush.bf16.msra.mxu0 %v2765
    %3090 = vmatpush.bf16.msra.mxu0 %v2763
    %3091 = vmatpush.bf16.msra.mxu0 %v2761
    %3092 = vmatpush.bf16.msra.mxu0 %v2759
    %3093 = vmatpush.bf16.msra.mxu0 %v2757
    %3094 = vmatmul.bf16.gmra.mxu0 %v2116
    %v3095 = vpop.f32.mrf.mxu0
    %v3096 = vadd.f32 %v3083, %v3095
    %v3097 = vpop.f32.mrf.mxu0
    %3098 = vdwg.mxu0
    %3099 = vmatpush.bf16.msra.mxu0 %v2787
    %3100 = vmatpush.bf16.msra.mxu0 %v2785
    %3101 = vmatpush.bf16.msra.mxu0 %v2783
    %3102 = vmatpush.bf16.msra.mxu0 %v2781
    %3103 = vmatpush.bf16.msra.mxu0 %v2779
    %3104 = vmatpush.bf16.msra.mxu0 %v2777
    %3105 = vmatpush.bf16.msra.mxu0 %v2775
    %3106 = vmatpush.bf16.msra.mxu0 %v2773
    %3107 = vmatmul.bf16.gmra.mxu0 %v2119
    %v3108 = vpop.f32.mrf.mxu0
    %v3109 = vadd.f32 %v3096, %v3108
    %v3110 = vpop.f32.mrf.mxu0
    %3111 = vdwg.mxu0
    %3112 = vmatpush.bf16.msra.mxu0 %v2803
    %3113 = vmatpush.bf16.msra.mxu0 %v2801
    %3114 = vmatpush.bf16.msra.mxu0 %v2799
    %3115 = vmatpush.bf16.msra.mxu0 %v2797
    %3116 = vmatpush.bf16.msra.mxu0 %v2795
    %3117 = vmatpush.bf16.msra.mxu0 %v2793
    %3118 = vmatpush.bf16.msra.mxu0 %v2791
    %3119 = vmatpush.bf16.msra.mxu0 %v2789
    %3120 = vmatmul.bf16.gmra.mxu0 %v2120
    %v3121 = vpop.f32.mrf.mxu0
    %v3122 = vadd.f32 %v3109, %v3121
    %v3123 = vpop.f32.mrf.mxu0
    %3124 = vdwg.mxu0
    %3125 = vmatpush.bf16.msra.mxu0 0
    %3126 = vmatpush.bf16.msra.mxu0 0
    %3127 = vmatpush.bf16.msra.mxu0 %v2990
    %3128 = vmatpush.bf16.msra.mxu0 %v2813
    %3129 = vmatpush.bf16.msra.mxu0 %v2811
    %3130 = vmatpush.bf16.msra.mxu0 %v2809
    %3131 = vmatpush.bf16.msra.mxu0 %v2807
    %3132 = vmatpush.bf16.msra.mxu0 %v2805
    %3133 = vmatmul.bf16.gmra.mxu0 %v2987
    %v3134 = vpop.f32.mrf.mxu0
    %v3135 = vadd.f32 %v3122, %v3134
    %v3136 = vpop.f32.mrf.mxu0
    %3137 = vdwg.mxu0
    %3138 = vmatpush.bf16.msra.mxu0 %v2660
    %3139 = vmatpush.bf16.msra.mxu0 %v2658
    %3140 = vmatpush.bf16.msra.mxu0 %v2656
    %3141 = vmatpush.bf16.msra.mxu0 %v2654
    %3142 = vmatpush.bf16.msra.mxu0 %v2652
    %3143 = vmatpush.bf16.msra.mxu0 %v2650
    %3144 = vmatpush.bf16.msra.mxu0 %v2648
    %3145 = vmatpush.bf16.msra.mxu0 %v2646
    %3146 = vmatmul.bf16.gmra.mxu0 %v2109
    %v3147 = vpop.f32.mrf.mxu0
    %v3148 = vadd.f32 %v2104, %v3147
    %v3149 = vpop.f32.mrf.mxu0
    %3150 = vdwg.mxu0
    %3151 = vmatpush.bf16.msra.mxu0 %v2676
    %3152 = vmatpush.bf16.msra.mxu0 %v2674
    %3153 = vmatpush.bf16.msra.mxu0 %v2672
    %3154 = vmatpush.bf16.msra.mxu0 %v2670
    %3155 = vmatpush.bf16.msra.mxu0 %v2668
    %3156 = vmatpush.bf16.msra.mxu0 %v2666
    %3157 = vmatpush.bf16.msra.mxu0 %v2664
    %3158 = vmatpush.bf16.msra.mxu0 %v2662
    %3159 = vmatmul.bf16.gmra.mxu0 %v2110
    %v3160 = vpop.f32.mrf.mxu0
    %v3161 = vadd.f32 %v3148, %v3160
    %v3162 = vpop.f32.mrf.mxu0
    %3163 = vdwg.mxu0
    %3164 = vmatpush.bf16.msra.mxu0 %v2692
    %3165 = vmatpush.bf16.msra.mxu0 %v2690
    %3166 = vmatpush.bf16.msra.mxu0 %v2688
    %3167 = vmatpush.bf16.msra.mxu0 %v2686
    %3168 = vmatpush.bf16.msra.mxu0 %v2684
    %3169 = vmatpush.bf16.msra.mxu0 %v2682
    %3170 = vmatpush.bf16.msra.mxu0 %v2680
    %3171 = vmatpush.bf16.msra.mxu0 %v2678
    %3172 = vmatmul.bf16.gmra.mxu0 %v2111
    %v3173 = vpop.f32.mrf.mxu0
    %v3174 = vadd.f32 %v3161, %v3173
    %v3175 = vpop.f32.mrf.mxu0
    %3176 = vdwg.mxu0
    %3177 = vmatpush.bf16.msra.mxu0 %v2708
    %3178 = vmatpush.bf16.msra.mxu0 %v2706
    %3179 = vmatpush.bf16.msra.mxu0 %v2704
    %3180 = vmatpush.bf16.msra.mxu0 %v2702
    %3181 = vmatpush.bf16.msra.mxu0 %v2700
    %3182 = vmatpush.bf16.msra.mxu0 %v2698
    %3183 = vmatpush.bf16.msra.mxu0 %v2696
    %3184 = vmatpush.bf16.msra.mxu0 %v2694
    %3185 = vmatmul.bf16.gmra.mxu0 %v2112
    %v3186 = vpop.f32.mrf.mxu0
    %v3187 = vadd.f32 %v3174, %v3186
    %v3188 = vpop.f32.mrf.mxu0
    %3189 = vdwg.mxu0
    %3190 = vmatpush.bf16.msra.mxu0 %v2724
    %3191 = vmatpush.bf16.msra.mxu0 %v2722
    %3192 = vmatpush.bf16.msra.mxu0 %v2720
    %3193 = vmatpush.bf16.msra.mxu0 %v2718
    %3194 = vmatpush.bf16.msra.mxu0 %v2716
    %3195 = vmatpush.bf16.msra.mxu0 %v2714
    %3196 = vmatpush.bf16.msra.mxu0 %v2712
    %3197 = vmatpush.bf16.msra.mxu0 %v2710
    %3198 = vmatmul.bf16.gmra.mxu0 %v2113
    %v3199 = vpop.f32.mrf.mxu0
    %v3200 = vadd.f32 %v3187, %v3199
    %v3201 = vpop.f32.mrf.mxu0
    %3202 = vdwg.mxu0
    %3203 = vmatpush.bf16.msra.mxu0 %v2740
    %3204 = vmatpush.bf16.msra.mxu0 %v2738
    %3205 = vmatpush.bf16.msra.mxu0 %v2736
    %3206 = vmatpush.bf16.msra.mxu0 %v2734
    %3207 = vmatpush.bf16.msra.mxu0 %v2732
    %3208 = vmatpush.bf16.msra.mxu0 %v2730
    %3209 = vmatpush.bf16.msra.mxu0 %v2728
    %3210 = vmatpush.bf16.msra.mxu0 %v2726
    %3211 = vmatmul.bf16.gmra.mxu0 %v2114
    %v3212 = vpop.f32.mrf.mxu0
    %v3213 = vadd.f32 %v3200, %v3212
    %v3214 = vpop.f32.mrf.mxu0
    %3215 = vdwg.mxu0
    %3216 = vmatpush.bf16.msra.mxu0 %v2756
    %3217 = vmatpush.bf16.msra.mxu0 %v2754
    %3218 = vmatpush.bf16.msra.mxu0 %v2752
    %3219 = vmatpush.bf16.msra.mxu0 %v2750
    %3220 = vmatpush.bf16.msra.mxu0 %v2748
    %3221 = vmatpush.bf16.msra.mxu0 %v2746
    %3222 = vmatpush.bf16.msra.mxu0 %v2744
    %3223 = vmatpush.bf16.msra.mxu0 %v2742
    %3224 = vmatmul.bf16.gmra.mxu0 %v2115
    %v3225 = vpop.f32.mrf.mxu0
    %v3226 = vadd.f32 %v3213, %v3225
    %v3227 = vpop.f32.mrf.mxu0
    %3228 = vdwg.mxu0
    %3229 = vmatpush.bf16.msra.mxu0 %v2772
    %3230 = vmatpush.bf16.msra.mxu0 %v2770
    %3231 = vmatpush.bf16.msra.mxu0 %v2768
    %3232 = vmatpush.bf16.msra.mxu0 %v2766
    %3233 = vmatpush.bf16.msra.mxu0 %v2764
    %3234 = vmatpush.bf16.msra.mxu0 %v2762
    %3235 = vmatpush.bf16.msra.mxu0 %v2760
    %3236 = vmatpush.bf16.msra.mxu0 %v2758
    %3237 = vmatmul.bf16.gmra.mxu0 %v2116
    %v3238 = vpop.f32.mrf.mxu0
    %v3239 = vadd.f32 %v3226, %v3238
    %v3240 = vpop.f32.mrf.mxu0
    %3241 = vdwg.mxu0
    %3242 = vmatpush.bf16.msra.mxu0 %v2788
    %3243 = vmatpush.bf16.msra.mxu0 %v2786
    %3244 = vmatpush.bf16.msra.mxu0 %v2784
    %3245 = vmatpush.bf16.msra.mxu0 %v2782
    %3246 = vmatpush.bf16.msra.mxu0 %v2780
    %3247 = vmatpush.bf16.msra.mxu0 %v2778
    %3248 = vmatpush.bf16.msra.mxu0 %v2776
    %3249 = vmatpush.bf16.msra.mxu0 %v2774
    %3250 = vmatmul.bf16.gmra.mxu0 %v2119
    %v3251 = vpop.f32.mrf.mxu0
    %v3252 = vadd.f32 %v3239, %v3251
    %v3253 = vpop.f32.mrf.mxu0
    %3254 = vdwg.mxu0
    %3255 = vmatpush.bf16.msra.mxu0 %v2804
    %3256 = vmatpush.bf16.msra.mxu0 %v2802
    %3257 = vmatpush.bf16.msra.mxu0 %v2800
    %3258 = vmatpush.bf16.msra.mxu0 %v2798
    %3259 = vmatpush.bf16.msra.mxu0 %v2796
    %3260 = vmatpush.bf16.msra.mxu0 %v2794
    %3261 = vmatpush.bf16.msra.mxu0 %v2792
    %3262 = vmatpush.bf16.msra.mxu0 %v2790
    %3263 = vmatmul.bf16.gmra.mxu0 %v2120
    %v3264 = vpop.f32.mrf.mxu0
    %v3265 = vadd.f32 %v3252, %v3264
    %v3266 = vpop.f32.mrf.mxu0
    %3267 = vdwg.mxu0
    %3268 = vmatpush.bf16.msra.mxu0 0
    %3269 = vmatpush.bf16.msra.mxu0 0
    %3270 = vmatpush.bf16.msra.mxu0 %v2993
    %3271 = vmatpush.bf16.msra.mxu0 %v2814
    %3272 = vmatpush.bf16.msra.mxu0 %v2812
    %3273 = vmatpush.bf16.msra.mxu0 %v2810
    %3274 = vmatpush.bf16.msra.mxu0 %v2808
    %3275 = vmatpush.bf16.msra.mxu0 %v2806
    %3276 = vmatmul.bf16.gmra.mxu0 %v2987
    %v3277 = vpop.f32.mrf.mxu0
    %v3278 = vadd.f32 %v3265, %v3277
    %v3279 = vpop.f32.mrf.mxu0
    %3280 = vdwg.mxu0
    %v3281 = vld [vmem:[%s4] sm:$0x3]
    %v3283 = vperm.slane %v3281, 0
    %v3284 = vperm.slane %v3281, 1
    %v3287 = vadd.f32 %v3135, %v3283
    %v3288 = vadd.f32 %v3278, %v3284
    %v3289 = vpack.c.bf16 %v3287, %v3287
    %v3290 = vpack.c.bf16 %v3288, %v3288
    %v3291 = vld [vmem:[%s5] sm:$0xf]
    %v3292 = vld [vmem:[%s5 + $0x4] sm:$0xf]
    %v3293 = vld [vmem:[%s5 + $0x8] sm:$0xf]
    %v3294 = vld [vmem:[%s5 + $0xc] sm:$0xf]
    %v3295 = vld [vmem:[%s5 + $0x10] sm:$0xf]
    %v3296 = vld [vmem:[%s5 + $0x14] sm:$0xf]
    %v3297 = vld [vmem:[%s5 + $0x18] sm:$0xf]
    %v3298 = vld [vmem:[%s5 + $0x1c] sm:$0xf]
    %v3299 = vld [vmem:[%s5 + $0x20] sm:$0xf]
    %v3300 = vld [vmem:[%s5 + $0x24] sm:$0xf]
    %v3301 = vld [vmem:[%s5 + $0x28] sm:$0xf]
    %v3302 = vld [vmem:[%s5 + $0x2c] sm:$0xf]
    %v3303 = vld [vmem:[%s5 + $0x30] sm:$0xf]
    %v3304 = vld [vmem:[%s5 + $0x34] sm:$0xf]
    %v3305 = vld [vmem:[%s5 + $0x38] sm:$0xf]
    %v3306 = vld [vmem:[%s5 + $0x3c] sm:$0xf]
    %v3307 = vld [vmem:[%s5 + $0x40] sm:$0xf]
    %v3308 = vld [vmem:[%s5 + $0x44] sm:$0xf]
    %v3309 = vld [vmem:[%s5 + $0x48] sm:$0xf]
    %v3310 = vld [vmem:[%s5 + $0x4c] sm:$0xf]
    %v3311 = vld [vmem:[%s5 + $0x50] sm:$0xf]
    %v3312 = vld [vmem:[%s5 + $0x54] sm:$0xf]
    %v3313 = vld [vmem:[%s5 + $0x58] sm:$0xf]
    %v3314 = vld [vmem:[%s5 + $0x5c] sm:$0xf]
    %v3315 = vld [vmem:[%s5 + $0x60] sm:$0xf]
    %v3316 = vld [vmem:[%s5 + $0x64] sm:$0xf]
    %v3317 = vld [vmem:[%s5 + $0x68] sm:$0xf]
    %v3318 = vld [vmem:[%s5 + $0x6c] sm:$0xf]
    %v3319 = vld [vmem:[%s5 + $0x70] sm:$0xf]
    %v3320 = vld [vmem:[%s5 + $0x74] sm:$0xf]
    %v3321 = vld [vmem:[%s5 + $0x78] sm:$0xf]
    %v3322 = vld [vmem:[%s5 + $0x7c] sm:$0xf]
    %v3323 = vld [vmem:[%s6] sm:$0x1]
    %v3325 = vperm.slane %v3323, 0
    %v3359 = vunpack.c.l.b16 %v3291
    %v3360 = vunpack.c.l.b16 %v3292
    %v3361 = vunpack.c.l.b16 %v3293
    %v3362 = vunpack.c.l.b16 %v3294
    %v3363 = vunpack.c.l.b16 %v3295
    %v3364 = vunpack.c.l.b16 %v3296
    %v3365 = vunpack.c.l.b16 %v3297
    %v3366 = vunpack.c.l.b16 %v3298
    %v3367 = vunpack.c.l.b16 %v3299
    %v3368 = vunpack.c.l.b16 %v3300
    %v3369 = vunpack.c.l.b16 %v3301
    %v3370 = vunpack.c.l.b16 %v3302
    %v3371 = vunpack.c.l.b16 %v3303
    %v3372 = vunpack.c.l.b16 %v3304
    %v3373 = vunpack.c.l.b16 %v3305
    %v3374 = vunpack.c.l.b16 %v3306
    %v3375 = vunpack.c.l.b16 %v3307
    %v3376 = vunpack.c.l.b16 %v3308
    %v3377 = vunpack.c.l.b16 %v3309
    %v3378 = vunpack.c.l.b16 %v3310
    %v3379 = vunpack.c.l.b16 %v3311
    %v3380 = vunpack.c.l.b16 %v3312
    %v3381 = vunpack.c.l.b16 %v3313
    %v3382 = vunpack.c.l.b16 %v3314
    %v3383 = vunpack.c.l.b16 %v3315
    %v3384 = vunpack.c.l.b16 %v3316
    %v3385 = vunpack.c.l.b16 %v3317
    %v3386 = vunpack.c.l.b16 %v3318
    %v3387 = vunpack.c.l.b16 %v3319
    %v3388 = vunpack.c.l.b16 %v3320
    %v3389 = vunpack.c.l.b16 %v3321
    %v3390 = vunpack.c.l.b16 %v3322
    %v3391 = vpack.c.b16 %v3360, %v3359
    %v3392 = vpack.c.b16 %v3362, %v3361
    %v3393 = vpack.c.b16 %v3364, %v3363
    %v3394 = vpack.c.b16 %v3366, %v3365
    %v3395 = vpack.c.b16 %v3368, %v3367
    %v3396 = vpack.c.b16 %v3370, %v3369
    %v3397 = vpack.c.b16 %v3372, %v3371
    %v3398 = vpack.c.b16 %v3374, %v3373
    %v3399 = vpack.c.b16 %v3376, %v3375
    %v3400 = vpack.c.b16 %v3378, %v3377
    %v3401 = vpack.c.b16 %v3380, %v3379
    %v3402 = vpack.c.b16 %v3382, %v3381
    %v3403 = vpack.c.b16 %v3384, %v3383
    %v3404 = vpack.c.b16 %v3386, %v3385
    %v3405 = vpack.c.b16 %v3388, %v3387
    %v3406 = vpack.c.b16 %v3390, %v3389
    %3423 = vmatpush.bf16.msra.mxu0 %v3398
    %3424 = vmatpush.bf16.msra.mxu0 %v3397
    %3425 = vmatpush.bf16.msra.mxu0 %v3396
    %3426 = vmatpush.bf16.msra.mxu0 %v3395
    %3427 = vmatpush.bf16.msra.mxu0 %v3394
    %3428 = vmatpush.bf16.msra.mxu0 %v3393
    %3429 = vmatpush.bf16.msra.mxu0 %v3392
    %3430 = vmatpush.bf16.msra.mxu0 %v3391
    %3431 = vmatmul.bf16.gmra.mxu0 %v3289
    %v3432 = vpop.f32.mrf.mxu0
    %v3433 = vadd.f32 %v3325, %v3432
    %v3434 = vpop.f32.mrf.mxu0
    %3435 = vdwg.mxu0
    %3436 = vmatpush.bf16.msra.mxu0 %v3406
    %3437 = vmatpush.bf16.msra.mxu0 %v3405
    %3438 = vmatpush.bf16.msra.mxu0 %v3404
    %3439 = vmatpush.bf16.msra.mxu0 %v3403
    %3440 = vmatpush.bf16.msra.mxu0 %v3402
    %3441 = vmatpush.bf16.msra.mxu0 %v3401
    %3442 = vmatpush.bf16.msra.mxu0 %v3400
    %3443 = vmatpush.bf16.msra.mxu0 %v3399
    %3444 = vmatmul.bf16.gmra.mxu0 %v3290
    %v3445 = vpop.f32.mrf.mxu0
    %v3446 = vadd.f32 %v3433, %v3445
    %v3447 = vpop.f32.mrf.mxu0
    %3448 = vdwg.mxu0
    %3449 = vst [vmem:[#allocation11] sm:$0x3] %v3446
    // Predicated region
    $region42: #{_forward_impl.1} parent=1 // pred_check
      _
    $region43: #{_forward_impl.1} parent=1 // pred_check_branch
      %3451 = sbr.rel (0) target = $region45
    $region44: #{_forward_impl.1} parent=1 // pred_region
      %3453 = vsyncadd [#allocation6], 0
      %s3455 = sshll.u32 [#allocation11], 4
      %s3456 = int_to_ptr.vmem [resolvable:$true] %s3455
      %s3457 = sshll.u32 %s7, 4
      %s3458 = int_to_ptr.hbm [resolvable:$true] %s3457
      %3460 = dma.vmem_to_hbm [thread:$0]  %s3456, 32, %s3458, [#allocation6]
    $region45: #{_forward_impl.1} parent=1 // pred_fallthru
      _
    // Predicated region
    $region46: #{_forward_impl.1} parent=1 // pred_check
      _
    $region47: #{_forward_impl.1} parent=1 // pred_check_branch
      %3462 = sbr.rel (0) target = $region49
    $region48: #{_forward_impl.1} parent=1 // pred_region
      %3464 = dma.done [#allocation6], 32
    $region49: #{_forward_impl.1} parent=1 // pred_fallthru
      _
    %3465 = vsyncpa [#allocation5], 1
    %3466 = vsyncpa [#allocation10], 1
    %3467 = vsyncpa [#allocation6], 1
    %3468 = vsyncpa [#allocation7], 1

// kernel: _forward_impl.1
$region0: #{_forward_impl.1}
  #allocation0 [shape = 'u32[]', space=smem, size = 0x4, offset = 0x4, fixed_abs, tag = 'smem constant byte address 0x4 - core index']
  #allocation1 [shape = 'u32[72,128]{1,0:T(1,128)}', space=vmem, size = 0x9000, scoped, tag = 'internal scratch']
  #allocation2 [shape = 'bf16[2,1366]{1,0:T(2,128)(2,1)}', space=vmem, size = 0x1600, scoped, tag = 'scratch operand']
  #allocation3 [shape = 'bf16[2,1366]{1,0:T(2,128)(2,1)}', space=vmem, size = 0x1600, scoped, tag = 'scratch operand']
  %s0 = inlined_call_operand.vmem [shape: f32[24], index: 0, kind: input, shape index: {}]
  %s1 = inlined_call_operand.vmem [shape: bf16[24,2,1366], index: 1, kind: input, shape index: {}]
  %s2 = inlined_call_operand.hbm [shape: bf16[1366,256], index: 2, kind: input, shape index: {}]
  %s3 = inlined_call_operand.hbm [shape: bf16[1366,256], index: 3, kind: input, shape index: {}]
  %s4 = inlined_call_operand.vmem [shape: f32[1,256], index: 4, kind: input, shape index: {}]
  %s5 = inlined_call_operand.vmem [shape: bf16[256,128], index: 5, kind: input, shape index: {}]
  %s6 = inlined_call_operand.vmem [shape: f32[1,128], index: 6, kind: input, shape index: {}]
  %s7 = inlined_call_operand.hbm [shape: f32[2,128], index: 7, kind: output, shape index: {}]
  %s8 = sld [smem:[#allocation0]]
  $region50: #{_forward_impl.1} parent=0
    _
  %s10 = ssub.s32 1, %s8
  %s11 = scalar_select 0, %s10, %s8
  $region1: #{_forward_impl.1} parent=0
    #allocation4 [shape = 'u8[512]{0}', space=smem, size = 0x200, scoped, tag = 'input window, operand 0, single buffered']
    #allocation5 [shape = 's32[1]{0}', space=sflag, size = 0x4, scoped, tag = 'scoped memory for _forward_impl.1']
    #allocation6 [shape = 's32[1]{0}', space=sflag, size = 0x4, scoped, tag = 'scoped memory for _forward_impl.1']
    #allocation7 [shape = 's32[1]{0}', space=sflag, size = 0x4, scoped, tag = 'scoped memory for _forward_impl.1']
    #allocation8 [shape = 'u8[700416]{0}', space=vmem, size = 0xab000, scoped, tag = 'input window, operand 2, single buffered']
    #allocation9 [shape = 'u8[700416]{0}', space=vmem, size = 0xab000, scoped, tag = 'input window, operand 3, single buffered']
    #allocation10 [shape = 's32[1]{0}', space=sflag, size = 0x4, scoped, tag = 'scoped memory for _forward_impl.1']
    #allocation11 [shape = 'u8[1024]{0}', space=vmem, size = 0x400, scoped, tag = 'output window, operand 0, single buffered']
    %12 = vsyncpa [#allocation7], 0
    %13 = vsyncpa [#allocation5], 0
    %14 = vsyncpa [#allocation10], 0
    %15 = vsyncpa [#allocation6], 0
    // Predicated region
    $region2: #{_forward_impl.1} parent=1 // pred_check
      _
    $region3: #{_forward_impl.1} parent=1 // pred_check_branch
      %17 = sbr.rel (0) target = $region5
    $region4: #{_forward_impl.1} parent=1 // pred_region
      %19 = vsyncadd [#allocation7], 0
      %s21 = sshll.u32 %s0, 4
      %s22 = int_to_ptr.vmem [resolvable:$true] %s21
      %24 = dma.vmem_to_smem %s22, 16, [#allocation4], [#allocation7]
    $region5: #{_forward_impl.1} parent=1 // pred_fallthru
      _
    // Predicated region
    $region6: #{_forward_impl.1} parent=1 // pred_check
      _
    $region7: #{_forward_impl.1} parent=1 // pred_check_branch
      %26 = sbr.rel (0) target = $region9
    $region8: #{_forward_impl.1} parent=1 // pred_region
      _
    $region9: #{_forward_impl.1} parent=1 // pred_fallthru
      _
    // Predicated region
    $region10: #{_forward_impl.1} parent=1 // pred_check
      _
    $region11: #{_forward_impl.1} parent=1 // pred_check_branch
      %28 = sbr.rel (0) target = $region13
    $region12: #{_forward_impl.1} parent=1 // pred_region
      %30 = vsyncadd [#allocation5], 0
      %s31 = sshll.u32 %s2, 4
      %s32 = int_to_ptr.hbm [resolvable:$true] %s31
      %s33 = sshll.u32 [#allocation8], 4
      %s34 = int_to_ptr.vmem [resolvable:$true] %s33
      %39 = dma.hbm_to_vmem [thread:$0]  %s32, 21888, %s34, [#allocation5], 128, 128, 8
    $region13: #{_forward_impl.1} parent=1 // pred_fallthru
      _
    // Predicated region
    $region14: #{_forward_impl.1} parent=1 // pred_check
      _
    $region15: #{_forward_impl.1} parent=1 // pred_check_branch
      %41 = sbr.rel (0) target = $region17
    $region16: #{_forward_impl.1} parent=1 // pred_region
      %43 = vsyncadd [#allocation10], 0
      %s44 = sshll.u32 %s3, 4
      %s45 = int_to_ptr.hbm [resolvable:$true] %s44
      %s46 = sshll.u32 [#allocation9], 4
      %s47 = int_to_ptr.vmem [resolvable:$true] %s46
      %52 = dma.hbm_to_vmem [thread:$0]  %s45, 21888, %s47, [#allocation10], 128, 128, 8
    $region17: #{_forward_impl.1} parent=1 // pred_fallthru
      _
    // Predicated region
    $region18: #{_forward_impl.1} parent=1 // pred_check
      _
    $region19: #{_forward_impl.1} parent=1 // pred_check_branch
      %54 = sbr.rel (0) target = $region21
    $region20: #{_forward_impl.1} parent=1 // pred_region
      _
    $region21: #{_forward_impl.1} parent=1 // pred_fallthru
      _
    // Predicated region
    $region22: #{_forward_impl.1} parent=1 // pred_check
      _
    $region23: #{_forward_impl.1} parent=1 // pred_check_branch
      %56 = sbr.rel (0) target = $region25
    $region24: #{_forward_impl.1} parent=1 // pred_region
      _
    $region25: #{_forward_impl.1} parent=1 // pred_fallthru
      _
    // Predicated region
    $region26: #{_forward_impl.1} parent=1 // pred_check
      _
    $region27: #{_forward_impl.1} parent=1 // pred_check_branch
      %58 = sbr.rel (0) target = $region29
    $region28: #{_forward_impl.1} parent=1 // pred_region
      _
    $region29: #{_forward_impl.1} parent=1 // pred_fallthru
      _
    // Predicated region
    $region30: #{_forward_impl.1} parent=1 // pred_check
      _
    $region31: #{_forward_impl.1} parent=1 // pred_check_branch
      %60 = sbr.rel (0) target = $region33
    $region32: #{_forward_impl.1} parent=1 // pred_region
      %62 = dma.done [#allocation7], 16
    $region33: #{_forward_impl.1} parent=1 // pred_fallthru
      _
    // Predicated region
    $region34: #{_forward_impl.1} parent=1 // pred_check
      _
    $region35: #{_forward_impl.1} parent=1 // pred_check_branch
      %64 = sbr.rel (0) target = $region37
    $region36: #{_forward_impl.1} parent=1 // pred_region
      %66 = dma.done [#allocation5], 21888
    $region37: #{_forward_impl.1} parent=1 // pred_fallthru
      _
    // Predicated region
    $region38: #{_forward_impl.1} parent=1 // pred_check
      _
    $region39: #{_forward_impl.1} parent=1 // pred_check_branch
      %68 = sbr.rel (0) target = $region41
    $region40: #{_forward_impl.1} parent=1 // pred_region
      %70 = dma.done [#allocation10], 21888
    $region41: #{_forward_impl.1} parent=1 // pred_fallthru
      _
    %71 = sfence
    %s73 = sld [smem:[#allocation4]]
    %s74 = sld [smem:[#allocation4 + $0x1]]
    %s75 = sld [smem:[#allocation4 + $0x2]]
    %s76 = sld [smem:[#allocation4 + $0x3]]
    %s77 = sld [smem:[#allocation4 + $0x4]]
    %s78 = sld [smem:[#allocation4 + $0x5]]
    %s79 = sld [smem:[#allocation4 + $0x6]]
    %s80 = sld [smem:[#allocation4 + $0x7]]
    %s81 = sld [smem:[#allocation4 + $0x8]]
    %s82 = sld [smem:[#allocation4 + $0x9]]
    %s83 = sld [smem:[#allocation4 + $0xa]]
    %s84 = sld [smem:[#allocation4 + $0xb]]
    %s85 = sld [smem:[#allocation4 + $0xc]]
    %s86 = sld [smem:[#allocation4 + $0xd]]
    %s87 = sld [smem:[#allocation4 + $0xe]]
    %s88 = sld [smem:[#allocation4 + $0xf]]
    %s89 = sld [smem:[#allocation4 + $0x10]]
    %s90 = sld [smem:[#allocation4 + $0x11]]
    %s91 = sld [smem:[#allocation4 + $0x12]]
    %s92 = sld [smem:[#allocation4 + $0x13]]
    %s93 = sld [smem:[#allocation4 + $0x14]]
    %s94 = sld [smem:[#allocation4 + $0x15]]
    %s95 = sld [smem:[#allocation4 + $0x16]]
    %s96 = sld [smem:[#allocation4 + $0x17]]
    %v97 = vld [vmem:[%s1] sm:$0xf]
    %v98 = vunpack.c.l.bf16 %v97
    %v99 = vstv %s73
    %v100 = vmul.f32 %v98, %v99
    %s101 = scalar_lea.vmem %s1, 132
    %v102 = vld [vmem:[%s101] sm:$0xf]
    %v103 = vunpack.c.l.bf16 %v102
    %v104 = vstv %s85
    %v105 = vmul.f32 %v103, %v104
    %s106 = scalar_lea.vmem %s1, 11
    %v107 = vld [vmem:[%s106] sm:$0xf]
    %v108 = vunpack.c.l.bf16 %v107
    %v109 = vstv %s74
    %v110 = vmul.f32 %v108, %v109
    %v111 = vadd.f32 %v100, %v110
    %s112 = scalar_lea.vmem %s1, 143
    %v113 = vld [vmem:[%s112] sm:$0xf]
    %v114 = vunpack.c.l.bf16 %v113
    %v115 = vstv %s86
    %v116 = vmul.f32 %v114, %v115
    %v117 = vadd.f32 %v105, %v116
    %s118 = scalar_lea.vmem %s1, 22
    %v119 = vld [vmem:[%s118] sm:$0xf]
    %v120 = vunpack.c.l.bf16 %v119
    %v121 = vstv %s75
    %v122 = vmul.f32 %v120, %v121
    %v123 = vadd.f32 %v111, %v122
    %s124 = scalar_lea.vmem %s1, 154
    %v125 = vld [vmem:[%s124] sm:$0xf]
    %v126 = vunpack.c.l.bf16 %v125
    %v127 = vstv %s87
    %v128 = vmul.f32 %v126, %v127
    %v129 = vadd.f32 %v117, %v128
    %s130 = scalar_lea.vmem %s1, 33
    %v131 = vld [vmem:[%s130] sm:$0xf]
    %v132 = vunpack.c.l.bf16 %v131
    %v133 = vstv %s76
    %v134 = vmul.f32 %v132, %v133
    %v135 = vadd.f32 %v123, %v134
    %s136 = scalar_lea.vmem %s1, 165
    %v137 = vld [vmem:[%s136] sm:$0xf]
    %v138 = vunpack.c.l.bf16 %v137
    %v139 = vstv %s88
    %v140 = vmul.f32 %v138, %v139
    %v141 = vadd.f32 %v129, %v140
    %s142 = scalar_lea.vmem %s1, 44
    %v143 = vld [vmem:[%s142] sm:$0xf]
    %v144 = vunpack.c.l.bf16 %v143
    %v145 = vstv %s77
    %v146 = vmul.f32 %v144, %v145
    %v147 = vadd.f32 %v135, %v146
    %s148 = scalar_lea.vmem %s1, 176
    %v149 = vld [vmem:[%s148] sm:$0xf]
    %v150 = vunpack.c.l.bf16 %v149
    %v151 = vstv %s89
    %v152 = vmul.f32 %v150, %v151
    %v153 = vadd.f32 %v141, %v152
    %s154 = scalar_lea.vmem %s1, 55
    %v155 = vld [vmem:[%s154] sm:$0xf]
    %v156 = vunpack.c.l.bf16 %v155
    %v157 = vstv %s78
    %v158 = vmul.f32 %v156, %v157
    %v159 = vadd.f32 %v147, %v158
    %s160 = scalar_lea.vmem %s1, 187
    %v161 = vld [vmem:[%s160] sm:$0xf]
    %v162 = vunpack.c.l.bf16 %v161
    %v163 = vstv %s90
    %v164 = vmul.f32 %v162, %v163
    %v165 = vadd.f32 %v153, %v164
    %s166 = scalar_lea.vmem %s1, 66
    %v167 = vld [vmem:[%s166] sm:$0xf]
    %v168 = vunpack.c.l.bf16 %v167
    %v169 = vstv %s79
    %v170 = vmul.f32 %v168, %v169
    %v171 = vadd.f32 %v159, %v170
    %s172 = scalar_lea.vmem %s1, 198
    %v173 = vld [vmem:[%s172] sm:$0xf]
    %v174 = vunpack.c.l.bf16 %v173
    %v175 = vstv %s91
    %v176 = vmul.f32 %v174, %v175
    %v177 = vadd.f32 %v165, %v176
    %s178 = scalar_lea.vmem %s1, 77
    %v179 = vld [vmem:[%s178] sm:$0xf]
    %v180 = vunpack.c.l.bf16 %v179
    %v181 = vstv %s80
    %v182 = vmul.f32 %v180, %v181
    %v183 = vadd.f32 %v171, %v182
    %s184 = scalar_lea.vmem %s1, 209
    %v185 = vld [vmem:[%s184] sm:$0xf]
    %v186 = vunpack.c.l.bf16 %v185
    %v187 = vstv %s92
    %v188 = vmul.f32 %v186, %v187
    %v189 = vadd.f32 %v177, %v188
    %s190 = scalar_lea.vmem %s1, 88
    %v191 = vld [vmem:[%s190] sm:$0xf]
    %v192 = vunpack.c.l.bf16 %v191
    %v193 = vstv %s81
    %v194 = vmul.f32 %v192, %v193
    %v195 = vadd.f32 %v183, %v194
    %s196 = scalar_lea.vmem %s1, 220
    %v197 = vld [vmem:[%s196] sm:$0xf]
    %v198 = vunpack.c.l.bf16 %v197
    %v199 = vstv %s93
    %v200 = vmul.f32 %v198, %v199
    %v201 = vadd.f32 %v189, %v200
    %s202 = scalar_lea.vmem %s1, 99
    %v203 = vld [vmem:[%s202] sm:$0xf]
    %v204 = vunpack.c.l.bf16 %v203
    %v205 = vstv %s82
    %v206 = vmul.f32 %v204, %v205
    %v207 = vadd.f32 %v195, %v206
    %s208 = scalar_lea.vmem %s1, 231
    %v209 = vld [vmem:[%s208] sm:$0xf]
    %v210 = vunpack.c.l.bf16 %v209
    %v211 = vstv %s94
    %v212 = vmul.f32 %v210, %v211
    %v213 = vadd.f32 %v201, %v212
    %s214 = scalar_lea.vmem %s1, 110
    %v215 = vld [vmem:[%s214] sm:$0xf]
    %v216 = vunpack.c.l.bf16 %v215
    %v217 = vstv %s83
    %v218 = vmul.f32 %v216, %v217
    %v219 = vadd.f32 %v207, %v218
    %s220 = scalar_lea.vmem %s1, 242
    %v221 = vld [vmem:[%s220] sm:$0xf]
    %v222 = vunpack.c.l.bf16 %v221
    %v223 = vstv %s95
    %v224 = vmul.f32 %v222, %v223
    %v225 = vadd.f32 %v213, %v224
    %s226 = scalar_lea.vmem %s1, 121
    %v227 = vld [vmem:[%s226] sm:$0xf]
    %v228 = vunpack.c.l.bf16 %v227
    %v229 = vstv %s84
    %v230 = vmul.f32 %v228, %v229
    %v231 = vadd.f32 %v219, %v230
    %s232 = scalar_lea.vmem %s1, 253
    %v233 = vld [vmem:[%s232] sm:$0xf]
    %v234 = vunpack.c.l.bf16 %v233
    %v235 = vstv %s96
    %v236 = vmul.f32 %v234, %v235
    %v237 = vadd.f32 %v225, %v236
    %239 = vst [vmem:[#allocation1] ss:$4 sm:$0xff] %v231
    %v240 = vld.sshfl [vmem:[#allocation1] sm:$0xff pattern:$0x73625140]
    %v241 = vld.sshfl [vmem:[#allocation1 + $0x8] sm:$0xff pattern:$0x73625140]
    %v242 = vld.sshfl [vmem:[#allocation1 + $0x10] sm:$0xff pattern:$0x73625140]
    %v243 = vld.sshfl [vmem:[#allocation1 + $0x18] sm:$0xff pattern:$0x73625140]
    %v248 = vpack.c.bf16 %v241, %v240
    %v249 = vpack.c.bf16 %v243, %v242
    %v252 = vrot.slane %v248, 3
    %v253 = vrot.slane %v249, 6
    %v254 = vrot.slane %v249, 1
    %vm255 = vcmask 1040384
    %v258 = vsel %vm255, %v248, %v252
    %vm259 = vcmask 1042434
    %v262 = vsel %vm259, %v253, %v254
    %vm263 = vcmask 1041408
    %v264 = vsel %vm263, %v258, %v262
    %266 = vst [vmem:[#allocation2] sm:$0xf] %v264
    %268 = vst [vmem:[#allocation1] ss:$4 sm:$0xff] %v237
    %v269 = vld.sshfl [vmem:[#allocation1] sm:$0xff pattern:$0x73625140]
    %v270 = vld.sshfl [vmem:[#allocation1 + $0x8] sm:$0xff pattern:$0x73625140]
    %v271 = vld.sshfl [vmem:[#allocation1 + $0x10] sm:$0xff pattern:$0x73625140]
    %v272 = vld.sshfl [vmem:[#allocation1 + $0x18] sm:$0xff pattern:$0x73625140]
    %v277 = vpack.c.bf16 %v270, %v269
    %v278 = vpack.c.bf16 %v272, %v271
    %v281 = vrot.slane %v277, 3
    %v282 = vrot.slane %v278, 6
    %v283 = vrot.slane %v278, 1
    %v286 = vsel %vm255, %v277, %v281
    %v289 = vsel %vm259, %v282, %v283
    %v290 = vsel %vm263, %v286, %v289
    %292 = vst [vmem:[#allocation3] sm:$0xf] %v290
    %v293 = vld [vmem:[%s1 + $0x4] sm:$0xf]
    %v294 = vunpack.c.l.bf16 %v293
    %v295 = vmul.f32 %v294, %v99
    %v296 = vld [vmem:[%s101 + $0x4] sm:$0xf]
    %v297 = vunpack.c.l.bf16 %v296
    %v298 = vmul.f32 %v297, %v104
    %v299 = vld [vmem:[%s106 + $0x4] sm:$0xf]
    %v300 = vunpack.c.l.bf16 %v299
    %v301 = vmul.f32 %v300, %v109
    %v302 = vadd.f32 %v295, %v301
    %v303 = vld [vmem:[%s112 + $0x4] sm:$0xf]
    %v304 = vunpack.c.l.bf16 %v303
    %v305 = vmul.f32 %v304, %v115
    %v306 = vadd.f32 %v298, %v305
    %v307 = vld [vmem:[%s118 + $0x4] sm:$0xf]
    %v308 = vunpack.c.l.bf16 %v307
    %v309 = vmul.f32 %v308, %v121
    %v310 = vadd.f32 %v302, %v309
    %v311 = vld [vmem:[%s124 + $0x4] sm:$0xf]
    %v312 = vunpack.c.l.bf16 %v311
    %v313 = vmul.f32 %v312, %v127
    %v314 = vadd.f32 %v306, %v313
    %v315 = vld [vmem:[%s130 + $0x4] sm:$0xf]
    %v316 = vunpack.c.l.bf16 %v315
    %v317 = vmul.f32 %v316, %v133
    %v318 = vadd.f32 %v310, %v317
    %v319 = vld [vmem:[%s136 + $0x4] sm:$0xf]
    %v320 = vunpack.c.l.bf16 %v319
    %v321 = vmul.f32 %v320, %v139
    %v322 = vadd.f32 %v314, %v321
    %v323 = vld [vmem:[%s142 + $0x4] sm:$0xf]
    %v324 = vunpack.c.l.bf16 %v323
    %v325 = vmul.f32 %v324, %v145
    %v326 = vadd.f32 %v318, %v325
    %v327 = vld [vmem:[%s148 + $0x4] sm:$0xf]
    %v328 = vunpack.c.l.bf16 %v327
    %v329 = vmul.f32 %v328, %v151
    %v330 = vadd.f32 %v322, %v329
    %v331 = vld [vmem:[%s154 + $0x4] sm:$0xf]
    %v332 = vunpack.c.l.bf16 %v331
    %v333 = vmul.f32 %v332, %v157
    %v334 = vadd.f32 %v326, %v333
    %v335 = vld [vmem:[%s160 + $0x4] sm:$0xf]
    %v336 = vunpack.c.l.bf16 %v335
    %v337 = vmul.f32 %v336, %v163
    %v338 = vadd.f32 %v330, %v337
    %v339 = vld [vmem:[%s166 + $0x4] sm:$0xf]
    %v340 = vunpack.c.l.bf16 %v339
    %v341 = vmul.f32 %v340, %v169
    %v342 = vadd.f32 %v334, %v341
    %v343 = vld [vmem:[%s172 + $0x4] sm:$0xf]
    %v344 = vunpack.c.l.bf16 %v343
    %v345 = vmul.f32 %v344, %v175
    %v346 = vadd.f32 %v338, %v345
    %v347 = vld [vmem:[%s178 + $0x4] sm:$0xf]
    %v348 = vunpack.c.l.bf16 %v347
    %v349 = vmul.f32 %v348, %v181
    %v350 = vadd.f32 %v342, %v349
    %v351 = vld [vmem:[%s184 + $0x4] sm:$0xf]
    %v352 = vunpack.c.l.bf16 %v351
    %v353 = vmul.f32 %v352, %v187
    %v354 = vadd.f32 %v346, %v353
    %v355 = vld [vmem:[%s190 + $0x4] sm:$0xf]
    %v356 = vunpack.c.l.bf16 %v355
    %v357 = vmul.f32 %v356, %v193
    %v358 = vadd.f32 %v350, %v357
    %v359 = vld [vmem:[%s196 + $0x4] sm:$0xf]
    %v360 = vunpack.c.l.bf16 %v359
    %v361 = vmul.f32 %v360, %v199
    %v362 = vadd.f32 %v354, %v361
    %v363 = vld [vmem:[%s202 + $0x4] sm:$0xf]
    %v364 = vunpack.c.l.bf16 %v363
    %v365 = vmul.f32 %v364, %v205
    %v366 = vadd.f32 %v358, %v365
    %v367 = vld [vmem:[%s208 + $0x4] sm:$0xf]
    %v368 = vunpack.c.l.bf16 %v367
    %v369 = vmul.f32 %v368, %v211
    %v370 = vadd.f32 %v362, %v369
    %v371 = vld [vmem:[%s214 + $0x4] sm:$0xf]
    %v372 = vunpack.c.l.bf16 %v371
    %v373 = vmul.f32 %v372, %v217
    %v374 = vadd.f32 %v366, %v373
    %v375 = vld [vmem:[%s220 + $0x4] sm:$0xf]
    %v376 = vunpack.c.l.bf16 %v375
    %v377 = vmul.f32 %v376, %v223
    %v378 = vadd.f32 %v370, %v377
    %v379 = vld [vmem:[%s226 + $0x4] sm:$0xf]
    %v380 = vunpack.c.l.bf16 %v379
    %v381 = vmul.f32 %v380, %v229
    %v382 = vadd.f32 %v374, %v381
    %v383 = vld [vmem:[%s232 + $0x4] sm:$0xf]
    %v384 = vunpack.c.l.bf16 %v383
    %v385 = vmul.f32 %v384, %v235
    %v386 = vadd.f32 %v378, %v385
    %388 = vst [vmem:[#allocation1] ss:$4 sm:$0xff] %v382
    %v389 = vld.sshfl [vmem:[#allocation1] sm:$0xff pattern:$0x73625140]
    %v390 = vld.sshfl [vmem:[#allocation1 + $0x8] sm:$0xff pattern:$0x73625140]
    %v391 = vld.sshfl [vmem:[#allocation1 + $0x10] sm:$0xff pattern:$0x73625140]
    %v392 = vld.sshfl [vmem:[#allocation1 + $0x18] sm:$0xff pattern:$0x73625140]
    %v397 = vpack.c.bf16 %v390, %v389
    %v398 = vpack.c.bf16 %v392, %v391
    %v401 = vrot.slane %v397, 3
    %v402 = vrot.slane %v398, 6
    %v403 = vrot.slane %v398, 1
    %v406 = vsel %vm255, %v397, %v401
    %v409 = vsel %vm259, %v402, %v403
    %v410 = vsel %vm263, %v406, %v409
    %412 = vst [vmem:[#allocation2 + $0x4] sm:$0xf] %v410
    %414 = vst [vmem:[#allocation1] ss:$4 sm:$0xff] %v386
    %v415 = vld.sshfl [vmem:[#allocation1] sm:$0xff pattern:$0x73625140]
    %v416 = vld.sshfl [vmem:[#allocation1 + $0x8] sm:$0xff pattern:$0x73625140]
    %v417 = vld.sshfl [vmem:[#allocation1 + $0x10] sm:$0xff pattern:$0x73625140]
    %v418 = vld.sshfl [vmem:[#allocation1 + $0x18] sm:$0xff pattern:$0x73625140]
    %v423 = vpack.c.bf16 %v416, %v415
    %v424 = vpack.c.bf16 %v418, %v417
    %v427 = vrot.slane %v423, 3
    %v428 = vrot.slane %v424, 6
    %v429 = vrot.slane %v424, 1
    %v432 = vsel %vm255, %v423, %v427
    %v435 = vsel %vm259, %v428, %v429
    %v436 = vsel %vm263, %v432, %v435
    %438 = vst [vmem:[#allocation3 + $0x4] sm:$0xf] %v436
    %v439 = vld [vmem:[%s1 + $0x8] sm:$0x7]
    %v440 = vunpack.c.l.bf16 %v439
    %v441 = vmul.f32 %v440, %v99
    %v442 = vld [vmem:[%s101 + $0x8] sm:$0x7]
    %v443 = vunpack.c.l.bf16 %v442
    %v444 = vmul.f32 %v443, %v104
    %v445 = vld [vmem:[%s106 + $0x8] sm:$0x7]
    %v446 = vunpack.c.l.bf16 %v445
    %v447 = vmul.f32 %v446, %v109
    %v448 = vadd.f32 %v441, %v447
    %v449 = vld [vmem:[%s112 + $0x8] sm:$0x7]
    %v450 = vunpack.c.l.bf16 %v449
    %v451 = vmul.f32 %v450, %v115
    %v452 = vadd.f32 %v444, %v451
    %v453 = vld [vmem:[%s118 + $0x8] sm:$0x7]
    %v454 = vunpack.c.l.bf16 %v453
    %v455 = vmul.f32 %v454, %v121
    %v456 = vadd.f32 %v448, %v455
    %v457 = vld [vmem:[%s124 + $0x8] sm:$0x7]
    %v458 = vunpack.c.l.bf16 %v457
    %v459 = vmul.f32 %v458, %v127
    %v460 = vadd.f32 %v452, %v459
    %v461 = vld [vmem:[%s130 + $0x8] sm:$0x7]
    %v462 = vunpack.c.l.bf16 %v461
    %v463 = vmul.f32 %v462, %v133
    %v464 = vadd.f32 %v456, %v463
    %v465 = vld [vmem:[%s136 + $0x8] sm:$0x7]
    %v466 = vunpack.c.l.bf16 %v465
    %v467 = vmul.f32 %v466, %v139
    %v468 = vadd.f32 %v460, %v467
    %v469 = vld [vmem:[%s142 + $0x8] sm:$0x7]
    %v470 = vunpack.c.l.bf16 %v469
    %v471 = vmul.f32 %v470, %v145
    %v472 = vadd.f32 %v464, %v471
    %v473 = vld [vmem:[%s148 + $0x8] sm:$0x7]
    %v474 = vunpack.c.l.bf16 %v473
    %v475 = vmul.f32 %v474, %v151
    %v476 = vadd.f32 %v468, %v475
    %v477 = vld [vmem:[%s154 + $0x8] sm:$0x7]
    %v478 = vunpack.c.l.bf16 %v477
    %v479 = vmul.f32 %v478, %v157
    %v480 = vadd.f32 %v472, %v479
    %v481 = vld [vmem:[%s160 + $0x8] sm:$0x7]
    %v482 = vunpack.c.l.bf16 %v481
    %v483 = vmul.f32 %v482, %v163
    %v484 = vadd.f32 %v476, %v483
    %v485 = vld [vmem:[%s166 + $0x8] sm:$0x7]
    %v486 = vunpack.c.l.bf16 %v485
    %v487 = vmul.f32 %v486, %v169
    %v488 = vadd.f32 %v480, %v487
    %v489 = vld [vmem:[%s172 + $0x8] sm:$0x7]
    %v490 = vunpack.c.l.bf16 %v489
    %v491 = vmul.f32 %v490, %v175
    %v492 = vadd.f32 %v484, %v491
    %v493 = vld [vmem:[%s178 + $0x8] sm:$0x7]
    %v494 = vunpack.c.l.bf16 %v493
    %v495 = vmul.f32 %v494, %v181
    %v496 = vadd.f32 %v488, %v495
    %v497 = vld [vmem:[%s184 + $0x8] sm:$0x7]
    %v498 = vunpack.c.l.bf16 %v497
    %v499 = vmul.f32 %v498, %v187
    %v500 = vadd.f32 %v492, %v499
    %v501 = vld [vmem:[%s190 + $0x8] sm:$0x7]
    %v502 = vunpack.c.l.bf16 %v501
    %v503 = vmul.f32 %v502, %v193
    %v504 = vadd.f32 %v496, %v503
    %v505 = vld [vmem:[%s196 + $0x8] sm:$0x7]
    %v506 = vunpack.c.l.bf16 %v505
    %v507 = vmul.f32 %v506, %v199
    %v508 = vadd.f32 %v500, %v507
    %v509 = vld [vmem:[%s202 + $0x8] sm:$0x7]
    %v510 = vunpack.c.l.bf16 %v509
    %v511 = vmul.f32 %v510, %v205
    %v512 = vadd.f32 %v504, %v511
    %v513 = vld [vmem:[%s208 + $0x8] sm:$0x7]
    %v514 = vunpack.c.l.bf16 %v513
    %v515 = vmul.f32 %v514, %v211
    %v516 = vadd.f32 %v508, %v515
    %v517 = vld [vmem:[%s214 + $0x8] sm:$0x7]
    %v518 = vunpack.c.l.bf16 %v517
    %v519 = vmul.f32 %v518, %v217
    %v520 = vadd.f32 %v512, %v519
    %v521 = vld [vmem:[%s220 + $0x8] sm:$0x7]
    %v522 = vunpack.c.l.bf16 %v521
    %v523 = vmul.f32 %v522, %v223
    %v524 = vadd.f32 %v516, %v523
    %v525 = vld [vmem:[%s226 + $0x8] sm:$0x7]
    %v526 = vunpack.c.l.bf16 %v525
    %v527 = vmul.f32 %v526, %v229
    %v528 = vadd.f32 %v520, %v527
    %v529 = vld [vmem:[%s232 + $0x8] sm:$0x7]
    %v530 = vunpack.c.l.bf16 %v529
    %v531 = vmul.f32 %v530, %v235
    %v532 = vadd.f32 %v524, %v531
    %534 = vst [vmem:[#allocation1] ss:$4 sm:$0xff] %v528
    %v535 = vld.sshfl [vmem:[#allocation1] sm:$0xff pattern:$0x73625140]
    %v536 = vld.sshfl [vmem:[#allocation1 + $0x8] sm:$0xff pattern:$0x73625140]
    %v537 = vld.sshfl [vmem:[#allocation1 + $0x10] sm:$0xff pattern:$0x73625140]
    %v541 = vpack.c.bf16 %v536, %v535
    %v542 = vpack.c.bf16 %v537, %v537
    %v545 = vrot.slane %v541, 3
    %v546 = vrot.slane %v542, 6
    %v547 = vrot.slane %v542, 1
    %v550 = vsel %vm255, %v541, %v545
    %v553 = vsel %vm259, %v546, %v547
    %v554 = vsel %vm263, %v550, %v553
    %vm556 = vcmask 1041409
    %vm557 = vmor %vm556, %vm255
    %vm558 = vcmask 698370
    %vm559 = vmor %vm558, %vm557
    %560 = vst.msk [vmem:[#allocation2 + $0x8] sm:$0x7] %vm559, %v554
    %562 = vst [vmem:[#allocation1] ss:$4 sm:$0xff] %v532
    %v563 = vld.sshfl [vmem:[#allocation1] sm:$0xff pattern:$0x73625140]
    %v564 = vld.sshfl [vmem:[#allocation1 + $0x8] sm:$0xff pattern:$0x73625140]
    %v565 = vld.sshfl [vmem:[#allocation1 + $0x10] sm:$0xff pattern:$0x73625140]
    %v569 = vpack.c.bf16 %v564, %v563
    %v570 = vpack.c.bf16 %v565, %v565
    %v573 = vrot.slane %v569, 3
    %v574 = vrot.slane %v570, 6
    %v575 = vrot.slane %v570, 1
    %v578 = vsel %vm255, %v569, %v573
    %v581 = vsel %vm259, %v574, %v575
    %v582 = vsel %vm263, %v578, %v581
    %584 = vst.msk [vmem:[#allocation3 + $0x8] sm:$0x7] %vm559, %v582
    %v585 = vld [vmem:[#allocation2] sm:$0xff]
    %v586 = vld [vmem:[#allocation2 + $0x8] sm:$0x7]
    %v587 = vld [vmem:[#allocation8] sm:$0xff]
    %v588 = vld [vmem:[#allocation8 + $0x8] sm:$0xff]
    %v589 = vld [vmem:[#allocation8 + $0x10] sm:$0xff]
    %v590 = vld [vmem:[#allocation8 + $0x18] sm:$0xff]
    %v591 = vld [vmem:[#allocation8 + $0x20] sm:$0xff]
    %v592 = vld [vmem:[#allocation8 + $0x28] sm:$0xff]
    %v593 = vld [vmem:[#allocation8 + $0x30] sm:$0xff]
    %v594 = vld [vmem:[#allocation8 + $0x38] sm:$0xff]
    %v595 = vld [vmem:[#allocation8 + $0x40] sm:$0xff]
    %v596 = vld [vmem:[#allocation8 + $0x48] sm:$0xff]
    %v597 = vld [vmem:[#allocation8 + $0x50] sm:$0xff]
    %v598 = vld [vmem:[#allocation8 + $0x58] sm:$0xff]
    %v599 = vld [vmem:[#allocation8 + $0x60] sm:$0xff]
    %v600 = vld [vmem:[#allocation8 + $0x68] sm:$0xff]
    %v601 = vld [vmem:[#allocation8 + $0x70] sm:$0xff]
    %v602 = vld [vmem:[#allocation8 + $0x78] sm:$0xff]
    %v603 = vld [vmem:[#allocation8 + $0x80] sm:$0xff]
    %v604 = vld [vmem:[#allocation8 + $0x88] sm:$0xff]
    %v605 = vld [vmem:[#allocation8 + $0x90] sm:$0xff]
    %v606 = vld [vmem:[#allocation8 + $0x98] sm:$0xff]
    %v607 = vld [vmem:[#allocation8 + $0xa0] sm:$0xff]
    %v608 = vld [vmem:[#allocation8 + $0xa8] sm:$0xff]
    %v609 = vld [vmem:[#allocation8 + $0xb0] sm:$0xff]
    %v610 = vld [vmem:[#allocation8 + $0xb8] sm:$0xff]
    %v611 = vld [vmem:[#allocation8 + $0xc0] sm:$0xff]
    %v612 = vld [vmem:[#allocation8 + $0xc8] sm:$0xff]
    %v613 = vld [vmem:[#allocation8 + $0xd0] sm:$0xff]
    %v614 = vld [vmem:[#allocation8 + $0xd8] sm:$0xff]
    %v615 = vld [vmem:[#allocation8 + $0xe0] sm:$0xff]
    %v616 = vld [vmem:[#allocation8 + $0xe8] sm:$0xff]
    %v617 = vld [vmem:[#allocation8 + $0xf0] sm:$0xff]
    %v618 = vld [vmem:[#allocation8 + $0xf8] sm:$0xff]
    %v619 = vld [vmem:[#allocation8 + $0x100] sm:$0xff]
    %v620 = vld [vmem:[#allocation8 + $0x108] sm:$0xff]
    %v621 = vld [vmem:[#allocation8 + $0x110] sm:$0xff]
    %v622 = vld [vmem:[#allocation8 + $0x118] sm:$0xff]
    %v623 = vld [vmem:[#allocation8 + $0x120] sm:$0xff]
    %v624 = vld [vmem:[#allocation8 + $0x128] sm:$0xff]
    %v625 = vld [vmem:[#allocation8 + $0x130] sm:$0xff]
    %v626 = vld [vmem:[#allocation8 + $0x138] sm:$0xff]
    %v627 = vld [vmem:[#allocation8 + $0x140] sm:$0xff]
    %v628 = vld [vmem:[#allocation8 + $0x148] sm:$0xff]
    %v629 = vld [vmem:[#allocation8 + $0x150] sm:$0xff]
    %v630 = vld [vmem:[#allocation8 + $0x158] sm:$0xff]
    %v631 = vld [vmem:[#allocation8 + $0x160] sm:$0xff]
    %v632 = vld [vmem:[#allocation8 + $0x168] sm:$0xff]
    %v633 = vld [vmem:[#allocation8 + $0x170] sm:$0xff]
    %v634 = vld [vmem:[#allocation8 + $0x178] sm:$0xff]
    %v635 = vld [vmem:[#allocation8 + $0x180] sm:$0xff]
    %v636 = vld [vmem:[#allocation8 + $0x188] sm:$0xff]
    %v637 = vld [vmem:[#allocation8 + $0x190] sm:$0xff]
    %v638 = vld [vmem:[#allocation8 + $0x198] sm:$0xff]
    %v639 = vld [vmem:[#allocation8 + $0x1a0] sm:$0xff]
    %v640 = vld [vmem:[#allocation8 + $0x1a8] sm:$0xff]
    %v641 = vld [vmem:[#allocation8 + $0x1b0] sm:$0xff]
    %v642 = vld [vmem:[#allocation8 + $0x1b8] sm:$0xff]
    %v643 = vld [vmem:[#allocation8 + $0x1c0] sm:$0xff]
    %v644 = vld [vmem:[#allocation8 + $0x1c8] sm:$0xff]
    %v645 = vld [vmem:[#allocation8 + $0x1d0] sm:$0xff]
    %v646 = vld [vmem:[#allocation8 + $0x1d8] sm:$0xff]
    %v647 = vld [vmem:[#allocation8 + $0x1e0] sm:$0xff]
    %v648 = vld [vmem:[#allocation8 + $0x1e8] sm:$0xff]
    %v649 = vld [vmem:[#allocation8 + $0x1f0] sm:$0xff]
    %v650 = vld [vmem:[#allocation8 + $0x1f8] sm:$0xff]
    %v651 = vld [vmem:[#allocation8 + $0x200] sm:$0xff]
    %v652 = vld [vmem:[#allocation8 + $0x208] sm:$0xff]
    %v653 = vld [vmem:[#allocation8 + $0x210] sm:$0xff]
    %v654 = vld [vmem:[#allocation8 + $0x218] sm:$0xff]
    %v655 = vld [vmem:[#allocation8 + $0x220] sm:$0xff]
    %v656 = vld [vmem:[#allocation8 + $0x228] sm:$0xff]
    %v657 = vld [vmem:[#allocation8 + $0x230] sm:$0xff]
    %v658 = vld [vmem:[#allocation8 + $0x238] sm:$0xff]
    %v659 = vld [vmem:[#allocation8 + $0x240] sm:$0xff]
    %v660 = vld [vmem:[#allocation8 + $0x248] sm:$0xff]
    %v661 = vld [vmem:[#allocation8 + $0x250] sm:$0xff]
    %v662 = vld [vmem:[#allocation8 + $0x258] sm:$0xff]
    %v663 = vld [vmem:[#allocation8 + $0x260] sm:$0xff]
    %v664 = vld [vmem:[#allocation8 + $0x268] sm:$0xff]
    %v665 = vld [vmem:[#allocation8 + $0x270] sm:$0xff]
    %v666 = vld [vmem:[#allocation8 + $0x278] sm:$0xff]
    %v667 = vld [vmem:[#allocation8 + $0x280] sm:$0xff]
    %v668 = vld [vmem:[#allocation8 + $0x288] sm:$0xff]
    %v669 = vld [vmem:[#allocation8 + $0x290] sm:$0xff]
    %v670 = vld [vmem:[#allocation8 + $0x298] sm:$0xff]
    %v671 = vld [vmem:[#allocation8 + $0x2a0] sm:$0xff]
    %v672 = vld [vmem:[#allocation8 + $0x2a8] sm:$0xff]
    %v673 = vld [vmem:[#allocation8 + $0x2b0] sm:$0xff]
    %v674 = vld [vmem:[#allocation8 + $0x2b8] sm:$0xff]
    %v675 = vld [vmem:[#allocation8 + $0x2c0] sm:$0xff]
    %v676 = vld [vmem:[#allocation8 + $0x2c8] sm:$0xff]
    %v677 = vld [vmem:[#allocation8 + $0x2d0] sm:$0xff]
    %v678 = vld [vmem:[#allocation8 + $0x2d8] sm:$0xff]
    %v679 = vld [vmem:[#allocation8 + $0x2e0] sm:$0xff]
    %v680 = vld [vmem:[#allocation8 + $0x2e8] sm:$0xff]
    %v681 = vld [vmem:[#allocation8 + $0x2f0] sm:$0xff]
    %v682 = vld [vmem:[#allocation8 + $0x2f8] sm:$0xff]
    %v683 = vld [vmem:[#allocation8 + $0x300] sm:$0xff]
    %v684 = vld [vmem:[#allocation8 + $0x308] sm:$0xff]
    %v685 = vld [vmem:[#allocation8 + $0x310] sm:$0xff]
    %v686 = vld [vmem:[#allocation8 + $0x318] sm:$0xff]
    %v687 = vld [vmem:[#allocation8 + $0x320] sm:$0xff]
    %v688 = vld [vmem:[#allocation8 + $0x328] sm:$0xff]
    %v689 = vld [vmem:[#allocation8 + $0x330] sm:$0xff]
    %v690 = vld [vmem:[#allocation8 + $0x338] sm:$0xff]
    %v691 = vld [vmem:[#allocation8 + $0x340] sm:$0xff]
    %v692 = vld [vmem:[#allocation8 + $0x348] sm:$0xff]
    %v693 = vld [vmem:[#allocation8 + $0x350] sm:$0xff]
    %v694 = vld [vmem:[#allocation8 + $0x358] sm:$0xff]
    %v695 = vld [vmem:[#allocation8 + $0x360] sm:$0xff]
    %v696 = vld [vmem:[#allocation8 + $0x368] sm:$0xff]
    %v697 = vld [vmem:[#allocation8 + $0x370] sm:$0xff]
    %v698 = vld [vmem:[#allocation8 + $0x378] sm:$0xff]
    %v699 = vld [vmem:[#allocation8 + $0x380] sm:$0xff]
    %v700 = vld [vmem:[#allocation8 + $0x388] sm:$0xff]
    %v701 = vld [vmem:[#allocation8 + $0x390] sm:$0xff]
    %v702 = vld [vmem:[#allocation8 + $0x398] sm:$0xff]
    %v703 = vld [vmem:[#allocation8 + $0x3a0] sm:$0xff]
    %v704 = vld [vmem:[#allocation8 + $0x3a8] sm:$0xff]
    %v705 = vld [vmem:[#allocation8 + $0x3b0] sm:$0xff]
    %v706 = vld [vmem:[#allocation8 + $0x3b8] sm:$0xff]
    %v707 = vld [vmem:[#allocation8 + $0x3c0] sm:$0xff]
    %v708 = vld [vmem:[#allocation8 + $0x3c8] sm:$0xff]
    %v709 = vld [vmem:[#allocation8 + $0x3d0] sm:$0xff]
    %v710 = vld [vmem:[#allocation8 + $0x3d8] sm:$0xff]
    %v711 = vld [vmem:[#allocation8 + $0x3e0] sm:$0xff]
    %v712 = vld [vmem:[#allocation8 + $0x3e8] sm:$0xff]
    %v713 = vld [vmem:[#allocation8 + $0x3f0] sm:$0xff]
    %v714 = vld [vmem:[#allocation8 + $0x3f8] sm:$0xff]
    %v715 = vld [vmem:[#allocation8 + $0x400] sm:$0xff]
    %v716 = vld [vmem:[#allocation8 + $0x408] sm:$0xff]
    %v717 = vld [vmem:[#allocation8 + $0x410] sm:$0xff]
    %v718 = vld [vmem:[#allocation8 + $0x418] sm:$0xff]
    %v719 = vld [vmem:[#allocation8 + $0x420] sm:$0xff]
    %v720 = vld [vmem:[#allocation8 + $0x428] sm:$0xff]
    %v721 = vld [vmem:[#allocation8 + $0x430] sm:$0xff]
    %v722 = vld [vmem:[#allocation8 + $0x438] sm:$0xff]
    %v723 = vld [vmem:[#allocation8 + $0x440] sm:$0xff]
    %v724 = vld [vmem:[#allocation8 + $0x448] sm:$0xff]
    %v725 = vld [vmem:[#allocation8 + $0x450] sm:$0xff]
    %v726 = vld [vmem:[#allocation8 + $0x458] sm:$0xff]
    %v727 = vld [vmem:[#allocation8 + $0x460] sm:$0xff]
    %v728 = vld [vmem:[#allocation8 + $0x468] sm:$0xff]
    %v729 = vld [vmem:[#allocation8 + $0x470] sm:$0xff]
    %v730 = vld [vmem:[#allocation8 + $0x478] sm:$0xff]
    %v731 = vld [vmem:[#allocation8 + $0x480] sm:$0xff]
    %v732 = vld [vmem:[#allocation8 + $0x488] sm:$0xff]
    %v733 = vld [vmem:[#allocation8 + $0x490] sm:$0xff]
    %v734 = vld [vmem:[#allocation8 + $0x498] sm:$0xff]
    %v735 = vld [vmem:[#allocation8 + $0x4a0] sm:$0xff]
    %v736 = vld [vmem:[#allocation8 + $0x4a8] sm:$0xff]
    %v737 = vld [vmem:[#allocation8 + $0x4b0] sm:$0xff]
    %v738 = vld [vmem:[#allocation8 + $0x4b8] sm:$0xff]
    %v739 = vld [vmem:[#allocation8 + $0x4c0] sm:$0xff]
    %v740 = vld [vmem:[#allocation8 + $0x4c8] sm:$0xff]
    %v741 = vld [vmem:[#allocation8 + $0x4d0] sm:$0xff]
    %v742 = vld [vmem:[#allocation8 + $0x4d8] sm:$0xff]
    %v743 = vld [vmem:[#allocation8 + $0x4e0] sm:$0xff]
    %v744 = vld [vmem:[#allocation8 + $0x4e8] sm:$0xff]
    %v745 = vld [vmem:[#allocation8 + $0x4f0] sm:$0xff]
    %v746 = vld [vmem:[#allocation8 + $0x4f8] sm:$0xff]
    %v747 = vld [vmem:[#allocation8 + $0x500] sm:$0xff]
    %v748 = vld [vmem:[#allocation8 + $0x508] sm:$0xff]
    %v749 = vld [vmem:[#allocation8 + $0x510] sm:$0xff]
    %v750 = vld [vmem:[#allocation8 + $0x518] sm:$0xff]
    %v751 = vld [vmem:[#allocation8 + $0x520] sm:$0xff]
    %v752 = vld [vmem:[#allocation8 + $0x528] sm:$0xff]
    %v753 = vld [vmem:[#allocation8 + $0x530] sm:$0xff]
    %v754 = vld [vmem:[#allocation8 + $0x538] sm:$0xff]
    %v755 = vld [vmem:[#allocation8 + $0x540] sm:$0xff]
    %v756 = vld [vmem:[#allocation8 + $0x548] sm:$0xff]
    %v757 = vld [vmem:[#allocation8 + $0x550] sm:$0x77]
    %v758 = vld [vmem:[#allocation3] sm:$0xff]
    %v759 = vld [vmem:[#allocation3 + $0x8] sm:$0x7]
    %v760 = vld [vmem:[#allocation9] sm:$0xff]
    %v761 = vld [vmem:[#allocation9 + $0x8] sm:$0xff]
    %v762 = vld [vmem:[#allocation9 + $0x10] sm:$0xff]
    %v763 = vld [vmem:[#allocation9 + $0x18] sm:$0xff]
    %v764 = vld [vmem:[#allocation9 + $0x20] sm:$0xff]
    %v765 = vld [vmem:[#allocation9 + $0x28] sm:$0xff]
    %v766 = vld [vmem:[#allocation9 + $0x30] sm:$0xff]
    %v767 = vld [vmem:[#allocation9 + $0x38] sm:$0xff]
    %v768 = vld [vmem:[#allocation9 + $0x40] sm:$0xff]
    %v769 = vld [vmem:[#allocation9 + $0x48] sm:$0xff]
    %v770 = vld [vmem:[#allocation9 + $0x50] sm:$0xff]
    %v771 = vld [vmem:[#allocation9 + $0x58] sm:$0xff]
    %v772 = vld [vmem:[#allocation9 + $0x60] sm:$0xff]
    %v773 = vld [vmem:[#allocation9 + $0x68] sm:$0xff]
    %v774 = vld [vmem:[#allocation9 + $0x70] sm:$0xff]
    %v775 = vld [vmem:[#allocation9 + $0x78] sm:$0xff]
    %v776 = vld [vmem:[#allocation9 + $0x80] sm:$0xff]
    %v777 = vld [vmem:[#allocation9 + $0x88] sm:$0xff]
    %v778 = vld [vmem:[#allocation9 + $0x90] sm:$0xff]
    %v779 = vld [vmem:[#allocation9 + $0x98] sm:$0xff]
    %v780 = vld [vmem:[#allocation9 + $0xa0] sm:$0xff]
    %v781 = vld [vmem:[#allocation9 + $0xa8] sm:$0xff]
    %v782 = vld [vmem:[#allocation9 + $0xb0] sm:$0xff]
    %v783 = vld [vmem:[#allocation9 + $0xb8] sm:$0xff]
    %v784 = vld [vmem:[#allocation9 + $0xc0] sm:$0xff]
    %v785 = vld [vmem:[#allocation9 + $0xc8] sm:$0xff]
    %v786 = vld [vmem:[#allocation9 + $0xd0] sm:$0xff]
    %v787 = vld [vmem:[#allocation9 + $0xd8] sm:$0xff]
    %v788 = vld [vmem:[#allocation9 + $0xe0] sm:$0xff]
    %v789 = vld [vmem:[#allocation9 + $0xe8] sm:$0xff]
    %v790 = vld [vmem:[#allocation9 + $0xf0] sm:$0xff]
    %v791 = vld [vmem:[#allocation9 + $0xf8] sm:$0xff]
    %v792 = vld [vmem:[#allocation9 + $0x100] sm:$0xff]
    %v793 = vld [vmem:[#allocation9 + $0x108] sm:$0xff]
    %v794 = vld [vmem:[#allocation9 + $0x110] sm:$0xff]
    %v795 = vld [vmem:[#allocation9 + $0x118] sm:$0xff]
    %v796 = vld [vmem:[#allocation9 + $0x120] sm:$0xff]
    %v797 = vld [vmem:[#allocation9 + $0x128] sm:$0xff]
    %v798 = vld [vmem:[#allocation9 + $0x130] sm:$0xff]
    %v799 = vld [vmem:[#allocation9 + $0x138] sm:$0xff]
    %v800 = vld [vmem:[#allocation9 + $0x140] sm:$0xff]
    %v801 = vld [vmem:[#allocation9 + $0x148] sm:$0xff]
    %v802 = vld [vmem:[#allocation9 + $0x150] sm:$0xff]
    %v803 = vld [vmem:[#allocation9 + $0x158] sm:$0xff]
    %v804 = vld [vmem:[#allocation9 + $0x160] sm:$0xff]
    %v805 = vld [vmem:[#allocation9 + $0x168] sm:$0xff]
    %v806 = vld [vmem:[#allocation9 + $0x170] sm:$0xff]
    %v807 = vld [vmem:[#allocation9 + $0x178] sm:$0xff]
    %v808 = vld [vmem:[#allocation9 + $0x180] sm:$0xff]
    %v809 = vld [vmem:[#allocation9 + $0x188] sm:$0xff]
    %v810 = vld [vmem:[#allocation9 + $0x190] sm:$0xff]
    %v811 = vld [vmem:[#allocation9 + $0x198] sm:$0xff]
    %v812 = vld [vmem:[#allocation9 + $0x1a0] sm:$0xff]
    %v813 = vld [vmem:[#allocation9 + $0x1a8] sm:$0xff]
    %v814 = vld [vmem:[#allocation9 + $0x1b0] sm:$0xff]
    %v815 = vld [vmem:[#allocation9 + $0x1b8] sm:$0xff]
    %v816 = vld [vmem:[#allocation9 + $0x1c0] sm:$0xff]
    %v817 = vld [vmem:[#allocation9 + $0x1c8] sm:$0xff]
    %v818 = vld [vmem:[#allocation9 + $0x1d0] sm:$0xff]
    %v819 = vld [vmem:[#allocation9 + $0x1d8] sm:$0xff]
    %v820 = vld [vmem:[#allocation9 + $0x1e0] sm:$0xff]
    %v821 = vld [vmem:[#allocation9 + $0x1e8] sm:$0xff]
    %v822 = vld [vmem:[#allocation9 + $0x1f0] sm:$0xff]
    %v823 = vld [vmem:[#allocation9 + $0x1f8] sm:$0xff]
    %v824 = vld [vmem:[#allocation9 + $0x200] sm:$0xff]
    %v825 = vld [vmem:[#allocation9 + $0x208] sm:$0xff]
    %v826 = vld [vmem:[#allocation9 + $0x210] sm:$0xff]
    %v827 = vld [vmem:[#allocation9 + $0x218] sm:$0xff]
    %v828 = vld [vmem:[#allocation9 + $0x220] sm:$0xff]
    %v829 = vld [vmem:[#allocation9 + $0x228] sm:$0xff]
    %v830 = vld [vmem:[#allocation9 + $0x230] sm:$0xff]
    %v831 = vld [vmem:[#allocation9 + $0x238] sm:$0xff]
    %v832 = vld [vmem:[#allocation9 + $0x240] sm:$0xff]
    %v833 = vld [vmem:[#allocation9 + $0x248] sm:$0xff]
    %v834 = vld [vmem:[#allocation9 + $0x250] sm:$0xff]
    %v835 = vld [vmem:[#allocation9 + $0x258] sm:$0xff]
    %v836 = vld [vmem:[#allocation9 + $0x260] sm:$0xff]
    %v837 = vld [vmem:[#allocation9 + $0x268] sm:$0xff]
    %v838 = vld [vmem:[#allocation9 + $0x270] sm:$0xff]
    %v839 = vld [vmem:[#allocation9 + $0x278] sm:$0xff]
    %v840 = vld [vmem:[#allocation9 + $0x280] sm:$0xff]
    %v841 = vld [vmem:[#allocation9 + $0x288] sm:$0xff]
    %v842 = vld [vmem:[#allocation9 + $0x290] sm:$0xff]
    %v843 = vld [vmem:[#allocation9 + $0x298] sm:$0xff]
    %v844 = vld [vmem:[#allocation9 + $0x2a0] sm:$0xff]
    %v845 = vld [vmem:[#allocation9 + $0x2a8] sm:$0xff]
    %v846 = vld [vmem:[#allocation9 + $0x2b0] sm:$0xff]
    %v847 = vld [vmem:[#allocation9 + $0x2b8] sm:$0xff]
    %v848 = vld [vmem:[#allocation9 + $0x2c0] sm:$0xff]
    %v849 = vld [vmem:[#allocation9 + $0x2c8] sm:$0xff]
    %v850 = vld [vmem:[#allocation9 + $0x2d0] sm:$0xff]
    %v851 = vld [vmem:[#allocation9 + $0x2d8] sm:$0xff]
    %v852 = vld [vmem:[#allocation9 + $0x2e0] sm:$0xff]
    %v853 = vld [vmem:[#allocation9 + $0x2e8] sm:$0xff]
    %v854 = vld [vmem:[#allocation9 + $0x2f0] sm:$0xff]
    %v855 = vld [vmem:[#allocation9 + $0x2f8] sm:$0xff]
    %v856 = vld [vmem:[#allocation9 + $0x300] sm:$0xff]
    %v857 = vld [vmem:[#allocation9 + $0x308] sm:$0xff]
    %v858 = vld [vmem:[#allocation9 + $0x310] sm:$0xff]
    %v859 = vld [vmem:[#allocation9 + $0x318] sm:$0xff]
    %v860 = vld [vmem:[#allocation9 + $0x320] sm:$0xff]
    %v861 = vld [vmem:[#allocation9 + $0x328] sm:$0xff]
    %v862 = vld [vmem:[#allocation9 + $0x330] sm:$0xff]
    %v863 = vld [vmem:[#allocation9 + $0x338] sm:$0xff]
    %v864 = vld [vmem:[#allocation9 + $0x340] sm:$0xff]
    %v865 = vld [vmem:[#allocation9 + $0x348] sm:$0xff]
    %v866 = vld [vmem:[#allocation9 + $0x350] sm:$0xff]
    %v867 = vld [vmem:[#allocation9 + $0x358] sm:$0xff]
    %v868 = vld [vmem:[#allocation9 + $0x360] sm:$0xff]
    %v869 = vld [vmem:[#allocation9 + $0x368] sm:$0xff]
    %v870 = vld [vmem:[#allocation9 + $0x370] sm:$0xff]
    %v871 = vld [vmem:[#allocation9 + $0x378] sm:$0xff]
    %v872 = vld [vmem:[#allocation9 + $0x380] sm:$0xff]
    %v873 = vld [vmem:[#allocation9 + $0x388] sm:$0xff]
    %v874 = vld [vmem:[#allocation9 + $0x390] sm:$0xff]
    %v875 = vld [vmem:[#allocation9 + $0x398] sm:$0xff]
    %v876 = vld [vmem:[#allocation9 + $0x3a0] sm:$0xff]
    %v877 = vld [vmem:[#allocation9 + $0x3a8] sm:$0xff]
    %v878 = vld [vmem:[#allocation9 + $0x3b0] sm:$0xff]
    %v879 = vld [vmem:[#allocation9 + $0x3b8] sm:$0xff]
    %v880 = vld [vmem:[#allocation9 + $0x3c0] sm:$0xff]
    %v881 = vld [vmem:[#allocation9 + $0x3c8] sm:$0xff]
    %v882 = vld [vmem:[#allocation9 + $0x3d0] sm:$0xff]
    %v883 = vld [vmem:[#allocation9 + $0x3d8] sm:$0xff]
    %v884 = vld [vmem:[#allocation9 + $0x3e0] sm:$0xff]
    %v885 = vld [vmem:[#allocation9 + $0x3e8] sm:$0xff]
    %v886 = vld [vmem:[#allocation9 + $0x3f0] sm:$0xff]
    %v887 = vld [vmem:[#allocation9 + $0x3f8] sm:$0xff]
    %v888 = vld [vmem:[#allocation9 + $0x400] sm:$0xff]
    %v889 = vld [vmem:[#allocation9 + $0x408] sm:$0xff]
    %v890 = vld [vmem:[#allocation9 + $0x410] sm:$0xff]
    %v891 = vld [vmem:[#allocation9 + $0x418] sm:$0xff]
    %v892 = vld [vmem:[#allocation9 + $0x420] sm:$0xff]
    %v893 = vld [vmem:[#allocation9 + $0x428] sm:$0xff]
    %v894 = vld [vmem:[#allocation9 + $0x430] sm:$0xff]
    %v895 = vld [vmem:[#allocation9 + $0x438] sm:$0xff]
    %v896 = vld [vmem:[#allocation9 + $0x440] sm:$0xff]
    %v897 = vld [vmem:[#allocation9 + $0x448] sm:$0xff]
    %v898 = vld [vmem:[#allocation9 + $0x450] sm:$0xff]
    %v899 = vld [vmem:[#allocation9 + $0x458] sm:$0xff]
    %v900 = vld [vmem:[#allocation9 + $0x460] sm:$0xff]
    %v901 = vld [vmem:[#allocation9 + $0x468] sm:$0xff]
    %v902 = vld [vmem:[#allocation9 + $0x470] sm:$0xff]
    %v903 = vld [vmem:[#allocation9 + $0x478] sm:$0xff]
    %v904 = vld [vmem:[#allocation9 + $0x480] sm:$0xff]
    %v905 = vld [vmem:[#allocation9 + $0x488] sm:$0xff]
    %v906 = vld [vmem:[#allocation9 + $0x490] sm:$0xff]
    %v907 = vld [vmem:[#allocation9 + $0x498] sm:$0xff]
    %v908 = vld [vmem:[#allocation9 + $0x4a0] sm:$0xff]
    %v909 = vld [vmem:[#allocation9 + $0x4a8] sm:$0xff]
    %v910 = vld [vmem:[#allocation9 + $0x4b0] sm:$0xff]
    %v911 = vld [vmem:[#allocation9 + $0x4b8] sm:$0xff]
    %v912 = vld [vmem:[#allocation9 + $0x4c0] sm:$0xff]
    %v913 = vld [vmem:[#allocation9 + $0x4c8] sm:$0xff]
    %v914 = vld [vmem:[#allocation9 + $0x4d0] sm:$0xff]
    %v915 = vld [vmem:[#allocation9 + $0x4d8] sm:$0xff]
    %v916 = vld [vmem:[#allocation9 + $0x4e0] sm:$0xff]
    %v917 = vld [vmem:[#allocation9 + $0x4e8] sm:$0xff]
    %v918 = vld [vmem:[#allocation9 + $0x4f0] sm:$0xff]
    %v919 = vld [vmem:[#allocation9 + $0x4f8] sm:$0xff]
    %v920 = vld [vmem:[#allocation9 + $0x500] sm:$0xff]
    %v921 = vld [vmem:[#allocation9 + $0x508] sm:$0xff]
    %v922 = vld [vmem:[#allocation9 + $0x510] sm:$0xff]
    %v923 = vld [vmem:[#allocation9 + $0x518] sm:$0xff]
    %v924 = vld [vmem:[#allocation9 + $0x520] sm:$0xff]
    %v925 = vld [vmem:[#allocation9 + $0x528] sm:$0xff]
    %v926 = vld [vmem:[#allocation9 + $0x530] sm:$0xff]
    %v927 = vld [vmem:[#allocation9 + $0x538] sm:$0xff]
    %v928 = vld [vmem:[#allocation9 + $0x540] sm:$0xff]
    %v929 = vld [vmem:[#allocation9 + $0x548] sm:$0xff]
    %v930 = vld [vmem:[#allocation9 + $0x550] sm:$0x77]
    %932 = vst [vmem:[#allocation1] ss:$9 sm:$0xff] %v758
    %v933 = vld [vmem:[#allocation1] sm:$0xff]
    %v934 = vld [vmem:[#allocation1 + $0x9] sm:$0xff]
    %v935 = vld [vmem:[#allocation1 + $0x12] sm:$0xff]
    %v936 = vld [vmem:[#allocation1 + $0x1b] sm:$0xff]
    %v937 = vld [vmem:[#allocation1 + $0x24] sm:$0xff]
    %v938 = vld [vmem:[#allocation1 + $0x2d] sm:$0xff]
    %v939 = vld [vmem:[#allocation1 + $0x36] sm:$0xff]
    %v940 = vld [vmem:[#allocation1 + $0x3f] sm:$0xff]
    %942 = vst [vmem:[#allocation1] ss:$9 sm:$0xff] %v759
    %v943 = vld [vmem:[#allocation1] sm:$0xff]
    %v944 = vld [vmem:[#allocation1 + $0x9] sm:$0xff]
    %v945 = vld [vmem:[#allocation1 + $0x12] sm:$0xff]
    %v1127 = vunpack.c.l.b16 %v760
    %v1128 = vunpack.c.h.b16 %v760
    %v1129 = vunpack.c.l.b16 %v761
    %v1130 = vunpack.c.h.b16 %v761
    %v1131 = vunpack.c.l.b16 %v762
    %v1132 = vunpack.c.h.b16 %v762
    %v1133 = vunpack.c.l.b16 %v763
    %v1134 = vunpack.c.h.b16 %v763
    %v1135 = vunpack.c.l.b16 %v764
    %v1136 = vunpack.c.h.b16 %v764
    %v1137 = vunpack.c.l.b16 %v765
    %v1138 = vunpack.c.h.b16 %v765
    %v1139 = vunpack.c.l.b16 %v766
    %v1140 = vunpack.c.h.b16 %v766
    %v1141 = vunpack.c.l.b16 %v767
    %v1142 = vunpack.c.h.b16 %v767
    %v1143 = vunpack.c.l.b16 %v768
    %v1144 = vunpack.c.h.b16 %v768
    %v1145 = vunpack.c.l.b16 %v769
    %v1146 = vunpack.c.h.b16 %v769
    %v1147 = vunpack.c.l.b16 %v770
    %v1148 = vunpack.c.h.b16 %v770
    %v1149 = vunpack.c.l.b16 %v771
    %v1150 = vunpack.c.h.b16 %v771
    %v1151 = vunpack.c.l.b16 %v772
    %v1152 = vunpack.c.h.b16 %v772
    %v1153 = vunpack.c.l.b16 %v773
    %v1154 = vunpack.c.h.b16 %v773
    %v1155 = vunpack.c.l.b16 %v774
    %v1156 = vunpack.c.h.b16 %v774
    %v1157 = vunpack.c.l.b16 %v775
    %v1158 = vunpack.c.h.b16 %v775
    %v1159 = vunpack.c.l.b16 %v776
    %v1160 = vunpack.c.h.b16 %v776
    %v1161 = vunpack.c.l.b16 %v777
    %v1162 = vunpack.c.h.b16 %v777
    %v1163 = vunpack.c.l.b16 %v778
    %v1164 = vunpack.c.h.b16 %v778
    %v1165 = vunpack.c.l.b16 %v779
    %v1166 = vunpack.c.h.b16 %v779
    %v1167 = vunpack.c.l.b16 %v780
    %v1168 = vunpack.c.h.b16 %v780
    %v1169 = vunpack.c.l.b16 %v781
    %v1170 = vunpack.c.h.b16 %v781
    %v1171 = vunpack.c.l.b16 %v782
    %v1172 = vunpack.c.h.b16 %v782
    %v1173 = vunpack.c.l.b16 %v783
    %v1174 = vunpack.c.h.b16 %v783
    %v1175 = vunpack.c.l.b16 %v784
    %v1176 = vunpack.c.h.b16 %v784
    %v1177 = vunpack.c.l.b16 %v785
    %v1178 = vunpack.c.h.b16 %v785
    %v1179 = vunpack.c.l.b16 %v786
    %v1180 = vunpack.c.h.b16 %v786
    %v1181 = vunpack.c.l.b16 %v787
    %v1182 = vunpack.c.h.b16 %v787
    %v1183 = vunpack.c.l.b16 %v788
    %v1184 = vunpack.c.h.b16 %v788
    %v1185 = vunpack.c.l.b16 %v789
    %v1186 = vunpack.c.h.b16 %v789
    %v1187 = vunpack.c.l.b16 %v790
    %v1188 = vunpack.c.h.b16 %v790
    %v1189 = vunpack.c.l.b16 %v791
    %v1190 = vunpack.c.h.b16 %v791
    %v1191 = vunpack.c.l.b16 %v792
    %v1192 = vunpack.c.h.b16 %v792
    %v1193 = vunpack.c.l.b16 %v793
    %v1194 = vunpack.c.h.b16 %v793
    %v1195 = vunpack.c.l.b16 %v794
    %v1196 = vunpack.c.h.b16 %v794
    %v1197 = vunpack.c.l.b16 %v795
    %v1198 = vunpack.c.h.b16 %v795
    %v1199 = vunpack.c.l.b16 %v796
    %v1200 = vunpack.c.h.b16 %v796
    %v1201 = vunpack.c.l.b16 %v797
    %v1202 = vunpack.c.h.b16 %v797
    %v1203 = vunpack.c.l.b16 %v798
    %v1204 = vunpack.c.h.b16 %v798
    %v1205 = vunpack.c.l.b16 %v799
    %v1206 = vunpack.c.h.b16 %v799
    %v1207 = vunpack.c.l.b16 %v800
    %v1208 = vunpack.c.h.b16 %v800
    %v1209 = vunpack.c.l.b16 %v801
    %v1210 = vunpack.c.h.b16 %v801
    %v1211 = vunpack.c.l.b16 %v802
    %v1212 = vunpack.c.h.b16 %v802
    %v1213 = vunpack.c.l.b16 %v803
    %v1214 = vunpack.c.h.b16 %v803
    %v1215 = vunpack.c.l.b16 %v804
    %v1216 = vunpack.c.h.b16 %v804
    %v1217 = vunpack.c.l.b16 %v805
    %v1218 = vunpack.c.h.b16 %v805
    %v1219 = vunpack.c.l.b16 %v806
    %v1220 = vunpack.c.h.b16 %v806
    %v1221 = vunpack.c.l.b16 %v807
    %v1222 = vunpack.c.h.b16 %v807
    %v1223 = vunpack.c.l.b16 %v808
    %v1224 = vunpack.c.h.b16 %v808
    %v1225 = vunpack.c.l.b16 %v809
    %v1226 = vunpack.c.h.b16 %v809
    %v1227 = vunpack.c.l.b16 %v810
    %v1228 = vunpack.c.h.b16 %v810
    %v1229 = vunpack.c.l.b16 %v811
    %v1230 = vunpack.c.h.b16 %v811
    %v1231 = vunpack.c.l.b16 %v812
    %v1232 = vunpack.c.h.b16 %v812
    %v1233 = vunpack.c.l.b16 %v813
    %v1234 = vunpack.c.h.b16 %v813
    %v1235 = vunpack.c.l.b16 %v814
    %v1236 = vunpack.c.h.b16 %v814
    %v1237 = vunpack.c.l.b16 %v815
    %v1238 = vunpack.c.h.b16 %v815
    %v1239 = vunpack.c.l.b16 %v816
    %v1240 = vunpack.c.h.b16 %v816
    %v1241 = vunpack.c.l.b16 %v817
    %v1242 = vunpack.c.h.b16 %v817
    %v1243 = vunpack.c.l.b16 %v818
    %v1244 = vunpack.c.h.b16 %v818
    %v1245 = vunpack.c.l.b16 %v819
    %v1246 = vunpack.c.h.b16 %v819
    %v1247 = vunpack.c.l.b16 %v820
    %v1248 = vunpack.c.h.b16 %v820
    %v1249 = vunpack.c.l.b16 %v821
    %v1250 = vunpack.c.h.b16 %v821
    %v1251 = vunpack.c.l.b16 %v822
    %v1252 = vunpack.c.h.b16 %v822
    %v1253 = vunpack.c.l.b16 %v823
    %v1254 = vunpack.c.h.b16 %v823
    %v1255 = vunpack.c.l.b16 %v824
    %v1256 = vunpack.c.h.b16 %v824
    %v1257 = vunpack.c.l.b16 %v825
    %v1258 = vunpack.c.h.b16 %v825
    %v1259 = vunpack.c.l.b16 %v826
    %v1260 = vunpack.c.h.b16 %v826
    %v1261 = vunpack.c.l.b16 %v827
    %v1262 = vunpack.c.h.b16 %v827
    %v1263 = vunpack.c.l.b16 %v828
    %v1264 = vunpack.c.h.b16 %v828
    %v1265 = vunpack.c.l.b16 %v829
    %v1266 = vunpack.c.h.b16 %v829
    %v1267 = vunpack.c.l.b16 %v830
    %v1268 = vunpack.c.h.b16 %v830
    %v1269 = vunpack.c.l.b16 %v831
    %v1270 = vunpack.c.h.b16 %v831
    %v1271 = vunpack.c.l.b16 %v832
    %v1272 = vunpack.c.h.b16 %v832
    %v1273 = vunpack.c.l.b16 %v833
    %v1274 = vunpack.c.h.b16 %v833
    %v1275 = vunpack.c.l.b16 %v834
    %v1276 = vunpack.c.h.b16 %v834
    %v1277 = vunpack.c.l.b16 %v835
    %v1278 = vunpack.c.h.b16 %v835
    %v1279 = vunpack.c.l.b16 %v836
    %v1280 = vunpack.c.h.b16 %v836
    %v1281 = vunpack.c.l.b16 %v837
    %v1282 = vunpack.c.h.b16 %v837
    %v1283 = vunpack.c.l.b16 %v838
    %v1284 = vunpack.c.h.b16 %v838
    %v1285 = vunpack.c.l.b16 %v839
    %v1286 = vunpack.c.h.b16 %v839
    %v1287 = vunpack.c.l.b16 %v840
    %v1288 = vunpack.c.h.b16 %v840
    %v1289 = vunpack.c.l.b16 %v841
    %v1290 = vunpack.c.h.b16 %v841
    %v1291 = vunpack.c.l.b16 %v842
    %v1292 = vunpack.c.h.b16 %v842
    %v1293 = vunpack.c.l.b16 %v843
    %v1294 = vunpack.c.h.b16 %v843
    %v1295 = vunpack.c.l.b16 %v844
    %v1296 = vunpack.c.h.b16 %v844
    %v1297 = vunpack.c.l.b16 %v845
    %v1298 = vunpack.c.h.b16 %v845
    %v1299 = vunpack.c.l.b16 %v846
    %v1300 = vunpack.c.h.b16 %v846
    %v1301 = vunpack.c.l.b16 %v847
    %v1302 = vunpack.c.h.b16 %v847
    %v1303 = vunpack.c.l.b16 %v848
    %v1304 = vunpack.c.h.b16 %v848
    %v1305 = vunpack.c.l.b16 %v849
    %v1306 = vunpack.c.h.b16 %v849
    %v1307 = vunpack.c.l.b16 %v850
    %v1308 = vunpack.c.h.b16 %v850
    %v1309 = vunpack.c.l.b16 %v851
    %v1310 = vunpack.c.h.b16 %v851
    %v1311 = vunpack.c.l.b16 %v852
    %v1312 = vunpack.c.h.b16 %v852
    %v1313 = vunpack.c.l.b16 %v853
    %v1314 = vunpack.c.h.b16 %v853
    %v1315 = vunpack.c.l.b16 %v854
    %v1316 = vunpack.c.h.b16 %v854
    %v1317 = vunpack.c.l.b16 %v855
    %v1318 = vunpack.c.h.b16 %v855
    %v1319 = vunpack.c.l.b16 %v856
    %v1320 = vunpack.c.h.b16 %v856
    %v1321 = vunpack.c.l.b16 %v857
    %v1322 = vunpack.c.h.b16 %v857
    %v1323 = vunpack.c.l.b16 %v858
    %v1324 = vunpack.c.h.b16 %v858
    %v1325 = vunpack.c.l.b16 %v859
    %v1326 = vunpack.c.h.b16 %v859
    %v1327 = vunpack.c.l.b16 %v860
    %v1328 = vunpack.c.h.b16 %v860
    %v1329 = vunpack.c.l.b16 %v861
    %v1330 = vunpack.c.h.b16 %v861
    %v1331 = vunpack.c.l.b16 %v862
    %v1332 = vunpack.c.h.b16 %v862
    %v1333 = vunpack.c.l.b16 %v863
    %v1334 = vunpack.c.h.b16 %v863
    %v1335 = vunpack.c.l.b16 %v864
    %v1336 = vunpack.c.h.b16 %v864
    %v1337 = vunpack.c.l.b16 %v865
    %v1338 = vunpack.c.h.b16 %v865
    %v1339 = vunpack.c.l.b16 %v866
    %v1340 = vunpack.c.h.b16 %v866
    %v1341 = vunpack.c.l.b16 %v867
    %v1342 = vunpack.c.h.b16 %v867
    %v1343 = vunpack.c.l.b16 %v868
    %v1344 = vunpack.c.h.b16 %v868
    %v1345 = vunpack.c.l.b16 %v869
    %v1346 = vunpack.c.h.b16 %v869
    %v1347 = vunpack.c.l.b16 %v870
    %v1348 = vunpack.c.h.b16 %v870
    %v1349 = vunpack.c.l.b16 %v871
    %v1350 = vunpack.c.h.b16 %v871
    %v1351 = vunpack.c.l.b16 %v872
    %v1352 = vunpack.c.h.b16 %v872
    %v1353 = vunpack.c.l.b16 %v873
    %v1354 = vunpack.c.h.b16 %v873
    %v1355 = vunpack.c.l.b16 %v874
    %v1356 = vunpack.c.h.b16 %v874
    %v1357 = vunpack.c.l.b16 %v875
    %v1358 = vunpack.c.h.b16 %v875
    %v1359 = vunpack.c.l.b16 %v876
    %v1360 = vunpack.c.h.b16 %v876
    %v1361 = vunpack.c.l.b16 %v877
    %v1362 = vunpack.c.h.b16 %v877
    %v1363 = vunpack.c.l.b16 %v878
    %v1364 = vunpack.c.h.b16 %v878
    %v1365 = vunpack.c.l.b16 %v879
    %v1366 = vunpack.c.h.b16 %v879
    %v1367 = vunpack.c.l.b16 %v880
    %v1368 = vunpack.c.h.b16 %v880
    %v1369 = vunpack.c.l.b16 %v881
    %v1370 = vunpack.c.h.b16 %v881
    %v1371 = vunpack.c.l.b16 %v882
    %v1372 = vunpack.c.h.b16 %v882
    %v1373 = vunpack.c.l.b16 %v883
    %v1374 = vunpack.c.h.b16 %v883
    %v1375 = vunpack.c.l.b16 %v884
    %v1376 = vunpack.c.h.b16 %v884
    %v1377 = vunpack.c.l.b16 %v885
    %v1378 = vunpack.c.h.b16 %v885
    %v1379 = vunpack.c.l.b16 %v886
    %v1380 = vunpack.c.h.b16 %v886
    %v1381 = vunpack.c.l.b16 %v887
    %v1382 = vunpack.c.h.b16 %v887
    %v1383 = vunpack.c.l.b16 %v888
    %v1384 = vunpack.c.h.b16 %v888
    %v1385 = vunpack.c.l.b16 %v889
    %v1386 = vunpack.c.h.b16 %v889
    %v1387 = vunpack.c.l.b16 %v890
    %v1388 = vunpack.c.h.b16 %v890
    %v1389 = vunpack.c.l.b16 %v891
    %v1390 = vunpack.c.h.b16 %v891
    %v1391 = vunpack.c.l.b16 %v892
    %v1392 = vunpack.c.h.b16 %v892
    %v1393 = vunpack.c.l.b16 %v893
    %v1394 = vunpack.c.h.b16 %v893
    %v1395 = vunpack.c.l.b16 %v894
    %v1396 = vunpack.c.h.b16 %v894
    %v1397 = vunpack.c.l.b16 %v895
    %v1398 = vunpack.c.h.b16 %v895
    %v1399 = vunpack.c.l.b16 %v896
    %v1400 = vunpack.c.h.b16 %v896
    %v1401 = vunpack.c.l.b16 %v897
    %v1402 = vunpack.c.h.b16 %v897
    %v1403 = vunpack.c.l.b16 %v898
    %v1404 = vunpack.c.h.b16 %v898
    %v1405 = vunpack.c.l.b16 %v899
    %v1406 = vunpack.c.h.b16 %v899
    %v1407 = vunpack.c.l.b16 %v900
    %v1408 = vunpack.c.h.b16 %v900
    %v1409 = vunpack.c.l.b16 %v901
    %v1410 = vunpack.c.h.b16 %v901
    %v1411 = vunpack.c.l.b16 %v902
    %v1412 = vunpack.c.h.b16 %v902
    %v1413 = vunpack.c.l.b16 %v903
    %v1414 = vunpack.c.h.b16 %v903
    %v1415 = vunpack.c.l.b16 %v904
    %v1416 = vunpack.c.h.b16 %v904
    %v1417 = vunpack.c.l.b16 %v905
    %v1418 = vunpack.c.h.b16 %v905
    %v1419 = vunpack.c.l.b16 %v906
    %v1420 = vunpack.c.h.b16 %v906
    %v1421 = vunpack.c.l.b16 %v907
    %v1422 = vunpack.c.h.b16 %v907
    %v1423 = vunpack.c.l.b16 %v908
    %v1424 = vunpack.c.h.b16 %v908
    %v1425 = vunpack.c.l.b16 %v909
    %v1426 = vunpack.c.h.b16 %v909
    %v1427 = vunpack.c.l.b16 %v910
    %v1428 = vunpack.c.h.b16 %v910
    %v1429 = vunpack.c.l.b16 %v911
    %v1430 = vunpack.c.h.b16 %v911
    %v1431 = vunpack.c.l.b16 %v912
    %v1432 = vunpack.c.h.b16 %v912
    %v1433 = vunpack.c.l.b16 %v913
    %v1434 = vunpack.c.h.b16 %v913
    %v1435 = vunpack.c.l.b16 %v914
    %v1436 = vunpack.c.h.b16 %v914
    %v1437 = vunpack.c.l.b16 %v915
    %v1438 = vunpack.c.h.b16 %v915
    %v1439 = vunpack.c.l.b16 %v916
    %v1440 = vunpack.c.h.b16 %v916
    %v1441 = vunpack.c.l.b16 %v917
    %v1442 = vunpack.c.h.b16 %v917
    %v1443 = vunpack.c.l.b16 %v918
    %v1444 = vunpack.c.h.b16 %v918
    %v1445 = vunpack.c.l.b16 %v919
    %v1446 = vunpack.c.h.b16 %v919
    %v1447 = vunpack.c.l.b16 %v920
    %v1448 = vunpack.c.h.b16 %v920
    %v1449 = vunpack.c.l.b16 %v921
    %v1450 = vunpack.c.h.b16 %v921
    %v1451 = vunpack.c.l.b16 %v922
    %v1452 = vunpack.c.h.b16 %v922
    %v1453 = vunpack.c.l.b16 %v923
    %v1454 = vunpack.c.h.b16 %v923
    %v1455 = vunpack.c.l.b16 %v924
    %v1456 = vunpack.c.h.b16 %v924
    %v1457 = vunpack.c.l.b16 %v925
    %v1458 = vunpack.c.h.b16 %v925
    %v1459 = vunpack.c.l.b16 %v926
    %v1460 = vunpack.c.h.b16 %v926
    %v1461 = vunpack.c.l.b16 %v927
    %v1462 = vunpack.c.h.b16 %v927
    %v1463 = vunpack.c.l.b16 %v928
    %v1464 = vunpack.c.h.b16 %v928
    %v1465 = vunpack.c.l.b16 %v929
    %v1466 = vunpack.c.h.b16 %v929
    %v1467 = vunpack.c.l.b16 %v930
    %v1468 = vunpack.c.h.b16 %v930
    %v1469 = vpack.c.b16 %v1129, %v1127
    %v1470 = vpack.c.b16 %v1130, %v1128
    %v1471 = vpack.c.b16 %v1133, %v1131
    %v1472 = vpack.c.b16 %v1134, %v1132
    %v1473 = vpack.c.b16 %v1137, %v1135
    %v1474 = vpack.c.b16 %v1138, %v1136
    %v1475 = vpack.c.b16 %v1141, %v1139
    %v1476 = vpack.c.b16 %v1142, %v1140
    %v1477 = vpack.c.b16 %v1145, %v1143
    %v1478 = vpack.c.b16 %v1146, %v1144
    %v1479 = vpack.c.b16 %v1149, %v1147
    %v1480 = vpack.c.b16 %v1150, %v1148
    %v1481 = vpack.c.b16 %v1153, %v1151
    %v1482 = vpack.c.b16 %v1154, %v1152
    %v1483 = vpack.c.b16 %v1157, %v1155
    %v1484 = vpack.c.b16 %v1158, %v1156
    %v1485 = vpack.c.b16 %v1161, %v1159
    %v1486 = vpack.c.b16 %v1162, %v1160
    %v1487 = vpack.c.b16 %v1165, %v1163
    %v1488 = vpack.c.b16 %v1166, %v1164
    %v1489 = vpack.c.b16 %v1169, %v1167
    %v1490 = vpack.c.b16 %v1170, %v1168
    %v1491 = vpack.c.b16 %v1173, %v1171
    %v1492 = vpack.c.b16 %v1174, %v1172
    %v1493 = vpack.c.b16 %v1177, %v1175
    %v1494 = vpack.c.b16 %v1178, %v1176
    %v1495 = vpack.c.b16 %v1181, %v1179
    %v1496 = vpack.c.b16 %v1182, %v1180
    %v1497 = vpack.c.b16 %v1185, %v1183
    %v1498 = vpack.c.b16 %v1186, %v1184
    %v1499 = vpack.c.b16 %v1189, %v1187
    %v1500 = vpack.c.b16 %v1190, %v1188
    %v1501 = vpack.c.b16 %v1193, %v1191
    %v1502 = vpack.c.b16 %v1194, %v1192
    %v1503 = vpack.c.b16 %v1197, %v1195
    %v1504 = vpack.c.b16 %v1198, %v1196
    %v1505 = vpack.c.b16 %v1201, %v1199
    %v1506 = vpack.c.b16 %v1202, %v1200
    %v1507 = vpack.c.b16 %v1205, %v1203
    %v1508 = vpack.c.b16 %v1206, %v1204
    %v1509 = vpack.c.b16 %v1209, %v1207
    %v1510 = vpack.c.b16 %v1210, %v1208
    %v1511 = vpack.c.b16 %v1213, %v1211
    %v1512 = vpack.c.b16 %v1214, %v1212
    %v1513 = vpack.c.b16 %v1217, %v1215
    %v1514 = vpack.c.b16 %v1218, %v1216
    %v1515 = vpack.c.b16 %v1221, %v1219
    %v1516 = vpack.c.b16 %v1222, %v1220
    %v1517 = vpack.c.b16 %v1225, %v1223
    %v1518 = vpack.c.b16 %v1226, %v1224
    %v1519 = vpack.c.b16 %v1229, %v1227
    %v1520 = vpack.c.b16 %v1230, %v1228
    %v1521 = vpack.c.b16 %v1233, %v1231
    %v1522 = vpack.c.b16 %v1234, %v1232
    %v1523 = vpack.c.b16 %v1237, %v1235
    %v1524 = vpack.c.b16 %v1238, %v1236
    %v1525 = vpack.c.b16 %v1241, %v1239
    %v1526 = vpack.c.b16 %v1242, %v1240
    %v1527 = vpack.c.b16 %v1245, %v1243
    %v1528 = vpack.c.b16 %v1246, %v1244
    %v1529 = vpack.c.b16 %v1249, %v1247
    %v1530 = vpack.c.b16 %v1250, %v1248
    %v1531 = vpack.c.b16 %v1253, %v1251
    %v1532 = vpack.c.b16 %v1254, %v1252
    %v1533 = vpack.c.b16 %v1257, %v1255
    %v1534 = vpack.c.b16 %v1258, %v1256
    %v1535 = vpack.c.b16 %v1261, %v1259
    %v1536 = vpack.c.b16 %v1262, %v1260
    %v1537 = vpack.c.b16 %v1265, %v1263
    %v1538 = vpack.c.b16 %v1266, %v1264
    %v1539 = vpack.c.b16 %v1269, %v1267
    %v1540 = vpack.c.b16 %v1270, %v1268
    %v1541 = vpack.c.b16 %v1273, %v1271
    %v1542 = vpack.c.b16 %v1274, %v1272
    %v1543 = vpack.c.b16 %v1277, %v1275
    %v1544 = vpack.c.b16 %v1278, %v1276
    %v1545 = vpack.c.b16 %v1281, %v1279
    %v1546 = vpack.c.b16 %v1282, %v1280
    %v1547 = vpack.c.b16 %v1285, %v1283
    %v1548 = vpack.c.b16 %v1286, %v1284
    %v1549 = vpack.c.b16 %v1289, %v1287
    %v1550 = vpack.c.b16 %v1290, %v1288
    %v1551 = vpack.c.b16 %v1293, %v1291
    %v1552 = vpack.c.b16 %v1294, %v1292
    %v1553 = vpack.c.b16 %v1297, %v1295
    %v1554 = vpack.c.b16 %v1298, %v1296
    %v1555 = vpack.c.b16 %v1301, %v1299
    %v1556 = vpack.c.b16 %v1302, %v1300
    %v1557 = vpack.c.b16 %v1305, %v1303
    %v1558 = vpack.c.b16 %v1306, %v1304
    %v1559 = vpack.c.b16 %v1309, %v1307
    %v1560 = vpack.c.b16 %v1310, %v1308
    %v1561 = vpack.c.b16 %v1313, %v1311
    %v1562 = vpack.c.b16 %v1314, %v1312
    %v1563 = vpack.c.b16 %v1317, %v1315
    %v1564 = vpack.c.b16 %v1318, %v1316
    %v1565 = vpack.c.b16 %v1321, %v1319
    %v1566 = vpack.c.b16 %v1322, %v1320
    %v1567 = vpack.c.b16 %v1325, %v1323
    %v1568 = vpack.c.b16 %v1326, %v1324
    %v1569 = vpack.c.b16 %v1329, %v1327
    %v1570 = vpack.c.b16 %v1330, %v1328
    %v1571 = vpack.c.b16 %v1333, %v1331
    %v1572 = vpack.c.b16 %v1334, %v1332
    %v1573 = vpack.c.b16 %v1337, %v1335
    %v1574 = vpack.c.b16 %v1338, %v1336
    %v1575 = vpack.c.b16 %v1341, %v1339
    %v1576 = vpack.c.b16 %v1342, %v1340
    %v1577 = vpack.c.b16 %v1345, %v1343
    %v1578 = vpack.c.b16 %v1346, %v1344
    %v1579 = vpack.c.b16 %v1349, %v1347
    %v1580 = vpack.c.b16 %v1350, %v1348
    %v1581 = vpack.c.b16 %v1353, %v1351
    %v1582 = vpack.c.b16 %v1354, %v1352
    %v1583 = vpack.c.b16 %v1357, %v1355
    %v1584 = vpack.c.b16 %v1358, %v1356
    %v1585 = vpack.c.b16 %v1361, %v1359
    %v1586 = vpack.c.b16 %v1362, %v1360
    %v1587 = vpack.c.b16 %v1365, %v1363
    %v1588 = vpack.c.b16 %v1366, %v1364
    %v1589 = vpack.c.b16 %v1369, %v1367
    %v1590 = vpack.c.b16 %v1370, %v1368
    %v1591 = vpack.c.b16 %v1373, %v1371
    %v1592 = vpack.c.b16 %v1374, %v1372
    %v1593 = vpack.c.b16 %v1377, %v1375
    %v1594 = vpack.c.b16 %v1378, %v1376
    %v1595 = vpack.c.b16 %v1381, %v1379
    %v1596 = vpack.c.b16 %v1382, %v1380
    %v1597 = vpack.c.b16 %v1385, %v1383
    %v1598 = vpack.c.b16 %v1386, %v1384
    %v1599 = vpack.c.b16 %v1389, %v1387
    %v1600 = vpack.c.b16 %v1390, %v1388
    %v1601 = vpack.c.b16 %v1393, %v1391
    %v1602 = vpack.c.b16 %v1394, %v1392
    %v1603 = vpack.c.b16 %v1397, %v1395
    %v1604 = vpack.c.b16 %v1398, %v1396
    %v1605 = vpack.c.b16 %v1401, %v1399
    %v1606 = vpack.c.b16 %v1402, %v1400
    %v1607 = vpack.c.b16 %v1405, %v1403
    %v1608 = vpack.c.b16 %v1406, %v1404
    %v1609 = vpack.c.b16 %v1409, %v1407
    %v1610 = vpack.c.b16 %v1410, %v1408
    %v1611 = vpack.c.b16 %v1413, %v1411
    %v1612 = vpack.c.b16 %v1414, %v1412
    %v1613 = vpack.c.b16 %v1417, %v1415
    %v1614 = vpack.c.b16 %v1418, %v1416
    %v1615 = vpack.c.b16 %v1421, %v1419
    %v1616 = vpack.c.b16 %v1422, %v1420
    %v1617 = vpack.c.b16 %v1425, %v1423
    %v1618 = vpack.c.b16 %v1426, %v1424
    %v1619 = vpack.c.b16 %v1429, %v1427
    %v1620 = vpack.c.b16 %v1430, %v1428
    %v1621 = vpack.c.b16 %v1433, %v1431
    %v1622 = vpack.c.b16 %v1434, %v1432
    %v1623 = vpack.c.b16 %v1437, %v1435
    %v1624 = vpack.c.b16 %v1438, %v1436
    %v1625 = vpack.c.b16 %v1441, %v1439
    %v1626 = vpack.c.b16 %v1442, %v1440
    %v1627 = vpack.c.b16 %v1445, %v1443
    %v1628 = vpack.c.b16 %v1446, %v1444
    %v1629 = vpack.c.b16 %v1449, %v1447
    %v1630 = vpack.c.b16 %v1450, %v1448
    %v1631 = vpack.c.b16 %v1453, %v1451
    %v1632 = vpack.c.b16 %v1454, %v1452
    %v1633 = vpack.c.b16 %v1457, %v1455
    %v1634 = vpack.c.b16 %v1458, %v1456
    %v1635 = vpack.c.b16 %v1461, %v1459
    %v1636 = vpack.c.b16 %v1462, %v1460
    %v1637 = vpack.c.b16 %v1465, %v1463
    %v1638 = vpack.c.b16 %v1466, %v1464
    %v1639 = vpack.c.b16 %v1467, %v1467
    %v1640 = vpack.c.b16 %v1468, %v1468
    %vm1811 = vcmask 703488
    %v1812 = vsel %vm1811, %v945, 0
    %vm1814 = vcmask 1042432
    %v1816 = vsel %vm1814, %v1639, 0
    %v1819 = vsel %vm1814, %v1640, 0
    %1821 = vmatpush.bf16.msra.mxu0 %v1483
    %1822 = vmatpush.bf16.msra.mxu0 %v1481
    %1823 = vmatpush.bf16.msra.mxu0 %v1479
    %1824 = vmatpush.bf16.msra.mxu0 %v1477
    %1825 = vmatpush.bf16.msra.mxu0 %v1475
    %1826 = vmatpush.bf16.msra.mxu0 %v1473
    %1827 = vmatpush.bf16.msra.mxu0 %v1471
    %1828 = vmatpush.bf16.msra.mxu0 %v1469
    %1829 = vmatmul.bf16.gmra.mxu0 %v933
    %v1830 = vpop.f32.mrf.mxu0
    %v1831 = vadd.f32 0.0, %v1830
    %v1832 = vpop.f32.mrf.mxu0
    %1833 = vdwg.mxu0
    %1834 = vmatpush.bf16.msra.mxu0 %v1499
    %1835 = vmatpush.bf16.msra.mxu0 %v1497
    %1836 = vmatpush.bf16.msra.mxu0 %v1495
    %1837 = vmatpush.bf16.msra.mxu0 %v1493
    %1838 = vmatpush.bf16.msra.mxu0 %v1491
    %1839 = vmatpush.bf16.msra.mxu0 %v1489
    %1840 = vmatpush.bf16.msra.mxu0 %v1487
    %1841 = vmatpush.bf16.msra.mxu0 %v1485
    %1842 = vmatmul.bf16.gmra.mxu0 %v934
    %v1843 = vpop.f32.mrf.mxu0
    %v1844 = vadd.f32 %v1831, %v1843
    %v1845 = vpop.f32.mrf.mxu0
    %1846 = vdwg.mxu0
    %1847 = vmatpush.bf16.msra.mxu0 %v1515
    %1848 = vmatpush.bf16.msra.mxu0 %v1513
    %1849 = vmatpush.bf16.msra.mxu0 %v1511
    %1850 = vmatpush.bf16.msra.mxu0 %v1509
    %1851 = vmatpush.bf16.msra.mxu0 %v1507
    %1852 = vmatpush.bf16.msra.mxu0 %v1505
    %1853 = vmatpush.bf16.msra.mxu0 %v1503
    %1854 = vmatpush.bf16.msra.mxu0 %v1501
    %1855 = vmatmul.bf16.gmra.mxu0 %v935
    %v1856 = vpop.f32.mrf.mxu0
    %v1857 = vadd.f32 %v1844, %v1856
    %v1858 = vpop.f32.mrf.mxu0
    %1859 = vdwg.mxu0
    %1860 = vmatpush.bf16.msra.mxu0 %v1531
    %1861 = vmatpush.bf16.msra.mxu0 %v1529
    %1862 = vmatpush.bf16.msra.mxu0 %v1527
    %1863 = vmatpush.bf16.msra.mxu0 %v1525
    %1864 = vmatpush.bf16.msra.mxu0 %v1523
    %1865 = vmatpush.bf16.msra.mxu0 %v1521
    %1866 = vmatpush.bf16.msra.mxu0 %v1519
    %1867 = vmatpush.bf16.msra.mxu0 %v1517
    %1868 = vmatmul.bf16.gmra.mxu0 %v936
    %v1869 = vpop.f32.mrf.mxu0
    %v1870 = vadd.f32 %v1857, %v1869
    %v1871 = vpop.f32.mrf.mxu0
    %1872 = vdwg.mxu0
    %1873 = vmatpush.bf16.msra.mxu0 %v1547
    %1874 = vmatpush.bf16.msra.mxu0 %v1545
    %1875 = vmatpush.bf16.msra.mxu0 %v1543
    %1876 = vmatpush.bf16.msra.mxu0 %v1541
    %1877 = vmatpush.bf16.msra.mxu0 %v1539
    %1878 = vmatpush.bf16.msra.mxu0 %v1537
    %1879 = vmatpush.bf16.msra.mxu0 %v1535
    %1880 = vmatpush.bf16.msra.mxu0 %v1533
    %1881 = vmatmul.bf16.gmra.mxu0 %v937
    %v1882 = vpop.f32.mrf.mxu0
    %v1883 = vadd.f32 %v1870, %v1882
    %v1884 = vpop.f32.mrf.mxu0
    %1885 = vdwg.mxu0
    %1886 = vmatpush.bf16.msra.mxu0 %v1563
    %1887 = vmatpush.bf16.msra.mxu0 %v1561
    %1888 = vmatpush.bf16.msra.mxu0 %v1559
    %1889 = vmatpush.bf16.msra.mxu0 %v1557
    %1890 = vmatpush.bf16.msra.mxu0 %v1555
    %1891 = vmatpush.bf16.msra.mxu0 %v1553
    %1892 = vmatpush.bf16.msra.mxu0 %v1551
    %1893 = vmatpush.bf16.msra.mxu0 %v1549
    %1894 = vmatmul.bf16.gmra.mxu0 %v938
    %v1895 = vpop.f32.mrf.mxu0
    %v1896 = vadd.f32 %v1883, %v1895
    %v1897 = vpop.f32.mrf.mxu0
    %1898 = vdwg.mxu0
    %1899 = vmatpush.bf16.msra.mxu0 %v1579
    %1900 = vmatpush.bf16.msra.mxu0 %v1577
    %1901 = vmatpush.bf16.msra.mxu0 %v1575
    %1902 = vmatpush.bf16.msra.mxu0 %v1573
    %1903 = vmatpush.bf16.msra.mxu0 %v1571
    %1904 = vmatpush.bf16.msra.mxu0 %v1569
    %1905 = vmatpush.bf16.msra.mxu0 %v1567
    %1906 = vmatpush.bf16.msra.mxu0 %v1565
    %1907 = vmatmul.bf16.gmra.mxu0 %v939
    %v1908 = vpop.f32.mrf.mxu0
    %v1909 = vadd.f32 %v1896, %v1908
    %v1910 = vpop.f32.mrf.mxu0
    %1911 = vdwg.mxu0
    %1912 = vmatpush.bf16.msra.mxu0 %v1595
    %1913 = vmatpush.bf16.msra.mxu0 %v1593
    %1914 = vmatpush.bf16.msra.mxu0 %v1591
    %1915 = vmatpush.bf16.msra.mxu0 %v1589
    %1916 = vmatpush.bf16.msra.mxu0 %v1587
    %1917 = vmatpush.bf16.msra.mxu0 %v1585
    %1918 = vmatpush.bf16.msra.mxu0 %v1583
    %1919 = vmatpush.bf16.msra.mxu0 %v1581
    %1920 = vmatmul.bf16.gmra.mxu0 %v940
    %v1921 = vpop.f32.mrf.mxu0
    %v1922 = vadd.f32 %v1909, %v1921
    %v1923 = vpop.f32.mrf.mxu0
    %1924 = vdwg.mxu0
    %1925 = vmatpush.bf16.msra.mxu0 %v1611
    %1926 = vmatpush.bf16.msra.mxu0 %v1609
    %1927 = vmatpush.bf16.msra.mxu0 %v1607
    %1928 = vmatpush.bf16.msra.mxu0 %v1605
    %1929 = vmatpush.bf16.msra.mxu0 %v1603
    %1930 = vmatpush.bf16.msra.mxu0 %v1601
    %1931 = vmatpush.bf16.msra.mxu0 %v1599
    %1932 = vmatpush.bf16.msra.mxu0 %v1597
    %1933 = vmatmul.bf16.gmra.mxu0 %v943
    %v1934 = vpop.f32.mrf.mxu0
    %v1935 = vadd.f32 %v1922, %v1934
    %v1936 = vpop.f32.mrf.mxu0
    %1937 = vdwg.mxu0
    %1938 = vmatpush.bf16.msra.mxu0 %v1627
    %1939 = vmatpush.bf16.msra.mxu0 %v1625
    %1940 = vmatpush.bf16.msra.mxu0 %v1623
    %1941 = vmatpush.bf16.msra.mxu0 %v1621
    %1942 = vmatpush.bf16.msra.mxu0 %v1619
    %1943 = vmatpush.bf16.msra.mxu0 %v1617
    %1944 = vmatpush.bf16.msra.mxu0 %v1615
    %1945 = vmatpush.bf16.msra.mxu0 %v1613
    %1946 = vmatmul.bf16.gmra.mxu0 %v944
    %v1947 = vpop.f32.mrf.mxu0
    %v1948 = vadd.f32 %v1935, %v1947
    %v1949 = vpop.f32.mrf.mxu0
    %1950 = vdwg.mxu0
    %1951 = vmatpush.bf16.msra.mxu0 0
    %1952 = vmatpush.bf16.msra.mxu0 0
    %1953 = vmatpush.bf16.msra.mxu0 %v1816
    %1954 = vmatpush.bf16.msra.mxu0 %v1637
    %1955 = vmatpush.bf16.msra.mxu0 %v1635
    %1956 = vmatpush.bf16.msra.mxu0 %v1633
    %1957 = vmatpush.bf16.msra.mxu0 %v1631
    %1958 = vmatpush.bf16.msra.mxu0 %v1629
    %1959 = vmatmul.bf16.gmra.mxu0 %v1812
    %v1960 = vpop.f32.mrf.mxu0
    %v1961 = vadd.f32 %v1948, %v1960
    %v1962 = vpop.f32.mrf.mxu0
    %1963 = vdwg.mxu0
    %1964 = vmatpush.bf16.msra.mxu0 %v1484
    %1965 = vmatpush.bf16.msra.mxu0 %v1482
    %1966 = vmatpush.bf16.msra.mxu0 %v1480
    %1967 = vmatpush.bf16.msra.mxu0 %v1478
    %1968 = vmatpush.bf16.msra.mxu0 %v1476
    %1969 = vmatpush.bf16.msra.mxu0 %v1474
    %1970 = vmatpush.bf16.msra.mxu0 %v1472
    %1971 = vmatpush.bf16.msra.mxu0 %v1470
    %1972 = vmatmul.bf16.gmra.mxu0 %v933
    %v1973 = vpop.f32.mrf.mxu0
    %v1974 = vadd.f32 0.0, %v1973
    %v1975 = vpop.f32.mrf.mxu0
    %1976 = vdwg.mxu0
    %1977 = vmatpush.bf16.msra.mxu0 %v1500
    %1978 = vmatpush.bf16.msra.mxu0 %v1498
    %1979 = vmatpush.bf16.msra.mxu0 %v1496
    %1980 = vmatpush.bf16.msra.mxu0 %v1494
    %1981 = vmatpush.bf16.msra.mxu0 %v1492
    %1982 = vmatpush.bf16.msra.mxu0 %v1490
    %1983 = vmatpush.bf16.msra.mxu0 %v1488
    %1984 = vmatpush.bf16.msra.mxu0 %v1486
    %1985 = vmatmul.bf16.gmra.mxu0 %v934
    %v1986 = vpop.f32.mrf.mxu0
    %v1987 = vadd.f32 %v1974, %v1986
    %v1988 = vpop.f32.mrf.mxu0
    %1989 = vdwg.mxu0
    %1990 = vmatpush.bf16.msra.mxu0 %v1516
    %1991 = vmatpush.bf16.msra.mxu0 %v1514
    %1992 = vmatpush.bf16.msra.mxu0 %v1512
    %1993 = vmatpush.bf16.msra.mxu0 %v1510
    %1994 = vmatpush.bf16.msra.mxu0 %v1508
    %1995 = vmatpush.bf16.msra.mxu0 %v1506
    %1996 = vmatpush.bf16.msra.mxu0 %v1504
    %1997 = vmatpush.bf16.msra.mxu0 %v1502
    %1998 = vmatmul.bf16.gmra.mxu0 %v935
    %v1999 = vpop.f32.mrf.mxu0
    %v2000 = vadd.f32 %v1987, %v1999
    %v2001 = vpop.f32.mrf.mxu0
    %2002 = vdwg.mxu0
    %2003 = vmatpush.bf16.msra.mxu0 %v1532
    %2004 = vmatpush.bf16.msra.mxu0 %v1530
    %2005 = vmatpush.bf16.msra.mxu0 %v1528
    %2006 = vmatpush.bf16.msra.mxu0 %v1526
    %2007 = vmatpush.bf16.msra.mxu0 %v1524
    %2008 = vmatpush.bf16.msra.mxu0 %v1522
    %2009 = vmatpush.bf16.msra.mxu0 %v1520
    %2010 = vmatpush.bf16.msra.mxu0 %v1518
    %2011 = vmatmul.bf16.gmra.mxu0 %v936
    %v2012 = vpop.f32.mrf.mxu0
    %v2013 = vadd.f32 %v2000, %v2012
    %v2014 = vpop.f32.mrf.mxu0
    %2015 = vdwg.mxu0
    %2016 = vmatpush.bf16.msra.mxu0 %v1548
    %2017 = vmatpush.bf16.msra.mxu0 %v1546
    %2018 = vmatpush.bf16.msra.mxu0 %v1544
    %2019 = vmatpush.bf16.msra.mxu0 %v1542
    %2020 = vmatpush.bf16.msra.mxu0 %v1540
    %2021 = vmatpush.bf16.msra.mxu0 %v1538
    %2022 = vmatpush.bf16.msra.mxu0 %v1536
    %2023 = vmatpush.bf16.msra.mxu0 %v1534
    %2024 = vmatmul.bf16.gmra.mxu0 %v937
    %v2025 = vpop.f32.mrf.mxu0
    %v2026 = vadd.f32 %v2013, %v2025
    %v2027 = vpop.f32.mrf.mxu0
    %2028 = vdwg.mxu0
    %2029 = vmatpush.bf16.msra.mxu0 %v1564
    %2030 = vmatpush.bf16.msra.mxu0 %v1562
    %2031 = vmatpush.bf16.msra.mxu0 %v1560
    %2032 = vmatpush.bf16.msra.mxu0 %v1558
    %2033 = vmatpush.bf16.msra.mxu0 %v1556
    %2034 = vmatpush.bf16.msra.mxu0 %v1554
    %2035 = vmatpush.bf16.msra.mxu0 %v1552
    %2036 = vmatpush.bf16.msra.mxu0 %v1550
    %2037 = vmatmul.bf16.gmra.mxu0 %v938
    %v2038 = vpop.f32.mrf.mxu0
    %v2039 = vadd.f32 %v2026, %v2038
    %v2040 = vpop.f32.mrf.mxu0
    %2041 = vdwg.mxu0
    %2042 = vmatpush.bf16.msra.mxu0 %v1580
    %2043 = vmatpush.bf16.msra.mxu0 %v1578
    %2044 = vmatpush.bf16.msra.mxu0 %v1576
    %2045 = vmatpush.bf16.msra.mxu0 %v1574
    %2046 = vmatpush.bf16.msra.mxu0 %v1572
    %2047 = vmatpush.bf16.msra.mxu0 %v1570
    %2048 = vmatpush.bf16.msra.mxu0 %v1568
    %2049 = vmatpush.bf16.msra.mxu0 %v1566
    %2050 = vmatmul.bf16.gmra.mxu0 %v939
    %v2051 = vpop.f32.mrf.mxu0
    %v2052 = vadd.f32 %v2039, %v2051
    %v2053 = vpop.f32.mrf.mxu0
    %2054 = vdwg.mxu0
    %2055 = vmatpush.bf16.msra.mxu0 %v1596
    %2056 = vmatpush.bf16.msra.mxu0 %v1594
    %2057 = vmatpush.bf16.msra.mxu0 %v1592
    %2058 = vmatpush.bf16.msra.mxu0 %v1590
    %2059 = vmatpush.bf16.msra.mxu0 %v1588
    %2060 = vmatpush.bf16.msra.mxu0 %v1586
    %2061 = vmatpush.bf16.msra.mxu0 %v1584
    %2062 = vmatpush.bf16.msra.mxu0 %v1582
    %2063 = vmatmul.bf16.gmra.mxu0 %v940
    %v2064 = vpop.f32.mrf.mxu0
    %v2065 = vadd.f32 %v2052, %v2064
    %v2066 = vpop.f32.mrf.mxu0
    %2067 = vdwg.mxu0
    %2068 = vmatpush.bf16.msra.mxu0 %v1612
    %2069 = vmatpush.bf16.msra.mxu0 %v1610
    %2070 = vmatpush.bf16.msra.mxu0 %v1608
    %2071 = vmatpush.bf16.msra.mxu0 %v1606
    %2072 = vmatpush.bf16.msra.mxu0 %v1604
    %2073 = vmatpush.bf16.msra.mxu0 %v1602
    %2074 = vmatpush.bf16.msra.mxu0 %v1600
    %2075 = vmatpush.bf16.msra.mxu0 %v1598
    %2076 = vmatmul.bf16.gmra.mxu0 %v943
    %v2077 = vpop.f32.mrf.mxu0
    %v2078 = vadd.f32 %v2065, %v2077
    %v2079 = vpop.f32.mrf.mxu0
    %2080 = vdwg.mxu0
    %2081 = vmatpush.bf16.msra.mxu0 %v1628
    %2082 = vmatpush.bf16.msra.mxu0 %v1626
    %2083 = vmatpush.bf16.msra.mxu0 %v1624
    %2084 = vmatpush.bf16.msra.mxu0 %v1622
    %2085 = vmatpush.bf16.msra.mxu0 %v1620
    %2086 = vmatpush.bf16.msra.mxu0 %v1618
    %2087 = vmatpush.bf16.msra.mxu0 %v1616
    %2088 = vmatpush.bf16.msra.mxu0 %v1614
    %2089 = vmatmul.bf16.gmra.mxu0 %v944
    %v2090 = vpop.f32.mrf.mxu0
    %v2091 = vadd.f32 %v2078, %v2090
    %v2092 = vpop.f32.mrf.mxu0
    %2093 = vdwg.mxu0
    %2094 = vmatpush.bf16.msra.mxu0 0
    %2095 = vmatpush.bf16.msra.mxu0 0
    %2096 = vmatpush.bf16.msra.mxu0 %v1819
    %2097 = vmatpush.bf16.msra.mxu0 %v1638
    %2098 = vmatpush.bf16.msra.mxu0 %v1636
    %2099 = vmatpush.bf16.msra.mxu0 %v1634
    %2100 = vmatpush.bf16.msra.mxu0 %v1632
    %2101 = vmatpush.bf16.msra.mxu0 %v1630
    %2102 = vmatmul.bf16.gmra.mxu0 %v1812
    %v2103 = vpop.f32.mrf.mxu0
    %v2104 = vadd.f32 %v2091, %v2103
    %v2105 = vpop.f32.mrf.mxu0
    %2106 = vdwg.mxu0
    %2108 = vst [vmem:[#allocation1] ss:$9 sm:$0xff] %v585
    %v2109 = vld [vmem:[#allocation1] sm:$0xff]
    %v2110 = vld [vmem:[#allocation1 + $0x9] sm:$0xff]
    %v2111 = vld [vmem:[#allocation1 + $0x12] sm:$0xff]
    %v2112 = vld [vmem:[#allocation1 + $0x1b] sm:$0xff]
    %v2113 = vld [vmem:[#allocation1 + $0x24] sm:$0xff]
    %v2114 = vld [vmem:[#allocation1 + $0x2d] sm:$0xff]
    %v2115 = vld [vmem:[#allocation1 + $0x36] sm:$0xff]
    %v2116 = vld [vmem:[#allocation1 + $0x3f] sm:$0xff]
    %2118 = vst [vmem:[#allocation1] ss:$9 sm:$0xff] %v586
    %v2119 = vld [vmem:[#allocation1] sm:$0xff]
    %v2120 = vld [vmem:[#allocation1 + $0x9] sm:$0xff]
    %v2121 = vld [vmem:[#allocation1 + $0x12] sm:$0xff]
    %v2303 = vunpack.c.l.b16 %v587
    %v2304 = vunpack.c.h.b16 %v587
    %v2305 = vunpack.c.l.b16 %v588
    %v2306 = vunpack.c.h.b16 %v588
    %v2307 = vunpack.c.l.b16 %v589
    %v2308 = vunpack.c.h.b16 %v589
    %v2309 = vunpack.c.l.b16 %v590
    %v2310 = vunpack.c.h.b16 %v590
    %v2311 = vunpack.c.l.b16 %v591
    %v2312 = vunpack.c.h.b16 %v591
    %v2313 = vunpack.c.l.b16 %v592
    %v2314 = vunpack.c.h.b16 %v592
    %v2315 = vunpack.c.l.b16 %v593
    %v2316 = vunpack.c.h.b16 %v593
    %v2317 = vunpack.c.l.b16 %v594
    %v2318 = vunpack.c.h.b16 %v594
    %v2319 = vunpack.c.l.b16 %v595
    %v2320 = vunpack.c.h.b16 %v595
    %v2321 = vunpack.c.l.b16 %v596
    %v2322 = vunpack.c.h.b16 %v596
    %v2323 = vunpack.c.l.b16 %v597
    %v2324 = vunpack.c.h.b16 %v597
    %v2325 = vunpack.c.l.b16 %v598
    %v2326 = vunpack.c.h.b16 %v598
    %v2327 = vunpack.c.l.b16 %v599
    %v2328 = vunpack.c.h.b16 %v599
    %v2329 = vunpack.c.l.b16 %v600
    %v2330 = vunpack.c.h.b16 %v600
    %v2331 = vunpack.c.l.b16 %v601
    %v2332 = vunpack.c.h.b16 %v601
    %v2333 = vunpack.c.l.b16 %v602
    %v2334 = vunpack.c.h.b16 %v602
    %v2335 = vunpack.c.l.b16 %v603
    %v2336 = vunpack.c.h.b16 %v603
    %v2337 = vunpack.c.l.b16 %v604
    %v2338 = vunpack.c.h.b16 %v604
    %v2339 = vunpack.c.l.b16 %v605
    %v2340 = vunpack.c.h.b16 %v605
    %v2341 = vunpack.c.l.b16 %v606
    %v2342 = vunpack.c.h.b16 %v606
    %v2343 = vunpack.c.l.b16 %v607
    %v2344 = vunpack.c.h.b16 %v607
    %v2345 = vunpack.c.l.b16 %v608
    %v2346 = vunpack.c.h.b16 %v608
    %v2347 = vunpack.c.l.b16 %v609
    %v2348 = vunpack.c.h.b16 %v609
    %v2349 = vunpack.c.l.b16 %v610
    %v2350 = vunpack.c.h.b16 %v610
    %v2351 = vunpack.c.l.b16 %v611
    %v2352 = vunpack.c.h.b16 %v611
    %v2353 = vunpack.c.l.b16 %v612
    %v2354 = vunpack.c.h.b16 %v612
    %v2355 = vunpack.c.l.b16 %v613
    %v2356 = vunpack.c.h.b16 %v613
    %v2357 = vunpack.c.l.b16 %v614
    %v2358 = vunpack.c.h.b16 %v614
    %v2359 = vunpack.c.l.b16 %v615
    %v2360 = vunpack.c.h.b16 %v615
    %v2361 = vunpack.c.l.b16 %v616
    %v2362 = vunpack.c.h.b16 %v616
    %v2363 = vunpack.c.l.b16 %v617
    %v2364 = vunpack.c.h.b16 %v617
    %v2365 = vunpack.c.l.b16 %v618
    %v2366 = vunpack.c.h.b16 %v618
    %v2367 = vunpack.c.l.b16 %v619
    %v2368 = vunpack.c.h.b16 %v619
    %v2369 = vunpack.c.l.b16 %v620
    %v2370 = vunpack.c.h.b16 %v620
    %v2371 = vunpack.c.l.b16 %v621
    %v2372 = vunpack.c.h.b16 %v621
    %v2373 = vunpack.c.l.b16 %v622
    %v2374 = vunpack.c.h.b16 %v622
    %v2375 = vunpack.c.l.b16 %v623
    %v2376 = vunpack.c.h.b16 %v623
    %v2377 = vunpack.c.l.b16 %v624
    %v2378 = vunpack.c.h.b16 %v624
    %v2379 = vunpack.c.l.b16 %v625
    %v2380 = vunpack.c.h.b16 %v625
    %v2381 = vunpack.c.l.b16 %v626
    %v2382 = vunpack.c.h.b16 %v626
    %v2383 = vunpack.c.l.b16 %v627
    %v2384 = vunpack.c.h.b16 %v627
    %v2385 = vunpack.c.l.b16 %v628
    %v2386 = vunpack.c.h.b16 %v628
    %v2387 = vunpack.c.l.b16 %v629
    %v2388 = vunpack.c.h.b16 %v629
    %v2389 = vunpack.c.l.b16 %v630
    %v2390 = vunpack.c.h.b16 %v630
    %v2391 = vunpack.c.l.b16 %v631
    %v2392 = vunpack.c.h.b16 %v631
    %v2393 = vunpack.c.l.b16 %v632
    %v2394 = vunpack.c.h.b16 %v632
    %v2395 = vunpack.c.l.b16 %v633
    %v2396 = vunpack.c.h.b16 %v633
    %v2397 = vunpack.c.l.b16 %v634
    %v2398 = vunpack.c.h.b16 %v634
    %v2399 = vunpack.c.l.b16 %v635
    %v2400 = vunpack.c.h.b16 %v635
    %v2401 = vunpack.c.l.b16 %v636
    %v2402 = vunpack.c.h.b16 %v636
    %v2403 = vunpack.c.l.b16 %v637
    %v2404 = vunpack.c.h.b16 %v637
    %v2405 = vunpack.c.l.b16 %v638
    %v2406 = vunpack.c.h.b16 %v638
    %v2407 = vunpack.c.l.b16 %v639
    %v2408 = vunpack.c.h.b16 %v639
    %v2409 = vunpack.c.l.b16 %v640
    %v2410 = vunpack.c.h.b16 %v640
    %v2411 = vunpack.c.l.b16 %v641
    %v2412 = vunpack.c.h.b16 %v641
    %v2413 = vunpack.c.l.b16 %v642
    %v2414 = vunpack.c.h.b16 %v642
    %v2415 = vunpack.c.l.b16 %v643
    %v2416 = vunpack.c.h.b16 %v643
    %v2417 = vunpack.c.l.b16 %v644
    %v2418 = vunpack.c.h.b16 %v644
    %v2419 = vunpack.c.l.b16 %v645
    %v2420 = vunpack.c.h.b16 %v645
    %v2421 = vunpack.c.l.b16 %v646
    %v2422 = vunpack.c.h.b16 %v646
    %v2423 = vunpack.c.l.b16 %v647
    %v2424 = vunpack.c.h.b16 %v647
    %v2425 = vunpack.c.l.b16 %v648
    %v2426 = vunpack.c.h.b16 %v648
    %v2427 = vunpack.c.l.b16 %v649
    %v2428 = vunpack.c.h.b16 %v649
    %v2429 = vunpack.c.l.b16 %v650
    %v2430 = vunpack.c.h.b16 %v650
    %v2431 = vunpack.c.l.b16 %v651
    %v2432 = vunpack.c.h.b16 %v651
    %v2433 = vunpack.c.l.b16 %v652
    %v2434 = vunpack.c.h.b16 %v652
    %v2435 = vunpack.c.l.b16 %v653
    %v2436 = vunpack.c.h.b16 %v653
    %v2437 = vunpack.c.l.b16 %v654
    %v2438 = vunpack.c.h.b16 %v654
    %v2439 = vunpack.c.l.b16 %v655
    %v2440 = vunpack.c.h.b16 %v655
    %v2441 = vunpack.c.l.b16 %v656
    %v2442 = vunpack.c.h.b16 %v656
    %v2443 = vunpack.c.l.b16 %v657
    %v2444 = vunpack.c.h.b16 %v657
    %v2445 = vunpack.c.l.b16 %v658
    %v2446 = vunpack.c.h.b16 %v658
    %v2447 = vunpack.c.l.b16 %v659
    %v2448 = vunpack.c.h.b16 %v659
    %v2449 = vunpack.c.l.b16 %v660
    %v2450 = vunpack.c.h.b16 %v660
    %v2451 = vunpack.c.l.b16 %v661
    %v2452 = vunpack.c.h.b16 %v661
    %v2453 = vunpack.c.l.b16 %v662
    %v2454 = vunpack.c.h.b16 %v662
    %v2455 = vunpack.c.l.b16 %v663
    %v2456 = vunpack.c.h.b16 %v663
    %v2457 = vunpack.c.l.b16 %v664
    %v2458 = vunpack.c.h.b16 %v664
    %v2459 = vunpack.c.l.b16 %v665
    %v2460 = vunpack.c.h.b16 %v665
    %v2461 = vunpack.c.l.b16 %v666
    %v2462 = vunpack.c.h.b16 %v666
    %v2463 = vunpack.c.l.b16 %v667
    %v2464 = vunpack.c.h.b16 %v667
    %v2465 = vunpack.c.l.b16 %v668
    %v2466 = vunpack.c.h.b16 %v668
    %v2467 = vunpack.c.l.b16 %v669
    %v2468 = vunpack.c.h.b16 %v669
    %v2469 = vunpack.c.l.b16 %v670
    %v2470 = vunpack.c.h.b16 %v670
    %v2471 = vunpack.c.l.b16 %v671
    %v2472 = vunpack.c.h.b16 %v671
    %v2473 = vunpack.c.l.b16 %v672
    %v2474 = vunpack.c.h.b16 %v672
    %v2475 = vunpack.c.l.b16 %v673
    %v2476 = vunpack.c.h.b16 %v673
    %v2477 = vunpack.c.l.b16 %v674
    %v2478 = vunpack.c.h.b16 %v674
    %v2479 = vunpack.c.l.b16 %v675
    %v2480 = vunpack.c.h.b16 %v675
    %v2481 = vunpack.c.l.b16 %v676
    %v2482 = vunpack.c.h.b16 %v676
    %v2483 = vunpack.c.l.b16 %v677
    %v2484 = vunpack.c.h.b16 %v677
    %v2485 = vunpack.c.l.b16 %v678
    %v2486 = vunpack.c.h.b16 %v678
    %v2487 = vunpack.c.l.b16 %v679
    %v2488 = vunpack.c.h.b16 %v679
    %v2489 = vunpack.c.l.b16 %v680
    %v2490 = vunpack.c.h.b16 %v680
    %v2491 = vunpack.c.l.b16 %v681
    %v2492 = vunpack.c.h.b16 %v681
    %v2493 = vunpack.c.l.b16 %v682
    %v2494 = vunpack.c.h.b16 %v682
    %v2495 = vunpack.c.l.b16 %v683
    %v2496 = vunpack.c.h.b16 %v683
    %v2497 = vunpack.c.l.b16 %v684
    %v2498 = vunpack.c.h.b16 %v684
    %v2499 = vunpack.c.l.b16 %v685
    %v2500 = vunpack.c.h.b16 %v685
    %v2501 = vunpack.c.l.b16 %v686
    %v2502 = vunpack.c.h.b16 %v686
    %v2503 = vunpack.c.l.b16 %v687
    %v2504 = vunpack.c.h.b16 %v687
    %v2505 = vunpack.c.l.b16 %v688
    %v2506 = vunpack.c.h.b16 %v688
    %v2507 = vunpack.c.l.b16 %v689
    %v2508 = vunpack.c.h.b16 %v689
    %v2509 = vunpack.c.l.b16 %v690
    %v2510 = vunpack.c.h.b16 %v690
    %v2511 = vunpack.c.l.b16 %v691
    %v2512 = vunpack.c.h.b16 %v691
    %v2513 = vunpack.c.l.b16 %v692
    %v2514 = vunpack.c.h.b16 %v692
    %v2515 = vunpack.c.l.b16 %v693
    %v2516 = vunpack.c.h.b16 %v693
    %v2517 = vunpack.c.l.b16 %v694
    %v2518 = vunpack.c.h.b16 %v694
    %v2519 = vunpack.c.l.b16 %v695
    %v2520 = vunpack.c.h.b16 %v695
    %v2521 = vunpack.c.l.b16 %v696
    %v2522 = vunpack.c.h.b16 %v696
    %v2523 = vunpack.c.l.b16 %v697
    %v2524 = vunpack.c.h.b16 %v697
    %v2525 = vunpack.c.l.b16 %v698
    %v2526 = vunpack.c.h.b16 %v698
    %v2527 = vunpack.c.l.b16 %v699
    %v2528 = vunpack.c.h.b16 %v699
    %v2529 = vunpack.c.l.b16 %v700
    %v2530 = vunpack.c.h.b16 %v700
    %v2531 = vunpack.c.l.b16 %v701
    %v2532 = vunpack.c.h.b16 %v701
    %v2533 = vunpack.c.l.b16 %v702
    %v2534 = vunpack.c.h.b16 %v702
    %v2535 = vunpack.c.l.b16 %v703
    %v2536 = vunpack.c.h.b16 %v703
    %v2537 = vunpack.c.l.b16 %v704
    %v2538 = vunpack.c.h.b16 %v704
    %v2539 = vunpack.c.l.b16 %v705
    %v2540 = vunpack.c.h.b16 %v705
    %v2541 = vunpack.c.l.b16 %v706
    %v2542 = vunpack.c.h.b16 %v706
    %v2543 = vunpack.c.l.b16 %v707
    %v2544 = vunpack.c.h.b16 %v707
    %v2545 = vunpack.c.l.b16 %v708
    %v2546 = vunpack.c.h.b16 %v708
    %v2547 = vunpack.c.l.b16 %v709
    %v2548 = vunpack.c.h.b16 %v709
    %v2549 = vunpack.c.l.b16 %v710
    %v2550 = vunpack.c.h.b16 %v710
    %v2551 = vunpack.c.l.b16 %v711
    %v2552 = vunpack.c.h.b16 %v711
    %v2553 = vunpack.c.l.b16 %v712
    %v2554 = vunpack.c.h.b16 %v712
    %v2555 = vunpack.c.l.b16 %v713
    %v2556 = vunpack.c.h.b16 %v713
    %v2557 = vunpack.c.l.b16 %v714
    %v2558 = vunpack.c.h.b16 %v714
    %v2559 = vunpack.c.l.b16 %v715
    %v2560 = vunpack.c.h.b16 %v715
    %v2561 = vunpack.c.l.b16 %v716
    %v2562 = vunpack.c.h.b16 %v716
    %v2563 = vunpack.c.l.b16 %v717
    %v2564 = vunpack.c.h.b16 %v717
    %v2565 = vunpack.c.l.b16 %v718
    %v2566 = vunpack.c.h.b16 %v718
    %v2567 = vunpack.c.l.b16 %v719
    %v2568 = vunpack.c.h.b16 %v719
    %v2569 = vunpack.c.l.b16 %v720
    %v2570 = vunpack.c.h.b16 %v720
    %v2571 = vunpack.c.l.b16 %v721
    %v2572 = vunpack.c.h.b16 %v721
    %v2573 = vunpack.c.l.b16 %v722
    %v2574 = vunpack.c.h.b16 %v722
    %v2575 = vunpack.c.l.b16 %v723
    %v2576 = vunpack.c.h.b16 %v723
    %v2577 = vunpack.c.l.b16 %v724
    %v2578 = vunpack.c.h.b16 %v724
    %v2579 = vunpack.c.l.b16 %v725
    %v2580 = vunpack.c.h.b16 %v725
    %v2581 = vunpack.c.l.b16 %v726
    %v2582 = vunpack.c.h.b16 %v726
    %v2583 = vunpack.c.l.b16 %v727
    %v2584 = vunpack.c.h.b16 %v727
    %v2585 = vunpack.c.l.b16 %v728
    %v2586 = vunpack.c.h.b16 %v728
    %v2587 = vunpack.c.l.b16 %v729
    %v2588 = vunpack.c.h.b16 %v729
    %v2589 = vunpack.c.l.b16 %v730
    %v2590 = vunpack.c.h.b16 %v730
    %v2591 = vunpack.c.l.b16 %v731
    %v2592 = vunpack.c.h.b16 %v731
    %v2593 = vunpack.c.l.b16 %v732
    %v2594 = vunpack.c.h.b16 %v732
    %v2595 = vunpack.c.l.b16 %v733
    %v2596 = vunpack.c.h.b16 %v733
    %v2597 = vunpack.c.l.b16 %v734
    %v2598 = vunpack.c.h.b16 %v734
    %v2599 = vunpack.c.l.b16 %v735
    %v2600 = vunpack.c.h.b16 %v735
    %v2601 = vunpack.c.l.b16 %v736
    %v2602 = vunpack.c.h.b16 %v736
    %v2603 = vunpack.c.l.b16 %v737
    %v2604 = vunpack.c.h.b16 %v737
    %v2605 = vunpack.c.l.b16 %v738
    %v2606 = vunpack.c.h.b16 %v738
    %v2607 = vunpack.c.l.b16 %v739
    %v2608 = vunpack.c.h.b16 %v739
    %v2609 = vunpack.c.l.b16 %v740
    %v2610 = vunpack.c.h.b16 %v740
    %v2611 = vunpack.c.l.b16 %v741
    %v2612 = vunpack.c.h.b16 %v741
    %v2613 = vunpack.c.l.b16 %v742
    %v2614 = vunpack.c.h.b16 %v742
    %v2615 = vunpack.c.l.b16 %v743
    %v2616 = vunpack.c.h.b16 %v743
    %v2617 = vunpack.c.l.b16 %v744
    %v2618 = vunpack.c.h.b16 %v744
    %v2619 = vunpack.c.l.b16 %v745
    %v2620 = vunpack.c.h.b16 %v745
    %v2621 = vunpack.c.l.b16 %v746
    %v2622 = vunpack.c.h.b16 %v746
    %v2623 = vunpack.c.l.b16 %v747
    %v2624 = vunpack.c.h.b16 %v747
    %v2625 = vunpack.c.l.b16 %v748
    %v2626 = vunpack.c.h.b16 %v748
    %v2627 = vunpack.c.l.b16 %v749
    %v2628 = vunpack.c.h.b16 %v749
    %v2629 = vunpack.c.l.b16 %v750
    %v2630 = vunpack.c.h.b16 %v750
    %v2631 = vunpack.c.l.b16 %v751
    %v2632 = vunpack.c.h.b16 %v751
    %v2633 = vunpack.c.l.b16 %v752
    %v2634 = vunpack.c.h.b16 %v752
    %v2635 = vunpack.c.l.b16 %v753
    %v2636 = vunpack.c.h.b16 %v753
    %v2637 = vunpack.c.l.b16 %v754
    %v2638 = vunpack.c.h.b16 %v754
    %v2639 = vunpack.c.l.b16 %v755
    %v2640 = vunpack.c.h.b16 %v755
    %v2641 = vunpack.c.l.b16 %v756
    %v2642 = vunpack.c.h.b16 %v756
    %v2643 = vunpack.c.l.b16 %v757
    %v2644 = vunpack.c.h.b16 %v757
    %v2645 = vpack.c.b16 %v2305, %v2303
    %v2646 = vpack.c.b16 %v2306, %v2304
    %v2647 = vpack.c.b16 %v2309, %v2307
    %v2648 = vpack.c.b16 %v2310, %v2308
    %v2649 = vpack.c.b16 %v2313, %v2311
    %v2650 = vpack.c.b16 %v2314, %v2312
    %v2651 = vpack.c.b16 %v2317, %v2315
    %v2652 = vpack.c.b16 %v2318, %v2316
    %v2653 = vpack.c.b16 %v2321, %v2319
    %v2654 = vpack.c.b16 %v2322, %v2320
    %v2655 = vpack.c.b16 %v2325, %v2323
    %v2656 = vpack.c.b16 %v2326, %v2324
    %v2657 = vpack.c.b16 %v2329, %v2327
    %v2658 = vpack.c.b16 %v2330, %v2328
    %v2659 = vpack.c.b16 %v2333, %v2331
    %v2660 = vpack.c.b16 %v2334, %v2332
    %v2661 = vpack.c.b16 %v2337, %v2335
    %v2662 = vpack.c.b16 %v2338, %v2336
    %v2663 = vpack.c.b16 %v2341, %v2339
    %v2664 = vpack.c.b16 %v2342, %v2340
    %v2665 = vpack.c.b16 %v2345, %v2343
    %v2666 = vpack.c.b16 %v2346, %v2344
    %v2667 = vpack.c.b16 %v2349, %v2347
    %v2668 = vpack.c.b16 %v2350, %v2348
    %v2669 = vpack.c.b16 %v2353, %v2351
    %v2670 = vpack.c.b16 %v2354, %v2352
    %v2671 = vpack.c.b16 %v2357, %v2355
    %v2672 = vpack.c.b16 %v2358, %v2356
    %v2673 = vpack.c.b16 %v2361, %v2359
    %v2674 = vpack.c.b16 %v2362, %v2360
    %v2675 = vpack.c.b16 %v2365, %v2363
    %v2676 = vpack.c.b16 %v2366, %v2364
    %v2677 = vpack.c.b16 %v2369, %v2367
    %v2678 = vpack.c.b16 %v2370, %v2368
    %v2679 = vpack.c.b16 %v2373, %v2371
    %v2680 = vpack.c.b16 %v2374, %v2372
    %v2681 = vpack.c.b16 %v2377, %v2375
    %v2682 = vpack.c.b16 %v2378, %v2376
    %v2683 = vpack.c.b16 %v2381, %v2379
    %v2684 = vpack.c.b16 %v2382, %v2380
    %v2685 = vpack.c.b16 %v2385, %v2383
    %v2686 = vpack.c.b16 %v2386, %v2384
    %v2687 = vpack.c.b16 %v2389, %v2387
    %v2688 = vpack.c.b16 %v2390, %v2388
    %v2689 = vpack.c.b16 %v2393, %v2391
    %v2690 = vpack.c.b16 %v2394, %v2392
    %v2691 = vpack.c.b16 %v2397, %v2395
    %v2692 = vpack.c.b16 %v2398, %v2396
    %v2693 = vpack.c.b16 %v2401, %v2399
    %v2694 = vpack.c.b16 %v2402, %v2400
    %v2695 = vpack.c.b16 %v2405, %v2403
    %v2696 = vpack.c.b16 %v2406, %v2404
    %v2697 = vpack.c.b16 %v2409, %v2407
    %v2698 = vpack.c.b16 %v2410, %v2408
    %v2699 = vpack.c.b16 %v2413, %v2411
    %v2700 = vpack.c.b16 %v2414, %v2412
    %v2701 = vpack.c.b16 %v2417, %v2415
    %v2702 = vpack.c.b16 %v2418, %v2416
    %v2703 = vpack.c.b16 %v2421, %v2419
    %v2704 = vpack.c.b16 %v2422, %v2420
    %v2705 = vpack.c.b16 %v2425, %v2423
    %v2706 = vpack.c.b16 %v2426, %v2424
    %v2707 = vpack.c.b16 %v2429, %v2427
    %v2708 = vpack.c.b16 %v2430, %v2428
    %v2709 = vpack.c.b16 %v2433, %v2431
    %v2710 = vpack.c.b16 %v2434, %v2432
    %v2711 = vpack.c.b16 %v2437, %v2435
    %v2712 = vpack.c.b16 %v2438, %v2436
    %v2713 = vpack.c.b16 %v2441, %v2439
    %v2714 = vpack.c.b16 %v2442, %v2440
    %v2715 = vpack.c.b16 %v2445, %v2443
    %v2716 = vpack.c.b16 %v2446, %v2444
    %v2717 = vpack.c.b16 %v2449, %v2447
    %v2718 = vpack.c.b16 %v2450, %v2448
    %v2719 = vpack.c.b16 %v2453, %v2451
    %v2720 = vpack.c.b16 %v2454, %v2452
    %v2721 = vpack.c.b16 %v2457, %v2455
    %v2722 = vpack.c.b16 %v2458, %v2456
    %v2723 = vpack.c.b16 %v2461, %v2459
    %v2724 = vpack.c.b16 %v2462, %v2460
    %v2725 = vpack.c.b16 %v2465, %v2463
    %v2726 = vpack.c.b16 %v2466, %v2464
    %v2727 = vpack.c.b16 %v2469, %v2467
    %v2728 = vpack.c.b16 %v2470, %v2468
    %v2729 = vpack.c.b16 %v2473, %v2471
    %v2730 = vpack.c.b16 %v2474, %v2472
    %v2731 = vpack.c.b16 %v2477, %v2475
    %v2732 = vpack.c.b16 %v2478, %v2476
    %v2733 = vpack.c.b16 %v2481, %v2479
    %v2734 = vpack.c.b16 %v2482, %v2480
    %v2735 = vpack.c.b16 %v2485, %v2483
    %v2736 = vpack.c.b16 %v2486, %v2484
    %v2737 = vpack.c.b16 %v2489, %v2487
    %v2738 = vpack.c.b16 %v2490, %v2488
    %v2739 = vpack.c.b16 %v2493, %v2491
    %v2740 = vpack.c.b16 %v2494, %v2492
    %v2741 = vpack.c.b16 %v2497, %v2495
    %v2742 = vpack.c.b16 %v2498, %v2496
    %v2743 = vpack.c.b16 %v2501, %v2499
    %v2744 = vpack.c.b16 %v2502, %v2500
    %v2745 = vpack.c.b16 %v2505, %v2503
    %v2746 = vpack.c.b16 %v2506, %v2504
    %v2747 = vpack.c.b16 %v2509, %v2507
    %v2748 = vpack.c.b16 %v2510, %v2508
    %v2749 = vpack.c.b16 %v2513, %v2511
    %v2750 = vpack.c.b16 %v2514, %v2512
    %v2751 = vpack.c.b16 %v2517, %v2515
    %v2752 = vpack.c.b16 %v2518, %v2516
    %v2753 = vpack.c.b16 %v2521, %v2519
    %v2754 = vpack.c.b16 %v2522, %v2520
    %v2755 = vpack.c.b16 %v2525, %v2523
    %v2756 = vpack.c.b16 %v2526, %v2524
    %v2757 = vpack.c.b16 %v2529, %v2527
    %v2758 = vpack.c.b16 %v2530, %v2528
    %v2759 = vpack.c.b16 %v2533, %v2531
    %v2760 = vpack.c.b16 %v2534, %v2532
    %v2761 = vpack.c.b16 %v2537, %v2535
    %v2762 = vpack.c.b16 %v2538, %v2536
    %v2763 = vpack.c.b16 %v2541, %v2539
    %v2764 = vpack.c.b16 %v2542, %v2540
    %v2765 = vpack.c.b16 %v2545, %v2543
    %v2766 = vpack.c.b16 %v2546, %v2544
    %v2767 = vpack.c.b16 %v2549, %v2547
    %v2768 = vpack.c.b16 %v2550, %v2548
    %v2769 = vpack.c.b16 %v2553, %v2551
    %v2770 = vpack.c.b16 %v2554, %v2552
    %v2771 = vpack.c.b16 %v2557, %v2555
    %v2772 = vpack.c.b16 %v2558, %v2556
    %v2773 = vpack.c.b16 %v2561, %v2559
    %v2774 = vpack.c.b16 %v2562, %v2560
    %v2775 = vpack.c.b16 %v2565, %v2563
    %v2776 = vpack.c.b16 %v2566, %v2564
    %v2777 = vpack.c.b16 %v2569, %v2567
    %v2778 = vpack.c.b16 %v2570, %v2568
    %v2779 = vpack.c.b16 %v2573, %v2571
    %v2780 = vpack.c.b16 %v2574, %v2572
    %v2781 = vpack.c.b16 %v2577, %v2575
    %v2782 = vpack.c.b16 %v2578, %v2576
    %v2783 = vpack.c.b16 %v2581, %v2579
    %v2784 = vpack.c.b16 %v2582, %v2580
    %v2785 = vpack.c.b16 %v2585, %v2583
    %v2786 = vpack.c.b16 %v2586, %v2584
    %v2787 = vpack.c.b16 %v2589, %v2587
    %v2788 = vpack.c.b16 %v2590, %v2588
    %v2789 = vpack.c.b16 %v2593, %v2591
    %v2790 = vpack.c.b16 %v2594, %v2592
    %v2791 = vpack.c.b16 %v2597, %v2595
    %v2792 = vpack.c.b16 %v2598, %v2596
    %v2793 = vpack.c.b16 %v2601, %v2599
    %v2794 = vpack.c.b16 %v2602, %v2600
    %v2795 = vpack.c.b16 %v2605, %v2603
    %v2796 = vpack.c.b16 %v2606, %v2604
    %v2797 = vpack.c.b16 %v2609, %v2607
    %v2798 = vpack.c.b16 %v2610, %v2608
    %v2799 = vpack.c.b16 %v2613, %v2611
    %v2800 = vpack.c.b16 %v2614, %v2612
    %v2801 = vpack.c.b16 %v2617, %v2615
    %v2802 = vpack.c.b16 %v2618, %v2616
    %v2803 = vpack.c.b16 %v2621, %v2619
    %v2804 = vpack.c.b16 %v2622, %v2620
    %v2805 = vpack.c.b16 %v2625, %v2623
    %v2806 = vpack.c.b16 %v2626, %v2624
    %v2807 = vpack.c.b16 %v2629, %v2627
    %v2808 = vpack.c.b16 %v2630, %v2628
    %v2809 = vpack.c.b16 %v2633, %v2631
    %v2810 = vpack.c.b16 %v2634, %v2632
    %v2811 = vpack.c.b16 %v2637, %v2635
    %v2812 = vpack.c.b16 %v2638, %v2636
    %v2813 = vpack.c.b16 %v2641, %v2639
    %v2814 = vpack.c.b16 %v2642, %v2640
    %v2815 = vpack.c.b16 %v2643, %v2643
    %v2816 = vpack.c.b16 %v2644, %v2644
    %v2987 = vsel %vm1811, %v2121, 0
    %v2990 = vsel %vm1814, %v2815, 0
    %v2993 = vsel %vm1814, %v2816, 0
    %2995 = vmatpush.bf16.msra.mxu0 %v2659
    %2996 = vmatpush.bf16.msra.mxu0 %v2657
    %2997 = vmatpush.bf16.msra.mxu0 %v2655
    %2998 = vmatpush.bf16.msra.mxu0 %v2653
    %2999 = vmatpush.bf16.msra.mxu0 %v2651
    %3000 = vmatpush.bf16.msra.mxu0 %v2649
    %3001 = vmatpush.bf16.msra.mxu0 %v2647
    %3002 = vmatpush.bf16.msra.mxu0 %v2645
    %3003 = vmatmul.bf16.gmra.mxu0 %v2109
    %v3004 = vpop.f32.mrf.mxu0
    %v3005 = vadd.f32 %v1961, %v3004
    %v3006 = vpop.f32.mrf.mxu0
    %3007 = vdwg.mxu0
    %3008 = vmatpush.bf16.msra.mxu0 %v2675
    %3009 = vmatpush.bf16.msra.mxu0 %v2673
    %3010 = vmatpush.bf16.msra.mxu0 %v2671
    %3011 = vmatpush.bf16.msra.mxu0 %v2669
    %3012 = vmatpush.bf16.msra.mxu0 %v2667
    %3013 = vmatpush.bf16.msra.mxu0 %v2665
    %3014 = vmatpush.bf16.msra.mxu0 %v2663
    %3015 = vmatpush.bf16.msra.mxu0 %v2661
    %3016 = vmatmul.bf16.gmra.mxu0 %v2110
    %v3017 = vpop.f32.mrf.mxu0
    %v3018 = vadd.f32 %v3005, %v3017
    %v3019 = vpop.f32.mrf.mxu0
    %3020 = vdwg.mxu0
    %3021 = vmatpush.bf16.msra.mxu0 %v2691
    %3022 = vmatpush.bf16.msra.mxu0 %v2689
    %3023 = vmatpush.bf16.msra.mxu0 %v2687
    %3024 = vmatpush.bf16.msra.mxu0 %v2685
    %3025 = vmatpush.bf16.msra.mxu0 %v2683
    %3026 = vmatpush.bf16.msra.mxu0 %v2681
    %3027 = vmatpush.bf16.msra.mxu0 %v2679
    %3028 = vmatpush.bf16.msra.mxu0 %v2677
    %3029 = vmatmul.bf16.gmra.mxu0 %v2111
    %v3030 = vpop.f32.mrf.mxu0
    %v3031 = vadd.f32 %v3018, %v3030
    %v3032 = vpop.f32.mrf.mxu0
    %3033 = vdwg.mxu0
    %3034 = vmatpush.bf16.msra.mxu0 %v2707
    %3035 = vmatpush.bf16.msra.mxu0 %v2705
    %3036 = vmatpush.bf16.msra.mxu0 %v2703
    %3037 = vmatpush.bf16.msra.mxu0 %v2701
    %3038 = vmatpush.bf16.msra.mxu0 %v2699
    %3039 = vmatpush.bf16.msra.mxu0 %v2697
    %3040 = vmatpush.bf16.msra.mxu0 %v2695
    %3041 = vmatpush.bf16.msra.mxu0 %v2693
    %3042 = vmatmul.bf16.gmra.mxu0 %v2112
    %v3043 = vpop.f32.mrf.mxu0
    %v3044 = vadd.f32 %v3031, %v3043
    %v3045 = vpop.f32.mrf.mxu0
    %3046 = vdwg.mxu0
    %3047 = vmatpush.bf16.msra.mxu0 %v2723
    %3048 = vmatpush.bf16.msra.mxu0 %v2721
    %3049 = vmatpush.bf16.msra.mxu0 %v2719
    %3050 = vmatpush.bf16.msra.mxu0 %v2717
    %3051 = vmatpush.bf16.msra.mxu0 %v2715
    %3052 = vmatpush.bf16.msra.mxu0 %v2713
    %3053 = vmatpush.bf16.msra.mxu0 %v2711
    %3054 = vmatpush.bf16.msra.mxu0 %v2709
    %3055 = vmatmul.bf16.gmra.mxu0 %v2113
    %v3056 = vpop.f32.mrf.mxu0
    %v3057 = vadd.f32 %v3044, %v3056
    %v3058 = vpop.f32.mrf.mxu0
    %3059 = vdwg.mxu0
    %3060 = vmatpush.bf16.msra.mxu0 %v2739
    %3061 = vmatpush.bf16.msra.mxu0 %v2737
    %3062 = vmatpush.bf16.msra.mxu0 %v2735
    %3063 = vmatpush.bf16.msra.mxu0 %v2733
    %3064 = vmatpush.bf16.msra.mxu0 %v2731
    %3065 = vmatpush.bf16.msra.mxu0 %v2729
    %3066 = vmatpush.bf16.msra.mxu0 %v2727
    %3067 = vmatpush.bf16.msra.mxu0 %v2725
    %3068 = vmatmul.bf16.gmra.mxu0 %v2114
    %v3069 = vpop.f32.mrf.mxu0
    %v3070 = vadd.f32 %v3057, %v3069
    %v3071 = vpop.f32.mrf.mxu0
    %3072 = vdwg.mxu0
    %3073 = vmatpush.bf16.msra.mxu0 %v2755
    %3074 = vmatpush.bf16.msra.mxu0 %v2753
    %3075 = vmatpush.bf16.msra.mxu0 %v2751
    %3076 = vmatpush.bf16.msra.mxu0 %v2749
    %3077 = vmatpush.bf16.msra.mxu0 %v2747
    %3078 = vmatpush.bf16.msra.mxu0 %v2745
    %3079 = vmatpush.bf16.msra.mxu0 %v2743
    %3080 = vmatpush.bf16.msra.mxu0 %v2741
    %3081 = vmatmul.bf16.gmra.mxu0 %v2115
    %v3082 = vpop.f32.mrf.mxu0
    %v3083 = vadd.f32 %v3070, %v3082
    %v3084 = vpop.f32.mrf.mxu0
    %3085 = vdwg.mxu0
    %3086 = vmatpush.bf16.msra.mxu0 %v2771
    %3087 = vmatpush.bf16.msra.mxu0 %v2769
    %3088 = vmatpush.bf16.msra.mxu0 %v2767
    %3089 = vmatpush.bf16.msra.mxu0 %v2765
    %3090 = vmatpush.bf16.msra.mxu0 %v2763
    %3091 = vmatpush.bf16.msra.mxu0 %v2761
    %3092 = vmatpush.bf16.msra.mxu0 %v2759
    %3093 = vmatpush.bf16.msra.mxu0 %v2757
    %3094 = vmatmul.bf16.gmra.mxu0 %v2116
    %v3095 = vpop.f32.mrf.mxu0
    %v3096 = vadd.f32 %v3083, %v3095
    %v3097 = vpop.f32.mrf.mxu0
    %3098 = vdwg.mxu0
    %3099 = vmatpush.bf16.msra.mxu0 %v2787
    %3100 = vmatpush.bf16.msra.mxu0 %v2785
    %3101 = vmatpush.bf16.msra.mxu0 %v2783
    %3102 = vmatpush.bf16.msra.mxu0 %v2781
    %3103 = vmatpush.bf16.msra.mxu0 %v2779
    %3104 = vmatpush.bf16.msra.mxu0 %v2777
    %3105 = vmatpush.bf16.msra.mxu0 %v2775
    %3106 = vmatpush.bf16.msra.mxu0 %v2773
    %3107 = vmatmul.bf16.gmra.mxu0 %v2119
    %v3108 = vpop.f32.mrf.mxu0
    %v3109 = vadd.f32 %v3096, %v3108
    %v3110 = vpop.f32.mrf.mxu0
    %3111 = vdwg.mxu0
    %3112 = vmatpush.bf16.msra.mxu0 %v2803
    %3113 = vmatpush.bf16.msra.mxu0 %v2801
    %3114 = vmatpush.bf16.msra.mxu0 %v2799
    %3115 = vmatpush.bf16.msra.mxu0 %v2797
    %3116 = vmatpush.bf16.msra.mxu0 %v2795
    %3117 = vmatpush.bf16.msra.mxu0 %v2793
    %3118 = vmatpush.bf16.msra.mxu0 %v2791
    %3119 = vmatpush.bf16.msra.mxu0 %v2789
    %3120 = vmatmul.bf16.gmra.mxu0 %v2120
    %v3121 = vpop.f32.mrf.mxu0
    %v3122 = vadd.f32 %v3109, %v3121
    %v3123 = vpop.f32.mrf.mxu0
    %3124 = vdwg.mxu0
    %3125 = vmatpush.bf16.msra.mxu0 0
    %3126 = vmatpush.bf16.msra.mxu0 0
    %3127 = vmatpush.bf16.msra.mxu0 %v2990
    %3128 = vmatpush.bf16.msra.mxu0 %v2813
    %3129 = vmatpush.bf16.msra.mxu0 %v2811
    %3130 = vmatpush.bf16.msra.mxu0 %v2809
    %3131 = vmatpush.bf16.msra.mxu0 %v2807
    %3132 = vmatpush.bf16.msra.mxu0 %v2805
    %3133 = vmatmul.bf16.gmra.mxu0 %v2987
    %v3134 = vpop.f32.mrf.mxu0
    %v3135 = vadd.f32 %v3122, %v3134
    %v3136 = vpop.f32.mrf.mxu0
    %3137 = vdwg.mxu0
    %3138 = vmatpush.bf16.msra.mxu0 %v2660
    %3139 = vmatpush.bf16.msra.mxu0 %v2658
    %3140 = vmatpush.bf16.msra.mxu0 %v2656
    %3141 = vmatpush.bf16.msra.mxu0 %v2654
    %3142 = vmatpush.bf16.msra.mxu0 %v2652
    %3143 = vmatpush.bf16.msra.mxu0 %v2650
    %3144 = vmatpush.bf16.msra.mxu0 %v2648
    %3145 = vmatpush.bf16.msra.mxu0 %v2646
    %3146 = vmatmul.bf16.gmra.mxu0 %v2109
    %v3147 = vpop.f32.mrf.mxu0
    %v3148 = vadd.f32 %v2104, %v3147
    %v3149 = vpop.f32.mrf.mxu0
    %3150 = vdwg.mxu0
    %3151 = vmatpush.bf16.msra.mxu0 %v2676
    %3152 = vmatpush.bf16.msra.mxu0 %v2674
    %3153 = vmatpush.bf16.msra.mxu0 %v2672
    %3154 = vmatpush.bf16.msra.mxu0 %v2670
    %3155 = vmatpush.bf16.msra.mxu0 %v2668
    %3156 = vmatpush.bf16.msra.mxu0 %v2666
    %3157 = vmatpush.bf16.msra.mxu0 %v2664
    %3158 = vmatpush.bf16.msra.mxu0 %v2662
    %3159 = vmatmul.bf16.gmra.mxu0 %v2110
    %v3160 = vpop.f32.mrf.mxu0
    %v3161 = vadd.f32 %v3148, %v3160
    %v3162 = vpop.f32.mrf.mxu0
    %3163 = vdwg.mxu0
    %3164 = vmatpush.bf16.msra.mxu0 %v2692
    %3165 = vmatpush.bf16.msra.mxu0 %v2690
    %3166 = vmatpush.bf16.msra.mxu0 %v2688
    %3167 = vmatpush.bf16.msra.mxu0 %v2686
    %3168 = vmatpush.bf16.msra.mxu0 %v2684
    %3169 = vmatpush.bf16.msra.mxu0 %v2682
    %3170 = vmatpush.bf16.msra.mxu0 %v2680
    %3171 = vmatpush.bf16.msra.mxu0 %v2678
    %3172 = vmatmul.bf16.gmra.mxu0 %v2111
    %v3173 = vpop.f32.mrf.mxu0
    %v3174 = vadd.f32 %v3161, %v3173
    %v3175 = vpop.f32.mrf.mxu0
    %3176 = vdwg.mxu0
    %3177 = vmatpush.bf16.msra.mxu0 %v2708
    %3178 = vmatpush.bf16.msra.mxu0 %v2706
    %3179 = vmatpush.bf16.msra.mxu0 %v2704
    %3180 = vmatpush.bf16.msra.mxu0 %v2702
    %3181 = vmatpush.bf16.msra.mxu0 %v2700
    %3182 = vmatpush.bf16.msra.mxu0 %v2698
    %3183 = vmatpush.bf16.msra.mxu0 %v2696
    %3184 = vmatpush.bf16.msra.mxu0 %v2694
    %3185 = vmatmul.bf16.gmra.mxu0 %v2112
    %v3186 = vpop.f32.mrf.mxu0
    %v3187 = vadd.f32 %v3174, %v3186
    %v3188 = vpop.f32.mrf.mxu0
    %3189 = vdwg.mxu0
    %3190 = vmatpush.bf16.msra.mxu0 %v2724
    %3191 = vmatpush.bf16.msra.mxu0 %v2722
    %3192 = vmatpush.bf16.msra.mxu0 %v2720
    %3193 = vmatpush.bf16.msra.mxu0 %v2718
    %3194 = vmatpush.bf16.msra.mxu0 %v2716
    %3195 = vmatpush.bf16.msra.mxu0 %v2714
    %3196 = vmatpush.bf16.msra.mxu0 %v2712
    %3197 = vmatpush.bf16.msra.mxu0 %v2710
    %3198 = vmatmul.bf16.gmra.mxu0 %v2113
    %v3199 = vpop.f32.mrf.mxu0
    %v3200 = vadd.f32 %v3187, %v3199
    %v3201 = vpop.f32.mrf.mxu0
    %3202 = vdwg.mxu0
    %3203 = vmatpush.bf16.msra.mxu0 %v2740
    %3204 = vmatpush.bf16.msra.mxu0 %v2738
    %3205 = vmatpush.bf16.msra.mxu0 %v2736
    %3206 = vmatpush.bf16.msra.mxu0 %v2734
    %3207 = vmatpush.bf16.msra.mxu0 %v2732
    %3208 = vmatpush.bf16.msra.mxu0 %v2730
    %3209 = vmatpush.bf16.msra.mxu0 %v2728
    %3210 = vmatpush.bf16.msra.mxu0 %v2726
    %3211 = vmatmul.bf16.gmra.mxu0 %v2114
    %v3212 = vpop.f32.mrf.mxu0
    %v3213 = vadd.f32 %v3200, %v3212
    %v3214 = vpop.f32.mrf.mxu0
    %3215 = vdwg.mxu0
    %3216 = vmatpush.bf16.msra.mxu0 %v2756
    %3217 = vmatpush.bf16.msra.mxu0 %v2754
    %3218 = vmatpush.bf16.msra.mxu0 %v2752
    %3219 = vmatpush.bf16.msra.mxu0 %v2750
    %3220 = vmatpush.bf16.msra.mxu0 %v2748
    %3221 = vmatpush.bf16.msra.mxu0 %v2746
    %3222 = vmatpush.bf16.msra.mxu0 %v2744
    %3223 = vmatpush.bf16.msra.mxu0 %v2742
    %3224 = vmatmul.bf16.gmra.mxu0 %v2115
    %v3225 = vpop.f32.mrf.mxu0
    %v3226 = vadd.f32 %v3213, %v3225
    %v3227 = vpop.f32.mrf.mxu0
    %3228 = vdwg.mxu0
    %3229 = vmatpush.bf16.msra.mxu0 %v2772
    %3230 = vmatpush.bf16.msra.mxu0 %v2770
    %3231 = vmatpush.bf16.msra.mxu0 %v2768
    %3232 = vmatpush.bf16.msra.mxu0 %v2766
    %3233 = vmatpush.bf16.msra.mxu0 %v2764
    %3234 = vmatpush.bf16.msra.mxu0 %v2762
    %3235 = vmatpush.bf16.msra.mxu0 %v2760
    %3236 = vmatpush.bf16.msra.mxu0 %v2758
    %3237 = vmatmul.bf16.gmra.mxu0 %v2116
    %v3238 = vpop.f32.mrf.mxu0
    %v3239 = vadd.f32 %v3226, %v3238
    %v3240 = vpop.f32.mrf.mxu0
    %3241 = vdwg.mxu0
    %3242 = vmatpush.bf16.msra.mxu0 %v2788
    %3243 = vmatpush.bf16.msra.mxu0 %v2786
    %3244 = vmatpush.bf16.msra.mxu0 %v2784
    %3245 = vmatpush.bf16.msra.mxu0 %v2782
    %3246 = vmatpush.bf16.msra.mxu0 %v2780
    %3247 = vmatpush.bf16.msra.mxu0 %v2778
    %3248 = vmatpush.bf16.msra.mxu0 %v2776
    %3249 = vmatpush.bf16.msra.mxu0 %v2774
    %3250 = vmatmul.bf16.gmra.mxu0 %v2119
    %v3251 = vpop.f32.mrf.mxu0
    %v3252 = vadd.f32 %v3239, %v3251
    %v3253 = vpop.f32.mrf.mxu0
    %3254 = vdwg.mxu0
    %3255 = vmatpush.bf16.msra.mxu0 %v2804
    %3256 = vmatpush.bf16.msra.mxu0 %v2802
    %3257 = vmatpush.bf16.msra.mxu0 %v2800
    %3258 = vmatpush.bf16.msra.mxu0 %v2798
    %3259 = vmatpush.bf16.msra.mxu0 %v2796
    %3260 = vmatpush.bf16.msra.mxu0 %v2794
    %3261 = vmatpush.bf16.msra.mxu0 %v2792
    %3262 = vmatpush.bf16.msra.mxu0 %v2790
    %3263 = vmatmul.bf16.gmra.mxu0 %v2120
    %v3264 = vpop.f32.mrf.mxu0
    %v3265 = vadd.f32 %v3252, %v3264
    %v3266 = vpop.f32.mrf.mxu0
    %3267 = vdwg.mxu0
    %3268 = vmatpush.bf16.msra.mxu0 0
    %3269 = vmatpush.bf16.msra.mxu0 0
    %3270 = vmatpush.bf16.msra.mxu0 %v2993
    %3271 = vmatpush.bf16.msra.mxu0 %v2814
    %3272 = vmatpush.bf16.msra.mxu0 %v2812
    %3273 = vmatpush.bf16.msra.mxu0 %v2810
    %3274 = vmatpush.bf16.msra.mxu0 %v2808
    %3275 = vmatpush.bf16.msra.mxu0 %v2806
    %3276 = vmatmul.bf16.gmra.mxu0 %v2987
    %v3277 = vpop.f32.mrf.mxu0
    %v3278 = vadd.f32 %v3265, %v3277
    %v3279 = vpop.f32.mrf.mxu0
    %3280 = vdwg.mxu0
    %v3281 = vld [vmem:[%s4] sm:$0x3]
    %v3283 = vperm.slane %v3281, 0
    %v3284 = vperm.slane %v3281, 1
    %v3287 = vadd.f32 %v3135, %v3283
    %v3288 = vadd.f32 %v3278, %v3284
    %v3289 = vpack.c.bf16 %v3287, %v3287
    %v3290 = vpack.c.bf16 %v3288, %v3288
    %v3291 = vld [vmem:[%s5] sm:$0xf]
    %v3292 = vld [vmem:[%s5 + $0x4] sm:$0xf]
    %v3293 = vld [vmem:[%s5 + $0x8] sm:$0xf]
    %v3294 = vld [vmem:[%s5 + $0xc] sm:$0xf]
    %v3295 = vld [vmem:[%s5 + $0x10] sm:$0xf]
    %v3296 = vld [vmem:[%s5 + $0x14] sm:$0xf]
    %v3297 = vld [vmem:[%s5 + $0x18] sm:$0xf]
    %v3298 = vld [vmem:[%s5 + $0x1c] sm:$0xf]
    %v3299 = vld [vmem:[%s5 + $0x20] sm:$0xf]
    %v3300 = vld [vmem:[%s5 + $0x24] sm:$0xf]
    %v3301 = vld [vmem:[%s5 + $0x28] sm:$0xf]
    %v3302 = vld [vmem:[%s5 + $0x2c] sm:$0xf]
    %v3303 = vld [vmem:[%s5 + $0x30] sm:$0xf]
    %v3304 = vld [vmem:[%s5 + $0x34] sm:$0xf]
    %v3305 = vld [vmem:[%s5 + $0x38] sm:$0xf]
    %v3306 = vld [vmem:[%s5 + $0x3c] sm:$0xf]
    %v3307 = vld [vmem:[%s5 + $0x40] sm:$0xf]
    %v3308 = vld [vmem:[%s5 + $0x44] sm:$0xf]
    %v3309 = vld [vmem:[%s5 + $0x48] sm:$0xf]
    %v3310 = vld [vmem:[%s5 + $0x4c] sm:$0xf]
    %v3311 = vld [vmem:[%s5 + $0x50] sm:$0xf]
    %v3312 = vld [vmem:[%s5 + $0x54] sm:$0xf]
    %v3313 = vld [vmem:[%s5 + $0x58] sm:$0xf]
    %v3314 = vld [vmem:[%s5 + $0x5c] sm:$0xf]
    %v3315 = vld [vmem:[%s5 + $0x60] sm:$0xf]
    %v3316 = vld [vmem:[%s5 + $0x64] sm:$0xf]
    %v3317 = vld [vmem:[%s5 + $0x68] sm:$0xf]
    %v3318 = vld [vmem:[%s5 + $0x6c] sm:$0xf]
    %v3319 = vld [vmem:[%s5 + $0x70] sm:$0xf]
    %v3320 = vld [vmem:[%s5 + $0x74] sm:$0xf]
    %v3321 = vld [vmem:[%s5 + $0x78] sm:$0xf]
    %v3322 = vld [vmem:[%s5 + $0x7c] sm:$0xf]
    %v3323 = vld [vmem:[%s6] sm:$0x1]
    %v3325 = vperm.slane %v3323, 0
    %v3359 = vunpack.c.l.b16 %v3291
    %v3360 = vunpack.c.l.b16 %v3292
    %v3361 = vunpack.c.l.b16 %v3293
    %v3362 = vunpack.c.l.b16 %v3294
    %v3363 = vunpack.c.l.b16 %v3295
    %v3364 = vunpack.c.l.b16 %v3296
    %v3365 = vunpack.c.l.b16 %v3297
    %v3366 = vunpack.c.l.b16 %v3298
    %v3367 = vunpack.c.l.b16 %v3299
    %v3368 = vunpack.c.l.b16 %v3300
    %v3369 = vunpack.c.l.b16 %v3301
    %v3370 = vunpack.c.l.b16 %v3302
    %v3371 = vunpack.c.l.b16 %v3303
    %v3372 = vunpack.c.l.b16 %v3304
    %v3373 = vunpack.c.l.b16 %v3305
    %v3374 = vunpack.c.l.b16 %v3306
    %v3375 = vunpack.c.l.b16 %v3307
    %v3376 = vunpack.c.l.b16 %v3308
    %v3377 = vunpack.c.l.b16 %v3309
    %v3378 = vunpack.c.l.b16 %v3310
    %v3379 = vunpack.c.l.b16 %v3311
    %v3380 = vunpack.c.l.b16 %v3312
    %v3381 = vunpack.c.l.b16 %v3313
    %v3382 = vunpack.c.l.b16 %v3314
    %v3383 = vunpack.c.l.b16 %v3315
    %v3384 = vunpack.c.l.b16 %v3316
    %v3385 = vunpack.c.l.b16 %v3317
    %v3386 = vunpack.c.l.b16 %v3318
    %v3387 = vunpack.c.l.b16 %v3319
    %v3388 = vunpack.c.l.b16 %v3320
    %v3389 = vunpack.c.l.b16 %v3321
    %v3390 = vunpack.c.l.b16 %v3322
    %v3391 = vpack.c.b16 %v3360, %v3359
    %v3392 = vpack.c.b16 %v3362, %v3361
    %v3393 = vpack.c.b16 %v3364, %v3363
    %v3394 = vpack.c.b16 %v3366, %v3365
    %v3395 = vpack.c.b16 %v3368, %v3367
    %v3396 = vpack.c.b16 %v3370, %v3369
    %v3397 = vpack.c.b16 %v3372, %v3371
    %v3398 = vpack.c.b16 %v3374, %v3373
    %v3399 = vpack.c.b16 %v3376, %v3375
    %v3400 = vpack.c.b16 %v3378, %v3377
    %v3401 = vpack.c.b16 %v3380, %v3379
    %v3402 = vpack.c.b16 %v3382, %v3381
    %v3403 = vpack.c.b16 %v3384, %v3383
    %v3404 = vpack.c.b16 %v3386, %v3385
    %v3405 = vpack.c.b16 %v3388, %v3387
    %v3406 = vpack.c.b16 %v3390, %v3389
    %3423 = vmatpush.bf16.msra.mxu0 %v3398
    %3424 = vmatpush.bf16.msra.mxu0 %v3397
    %3425 = vmatpush.bf16.msra.mxu0 %v3396
    %3426 = vmatpush.bf16.msra.mxu0 %v3395
    %3427 = vmatpush.bf16.msra.mxu0 %v3394
    %3428 = vmatpush.bf16.msra.mxu0 %v3393
    %3429 = vmatpush.bf16.msra.mxu0 %v3392
    %3430 = vmatpush.bf16.msra.mxu0 %v3391
    %3431 = vmatmul.bf16.gmra.mxu0 %v3289
    %v3432 = vpop.f32.mrf.mxu0
    %v3433 = vadd.f32 %v3325, %v3432
    %v3434 = vpop.f32.mrf.mxu0
    %3435 = vdwg.mxu0
    %3436 = vmatpush.bf16.msra.mxu0 %v3406
    %3437 = vmatpush.bf16.msra.mxu0 %v3405
    %3438 = vmatpush.bf16.msra.mxu0 %v3404
    %3439 = vmatpush.bf16.msra.mxu0 %v3403
    %3440 = vmatpush.bf16.msra.mxu0 %v3402
    %3441 = vmatpush.bf16.msra.mxu0 %v3401
    %3442 = vmatpush.bf16.msra.mxu0 %v3400
    %3443 = vmatpush.bf16.msra.mxu0 %v3399
    %3444 = vmatmul.bf16.gmra.mxu0 %v3290
    %v3445 = vpop.f32.mrf.mxu0
    %v3446 = vadd.f32 %v3433, %v3445
    %v3447 = vpop.f32.mrf.mxu0
    %3448 = vdwg.mxu0
    %3449 = vst [vmem:[#allocation11] sm:$0x3] %v3446
    // Predicated region
    $region42: #{_forward_impl.1} parent=1 // pred_check
      _
    $region43: #{_forward_impl.1} parent=1 // pred_check_branch
      %3451 = sbr.rel (0) target = $region45
    $region44: #{_forward_impl.1} parent=1 // pred_region
      %3453 = vsyncadd [#allocation6], 0
      %s3455 = sshll.u32 [#allocation11], 4
      %s3456 = int_to_ptr.vmem [resolvable:$true] %s3455
      %s3457 = sshll.u32 %s7, 4
      %s3458 = int_to_ptr.hbm [resolvable:$true] %s3457
      %3460 = dma.vmem_to_hbm [thread:$0]  %s3456, 32, %s3458, [#allocation6]
    $region45: #{_forward_impl.1} parent=1 // pred_fallthru
      _
    // Predicated region
    $region46: #{_forward_impl.1} parent=1 // pred_check
      _
    $region47: #{_forward_impl.1} parent=1 // pred_check_branch
      %3462 = sbr.rel (0) target = $region49
    $region48: #{_forward_impl.1} parent=1 // pred_region
      %3464 = dma.done [#allocation6], 32
    $region49: #{_forward_impl.1} parent=1 // pred_fallthru
      _
    %3465 = vsyncpa [#allocation5], 1
    %3466 = vsyncpa [#allocation10], 1
    %3467 = vsyncpa [#allocation6], 1
    %3468 = vsyncpa [#allocation7], 1

</llo_original>
